<compile_context>
chip_gen: v6e
topology: v6e:2x2x1
jax: 0.10.0
libtpu: 0.0.40
codegen_flags: <defaults>
</compile_context>

<pallas_src>
import functools

import jax
import jax.numpy as jnp
import numpy as np
from jax.experimental import pallas as pl
from jax.experimental.pallas import tpu as pltpu


def _round_up(v, m):
    return (v + m - 1) // m * m


def _make_ae_kernel(num_linear: int, bottleneck: int, fused_width: int):
    """Fused encoder+decoder kernel.

    Ref order: x_ref, W0, b0, ..., W_{L-1}, b_{L-1}, out_ref
    Wi are bf16 [in_used_i, out_used_i] (pre-transposed, zero padded; the last
    layer's real columns are shifted to offset enc_dim), bi are f32
    [1, out_used_i].  tanh after every Linear except the last, like the module.
    """

    def kernel(x_ref, *refs):
        out_ref = refs[2 * num_linear]
        h = x_ref[...].astype(jnp.bfloat16)          # bf16 cast on VPU, under DMA
        enc = None
        dec = None
        for i in range(num_linear):
            w = refs[2 * i][...]                     # bf16 [in_used, out_used]
            b = refs[2 * i + 1][...]                 # f32  [1, out_used]
            acc = jnp.dot(h, w, preferred_element_type=jnp.float32) + b
            if i < num_linear - 1:
                acc = jnp.tanh(acc)                  # f32 on VPU/EUP (v5e has no bf16 VPU)
                if i == bottleneck - 1:
                    # Post-activation bottleneck output == encoding.  Its padded
                    # columns are exactly tanh(0)=0, so the fused add below is exact.
                    enc = acc
                h = acc.astype(jnp.bfloat16)         # back onto the MXU path
            else:
                # Last layer: real columns already sit at [enc_dim, enc_dim+dec_dim)
                # (weight/bias pre-shifted); all other columns are exactly zero.
                dec = acc
        if enc.shape[1] < fused_width:               # trace-time branch; exact zero pad
            enc = jnp.pad(enc, ((0, 0), (0, fused_width - enc.shape[1])))
        # Single lane-dense, unmasked store of the fused [encoding | decoding] slab.
        out_ref[...] = (enc + dec).astype(out_ref.dtype)

    return kernel


def prepare_params(params, architecture):
    """Pads/casts the (pre-transposed [in,out]) weights and [1,out] biases.

    * layer 0 keeps its true input dim (x is not padded);
    * inner layers pad both dims to multiples of 128 (zero padding is exact
      through Linear+tanh chains);
    * the LAST layer's output columns are shifted to offset enc_dim inside a
      width-F slab so the kernel can fuse encoding+decoding into one store.
    Weights -> bf16, biases -> f32.  Done once, outside the jitted forward.
    """
    arch = [int(a) for a in architecture]
    num_linear = len(arch) - 1
    bottleneck = int(np.argmin(arch))
    enc_dim, dec_dim = arch[bottleneck], arch[-1]
    fused = _round_up(enc_dim + dec_dim, 128)

    prepared = []
    for i in range(num_linear):
        w, b = params[2 * i], params[2 * i + 1]
        in_d, out_d = arch[i], arch[i + 1]
        in_p = in_d if i == 0 else _round_up(in_d, 128)
        if i == num_linear - 1:
            out_p, off = fused, enc_dim
        else:
            out_p, off = _round_up(out_d, 128), 0
        w = jnp.pad(w, ((0, in_p - in_d), (off, out_p - out_d - off))).astype(jnp.bfloat16)
        b = jnp.pad(b, ((0, 0), (off, out_p - out_d - off))).astype(jnp.float32)
        prepared += [w, b]
    return tuple(prepared)


@functools.partial(jax.jit, static_argnames=("architecture",))
def autoencoder_forward(x, prepared_params, architecture):
    """Runs the fused autoencoder Pallas kernel.

    x: [batch, architecture[0]] float32 (passed to the kernel unpadded).
    prepared_params: output of prepare_params.
    Returns (encoding, decoding) just like the PyTorch module.
    """
    arch = tuple(int(a) for a in architecture)
    num_linear = len(arch) - 1
    bottleneck = int(np.argmin(arch))
    if arch[0] != arch[-1] or arch[0] <= arch[bottleneck] or bottleneck == 0:
        raise ValueError("Not an autoencoder architecture")

    enc_dim, dec_dim = arch[bottleneck], arch[-1]
    fused = _round_up(enc_dim + dec_dim, 128)
    batch = x.shape[0]
    in_d = arch[0]

    # Dims actually used inside the kernel (for VMEM / cost accounting).
    in_used = [in_d] + [_round_up(arch[i], 128) for i in range(1, num_linear)]
    out_used = [_round_up(arch[i + 1], 128) for i in range(num_linear - 1)] + [fused]
    max_w = max(in_used + out_used)

    weight_bytes = sum(int(np.prod(p.shape)) * p.dtype.itemsize
                       for p in prepared_params)

    def _vmem_need(t):
        io = 2 * (t * in_d * 4 + t * fused * 4)     # double-buffered x + fused-out tiles
        params_vmem = 2 * weight_bytes              # Pallas double-buffers every input
        live = 3 * t * max_w * 4                    # live f32 act + bf16 copy + slack
        return io + params_vmem + live

    # Largest batch tile (<= 2048 rows) that fits a conservative 20 MiB budget
    # -> survives v7x's 64 MiB VMEM with headroom, amortizes per-step overhead.
    tm = min(2048, _round_up(max(batch, 1), 8))
    while tm > 8 and _vmem_need(tm) > 20 * 1024 * 1024:
        tm = max(8, _round_up(tm // 2, 8))

    grid = (pl.cdiv(batch, tm),)                    # no batch padding; partial last tile

    kernel = _make_ae_kernel(num_linear, bottleneck, fused)

    in_specs = [pl.BlockSpec((tm, in_d), lambda i: (i, 0))]
    for p in prepared_params:
        # Constant index_map -> weights/biases stay VMEM-resident across tiles.
        # TODO(synk): pipeline_mode=pl.Buffered(1) would single-buffer these and
        # free a little more VMEM for larger architectures on v7x.
        in_specs.append(pl.BlockSpec(p.shape, lambda i: (0, 0)))

    flops = 2 * batch * sum(a * b for a, b in zip(in_used, out_used))
    transcendentals = batch * sum(out_used[:-1])
    bytes_accessed = batch * in_d * 4 + weight_bytes + batch * fused * 4

    fused_out = pl.pallas_call(
        kernel,
        grid=grid,
        out_shape=jax.ShapeDtypeStruct((batch, fused), jnp.float32),
        in_specs=in_specs,
        out_specs=pl.BlockSpec((tm, fused), lambda i: (i, 0)),
        compiler_params=pltpu.CompilerParams(
            dimension_semantics=("parallel",),
            vmem_limit_bytes=32 * 1024 * 1024,
        ),
        cost_estimate=pl.CostEstimate(
            flops=flops,
            transcendentals=transcendentals,
            bytes_accessed=bytes_accessed,
        ),
    )(x, *prepared_params)

    # Two cheap column slices split the fused lane-dense slab.
    encoding = fused_out[:, :enc_dim]
    decoding = fused_out[:, enc_dim:enc_dim + dec_dim]
    return encoding, decoding


def init_params(architecture, key):
    """Deterministic Xavier-uniform weights (like nn.init.xavier_uniform_)
    and PyTorch-default uniform biases, stored pre-transposed as [in, out]."""
    params = []
    for i in range(len(architecture) - 1):
        fan_in, fan_out = architecture[i], architecture[i + 1]
        key, kw, kb = jax.random.split(key, 3)
        limit = float(np.sqrt(6.0 / (fan_in + fan_out)))
        w = jax.random.uniform(
            kw, (fan_in, fan_out), jnp.float32, minval=-limit, maxval=limit
        )
        bound = 1.0 / float(np.sqrt(fan_in))
        b = jax.random.uniform(
            kb, (1, fan_out), jnp.float32, minval=-bound, maxval=bound
        )
        params += [w, b]
    return tuple(params)


if __name__ == "__main__":
    # architecture must satisfy: arch[0] == arch[-1] and arch[0] > min(arch)
    architecture = (64, 32, 8, 32, 64)   # encoder: 64->32->8, decoder: 8->32->64
    batch = 4000                         # tm=2048 -> 2 batch tiles incl. a partial one

    key = jax.random.PRNGKey(0)
    key, kx = jax.random.split(key)
    x = jax.random.normal(kx, (batch, architecture[0]), dtype=jnp.float32)

    params = init_params(architecture, key)
    prepared = prepare_params(params, architecture)

    encoding, decoding = autoencoder_forward(x, prepared, architecture)
    jax.block_until_ready((encoding, decoding))

    # Pure-JAX reference using the same bf16-in / f32-accumulate math
    # on the ORIGINAL (unpadded, unshifted) parameters.
    def ref_forward(x, params, arch):
        bott = int(np.argmin(arch))
        n = len(arch) - 1
        h = x.astype(jnp.bfloat16)
        enc = None
        acc = None
        for i in range(n):
            w, b = params[2 * i], params[2 * i + 1]
            acc = jnp.dot(h, w.astype(jnp.bfloat16),
                          preferred_element_type=jnp.float32) + b
            if i < n - 1:
                acc = jnp.tanh(acc)
                if i == bott - 1:
                    enc = acc
                h = acc.astype(jnp.bfloat16)
        return enc, acc

    enc_ref, dec_ref = ref_forward(x, params, list(architecture))
    bott = int(np.argmin(architecture))
    assert encoding.shape == (batch, architecture[bott])
    assert decoding.shape == (batch, architecture[-1])
    np.testing.assert_allclose(np.asarray(encoding), np.asarray(enc_ref),
                               atol=2e-3, rtol=2e-3)
    np.testing.assert_allclose(np.asarray(decoding), np.asarray(dec_ref),
                               atol=2e-3, rtol=2e-3)

    print("KERNEL_OK")
</pallas_src>

<mosaic_0001>
module attributes {stable_mosaic.version = 11 : i64} {
  func.func @kernel(%arg0: i32, %arg1: memref<2048x64xf32, #tpu.memory_space<vmem>>, %arg2: memref<64x128xbf16, #tpu.memory_space<vmem>>, %arg3: memref<1x128xf32, #tpu.memory_space<vmem>>, %arg4: memref<128x128xbf16, #tpu.memory_space<vmem>>, %arg5: memref<1x128xf32, #tpu.memory_space<vmem>>, %arg6: memref<128x128xbf16, #tpu.memory_space<vmem>>, %arg7: memref<1x128xf32, #tpu.memory_space<vmem>>, %arg8: memref<128x128xbf16, #tpu.memory_space<vmem>>, %arg9: memref<1x128xf32, #tpu.memory_space<vmem>>, %arg10: memref<2048x128xf32, #tpu.memory_space<vmem>>) attributes {dimension_semantics = [#tpu.dimension_semantics<parallel>], iteration_bounds = array<i64: 2>, scalar_prefetch = 0 : i64, scratch_operands = 0 : i64, tpu.core_type = #tpu.core_type<tc>, window_params = [{transform_indices = @transform_0, window_bounds = array<i64: 2048, 64>}, {pipeline_mode = #tpu.pipeline_mode<synchronous>, transform_indices = @transform_1, window_bounds = array<i64: 64, 128>}, {pipeline_mode = #tpu.pipeline_mode<synchronous>, transform_indices = @transform_2, window_bounds = array<i64: 1, 128>}, {pipeline_mode = #tpu.pipeline_mode<synchronous>, transform_indices = @transform_3, window_bounds = array<i64: 128, 128>}, {pipeline_mode = #tpu.pipeline_mode<synchronous>, transform_indices = @transform_4, window_bounds = array<i64: 1, 128>}, {pipeline_mode = #tpu.pipeline_mode<synchronous>, transform_indices = @transform_5, window_bounds = array<i64: 128, 128>}, {pipeline_mode = #tpu.pipeline_mode<synchronous>, transform_indices = @transform_6, window_bounds = array<i64: 1, 128>}, {pipeline_mode = #tpu.pipeline_mode<synchronous>, transform_indices = @transform_7, window_bounds = array<i64: 128, 128>}, {pipeline_mode = #tpu.pipeline_mode<synchronous>, transform_indices = @transform_8, window_bounds = array<i64: 1, 128>}, {transform_indices = @transform_9, window_bounds = array<i64: 2048, 128>}]} {
    %c0 = arith.constant 0 : index
    %c0_0 = arith.constant 0 : index
    %0 = vector.load %arg1[%c0, %c0_0] : memref<2048x64xf32, #tpu.memory_space<vmem>>, vector<2048x64xf32>
    %1 = arith.truncf %0 : vector<2048x64xf32> to vector<2048x64xbf16>
    %c0_1 = arith.constant 0 : index
    %c0_2 = arith.constant 0 : index
    %2 = vector.load %arg2[%c0_1, %c0_2] : memref<64x128xbf16, #tpu.memory_space<vmem>>, vector<64x128xbf16>
    %c0_3 = arith.constant 0 : index
    %c0_4 = arith.constant 0 : index
    %3 = vector.load %arg3[%c0_3, %c0_4] : memref<1x128xf32, #tpu.memory_space<vmem>>, vector<1x128xf32>
    %cst = arith.constant dense<0.000000e+00> : vector<2048x128xf32>
    %4 = tpu.matmul %1, %2, %cst {dimension_numbers = #tpu.dot_dimension_numbers<[1], [0], [0], [1], [0, 0, 1, 1], [], []>} : vector<2048x64xbf16>, vector<64x128xbf16>, vector<2048x128xf32> -> vector<2048x128xf32>
    %5 = vector.broadcast %3 : vector<1x128xf32> to vector<2048x128xf32>
    %6 = arith.addf %4, %5 : vector<2048x128xf32>
    %7 = math.tanh %6 : vector<2048x128xf32>
    %8 = arith.truncf %7 : vector<2048x128xf32> to vector<2048x128xbf16>
    %c0_5 = arith.constant 0 : index
    %c0_6 = arith.constant 0 : index
    %9 = vector.load %arg4[%c0_5, %c0_6] : memref<128x128xbf16, #tpu.memory_space<vmem>>, vector<128x128xbf16>
    %c0_7 = arith.constant 0 : index
    %c0_8 = arith.constant 0 : index
    %10 = vector.load %arg5[%c0_7, %c0_8] : memref<1x128xf32, #tpu.memory_space<vmem>>, vector<1x128xf32>
    %cst_9 = arith.constant dense<0.000000e+00> : vector<2048x128xf32>
    %11 = tpu.matmul %8, %9, %cst_9 {dimension_numbers = #tpu.dot_dimension_numbers<[1], [0], [0], [1], [0, 0, 1, 1], [], []>} : vector<2048x128xbf16>, vector<128x128xbf16>, vector<2048x128xf32> -> vector<2048x128xf32>
    %12 = vector.broadcast %10 : vector<1x128xf32> to vector<2048x128xf32>
    %13 = arith.addf %11, %12 : vector<2048x128xf32>
    %14 = math.tanh %13 : vector<2048x128xf32>
    %15 = arith.truncf %14 : vector<2048x128xf32> to vector<2048x128xbf16>
    %c0_10 = arith.constant 0 : index
    %c0_11 = arith.constant 0 : index
    %16 = vector.load %arg6[%c0_10, %c0_11] : memref<128x128xbf16, #tpu.memory_space<vmem>>, vector<128x128xbf16>
    %c0_12 = arith.constant 0 : index
    %c0_13 = arith.constant 0 : index
    %17 = vector.load %arg7[%c0_12, %c0_13] : memref<1x128xf32, #tpu.memory_space<vmem>>, vector<1x128xf32>
    %cst_14 = arith.constant dense<0.000000e+00> : vector<2048x128xf32>
    %18 = tpu.matmul %15, %16, %cst_14 {dimension_numbers = #tpu.dot_dimension_numbers<[1], [0], [0], [1], [0, 0, 1, 1], [], []>} : vector<2048x128xbf16>, vector<128x128xbf16>, vector<2048x128xf32> -> vector<2048x128xf32>
    %19 = vector.broadcast %17 : vector<1x128xf32> to vector<2048x128xf32>
    %20 = arith.addf %18, %19 : vector<2048x128xf32>
    %21 = math.tanh %20 : vector<2048x128xf32>
    %22 = arith.truncf %21 : vector<2048x128xf32> to vector<2048x128xbf16>
    %c0_15 = arith.constant 0 : index
    %c0_16 = arith.constant 0 : index
    %23 = vector.load %arg8[%c0_15, %c0_16] : memref<128x128xbf16, #tpu.memory_space<vmem>>, vector<128x128xbf16>
    %c0_17 = arith.constant 0 : index
    %c0_18 = arith.constant 0 : index
    %24 = vector.load %arg9[%c0_17, %c0_18] : memref<1x128xf32, #tpu.memory_space<vmem>>, vector<1x128xf32>
    %cst_19 = arith.constant dense<0.000000e+00> : vector<2048x128xf32>
    %25 = tpu.matmul %22, %23, %cst_19 {dimension_numbers = #tpu.dot_dimension_numbers<[1], [0], [0], [1], [0, 0, 1, 1], [], []>} : vector<2048x128xbf16>, vector<128x128xbf16>, vector<2048x128xf32> -> vector<2048x128xf32>
    %26 = vector.broadcast %24 : vector<1x128xf32> to vector<2048x128xf32>
    %27 = arith.addf %25, %26 : vector<2048x128xf32>
    %28 = arith.addf %14, %27 : vector<2048x128xf32>
    %c0_20 = arith.constant 0 : index
    %c0_21 = arith.constant 0 : index
    %29 = vector.load %arg10[%c0_20, %c0_21] : memref<2048x128xf32, #tpu.memory_space<vmem>>, vector<2048x128xf32>
    tpu.vector_store %arg10[%c0_20, %c0_21], %28 {strides = array<i32>} : memref<2048x128xf32, #tpu.memory_space<vmem>>, vector<2048x128xf32>,
    return
  }
  func.func @transform_0(%arg0: i32) -> (i32, i32) {
    %c0_i32 = arith.constant 0 : i32
    %c0_i32_0 = arith.constant 0 : i32
    return %arg0, %c0_i32 : i32, i32
  }
  func.func @transform_1(%arg0: i32) -> (i32, i32) {
    %c0_i32 = arith.constant 0 : i32
    %c0_i32_0 = arith.constant 0 : i32
    %c0_i32_1 = arith.constant 0 : i32
    return %c0_i32, %c0_i32_0 : i32, i32
  }
  func.func @transform_2(%arg0: i32) -> (i32, i32) {
    %c0_i32 = arith.constant 0 : i32
    %c0_i32_0 = arith.constant 0 : i32
    %c0_i32_1 = arith.constant 0 : i32
    return %c0_i32, %c0_i32_0 : i32, i32
  }
  func.func @transform_3(%arg0: i32) -> (i32, i32) {
    %c0_i32 = arith.constant 0 : i32
    %c0_i32_0 = arith.constant 0 : i32
    %c0_i32_1 = arith.constant 0 : i32
    return %c0_i32, %c0_i32_0 : i32, i32
  }
  func.func @transform_4(%arg0: i32) -> (i32, i32) {
    %c0_i32 = arith.constant 0 : i32
    %c0_i32_0 = arith.constant 0 : i32
    %c0_i32_1 = arith.constant 0 : i32
    return %c0_i32, %c0_i32_0 : i32, i32
  }
  func.func @transform_5(%arg0: i32) -> (i32, i32) {
    %c0_i32 = arith.constant 0 : i32
    %c0_i32_0 = arith.constant 0 : i32
    %c0_i32_1 = arith.constant 0 : i32
    return %c0_i32, %c0_i32_0 : i32, i32
  }
  func.func @transform_6(%arg0: i32) -> (i32, i32) {
    %c0_i32 = arith.constant 0 : i32
    %c0_i32_0 = arith.constant 0 : i32
    %c0_i32_1 = arith.constant 0 : i32
    return %c0_i32, %c0_i32_0 : i32, i32
  }
  func.func @transform_7(%arg0: i32) -> (i32, i32) {
    %c0_i32 = arith.constant 0 : i32
    %c0_i32_0 = arith.constant 0 : i32
    %c0_i32_1 = arith.constant 0 : i32
    return %c0_i32, %c0_i32_0 : i32, i32
  }
  func.func @transform_8(%arg0: i32) -> (i32, i32) {
    %c0_i32 = arith.constant 0 : i32
    %c0_i32_0 = arith.constant 0 : i32
    %c0_i32_1 = arith.constant 0 : i32
    return %c0_i32, %c0_i32_0 : i32, i32
  }
  func.func @transform_9(%arg0: i32) -> (i32, i32) {
    %c0_i32 = arith.constant 0 : i32
    %c0_i32_0 = arith.constant 0 : i32
    return %arg0, %c0_i32 : i32, i32
  }
}

</mosaic_0001>

<llo_original>
// kernel: autoencoder_forward.1
$region0: #{autoencoder_forward.1}
  #allocation0 [shape = 'u32[]', space=smem, size = 0x4, offset = 0x4, fixed_abs, tag = 'smem constant byte address 0x4 - core index']
  #allocation1 [shape = 'u32[144,128]{1,0:T(1,128)}', space=vmem, size = 0x12000, scoped, tag = 'internal scratch']
  %s0 = inlined_call_operand.vmem [shape: f32[4000,64], index: 0, kind: input, shape index: {}]
  %s1 = inlined_call_operand.vmem [shape: bf16[64,128], index: 1, kind: input, shape index: {}]
  %s2 = inlined_call_operand.vmem [shape: f32[1,128], index: 2, kind: input, shape index: {}]
  %s3 = inlined_call_operand.vmem [shape: bf16[128,128], index: 3, kind: input, shape index: {}]
  %s4 = inlined_call_operand.vmem [shape: f32[1,128], index: 4, kind: input, shape index: {}]
  %s5 = inlined_call_operand.vmem [shape: bf16[128,128], index: 5, kind: input, shape index: {}]
  %s6 = inlined_call_operand.vmem [shape: f32[1,128], index: 6, kind: input, shape index: {}]
  %s7 = inlined_call_operand.vmem [shape: bf16[128,128], index: 7, kind: input, shape index: {}]
  %s8 = inlined_call_operand.vmem [shape: f32[1,128], index: 8, kind: input, shape index: {}]
  %s9 = inlined_call_operand.vmem [shape: f32[4000,128], index: 9, kind: output, shape index: {}]
  %s10 = sld [smem:[#allocation0]]
  $region117: #{autoencoder_forward.1} parent=0
    _
  %s12 = ssub.s32 1, %s10
  %s13 = scalar_select 0, %s12, %s10
  $region1: #{autoencoder_forward.1} parent=0
    #allocation2 [shape = 'u8[2097152]{0}', space=vmem, size = 0x200000, scoped, tag = 'output window, operand 0']
    loop: start=0, step=1, limit=4
    $region2: #{autoencoder_forward.1} parent=1 // loop_pre_header
      _
    $region3: #{autoencoder_forward.1} parent=1 // loop_header
      %s15 = sphi 0, %s19
      %p16 = scmp.ge.s32.totalorder %s15, 4
      %s25 = sphi 0, %s27
      %s28 = sphi 0, %s25
      %s29 = sphi 0, %s28
      %s45 = sphi 0, %s29
      %s49 = sphi 0, %s49
      %s51 = sphi 0, %s49
      %s52 = sphi 0, %s51
      %s66 = sphi 0, %s52
      %s70 = sphi 0, %s70
      %s72 = sphi 0, %s70
      %s73 = sphi 0, %s72
      %s87 = sphi 0, %s73
      %s91 = sphi 0, %s91
      %s93 = sphi 0, %s91
      %s94 = sphi 0, %s93
      %s108 = sphi 0, %s94
      %s112 = sphi 0, %s112
      %s114 = sphi 0, %s112
      %s115 = sphi 0, %s114
      %s129 = sphi 0, %s115
      %s133 = sphi 0, %s133
      %s135 = sphi 0, %s133
      %s136 = sphi 0, %s135
      %s150 = sphi 0, %s136
      %s154 = sphi 0, %s154
      %s156 = sphi 0, %s154
      %s157 = sphi 0, %s156
      %s171 = sphi 0, %s157
      %s175 = sphi 0, %s175
      %s177 = sphi 0, %s175
      %s178 = sphi 0, %s177
      %s192 = sphi 0, %s178
      %s196 = sphi 0, %s196
      %s198 = sphi 0, %s196
      %s199 = sphi 0, %s198
      %s213 = sphi 0, %s199
      %s219 = sphi 0, %s221
      %s222 = sphi 0, %s219
      %s223 = sphi 0, %s222
      %s239 = sphi 0, %s223
    $region4: #{autoencoder_forward.1} parent=1 // loop_header_branch
      %18 = sbr.rel (%p16) target = $region8
    $region5: #{autoencoder_forward.1} parent=1 // loop_body
      %s20 = ssub.s32 %s15, 1
      %s21 = ssub.s32 %s15, 2
      %s22 = sadd.s32 %s15, 1
      %s23 = ssub.s32 %s15, %s22
      %p24 = scmp.eq.s32.totalorder %s23, 0
      %s26 = sadd.s32 %s25, 1
      %s27 = scalar_select %p24, %s25, %s26
      %p30 = pneg %p24
      %p31 = scmp.eq.s32.totalorder %s15, 1
      %p32 = por %p30, %p31
      %p33 = scmp.ne.s32.totalorder %s25, %s28
      %p34 = scmp.eq.s32.totalorder %s15, 0
      %p35 = por %p33, %p34
      %p36 = scmp.ne.s32.totalorder %s25, %s28
      %p37 = scmp.eq.s32.totalorder %s20, 1
      %p38 = por %p36, %p37
      %p39 = scmp.ne.s32.totalorder %s28, %s29
      %p40 = scmp.eq.s32.totalorder %s20, 0
      %p41 = por %p39, %p40
      %p42 = scmp.ne.s32.totalorder %s28, %s29
      %p43 = scmp.eq.s32.totalorder %s21, 1
      %p44 = por %p42, %p43
      %p46 = scmp.ne.s32.totalorder %s29, %s45
      %p47 = scmp.eq.s32.totalorder %s21, 0
      %p48 = por %p46, %p47
      %s50 = sadd.s32 %s49, 1
      %p53 = scmp.eq.s32.totalorder %s15, 1
      %p54 = scmp.ne.s32.totalorder %s49, %s51
      %p55 = scmp.eq.s32.totalorder %s15, 0
      %p56 = por %p54, %p55
      %p57 = scmp.ne.s32.totalorder %s49, %s51
      %p58 = scmp.eq.s32.totalorder %s20, 1
      %p59 = por %p57, %p58
      %p60 = scmp.ne.s32.totalorder %s51, %s52
      %p61 = scmp.eq.s32.totalorder %s20, 0
      %p62 = por %p60, %p61
      %p63 = scmp.ne.s32.totalorder %s51, %s52
      %p64 = scmp.eq.s32.totalorder %s21, 1
      %p65 = por %p63, %p64
      %p67 = scmp.ne.s32.totalorder %s52, %s66
      %p68 = scmp.eq.s32.totalorder %s21, 0
      %p69 = por %p67, %p68
      %s71 = sadd.s32 %s70, 1
      %p74 = scmp.eq.s32.totalorder %s15, 1
      %p75 = scmp.ne.s32.totalorder %s70, %s72
      %p76 = scmp.eq.s32.totalorder %s15, 0
      %p77 = por %p75, %p76
      %p78 = scmp.ne.s32.totalorder %s70, %s72
      %p79 = scmp.eq.s32.totalorder %s20, 1
      %p80 = por %p78, %p79
      %p81 = scmp.ne.s32.totalorder %s72, %s73
      %p82 = scmp.eq.s32.totalorder %s20, 0
      %p83 = por %p81, %p82
      %p84 = scmp.ne.s32.totalorder %s72, %s73
      %p85 = scmp.eq.s32.totalorder %s21, 1
      %p86 = por %p84, %p85
      %p88 = scmp.ne.s32.totalorder %s73, %s87
      %p89 = scmp.eq.s32.totalorder %s21, 0
      %p90 = por %p88, %p89
      %s92 = sadd.s32 %s91, 1
      %p95 = scmp.eq.s32.totalorder %s15, 1
      %p96 = scmp.ne.s32.totalorder %s91, %s93
      %p97 = scmp.eq.s32.totalorder %s15, 0
      %p98 = por %p96, %p97
      %p99 = scmp.ne.s32.totalorder %s91, %s93
      %p100 = scmp.eq.s32.totalorder %s20, 1
      %p101 = por %p99, %p100
      %p102 = scmp.ne.s32.totalorder %s93, %s94
      %p103 = scmp.eq.s32.totalorder %s20, 0
      %p104 = por %p102, %p103
      %p105 = scmp.ne.s32.totalorder %s93, %s94
      %p106 = scmp.eq.s32.totalorder %s21, 1
      %p107 = por %p105, %p106
      %p109 = scmp.ne.s32.totalorder %s94, %s108
      %p110 = scmp.eq.s32.totalorder %s21, 0
      %p111 = por %p109, %p110
      %s113 = sadd.s32 %s112, 1
      %p116 = scmp.eq.s32.totalorder %s15, 1
      %p117 = scmp.ne.s32.totalorder %s112, %s114
      %p118 = scmp.eq.s32.totalorder %s15, 0
      %p119 = por %p117, %p118
      %p120 = scmp.ne.s32.totalorder %s112, %s114
      %p121 = scmp.eq.s32.totalorder %s20, 1
      %p122 = por %p120, %p121
      %p123 = scmp.ne.s32.totalorder %s114, %s115
      %p124 = scmp.eq.s32.totalorder %s20, 0
      %p125 = por %p123, %p124
      %p126 = scmp.ne.s32.totalorder %s114, %s115
      %p127 = scmp.eq.s32.totalorder %s21, 1
      %p128 = por %p126, %p127
      %p130 = scmp.ne.s32.totalorder %s115, %s129
      %p131 = scmp.eq.s32.totalorder %s21, 0
      %p132 = por %p130, %p131
      %s134 = sadd.s32 %s133, 1
      %p137 = scmp.eq.s32.totalorder %s15, 1
      %p138 = scmp.ne.s32.totalorder %s133, %s135
      %p139 = scmp.eq.s32.totalorder %s15, 0
      %p140 = por %p138, %p139
      %p141 = scmp.ne.s32.totalorder %s133, %s135
      %p142 = scmp.eq.s32.totalorder %s20, 1
      %p143 = por %p141, %p142
      %p144 = scmp.ne.s32.totalorder %s135, %s136
      %p145 = scmp.eq.s32.totalorder %s20, 0
      %p146 = por %p144, %p145
      %p147 = scmp.ne.s32.totalorder %s135, %s136
      %p148 = scmp.eq.s32.totalorder %s21, 1
      %p149 = por %p147, %p148
      %p151 = scmp.ne.s32.totalorder %s136, %s150
      %p152 = scmp.eq.s32.totalorder %s21, 0
      %p153 = por %p151, %p152
      %s155 = sadd.s32 %s154, 1
      %p158 = scmp.eq.s32.totalorder %s15, 1
      %p159 = scmp.ne.s32.totalorder %s154, %s156
      %p160 = scmp.eq.s32.totalorder %s15, 0
      %p161 = por %p159, %p160
      %p162 = scmp.ne.s32.totalorder %s154, %s156
      %p163 = scmp.eq.s32.totalorder %s20, 1
      %p164 = por %p162, %p163
      %p165 = scmp.ne.s32.totalorder %s156, %s157
      %p166 = scmp.eq.s32.totalorder %s20, 0
      %p167 = por %p165, %p166
      %p168 = scmp.ne.s32.totalorder %s156, %s157
      %p169 = scmp.eq.s32.totalorder %s21, 1
      %p170 = por %p168, %p169
      %p172 = scmp.ne.s32.totalorder %s157, %s171
      %p173 = scmp.eq.s32.totalorder %s21, 0
      %p174 = por %p172, %p173
      %s176 = sadd.s32 %s175, 1
      %p179 = scmp.eq.s32.totalorder %s15, 1
      %p180 = scmp.ne.s32.totalorder %s175, %s177
      %p181 = scmp.eq.s32.totalorder %s15, 0
      %p182 = por %p180, %p181
      %p183 = scmp.ne.s32.totalorder %s175, %s177
      %p184 = scmp.eq.s32.totalorder %s20, 1
      %p185 = por %p183, %p184
      %p186 = scmp.ne.s32.totalorder %s177, %s178
      %p187 = scmp.eq.s32.totalorder %s20, 0
      %p188 = por %p186, %p187
      %p189 = scmp.ne.s32.totalorder %s177, %s178
      %p190 = scmp.eq.s32.totalorder %s21, 1
      %p191 = por %p189, %p190
      %p193 = scmp.ne.s32.totalorder %s178, %s192
      %p194 = scmp.eq.s32.totalorder %s21, 0
      %p195 = por %p193, %p194
      %s197 = sadd.s32 %s196, 1
      %p200 = scmp.eq.s32.totalorder %s15, 1
      %p201 = scmp.ne.s32.totalorder %s196, %s198
      %p202 = scmp.eq.s32.totalorder %s15, 0
      %p203 = por %p201, %p202
      %p204 = scmp.ne.s32.totalorder %s196, %s198
      %p205 = scmp.eq.s32.totalorder %s20, 1
      %p206 = por %p204, %p205
      %p207 = scmp.ne.s32.totalorder %s198, %s199
      %p208 = scmp.eq.s32.totalorder %s20, 0
      %p209 = por %p207, %p208
      %p210 = scmp.ne.s32.totalorder %s198, %s199
      %p211 = scmp.eq.s32.totalorder %s21, 1
      %p212 = por %p210, %p211
      %p214 = scmp.ne.s32.totalorder %s199, %s213
      %p215 = scmp.eq.s32.totalorder %s21, 0
      %p216 = por %p214, %p215
      %s217 = ssub.s32 %s15, %s22
      %p218 = scmp.eq.s32.totalorder %s217, 0
      %s220 = sadd.s32 %s219, 1
      %s221 = scalar_select %p218, %s219, %s220
      %p224 = pneg %p218
      %p225 = scmp.eq.s32.totalorder %s15, 1
      %p226 = por %p224, %p225
      %p227 = scmp.ne.s32.totalorder %s219, %s222
      %p228 = scmp.eq.s32.totalorder %s15, 0
      %p229 = por %p227, %p228
      %p230 = scmp.ne.s32.totalorder %s219, %s222
      %p231 = scmp.eq.s32.totalorder %s20, 1
      %p232 = por %p230, %p231
      %p233 = scmp.ne.s32.totalorder %s222, %s223
      %p234 = scmp.eq.s32.totalorder %s20, 0
      %p235 = por %p233, %p234
      %p236 = scmp.ne.s32.totalorder %s222, %s223
      %p237 = scmp.eq.s32.totalorder %s21, 1
      %p238 = por %p236, %p237
      %p240 = scmp.ne.s32.totalorder %s223, %s239
      %p241 = scmp.eq.s32.totalorder %s21, 0
      %p242 = por %p240, %p241
      %p243 = scmp.le.s32.totalorder 1, %s15
      %p244 = scmp.lt.s32.totalorder %s15, 3
      %p245 = pnand %p243, %p244
      %p246 = pneg %p245
      // Predicated region
      $region9: #{autoencoder_forward.1} parent=5 // pred_check
        _
      $region10: #{autoencoder_forward.1} parent=5 // pred_check_branch
        %248 = sbr.rel (%p245) target = $region12
      $region11: #{autoencoder_forward.1} parent=5 // pred_region
        %s249 = ssub.s32 %s15, 1
        // Predicated region
        $region13: #{autoencoder_forward.1} parent=11 // pred_check
          %p250 = pneg %p62
        $region14: #{autoencoder_forward.1} parent=11 // pred_check_branch
          %252 = sbr.rel (%p250) target = $region16
        $region15: #{autoencoder_forward.1} parent=11 // pred_region
          _
        $region16: #{autoencoder_forward.1} parent=11 // pred_fallthru
          _
        // Predicated region
        $region17: #{autoencoder_forward.1} parent=11 // pred_check
          %p253 = pneg %p83
        $region18: #{autoencoder_forward.1} parent=11 // pred_check_branch
          %255 = sbr.rel (%p253) target = $region20
        $region19: #{autoencoder_forward.1} parent=11 // pred_region
          _
        $region20: #{autoencoder_forward.1} parent=11 // pred_fallthru
          _
        // Predicated region
        $region21: #{autoencoder_forward.1} parent=11 // pred_check
          %p256 = pneg %p104
        $region22: #{autoencoder_forward.1} parent=11 // pred_check_branch
          %258 = sbr.rel (%p256) target = $region24
        $region23: #{autoencoder_forward.1} parent=11 // pred_region
          _
        $region24: #{autoencoder_forward.1} parent=11 // pred_fallthru
          _
        // Predicated region
        $region25: #{autoencoder_forward.1} parent=11 // pred_check
          %p259 = pneg %p125
        $region26: #{autoencoder_forward.1} parent=11 // pred_check_branch
          %261 = sbr.rel (%p259) target = $region28
        $region27: #{autoencoder_forward.1} parent=11 // pred_region
          _
        $region28: #{autoencoder_forward.1} parent=11 // pred_fallthru
          _
        // Predicated region
        $region29: #{autoencoder_forward.1} parent=11 // pred_check
          %p262 = pneg %p146
        $region30: #{autoencoder_forward.1} parent=11 // pred_check_branch
          %264 = sbr.rel (%p262) target = $region32
        $region31: #{autoencoder_forward.1} parent=11 // pred_region
          _
        $region32: #{autoencoder_forward.1} parent=11 // pred_fallthru
          _
        // Predicated region
        $region33: #{autoencoder_forward.1} parent=11 // pred_check
          %p265 = pneg %p167
        $region34: #{autoencoder_forward.1} parent=11 // pred_check_branch
          %267 = sbr.rel (%p265) target = $region36
        $region35: #{autoencoder_forward.1} parent=11 // pred_region
          _
        $region36: #{autoencoder_forward.1} parent=11 // pred_fallthru
          _
        // Predicated region
        $region37: #{autoencoder_forward.1} parent=11 // pred_check
          %p268 = pneg %p188
        $region38: #{autoencoder_forward.1} parent=11 // pred_check_branch
          %270 = sbr.rel (%p268) target = $region40
        $region39: #{autoencoder_forward.1} parent=11 // pred_region
          _
        $region40: #{autoencoder_forward.1} parent=11 // pred_fallthru
          _
        // Predicated region
        $region41: #{autoencoder_forward.1} parent=11 // pred_check
          %p271 = pneg %p209
        $region42: #{autoencoder_forward.1} parent=11 // pred_check_branch
          %273 = sbr.rel (%p271) target = $region44
        $region43: #{autoencoder_forward.1} parent=11 // pred_region
          _
        $region44: #{autoencoder_forward.1} parent=11 // pred_fallthru
          _
      $region12: #{autoencoder_forward.1} parent=5 // pred_fallthru
        _
      %p274 = scmp.lt.s32.totalorder %s15, 2
      // Predicated region
      $region45: #{autoencoder_forward.1} parent=5 // pred_check
        %p275 = pneg %p274
      $region46: #{autoencoder_forward.1} parent=5 // pred_check_branch
        %277 = sbr.rel (%p275) target = $region48
      $region47: #{autoencoder_forward.1} parent=5 // pred_region
        // Predicated region
        $region49: #{autoencoder_forward.1} parent=47 // pred_check
          %p278 = pneg %p35
        $region50: #{autoencoder_forward.1} parent=47 // pred_check_branch
          %280 = sbr.rel (%p278) target = $region52
        $region51: #{autoencoder_forward.1} parent=47 // pred_region
          %s281 = smul.u32 256, %s15
          %s282 = ssub.s32 500, %s281
          %p283 = scmp.lt.s32.totalorder %s282, 256
          %s284 = scalar_select %p283, %s282, 256
          %s285 = smul.u32 128, %s284
          %p286 = scmp.lt.s32.totalorder %s281, 499
          %s287 = scalar_select %p286, %s281, 499
          %s288 = smul.addr %s287, 8
          %s289 = scalar_lea.vmem %s0, %s288
          %s290 = smul.u32 256, %s15
          %s291 = ssub.s32 500, %s290
          %p292 = scmp.lt.s32.totalorder %s291, 256
          %s293 = scalar_select %p292, %s291, 256
          %s294 = smul.u32 128, %s293
        $region52: #{autoencoder_forward.1} parent=47 // pred_fallthru
          _
      $region48: #{autoencoder_forward.1} parent=5 // pred_fallthru
        _
      %p295 = scmp.le.s32.totalorder 1, %s15
      %p296 = scmp.lt.s32.totalorder %s15, 3
      %p297 = pnand %p295, %p296
      %p298 = pneg %p297
      // Predicated region
      $region53: #{autoencoder_forward.1} parent=5 // pred_check
        _
      $region54: #{autoencoder_forward.1} parent=5 // pred_check_branch
        %300 = sbr.rel (%p297) target = $region56
      $region55: #{autoencoder_forward.1} parent=5 // pred_region
        %s301 = ssub.s32 %s15, 1
        %s302 = smul.u32 256, %s20
        %s303 = ssub.s32 500, %s302
        %p304 = scmp.lt.s32.totalorder %s303, 256
        %s305 = scalar_select %p304, %s303, 256
        %s306 = smul.u32 128, %s305
        %p307 = scmp.lt.s32.totalorder %s302, 499
        %s308 = scalar_select %p307, %s302, 499
        %s309 = smul.addr %s308, 8
        %s310 = scalar_lea.vmem %s0, %s309
        %p311 = pneg %p41
        %p312 = pneg %p38
        %p313 = pneg %p62
        %p314 = pneg %p59
        %p315 = pneg %p83
        %p316 = pneg %p80
        %p317 = pneg %p104
        %p318 = pneg %p101
        %p319 = pneg %p125
        %p320 = pneg %p122
        %p321 = pneg %p146
        %p322 = pneg %p143
        %p323 = pneg %p167
        %p324 = pneg %p164
        %p325 = pneg %p188
        %p326 = pneg %p185
        %p327 = pneg %p209
        %p328 = pneg %p206
        %p329 = pneg %p235
        %p330 = pneg %p232
        %s331 = sand.u32 %s222, 1
        %s332 = sand.u32 %s222, 1
        %s333 = smul.addr %s332, 2048
        %s334 = scalar_lea.vmem [#allocation2], %s333
        %s335 = smul.u32 256, %s20
        %s336 = ssub.s32 500, %s335
        %p337 = scmp.lt.s32.totalorder %s336, 256
        %s338 = scalar_select %p337, %s336, 256
        %s339 = smul.u32 128, %s338
        %p340 = scmp.lt.s32.totalorder %s335, 499
        %s341 = scalar_select %p340, %s335, 499
        %s342 = smul.addr %s341, 8
        %s343 = scalar_lea.vmem %s0, %s342
        %s344 = smul.u32 256, %s20
        %s345 = ssub.s32 500, %s344
        %p346 = scmp.lt.s32.totalorder %s345, 256
        %s347 = scalar_select %p346, %s345, 256
        %s348 = smul.u32 128, %s347
        %s349 = smul.u32 256, %s20
        %s350 = ssub.s32 500, %s349
        %p351 = scmp.lt.s32.totalorder %s350, 256
        %s352 = scalar_select %p351, %s350, 256
        %s353 = smul.u32 128, %s352
        %v355 = vld [vmem:[%s343] sm:$0xff]
        %v356 = vld [vmem:[%s343 + $0x8] sm:$0xff]
        %v357 = vld [vmem:[%s343 + $0x10] sm:$0xff]
        %v358 = vld [vmem:[%s343 + $0x18] sm:$0xff]
        %v359 = vld [vmem:[%s343 + $0x20] sm:$0xff]
        %v360 = vld [vmem:[%s343 + $0x28] sm:$0xff]
        %v361 = vld [vmem:[%s343 + $0x30] sm:$0xff]
        %v362 = vld [vmem:[%s343 + $0x38] sm:$0xff]
        %v363 = vld [vmem:[%s343 + $0x40] sm:$0xff]
        %v364 = vld [vmem:[%s343 + $0x48] sm:$0xff]
        %v365 = vld [vmem:[%s343 + $0x50] sm:$0xff]
        %v366 = vld [vmem:[%s343 + $0x58] sm:$0xff]
        %v367 = vld [vmem:[%s343 + $0x60] sm:$0xff]
        %v368 = vld [vmem:[%s343 + $0x68] sm:$0xff]
        %v369 = vld [vmem:[%s343 + $0x70] sm:$0xff]
        %v370 = vld [vmem:[%s343 + $0x78] sm:$0xff]
        %v371 = vld [vmem:[%s343 + $0x80] sm:$0xff]
        %v372 = vld [vmem:[%s343 + $0x88] sm:$0xff]
        %v373 = vld [vmem:[%s343 + $0x90] sm:$0xff]
        %v374 = vld [vmem:[%s343 + $0x98] sm:$0xff]
        %v375 = vld [vmem:[%s343 + $0xa0] sm:$0xff]
        %v376 = vld [vmem:[%s343 + $0xa8] sm:$0xff]
        %v377 = vld [vmem:[%s343 + $0xb0] sm:$0xff]
        %v378 = vld [vmem:[%s343 + $0xb8] sm:$0xff]
        %v379 = vld [vmem:[%s343 + $0xc0] sm:$0xff]
        %v380 = vld [vmem:[%s343 + $0xc8] sm:$0xff]
        %v381 = vld [vmem:[%s343 + $0xd0] sm:$0xff]
        %v382 = vld [vmem:[%s343 + $0xd8] sm:$0xff]
        %v383 = vld [vmem:[%s343 + $0xe0] sm:$0xff]
        %v384 = vld [vmem:[%s343 + $0xe8] sm:$0xff]
        %v385 = vld [vmem:[%s343 + $0xf0] sm:$0xff]
        %v386 = vld [vmem:[%s343 + $0xf8] sm:$0xff]
        %v387 = vld [vmem:[%s343 + $0x100] sm:$0xff]
        %v388 = vld [vmem:[%s343 + $0x108] sm:$0xff]
        %v389 = vld [vmem:[%s343 + $0x110] sm:$0xff]
        %v390 = vld [vmem:[%s343 + $0x118] sm:$0xff]
        %v391 = vld [vmem:[%s343 + $0x120] sm:$0xff]
        %v392 = vld [vmem:[%s343 + $0x128] sm:$0xff]
        %v393 = vld [vmem:[%s343 + $0x130] sm:$0xff]
        %v394 = vld [vmem:[%s343 + $0x138] sm:$0xff]
        %v395 = vld [vmem:[%s343 + $0x140] sm:$0xff]
        %v396 = vld [vmem:[%s343 + $0x148] sm:$0xff]
        %v397 = vld [vmem:[%s343 + $0x150] sm:$0xff]
        %v398 = vld [vmem:[%s343 + $0x158] sm:$0xff]
        %v399 = vld [vmem:[%s343 + $0x160] sm:$0xff]
        %v400 = vld [vmem:[%s343 + $0x168] sm:$0xff]
        %v401 = vld [vmem:[%s343 + $0x170] sm:$0xff]
        %v402 = vld [vmem:[%s343 + $0x178] sm:$0xff]
        %v403 = vld [vmem:[%s343 + $0x180] sm:$0xff]
        %v404 = vld [vmem:[%s343 + $0x188] sm:$0xff]
        %v405 = vld [vmem:[%s343 + $0x190] sm:$0xff]
        %v406 = vld [vmem:[%s343 + $0x198] sm:$0xff]
        %v407 = vld [vmem:[%s343 + $0x1a0] sm:$0xff]
        %v408 = vld [vmem:[%s343 + $0x1a8] sm:$0xff]
        %v409 = vld [vmem:[%s343 + $0x1b0] sm:$0xff]
        %v410 = vld [vmem:[%s343 + $0x1b8] sm:$0xff]
        %v411 = vld [vmem:[%s343 + $0x1c0] sm:$0xff]
        %v412 = vld [vmem:[%s343 + $0x1c8] sm:$0xff]
        %v413 = vld [vmem:[%s343 + $0x1d0] sm:$0xff]
        %v414 = vld [vmem:[%s343 + $0x1d8] sm:$0xff]
        %v415 = vld [vmem:[%s343 + $0x1e0] sm:$0xff]
        %v416 = vld [vmem:[%s343 + $0x1e8] sm:$0xff]
        %v417 = vld [vmem:[%s343 + $0x1f0] sm:$0xff]
        %v418 = vld [vmem:[%s343 + $0x1f8] sm:$0xff]
        %v419 = vld [vmem:[%s343 + $0x200] sm:$0xff]
        %v420 = vld [vmem:[%s343 + $0x208] sm:$0xff]
        %v421 = vld [vmem:[%s343 + $0x210] sm:$0xff]
        %v422 = vld [vmem:[%s343 + $0x218] sm:$0xff]
        %v423 = vld [vmem:[%s343 + $0x220] sm:$0xff]
        %v424 = vld [vmem:[%s343 + $0x228] sm:$0xff]
        %v425 = vld [vmem:[%s343 + $0x230] sm:$0xff]
        %v426 = vld [vmem:[%s343 + $0x238] sm:$0xff]
        %v427 = vld [vmem:[%s343 + $0x240] sm:$0xff]
        %v428 = vld [vmem:[%s343 + $0x248] sm:$0xff]
        %v429 = vld [vmem:[%s343 + $0x250] sm:$0xff]
        %v430 = vld [vmem:[%s343 + $0x258] sm:$0xff]
        %v431 = vld [vmem:[%s343 + $0x260] sm:$0xff]
        %v432 = vld [vmem:[%s343 + $0x268] sm:$0xff]
        %v433 = vld [vmem:[%s343 + $0x270] sm:$0xff]
        %v434 = vld [vmem:[%s343 + $0x278] sm:$0xff]
        %v435 = vld [vmem:[%s343 + $0x280] sm:$0xff]
        %v436 = vld [vmem:[%s343 + $0x288] sm:$0xff]
        %v437 = vld [vmem:[%s343 + $0x290] sm:$0xff]
        %v438 = vld [vmem:[%s343 + $0x298] sm:$0xff]
        %v439 = vld [vmem:[%s343 + $0x2a0] sm:$0xff]
        %v440 = vld [vmem:[%s343 + $0x2a8] sm:$0xff]
        %v441 = vld [vmem:[%s343 + $0x2b0] sm:$0xff]
        %v442 = vld [vmem:[%s343 + $0x2b8] sm:$0xff]
        %v443 = vld [vmem:[%s343 + $0x2c0] sm:$0xff]
        %v444 = vld [vmem:[%s343 + $0x2c8] sm:$0xff]
        %v445 = vld [vmem:[%s343 + $0x2d0] sm:$0xff]
        %v446 = vld [vmem:[%s343 + $0x2d8] sm:$0xff]
        %v447 = vld [vmem:[%s343 + $0x2e0] sm:$0xff]
        %v448 = vld [vmem:[%s343 + $0x2e8] sm:$0xff]
        %v449 = vld [vmem:[%s343 + $0x2f0] sm:$0xff]
        %v450 = vld [vmem:[%s343 + $0x2f8] sm:$0xff]
        %v451 = vld [vmem:[%s343 + $0x300] sm:$0xff]
        %v452 = vld [vmem:[%s343 + $0x308] sm:$0xff]
        %v453 = vld [vmem:[%s343 + $0x310] sm:$0xff]
        %v454 = vld [vmem:[%s343 + $0x318] sm:$0xff]
        %v455 = vld [vmem:[%s343 + $0x320] sm:$0xff]
        %v456 = vld [vmem:[%s343 + $0x328] sm:$0xff]
        %v457 = vld [vmem:[%s343 + $0x330] sm:$0xff]
        %v458 = vld [vmem:[%s343 + $0x338] sm:$0xff]
        %v459 = vld [vmem:[%s343 + $0x340] sm:$0xff]
        %v460 = vld [vmem:[%s343 + $0x348] sm:$0xff]
        %v461 = vld [vmem:[%s343 + $0x350] sm:$0xff]
        %v462 = vld [vmem:[%s343 + $0x358] sm:$0xff]
        %v463 = vld [vmem:[%s343 + $0x360] sm:$0xff]
        %v464 = vld [vmem:[%s343 + $0x368] sm:$0xff]
        %v465 = vld [vmem:[%s343 + $0x370] sm:$0xff]
        %v466 = vld [vmem:[%s343 + $0x378] sm:$0xff]
        %v467 = vld [vmem:[%s343 + $0x380] sm:$0xff]
        %v468 = vld [vmem:[%s343 + $0x388] sm:$0xff]
        %v469 = vld [vmem:[%s343 + $0x390] sm:$0xff]
        %v470 = vld [vmem:[%s343 + $0x398] sm:$0xff]
        %v471 = vld [vmem:[%s343 + $0x3a0] sm:$0xff]
        %v472 = vld [vmem:[%s343 + $0x3a8] sm:$0xff]
        %v473 = vld [vmem:[%s343 + $0x3b0] sm:$0xff]
        %v474 = vld [vmem:[%s343 + $0x3b8] sm:$0xff]
        %v475 = vld [vmem:[%s343 + $0x3c0] sm:$0xff]
        %v476 = vld [vmem:[%s343 + $0x3c8] sm:$0xff]
        %v477 = vld [vmem:[%s343 + $0x3d0] sm:$0xff]
        %v478 = vld [vmem:[%s343 + $0x3d8] sm:$0xff]
        %v479 = vld [vmem:[%s343 + $0x3e0] sm:$0xff]
        %v480 = vld [vmem:[%s343 + $0x3e8] sm:$0xff]
        %v481 = vld [vmem:[%s343 + $0x3f0] sm:$0xff]
        %v482 = vld [vmem:[%s343 + $0x3f8] sm:$0xff]
        %v483 = vld [vmem:[%s343 + $0x400] sm:$0xff]
        %v484 = vld [vmem:[%s343 + $0x408] sm:$0xff]
        %v485 = vld [vmem:[%s343 + $0x410] sm:$0xff]
        %v486 = vld [vmem:[%s343 + $0x418] sm:$0xff]
        %v487 = vld [vmem:[%s343 + $0x420] sm:$0xff]
        %v488 = vld [vmem:[%s343 + $0x428] sm:$0xff]
        %v489 = vld [vmem:[%s343 + $0x430] sm:$0xff]
        %v490 = vld [vmem:[%s343 + $0x438] sm:$0xff]
        %v491 = vld [vmem:[%s343 + $0x440] sm:$0xff]
        %v492 = vld [vmem:[%s343 + $0x448] sm:$0xff]
        %v493 = vld [vmem:[%s343 + $0x450] sm:$0xff]
        %v494 = vld [vmem:[%s343 + $0x458] sm:$0xff]
        %v495 = vld [vmem:[%s343 + $0x460] sm:$0xff]
        %v496 = vld [vmem:[%s343 + $0x468] sm:$0xff]
        %v497 = vld [vmem:[%s343 + $0x470] sm:$0xff]
        %v498 = vld [vmem:[%s343 + $0x478] sm:$0xff]
        %v499 = vld [vmem:[%s343 + $0x480] sm:$0xff]
        %v500 = vld [vmem:[%s343 + $0x488] sm:$0xff]
        %v501 = vld [vmem:[%s343 + $0x490] sm:$0xff]
        %v502 = vld [vmem:[%s343 + $0x498] sm:$0xff]
        %v503 = vld [vmem:[%s343 + $0x4a0] sm:$0xff]
        %v504 = vld [vmem:[%s343 + $0x4a8] sm:$0xff]
        %v505 = vld [vmem:[%s343 + $0x4b0] sm:$0xff]
        %v506 = vld [vmem:[%s343 + $0x4b8] sm:$0xff]
        %v507 = vld [vmem:[%s343 + $0x4c0] sm:$0xff]
        %v508 = vld [vmem:[%s343 + $0x4c8] sm:$0xff]
        %v509 = vld [vmem:[%s343 + $0x4d0] sm:$0xff]
        %v510 = vld [vmem:[%s343 + $0x4d8] sm:$0xff]
        %v511 = vld [vmem:[%s343 + $0x4e0] sm:$0xff]
        %v512 = vld [vmem:[%s343 + $0x4e8] sm:$0xff]
        %v513 = vld [vmem:[%s343 + $0x4f0] sm:$0xff]
        %v514 = vld [vmem:[%s343 + $0x4f8] sm:$0xff]
        %v515 = vld [vmem:[%s343 + $0x500] sm:$0xff]
        %v516 = vld [vmem:[%s343 + $0x508] sm:$0xff]
        %v517 = vld [vmem:[%s343 + $0x510] sm:$0xff]
        %v518 = vld [vmem:[%s343 + $0x518] sm:$0xff]
        %v519 = vld [vmem:[%s343 + $0x520] sm:$0xff]
        %v520 = vld [vmem:[%s343 + $0x528] sm:$0xff]
        %v521 = vld [vmem:[%s343 + $0x530] sm:$0xff]
        %v522 = vld [vmem:[%s343 + $0x538] sm:$0xff]
        %v523 = vld [vmem:[%s343 + $0x540] sm:$0xff]
        %v524 = vld [vmem:[%s343 + $0x548] sm:$0xff]
        %v525 = vld [vmem:[%s343 + $0x550] sm:$0xff]
        %v526 = vld [vmem:[%s343 + $0x558] sm:$0xff]
        %v527 = vld [vmem:[%s343 + $0x560] sm:$0xff]
        %v528 = vld [vmem:[%s343 + $0x568] sm:$0xff]
        %v529 = vld [vmem:[%s343 + $0x570] sm:$0xff]
        %v530 = vld [vmem:[%s343 + $0x578] sm:$0xff]
        %v531 = vld [vmem:[%s343 + $0x580] sm:$0xff]
        %v532 = vld [vmem:[%s343 + $0x588] sm:$0xff]
        %v533 = vld [vmem:[%s343 + $0x590] sm:$0xff]
        %v534 = vld [vmem:[%s343 + $0x598] sm:$0xff]
        %v535 = vld [vmem:[%s343 + $0x5a0] sm:$0xff]
        %v536 = vld [vmem:[%s343 + $0x5a8] sm:$0xff]
        %v537 = vld [vmem:[%s343 + $0x5b0] sm:$0xff]
        %v538 = vld [vmem:[%s343 + $0x5b8] sm:$0xff]
        %v539 = vld [vmem:[%s343 + $0x5c0] sm:$0xff]
        %v540 = vld [vmem:[%s343 + $0x5c8] sm:$0xff]
        %v541 = vld [vmem:[%s343 + $0x5d0] sm:$0xff]
        %v542 = vld [vmem:[%s343 + $0x5d8] sm:$0xff]
        %v543 = vld [vmem:[%s343 + $0x5e0] sm:$0xff]
        %v544 = vld [vmem:[%s343 + $0x5e8] sm:$0xff]
        %v545 = vld [vmem:[%s343 + $0x5f0] sm:$0xff]
        %v546 = vld [vmem:[%s343 + $0x5f8] sm:$0xff]
        %v547 = vld [vmem:[%s343 + $0x600] sm:$0xff]
        %v548 = vld [vmem:[%s343 + $0x608] sm:$0xff]
        %v549 = vld [vmem:[%s343 + $0x610] sm:$0xff]
        %v550 = vld [vmem:[%s343 + $0x618] sm:$0xff]
        %v551 = vld [vmem:[%s343 + $0x620] sm:$0xff]
        %v552 = vld [vmem:[%s343 + $0x628] sm:$0xff]
        %v553 = vld [vmem:[%s343 + $0x630] sm:$0xff]
        %v554 = vld [vmem:[%s343 + $0x638] sm:$0xff]
        %v555 = vld [vmem:[%s343 + $0x640] sm:$0xff]
        %v556 = vld [vmem:[%s343 + $0x648] sm:$0xff]
        %v557 = vld [vmem:[%s343 + $0x650] sm:$0xff]
        %v558 = vld [vmem:[%s343 + $0x658] sm:$0xff]
        %v559 = vld [vmem:[%s343 + $0x660] sm:$0xff]
        %v560 = vld [vmem:[%s343 + $0x668] sm:$0xff]
        %v561 = vld [vmem:[%s343 + $0x670] sm:$0xff]
        %v562 = vld [vmem:[%s343 + $0x678] sm:$0xff]
        %v563 = vld [vmem:[%s343 + $0x680] sm:$0xff]
        %v564 = vld [vmem:[%s343 + $0x688] sm:$0xff]
        %v565 = vld [vmem:[%s343 + $0x690] sm:$0xff]
        %v566 = vld [vmem:[%s343 + $0x698] sm:$0xff]
        %v567 = vld [vmem:[%s343 + $0x6a0] sm:$0xff]
        %v568 = vld [vmem:[%s343 + $0x6a8] sm:$0xff]
        %v569 = vld [vmem:[%s343 + $0x6b0] sm:$0xff]
        %v570 = vld [vmem:[%s343 + $0x6b8] sm:$0xff]
        %v571 = vld [vmem:[%s343 + $0x6c0] sm:$0xff]
        %v572 = vld [vmem:[%s343 + $0x6c8] sm:$0xff]
        %v573 = vld [vmem:[%s343 + $0x6d0] sm:$0xff]
        %v574 = vld [vmem:[%s343 + $0x6d8] sm:$0xff]
        %v575 = vld [vmem:[%s343 + $0x6e0] sm:$0xff]
        %v576 = vld [vmem:[%s343 + $0x6e8] sm:$0xff]
        %v577 = vld [vmem:[%s343 + $0x6f0] sm:$0xff]
        %v578 = vld [vmem:[%s343 + $0x6f8] sm:$0xff]
        %v579 = vld [vmem:[%s343 + $0x700] sm:$0xff]
        %v580 = vld [vmem:[%s343 + $0x708] sm:$0xff]
        %v581 = vld [vmem:[%s343 + $0x710] sm:$0xff]
        %v582 = vld [vmem:[%s343 + $0x718] sm:$0xff]
        %v583 = vld [vmem:[%s343 + $0x720] sm:$0xff]
        %v584 = vld [vmem:[%s343 + $0x728] sm:$0xff]
        %v585 = vld [vmem:[%s343 + $0x730] sm:$0xff]
        %v586 = vld [vmem:[%s343 + $0x738] sm:$0xff]
        %v587 = vld [vmem:[%s343 + $0x740] sm:$0xff]
        %v588 = vld [vmem:[%s343 + $0x748] sm:$0xff]
        %v589 = vld [vmem:[%s343 + $0x750] sm:$0xff]
        %v590 = vld [vmem:[%s343 + $0x758] sm:$0xff]
        %v591 = vld [vmem:[%s343 + $0x760] sm:$0xff]
        %v592 = vld [vmem:[%s343 + $0x768] sm:$0xff]
        %v593 = vld [vmem:[%s343 + $0x770] sm:$0xff]
        %v594 = vld [vmem:[%s343 + $0x778] sm:$0xff]
        %v595 = vld [vmem:[%s343 + $0x780] sm:$0xff]
        %v596 = vld [vmem:[%s343 + $0x788] sm:$0xff]
        %v597 = vld [vmem:[%s343 + $0x790] sm:$0xff]
        %v598 = vld [vmem:[%s343 + $0x798] sm:$0xff]
        %v599 = vld [vmem:[%s343 + $0x7a0] sm:$0xff]
        %v600 = vld [vmem:[%s343 + $0x7a8] sm:$0xff]
        %v601 = vld [vmem:[%s343 + $0x7b0] sm:$0xff]
        %v602 = vld [vmem:[%s343 + $0x7b8] sm:$0xff]
        %v603 = vld [vmem:[%s343 + $0x7c0] sm:$0xff]
        %v604 = vld [vmem:[%s343 + $0x7c8] sm:$0xff]
        %v605 = vld [vmem:[%s343 + $0x7d0] sm:$0xff]
        %v606 = vld [vmem:[%s343 + $0x7d8] sm:$0xff]
        %v607 = vld [vmem:[%s343 + $0x7e0] sm:$0xff]
        %v608 = vld [vmem:[%s343 + $0x7e8] sm:$0xff]
        %v609 = vld [vmem:[%s343 + $0x7f0] sm:$0xff]
        %v610 = vld [vmem:[%s343 + $0x7f8] sm:$0xff]
        %v611 = vpack.c.bf16 %v356, %v355
        %v612 = vpack.c.bf16 %v358, %v357
        %v613 = vpack.c.bf16 %v360, %v359
        %v614 = vpack.c.bf16 %v362, %v361
        %v615 = vpack.c.bf16 %v364, %v363
        %v616 = vpack.c.bf16 %v366, %v365
        %v617 = vpack.c.bf16 %v368, %v367
        %v618 = vpack.c.bf16 %v370, %v369
        %v619 = vpack.c.bf16 %v372, %v371
        %v620 = vpack.c.bf16 %v374, %v373
        %v621 = vpack.c.bf16 %v376, %v375
        %v622 = vpack.c.bf16 %v378, %v377
        %v623 = vpack.c.bf16 %v380, %v379
        %v624 = vpack.c.bf16 %v382, %v381
        %v625 = vpack.c.bf16 %v384, %v383
        %v626 = vpack.c.bf16 %v386, %v385
        %v627 = vpack.c.bf16 %v388, %v387
        %v628 = vpack.c.bf16 %v390, %v389
        %v629 = vpack.c.bf16 %v392, %v391
        %v630 = vpack.c.bf16 %v394, %v393
        %v631 = vpack.c.bf16 %v396, %v395
        %v632 = vpack.c.bf16 %v398, %v397
        %v633 = vpack.c.bf16 %v400, %v399
        %v634 = vpack.c.bf16 %v402, %v401
        %v635 = vpack.c.bf16 %v404, %v403
        %v636 = vpack.c.bf16 %v406, %v405
        %v637 = vpack.c.bf16 %v408, %v407
        %v638 = vpack.c.bf16 %v410, %v409
        %v639 = vpack.c.bf16 %v412, %v411
        %v640 = vpack.c.bf16 %v414, %v413
        %v641 = vpack.c.bf16 %v416, %v415
        %v642 = vpack.c.bf16 %v418, %v417
        %v643 = vpack.c.bf16 %v420, %v419
        %v644 = vpack.c.bf16 %v422, %v421
        %v645 = vpack.c.bf16 %v424, %v423
        %v646 = vpack.c.bf16 %v426, %v425
        %v647 = vpack.c.bf16 %v428, %v427
        %v648 = vpack.c.bf16 %v430, %v429
        %v649 = vpack.c.bf16 %v432, %v431
        %v650 = vpack.c.bf16 %v434, %v433
        %v651 = vpack.c.bf16 %v436, %v435
        %v652 = vpack.c.bf16 %v438, %v437
        %v653 = vpack.c.bf16 %v440, %v439
        %v654 = vpack.c.bf16 %v442, %v441
        %v655 = vpack.c.bf16 %v444, %v443
        %v656 = vpack.c.bf16 %v446, %v445
        %v657 = vpack.c.bf16 %v448, %v447
        %v658 = vpack.c.bf16 %v450, %v449
        %v659 = vpack.c.bf16 %v452, %v451
        %v660 = vpack.c.bf16 %v454, %v453
        %v661 = vpack.c.bf16 %v456, %v455
        %v662 = vpack.c.bf16 %v458, %v457
        %v663 = vpack.c.bf16 %v460, %v459
        %v664 = vpack.c.bf16 %v462, %v461
        %v665 = vpack.c.bf16 %v464, %v463
        %v666 = vpack.c.bf16 %v466, %v465
        %v667 = vpack.c.bf16 %v468, %v467
        %v668 = vpack.c.bf16 %v470, %v469
        %v669 = vpack.c.bf16 %v472, %v471
        %v670 = vpack.c.bf16 %v474, %v473
        %v671 = vpack.c.bf16 %v476, %v475
        %v672 = vpack.c.bf16 %v478, %v477
        %v673 = vpack.c.bf16 %v480, %v479
        %v674 = vpack.c.bf16 %v482, %v481
        %v675 = vpack.c.bf16 %v484, %v483
        %v676 = vpack.c.bf16 %v486, %v485
        %v677 = vpack.c.bf16 %v488, %v487
        %v678 = vpack.c.bf16 %v490, %v489
        %v679 = vpack.c.bf16 %v492, %v491
        %v680 = vpack.c.bf16 %v494, %v493
        %v681 = vpack.c.bf16 %v496, %v495
        %v682 = vpack.c.bf16 %v498, %v497
        %v683 = vpack.c.bf16 %v500, %v499
        %v684 = vpack.c.bf16 %v502, %v501
        %v685 = vpack.c.bf16 %v504, %v503
        %v686 = vpack.c.bf16 %v506, %v505
        %v687 = vpack.c.bf16 %v508, %v507
        %v688 = vpack.c.bf16 %v510, %v509
        %v689 = vpack.c.bf16 %v512, %v511
        %v690 = vpack.c.bf16 %v514, %v513
        %v691 = vpack.c.bf16 %v516, %v515
        %v692 = vpack.c.bf16 %v518, %v517
        %v693 = vpack.c.bf16 %v520, %v519
        %v694 = vpack.c.bf16 %v522, %v521
        %v695 = vpack.c.bf16 %v524, %v523
        %v696 = vpack.c.bf16 %v526, %v525
        %v697 = vpack.c.bf16 %v528, %v527
        %v698 = vpack.c.bf16 %v530, %v529
        %v699 = vpack.c.bf16 %v532, %v531
        %v700 = vpack.c.bf16 %v534, %v533
        %v701 = vpack.c.bf16 %v536, %v535
        %v702 = vpack.c.bf16 %v538, %v537
        %v703 = vpack.c.bf16 %v540, %v539
        %v704 = vpack.c.bf16 %v542, %v541
        %v705 = vpack.c.bf16 %v544, %v543
        %v706 = vpack.c.bf16 %v546, %v545
        %v707 = vpack.c.bf16 %v548, %v547
        %v708 = vpack.c.bf16 %v550, %v549
        %v709 = vpack.c.bf16 %v552, %v551
        %v710 = vpack.c.bf16 %v554, %v553
        %v711 = vpack.c.bf16 %v556, %v555
        %v712 = vpack.c.bf16 %v558, %v557
        %v713 = vpack.c.bf16 %v560, %v559
        %v714 = vpack.c.bf16 %v562, %v561
        %v715 = vpack.c.bf16 %v564, %v563
        %v716 = vpack.c.bf16 %v566, %v565
        %v717 = vpack.c.bf16 %v568, %v567
        %v718 = vpack.c.bf16 %v570, %v569
        %v719 = vpack.c.bf16 %v572, %v571
        %v720 = vpack.c.bf16 %v574, %v573
        %v721 = vpack.c.bf16 %v576, %v575
        %v722 = vpack.c.bf16 %v578, %v577
        %v723 = vpack.c.bf16 %v580, %v579
        %v724 = vpack.c.bf16 %v582, %v581
        %v725 = vpack.c.bf16 %v584, %v583
        %v726 = vpack.c.bf16 %v586, %v585
        %v727 = vpack.c.bf16 %v588, %v587
        %v728 = vpack.c.bf16 %v590, %v589
        %v729 = vpack.c.bf16 %v592, %v591
        %v730 = vpack.c.bf16 %v594, %v593
        %v731 = vpack.c.bf16 %v596, %v595
        %v732 = vpack.c.bf16 %v598, %v597
        %v733 = vpack.c.bf16 %v600, %v599
        %v734 = vpack.c.bf16 %v602, %v601
        %v735 = vpack.c.bf16 %v604, %v603
        %v736 = vpack.c.bf16 %v606, %v605
        %v737 = vpack.c.bf16 %v608, %v607
        %v738 = vpack.c.bf16 %v610, %v609
        %v739 = vld [vmem:[%s1] sm:$0xf]
        %v740 = vld [vmem:[%s1 + $0x4] sm:$0xf]
        %v741 = vld [vmem:[%s1 + $0x8] sm:$0xf]
        %v742 = vld [vmem:[%s1 + $0xc] sm:$0xf]
        %v743 = vld [vmem:[%s1 + $0x10] sm:$0xf]
        %v744 = vld [vmem:[%s1 + $0x14] sm:$0xf]
        %v745 = vld [vmem:[%s1 + $0x18] sm:$0xf]
        %v746 = vld [vmem:[%s1 + $0x1c] sm:$0xf]
        %v747 = vld [vmem:[%s2] sm:$0x1]
        %v749 = vlaneseq
        %v750 = vshrl.u32 %v749, 7
        %v751 = vsub.s32 0, %v750
        %v752 = vrot.slane %v747, %v751
        %v762 = vunpack.c.l.b16 %v739
        %v763 = vunpack.c.l.b16 %v740
        %v764 = vunpack.c.l.b16 %v741
        %v765 = vunpack.c.l.b16 %v742
        %v766 = vunpack.c.l.b16 %v743
        %v767 = vunpack.c.l.b16 %v744
        %v768 = vunpack.c.l.b16 %v745
        %v769 = vunpack.c.l.b16 %v746
        %v770 = vpack.c.b16 %v763, %v762
        %v771 = vpack.c.b16 %v765, %v764
        %v772 = vpack.c.b16 %v767, %v766
        %v773 = vpack.c.b16 %v769, %v768
        %vm778 = vcmask 523264
        %v780 = vsel %vm778, %v611, 0
        %v783 = vsel %vm778, %v612, 0
        %v786 = vsel %vm778, %v613, 0
        %v789 = vsel %vm778, %v614, 0
        %v792 = vsel %vm778, %v615, 0
        %v795 = vsel %vm778, %v616, 0
        %v798 = vsel %vm778, %v617, 0
        %v801 = vsel %vm778, %v618, 0
        %v804 = vsel %vm778, %v619, 0
        %v807 = vsel %vm778, %v620, 0
        %v810 = vsel %vm778, %v621, 0
        %v813 = vsel %vm778, %v622, 0
        %v816 = vsel %vm778, %v623, 0
        %v819 = vsel %vm778, %v624, 0
        %v822 = vsel %vm778, %v625, 0
        %v825 = vsel %vm778, %v626, 0
        %v828 = vsel %vm778, %v627, 0
        %v831 = vsel %vm778, %v628, 0
        %v834 = vsel %vm778, %v629, 0
        %v837 = vsel %vm778, %v630, 0
        %v840 = vsel %vm778, %v631, 0
        %v843 = vsel %vm778, %v632, 0
        %v846 = vsel %vm778, %v633, 0
        %v849 = vsel %vm778, %v634, 0
        %v852 = vsel %vm778, %v635, 0
        %v855 = vsel %vm778, %v636, 0
        %v858 = vsel %vm778, %v637, 0
        %v861 = vsel %vm778, %v638, 0
        %v864 = vsel %vm778, %v639, 0
        %v867 = vsel %vm778, %v640, 0
        %v870 = vsel %vm778, %v641, 0
        %v873 = vsel %vm778, %v642, 0
        %v876 = vsel %vm778, %v643, 0
        %v879 = vsel %vm778, %v644, 0
        %v882 = vsel %vm778, %v645, 0
        %v885 = vsel %vm778, %v646, 0
        %v888 = vsel %vm778, %v647, 0
        %v891 = vsel %vm778, %v648, 0
        %v894 = vsel %vm778, %v649, 0
        %v897 = vsel %vm778, %v650, 0
        %v900 = vsel %vm778, %v651, 0
        %v903 = vsel %vm778, %v652, 0
        %v906 = vsel %vm778, %v653, 0
        %v909 = vsel %vm778, %v654, 0
        %v912 = vsel %vm778, %v655, 0
        %v915 = vsel %vm778, %v656, 0
        %v918 = vsel %vm778, %v657, 0
        %v921 = vsel %vm778, %v658, 0
        %v924 = vsel %vm778, %v659, 0
        %v927 = vsel %vm778, %v660, 0
        %v930 = vsel %vm778, %v661, 0
        %v933 = vsel %vm778, %v662, 0
        %v936 = vsel %vm778, %v663, 0
        %v939 = vsel %vm778, %v664, 0
        %v942 = vsel %vm778, %v665, 0
        %v945 = vsel %vm778, %v666, 0
        %v948 = vsel %vm778, %v667, 0
        %v951 = vsel %vm778, %v668, 0
        %v954 = vsel %vm778, %v669, 0
        %v957 = vsel %vm778, %v670, 0
        %v960 = vsel %vm778, %v671, 0
        %v963 = vsel %vm778, %v672, 0
        %v966 = vsel %vm778, %v673, 0
        %v969 = vsel %vm778, %v674, 0
        %v972 = vsel %vm778, %v675, 0
        %v975 = vsel %vm778, %v676, 0
        %v978 = vsel %vm778, %v677, 0
        %v981 = vsel %vm778, %v678, 0
        %v984 = vsel %vm778, %v679, 0
        %v987 = vsel %vm778, %v680, 0
        %v990 = vsel %vm778, %v681, 0
        %v993 = vsel %vm778, %v682, 0
        %v996 = vsel %vm778, %v683, 0
        %v999 = vsel %vm778, %v684, 0
        %v1002 = vsel %vm778, %v685, 0
        %v1005 = vsel %vm778, %v686, 0
        %v1008 = vsel %vm778, %v687, 0
        %v1011 = vsel %vm778, %v688, 0
        %v1014 = vsel %vm778, %v689, 0
        %v1017 = vsel %vm778, %v690, 0
        %v1020 = vsel %vm778, %v691, 0
        %v1023 = vsel %vm778, %v692, 0
        %v1026 = vsel %vm778, %v693, 0
        %v1029 = vsel %vm778, %v694, 0
        %v1032 = vsel %vm778, %v695, 0
        %v1035 = vsel %vm778, %v696, 0
        %v1038 = vsel %vm778, %v697, 0
        %v1041 = vsel %vm778, %v698, 0
        %v1044 = vsel %vm778, %v699, 0
        %v1047 = vsel %vm778, %v700, 0
        %v1050 = vsel %vm778, %v701, 0
        %v1053 = vsel %vm778, %v702, 0
        %v1056 = vsel %vm778, %v703, 0
        %v1059 = vsel %vm778, %v704, 0
        %v1062 = vsel %vm778, %v705, 0
        %v1065 = vsel %vm778, %v706, 0
        %v1068 = vsel %vm778, %v707, 0
        %v1071 = vsel %vm778, %v708, 0
        %v1074 = vsel %vm778, %v709, 0
        %v1077 = vsel %vm778, %v710, 0
        %v1080 = vsel %vm778, %v711, 0
        %v1083 = vsel %vm778, %v712, 0
        %v1086 = vsel %vm778, %v713, 0
        %v1089 = vsel %vm778, %v714, 0
        %v1092 = vsel %vm778, %v715, 0
        %v1095 = vsel %vm778, %v716, 0
        %v1098 = vsel %vm778, %v717, 0
        %v1101 = vsel %vm778, %v718, 0
        %v1104 = vsel %vm778, %v719, 0
        %v1107 = vsel %vm778, %v720, 0
        %v1110 = vsel %vm778, %v721, 0
        %v1113 = vsel %vm778, %v722, 0
        %v1116 = vsel %vm778, %v723, 0
        %v1119 = vsel %vm778, %v724, 0
        %v1122 = vsel %vm778, %v725, 0
        %v1125 = vsel %vm778, %v726, 0
        %v1128 = vsel %vm778, %v727, 0
        %v1131 = vsel %vm778, %v728, 0
        %v1134 = vsel %vm778, %v729, 0
        %v1137 = vsel %vm778, %v730, 0
        %v1140 = vsel %vm778, %v731, 0
        %v1143 = vsel %vm778, %v732, 0
        %v1146 = vsel %vm778, %v733, 0
        %v1149 = vsel %vm778, %v734, 0
        %v1152 = vsel %vm778, %v735, 0
        %v1155 = vsel %vm778, %v736, 0
        %v1158 = vsel %vm778, %v737, 0
        %v1161 = vsel %vm778, %v738, 0
        %1163 = vmatprep.subr.bf16.mxu0 0
        %1164 = vmatpush1.bf16.msra.mxu0 0
        %1165 = vmatprep.subr.bf16.mxu0 0
        %1166 = vmatpush1.bf16.msra.mxu0 0
        %1167 = vmatprep.subr.bf16.mxu0 0
        %1168 = vmatpush1.bf16.msra.mxu0 0
        %1169 = vmatprep.subr.bf16.mxu0 0
        %1170 = vmatpush1.bf16.msra.mxu0 0
        %1171 = vmatprep.subr.bf16.mxu0 0
        %1172 = vmatpush1.bf16.msra.mxu0 %v773
        %1173 = vmatprep.subr.bf16.mxu0 0
        %1174 = vmatpush1.bf16.msra.mxu0 %v772
        %1175 = vmatprep.subr.bf16.mxu0 0
        %1176 = vmatpush1.bf16.msra.mxu0 %v771
        %1177 = vmatprep.subr.bf16.mxu0 0
        %1178 = vmatpush1.bf16.msra.mxu0 %v770
        %1179 = vmatprep.subr.bf16.mxu0 0
        %1180 = vmatpush2.bf16.msra.mxu0 0
        %1181 = vmatprep.subr.bf16.mxu0 0
        %1182 = vmatpush2.bf16.msra.mxu0 0
        %1183 = vmatprep.subr.bf16.mxu0 0
        %1184 = vmatpush2.bf16.msra.mxu0 0
        %1185 = vmatprep.subr.bf16.mxu0 0
        %1186 = vmatpush2.bf16.msra.mxu0 0
        %1187 = vmatprep.subr.bf16.mxu0 0
        %1188 = vmatpush2.bf16.msra.mxu0 0
        %1189 = vmatprep.subr.bf16.mxu0 0
        %1190 = vmatpush2.bf16.msra.mxu0 0
        %1191 = vmatprep.subr.bf16.mxu0 0
        %1192 = vmatpush2.bf16.msra.mxu0 0
        %1193 = vmatprep.subr.bf16.mxu0 0
        %1194 = vmatpush2.bf16.msra.mxu0 0
        %1195 = vmatprep.mubr.bf16.mxu0 0
        %1196 = vmatmul.mubr.bf16.gmra.mxu0 %v780
        %v1197 = vpop.f32.mrf.mxu0
        %v1198 = vadd.f32 %v752, %v1197
        %v1199 = vpop.f32.mrf.mxu0
        %v1200 = vpop.f32.mrf.mxu0
        %v1201 = vadd.f32 %v752, %v1200
        %v1202 = vpop.f32.mrf.mxu0
        %1203 = vmatprep.mubr.bf16.mxu0 0
        %1204 = vmatmul.mubr.bf16.gmra.mxu0 %v783
        %v1205 = vpop.f32.mrf.mxu0
        %v1206 = vadd.f32 %v752, %v1205
        %v1207 = vpop.f32.mrf.mxu0
        %v1208 = vpop.f32.mrf.mxu0
        %v1209 = vadd.f32 %v752, %v1208
        %v1210 = vpop.f32.mrf.mxu0
        %1211 = vmatprep.mubr.bf16.mxu0 0
        %1212 = vmatmul.mubr.bf16.gmra.mxu0 %v786
        %v1213 = vpop.f32.mrf.mxu0
        %v1214 = vadd.f32 %v752, %v1213
        %v1215 = vpop.f32.mrf.mxu0
        %v1216 = vpop.f32.mrf.mxu0
        %v1217 = vadd.f32 %v752, %v1216
        %v1218 = vpop.f32.mrf.mxu0
        %1219 = vmatprep.mubr.bf16.mxu0 0
        %1220 = vmatmul.mubr.bf16.gmra.mxu0 %v789
        %v1221 = vpop.f32.mrf.mxu0
        %v1222 = vadd.f32 %v752, %v1221
        %v1223 = vpop.f32.mrf.mxu0
        %v1224 = vpop.f32.mrf.mxu0
        %v1225 = vadd.f32 %v752, %v1224
        %v1226 = vpop.f32.mrf.mxu0
        %1227 = vmatprep.mubr.bf16.mxu0 0
        %1228 = vmatmul.mubr.bf16.gmra.mxu0 %v792
        %v1229 = vpop.f32.mrf.mxu0
        %v1230 = vadd.f32 %v752, %v1229
        %v1231 = vpop.f32.mrf.mxu0
        %v1232 = vpop.f32.mrf.mxu0
        %v1233 = vadd.f32 %v752, %v1232
        %v1234 = vpop.f32.mrf.mxu0
        %1235 = vmatprep.mubr.bf16.mxu0 0
        %1236 = vmatmul.mubr.bf16.gmra.mxu0 %v795
        %v1237 = vpop.f32.mrf.mxu0
        %v1238 = vadd.f32 %v752, %v1237
        %v1239 = vpop.f32.mrf.mxu0
        %v1240 = vpop.f32.mrf.mxu0
        %v1241 = vadd.f32 %v752, %v1240
        %v1242 = vpop.f32.mrf.mxu0
        %1243 = vmatprep.mubr.bf16.mxu0 0
        %1244 = vmatmul.mubr.bf16.gmra.mxu0 %v798
        %v1245 = vpop.f32.mrf.mxu0
        %v1246 = vadd.f32 %v752, %v1245
        %v1247 = vpop.f32.mrf.mxu0
        %v1248 = vpop.f32.mrf.mxu0
        %v1249 = vadd.f32 %v752, %v1248
        %v1250 = vpop.f32.mrf.mxu0
        %1251 = vmatprep.mubr.bf16.mxu0 0
        %1252 = vmatmul.mubr.bf16.gmra.mxu0 %v801
        %v1253 = vpop.f32.mrf.mxu0
        %v1254 = vadd.f32 %v752, %v1253
        %v1255 = vpop.f32.mrf.mxu0
        %v1256 = vpop.f32.mrf.mxu0
        %v1257 = vadd.f32 %v752, %v1256
        %v1258 = vpop.f32.mrf.mxu0
        %1259 = vmatprep.mubr.bf16.mxu0 0
        %1260 = vmatmul.mubr.bf16.gmra.mxu0 %v804
        %v1261 = vpop.f32.mrf.mxu0
        %v1262 = vadd.f32 %v752, %v1261
        %v1263 = vpop.f32.mrf.mxu0
        %v1264 = vpop.f32.mrf.mxu0
        %v1265 = vadd.f32 %v752, %v1264
        %v1266 = vpop.f32.mrf.mxu0
        %1267 = vmatprep.mubr.bf16.mxu0 0
        %1268 = vmatmul.mubr.bf16.gmra.mxu0 %v807
        %v1269 = vpop.f32.mrf.mxu0
        %v1270 = vadd.f32 %v752, %v1269
        %v1271 = vpop.f32.mrf.mxu0
        %v1272 = vpop.f32.mrf.mxu0
        %v1273 = vadd.f32 %v752, %v1272
        %v1274 = vpop.f32.mrf.mxu0
        %1275 = vmatprep.mubr.bf16.mxu0 0
        %1276 = vmatmul.mubr.bf16.gmra.mxu0 %v810
        %v1277 = vpop.f32.mrf.mxu0
        %v1278 = vadd.f32 %v752, %v1277
        %v1279 = vpop.f32.mrf.mxu0
        %v1280 = vpop.f32.mrf.mxu0
        %v1281 = vadd.f32 %v752, %v1280
        %v1282 = vpop.f32.mrf.mxu0
        %1283 = vmatprep.mubr.bf16.mxu0 0
        %1284 = vmatmul.mubr.bf16.gmra.mxu0 %v813
        %v1285 = vpop.f32.mrf.mxu0
        %v1286 = vadd.f32 %v752, %v1285
        %v1287 = vpop.f32.mrf.mxu0
        %v1288 = vpop.f32.mrf.mxu0
        %v1289 = vadd.f32 %v752, %v1288
        %v1290 = vpop.f32.mrf.mxu0
        %1291 = vmatprep.mubr.bf16.mxu0 0
        %1292 = vmatmul.mubr.bf16.gmra.mxu0 %v816
        %v1293 = vpop.f32.mrf.mxu0
        %v1294 = vadd.f32 %v752, %v1293
        %v1295 = vpop.f32.mrf.mxu0
        %v1296 = vpop.f32.mrf.mxu0
        %v1297 = vadd.f32 %v752, %v1296
        %v1298 = vpop.f32.mrf.mxu0
        %1299 = vmatprep.mubr.bf16.mxu0 0
        %1300 = vmatmul.mubr.bf16.gmra.mxu0 %v819
        %v1301 = vpop.f32.mrf.mxu0
        %v1302 = vadd.f32 %v752, %v1301
        %v1303 = vpop.f32.mrf.mxu0
        %v1304 = vpop.f32.mrf.mxu0
        %v1305 = vadd.f32 %v752, %v1304
        %v1306 = vpop.f32.mrf.mxu0
        %1307 = vmatprep.mubr.bf16.mxu0 0
        %1308 = vmatmul.mubr.bf16.gmra.mxu0 %v822
        %v1309 = vpop.f32.mrf.mxu0
        %v1310 = vadd.f32 %v752, %v1309
        %v1311 = vpop.f32.mrf.mxu0
        %v1312 = vpop.f32.mrf.mxu0
        %v1313 = vadd.f32 %v752, %v1312
        %v1314 = vpop.f32.mrf.mxu0
        %1315 = vmatprep.mubr.bf16.mxu0 0
        %1316 = vmatmul.mubr.bf16.gmra.mxu0 %v825
        %v1317 = vpop.f32.mrf.mxu0
        %v1318 = vadd.f32 %v752, %v1317
        %v1319 = vpop.f32.mrf.mxu0
        %v1320 = vpop.f32.mrf.mxu0
        %v1321 = vadd.f32 %v752, %v1320
        %v1322 = vpop.f32.mrf.mxu0
        %1323 = vmatprep.mubr.bf16.mxu0 0
        %1324 = vmatmul.mubr.bf16.gmra.mxu0 %v828
        %v1325 = vpop.f32.mrf.mxu0
        %v1326 = vadd.f32 %v752, %v1325
        %v1327 = vpop.f32.mrf.mxu0
        %v1328 = vpop.f32.mrf.mxu0
        %v1329 = vadd.f32 %v752, %v1328
        %v1330 = vpop.f32.mrf.mxu0
        %1331 = vmatprep.mubr.bf16.mxu0 0
        %1332 = vmatmul.mubr.bf16.gmra.mxu0 %v831
        %v1333 = vpop.f32.mrf.mxu0
        %v1334 = vadd.f32 %v752, %v1333
        %v1335 = vpop.f32.mrf.mxu0
        %v1336 = vpop.f32.mrf.mxu0
        %v1337 = vadd.f32 %v752, %v1336
        %v1338 = vpop.f32.mrf.mxu0
        %1339 = vmatprep.mubr.bf16.mxu0 0
        %1340 = vmatmul.mubr.bf16.gmra.mxu0 %v834
        %v1341 = vpop.f32.mrf.mxu0
        %v1342 = vadd.f32 %v752, %v1341
        %v1343 = vpop.f32.mrf.mxu0
        %v1344 = vpop.f32.mrf.mxu0
        %v1345 = vadd.f32 %v752, %v1344
        %v1346 = vpop.f32.mrf.mxu0
        %1347 = vmatprep.mubr.bf16.mxu0 0
        %1348 = vmatmul.mubr.bf16.gmra.mxu0 %v837
        %v1349 = vpop.f32.mrf.mxu0
        %v1350 = vadd.f32 %v752, %v1349
        %v1351 = vpop.f32.mrf.mxu0
        %v1352 = vpop.f32.mrf.mxu0
        %v1353 = vadd.f32 %v752, %v1352
        %v1354 = vpop.f32.mrf.mxu0
        %1355 = vmatprep.mubr.bf16.mxu0 0
        %1356 = vmatmul.mubr.bf16.gmra.mxu0 %v840
        %v1357 = vpop.f32.mrf.mxu0
        %v1358 = vadd.f32 %v752, %v1357
        %v1359 = vpop.f32.mrf.mxu0
        %v1360 = vpop.f32.mrf.mxu0
        %v1361 = vadd.f32 %v752, %v1360
        %v1362 = vpop.f32.mrf.mxu0
        %1363 = vmatprep.mubr.bf16.mxu0 0
        %1364 = vmatmul.mubr.bf16.gmra.mxu0 %v843
        %v1365 = vpop.f32.mrf.mxu0
        %v1366 = vadd.f32 %v752, %v1365
        %v1367 = vpop.f32.mrf.mxu0
        %v1368 = vpop.f32.mrf.mxu0
        %v1369 = vadd.f32 %v752, %v1368
        %v1370 = vpop.f32.mrf.mxu0
        %1371 = vmatprep.mubr.bf16.mxu0 0
        %1372 = vmatmul.mubr.bf16.gmra.mxu0 %v846
        %v1373 = vpop.f32.mrf.mxu0
        %v1374 = vadd.f32 %v752, %v1373
        %v1375 = vpop.f32.mrf.mxu0
        %v1376 = vpop.f32.mrf.mxu0
        %v1377 = vadd.f32 %v752, %v1376
        %v1378 = vpop.f32.mrf.mxu0
        %1379 = vmatprep.mubr.bf16.mxu0 0
        %1380 = vmatmul.mubr.bf16.gmra.mxu0 %v849
        %v1381 = vpop.f32.mrf.mxu0
        %v1382 = vadd.f32 %v752, %v1381
        %v1383 = vpop.f32.mrf.mxu0
        %v1384 = vpop.f32.mrf.mxu0
        %v1385 = vadd.f32 %v752, %v1384
        %v1386 = vpop.f32.mrf.mxu0
        %1387 = vmatprep.mubr.bf16.mxu0 0
        %1388 = vmatmul.mubr.bf16.gmra.mxu0 %v852
        %v1389 = vpop.f32.mrf.mxu0
        %v1390 = vadd.f32 %v752, %v1389
        %v1391 = vpop.f32.mrf.mxu0
        %v1392 = vpop.f32.mrf.mxu0
        %v1393 = vadd.f32 %v752, %v1392
        %v1394 = vpop.f32.mrf.mxu0
        %1395 = vmatprep.mubr.bf16.mxu0 0
        %1396 = vmatmul.mubr.bf16.gmra.mxu0 %v855
        %v1397 = vpop.f32.mrf.mxu0
        %v1398 = vadd.f32 %v752, %v1397
        %v1399 = vpop.f32.mrf.mxu0
        %v1400 = vpop.f32.mrf.mxu0
        %v1401 = vadd.f32 %v752, %v1400
        %v1402 = vpop.f32.mrf.mxu0
        %1403 = vmatprep.mubr.bf16.mxu0 0
        %1404 = vmatmul.mubr.bf16.gmra.mxu0 %v858
        %v1405 = vpop.f32.mrf.mxu0
        %v1406 = vadd.f32 %v752, %v1405
        %v1407 = vpop.f32.mrf.mxu0
        %v1408 = vpop.f32.mrf.mxu0
        %v1409 = vadd.f32 %v752, %v1408
        %v1410 = vpop.f32.mrf.mxu0
        %1411 = vmatprep.mubr.bf16.mxu0 0
        %1412 = vmatmul.mubr.bf16.gmra.mxu0 %v861
        %v1413 = vpop.f32.mrf.mxu0
        %v1414 = vadd.f32 %v752, %v1413
        %v1415 = vpop.f32.mrf.mxu0
        %v1416 = vpop.f32.mrf.mxu0
        %v1417 = vadd.f32 %v752, %v1416
        %v1418 = vpop.f32.mrf.mxu0
        %1419 = vmatprep.mubr.bf16.mxu0 0
        %1420 = vmatmul.mubr.bf16.gmra.mxu0 %v864
        %v1421 = vpop.f32.mrf.mxu0
        %v1422 = vadd.f32 %v752, %v1421
        %v1423 = vpop.f32.mrf.mxu0
        %v1424 = vpop.f32.mrf.mxu0
        %v1425 = vadd.f32 %v752, %v1424
        %v1426 = vpop.f32.mrf.mxu0
        %1427 = vmatprep.mubr.bf16.mxu0 0
        %1428 = vmatmul.mubr.bf16.gmra.mxu0 %v867
        %v1429 = vpop.f32.mrf.mxu0
        %v1430 = vadd.f32 %v752, %v1429
        %v1431 = vpop.f32.mrf.mxu0
        %v1432 = vpop.f32.mrf.mxu0
        %v1433 = vadd.f32 %v752, %v1432
        %v1434 = vpop.f32.mrf.mxu0
        %1435 = vmatprep.mubr.bf16.mxu0 0
        %1436 = vmatmul.mubr.bf16.gmra.mxu0 %v870
        %v1437 = vpop.f32.mrf.mxu0
        %v1438 = vadd.f32 %v752, %v1437
        %v1439 = vpop.f32.mrf.mxu0
        %v1440 = vpop.f32.mrf.mxu0
        %v1441 = vadd.f32 %v752, %v1440
        %v1442 = vpop.f32.mrf.mxu0
        %1443 = vmatprep.mubr.bf16.mxu0 0
        %1444 = vmatmul.mubr.bf16.gmra.mxu0 %v873
        %v1445 = vpop.f32.mrf.mxu0
        %v1446 = vadd.f32 %v752, %v1445
        %v1447 = vpop.f32.mrf.mxu0
        %v1448 = vpop.f32.mrf.mxu0
        %v1449 = vadd.f32 %v752, %v1448
        %v1450 = vpop.f32.mrf.mxu0
        %1451 = vmatprep.mubr.bf16.mxu0 0
        %1452 = vmatmul.mubr.bf16.gmra.mxu0 %v876
        %v1453 = vpop.f32.mrf.mxu0
        %v1454 = vadd.f32 %v752, %v1453
        %v1455 = vpop.f32.mrf.mxu0
        %v1456 = vpop.f32.mrf.mxu0
        %v1457 = vadd.f32 %v752, %v1456
        %v1458 = vpop.f32.mrf.mxu0
        %1459 = vmatprep.mubr.bf16.mxu0 0
        %1460 = vmatmul.mubr.bf16.gmra.mxu0 %v879
        %v1461 = vpop.f32.mrf.mxu0
        %v1462 = vadd.f32 %v752, %v1461
        %v1463 = vpop.f32.mrf.mxu0
        %v1464 = vpop.f32.mrf.mxu0
        %v1465 = vadd.f32 %v752, %v1464
        %v1466 = vpop.f32.mrf.mxu0
        %1467 = vmatprep.mubr.bf16.mxu0 0
        %1468 = vmatmul.mubr.bf16.gmra.mxu0 %v882
        %v1469 = vpop.f32.mrf.mxu0
        %v1470 = vadd.f32 %v752, %v1469
        %v1471 = vpop.f32.mrf.mxu0
        %v1472 = vpop.f32.mrf.mxu0
        %v1473 = vadd.f32 %v752, %v1472
        %v1474 = vpop.f32.mrf.mxu0
        %1475 = vmatprep.mubr.bf16.mxu0 0
        %1476 = vmatmul.mubr.bf16.gmra.mxu0 %v885
        %v1477 = vpop.f32.mrf.mxu0
        %v1478 = vadd.f32 %v752, %v1477
        %v1479 = vpop.f32.mrf.mxu0
        %v1480 = vpop.f32.mrf.mxu0
        %v1481 = vadd.f32 %v752, %v1480
        %v1482 = vpop.f32.mrf.mxu0
        %1483 = vmatprep.mubr.bf16.mxu0 0
        %1484 = vmatmul.mubr.bf16.gmra.mxu0 %v888
        %v1485 = vpop.f32.mrf.mxu0
        %v1486 = vadd.f32 %v752, %v1485
        %v1487 = vpop.f32.mrf.mxu0
        %v1488 = vpop.f32.mrf.mxu0
        %v1489 = vadd.f32 %v752, %v1488
        %v1490 = vpop.f32.mrf.mxu0
        %1491 = vmatprep.mubr.bf16.mxu0 0
        %1492 = vmatmul.mubr.bf16.gmra.mxu0 %v891
        %v1493 = vpop.f32.mrf.mxu0
        %v1494 = vadd.f32 %v752, %v1493
        %v1495 = vpop.f32.mrf.mxu0
        %v1496 = vpop.f32.mrf.mxu0
        %v1497 = vadd.f32 %v752, %v1496
        %v1498 = vpop.f32.mrf.mxu0
        %1499 = vmatprep.mubr.bf16.mxu0 0
        %1500 = vmatmul.mubr.bf16.gmra.mxu0 %v894
        %v1501 = vpop.f32.mrf.mxu0
        %v1502 = vadd.f32 %v752, %v1501
        %v1503 = vpop.f32.mrf.mxu0
        %v1504 = vpop.f32.mrf.mxu0
        %v1505 = vadd.f32 %v752, %v1504
        %v1506 = vpop.f32.mrf.mxu0
        %1507 = vmatprep.mubr.bf16.mxu0 0
        %1508 = vmatmul.mubr.bf16.gmra.mxu0 %v897
        %v1509 = vpop.f32.mrf.mxu0
        %v1510 = vadd.f32 %v752, %v1509
        %v1511 = vpop.f32.mrf.mxu0
        %v1512 = vpop.f32.mrf.mxu0
        %v1513 = vadd.f32 %v752, %v1512
        %v1514 = vpop.f32.mrf.mxu0
        %1515 = vmatprep.mubr.bf16.mxu0 0
        %1516 = vmatmul.mubr.bf16.gmra.mxu0 %v900
        %v1517 = vpop.f32.mrf.mxu0
        %v1518 = vadd.f32 %v752, %v1517
        %v1519 = vpop.f32.mrf.mxu0
        %v1520 = vpop.f32.mrf.mxu0
        %v1521 = vadd.f32 %v752, %v1520
        %v1522 = vpop.f32.mrf.mxu0
        %1523 = vmatprep.mubr.bf16.mxu0 0
        %1524 = vmatmul.mubr.bf16.gmra.mxu0 %v903
        %v1525 = vpop.f32.mrf.mxu0
        %v1526 = vadd.f32 %v752, %v1525
        %v1527 = vpop.f32.mrf.mxu0
        %v1528 = vpop.f32.mrf.mxu0
        %v1529 = vadd.f32 %v752, %v1528
        %v1530 = vpop.f32.mrf.mxu0
        %1531 = vmatprep.mubr.bf16.mxu0 0
        %1532 = vmatmul.mubr.bf16.gmra.mxu0 %v906
        %v1533 = vpop.f32.mrf.mxu0
        %v1534 = vadd.f32 %v752, %v1533
        %v1535 = vpop.f32.mrf.mxu0
        %v1536 = vpop.f32.mrf.mxu0
        %v1537 = vadd.f32 %v752, %v1536
        %v1538 = vpop.f32.mrf.mxu0
        %1539 = vmatprep.mubr.bf16.mxu0 0
        %1540 = vmatmul.mubr.bf16.gmra.mxu0 %v909
        %v1541 = vpop.f32.mrf.mxu0
        %v1542 = vadd.f32 %v752, %v1541
        %v1543 = vpop.f32.mrf.mxu0
        %v1544 = vpop.f32.mrf.mxu0
        %v1545 = vadd.f32 %v752, %v1544
        %v1546 = vpop.f32.mrf.mxu0
        %1547 = vmatprep.mubr.bf16.mxu0 0
        %1548 = vmatmul.mubr.bf16.gmra.mxu0 %v912
        %v1549 = vpop.f32.mrf.mxu0
        %v1550 = vadd.f32 %v752, %v1549
        %v1551 = vpop.f32.mrf.mxu0
        %v1552 = vpop.f32.mrf.mxu0
        %v1553 = vadd.f32 %v752, %v1552
        %v1554 = vpop.f32.mrf.mxu0
        %1555 = vmatprep.mubr.bf16.mxu0 0
        %1556 = vmatmul.mubr.bf16.gmra.mxu0 %v915
        %v1557 = vpop.f32.mrf.mxu0
        %v1558 = vadd.f32 %v752, %v1557
        %v1559 = vpop.f32.mrf.mxu0
        %v1560 = vpop.f32.mrf.mxu0
        %v1561 = vadd.f32 %v752, %v1560
        %v1562 = vpop.f32.mrf.mxu0
        %1563 = vmatprep.mubr.bf16.mxu0 0
        %1564 = vmatmul.mubr.bf16.gmra.mxu0 %v918
        %v1565 = vpop.f32.mrf.mxu0
        %v1566 = vadd.f32 %v752, %v1565
        %v1567 = vpop.f32.mrf.mxu0
        %v1568 = vpop.f32.mrf.mxu0
        %v1569 = vadd.f32 %v752, %v1568
        %v1570 = vpop.f32.mrf.mxu0
        %1571 = vmatprep.mubr.bf16.mxu0 0
        %1572 = vmatmul.mubr.bf16.gmra.mxu0 %v921
        %v1573 = vpop.f32.mrf.mxu0
        %v1574 = vadd.f32 %v752, %v1573
        %v1575 = vpop.f32.mrf.mxu0
        %v1576 = vpop.f32.mrf.mxu0
        %v1577 = vadd.f32 %v752, %v1576
        %v1578 = vpop.f32.mrf.mxu0
        %1579 = vmatprep.mubr.bf16.mxu0 0
        %1580 = vmatmul.mubr.bf16.gmra.mxu0 %v924
        %v1581 = vpop.f32.mrf.mxu0
        %v1582 = vadd.f32 %v752, %v1581
        %v1583 = vpop.f32.mrf.mxu0
        %v1584 = vpop.f32.mrf.mxu0
        %v1585 = vadd.f32 %v752, %v1584
        %v1586 = vpop.f32.mrf.mxu0
        %1587 = vmatprep.mubr.bf16.mxu0 0
        %1588 = vmatmul.mubr.bf16.gmra.mxu0 %v927
        %v1589 = vpop.f32.mrf.mxu0
        %v1590 = vadd.f32 %v752, %v1589
        %v1591 = vpop.f32.mrf.mxu0
        %v1592 = vpop.f32.mrf.mxu0
        %v1593 = vadd.f32 %v752, %v1592
        %v1594 = vpop.f32.mrf.mxu0
        %1595 = vmatprep.mubr.bf16.mxu0 0
        %1596 = vmatmul.mubr.bf16.gmra.mxu0 %v930
        %v1597 = vpop.f32.mrf.mxu0
        %v1598 = vadd.f32 %v752, %v1597
        %v1599 = vpop.f32.mrf.mxu0
        %v1600 = vpop.f32.mrf.mxu0
        %v1601 = vadd.f32 %v752, %v1600
        %v1602 = vpop.f32.mrf.mxu0
        %1603 = vmatprep.mubr.bf16.mxu0 0
        %1604 = vmatmul.mubr.bf16.gmra.mxu0 %v933
        %v1605 = vpop.f32.mrf.mxu0
        %v1606 = vadd.f32 %v752, %v1605
        %v1607 = vpop.f32.mrf.mxu0
        %v1608 = vpop.f32.mrf.mxu0
        %v1609 = vadd.f32 %v752, %v1608
        %v1610 = vpop.f32.mrf.mxu0
        %1611 = vmatprep.mubr.bf16.mxu0 0
        %1612 = vmatmul.mubr.bf16.gmra.mxu0 %v936
        %v1613 = vpop.f32.mrf.mxu0
        %v1614 = vadd.f32 %v752, %v1613
        %v1615 = vpop.f32.mrf.mxu0
        %v1616 = vpop.f32.mrf.mxu0
        %v1617 = vadd.f32 %v752, %v1616
        %v1618 = vpop.f32.mrf.mxu0
        %1619 = vmatprep.mubr.bf16.mxu0 0
        %1620 = vmatmul.mubr.bf16.gmra.mxu0 %v939
        %v1621 = vpop.f32.mrf.mxu0
        %v1622 = vadd.f32 %v752, %v1621
        %v1623 = vpop.f32.mrf.mxu0
        %v1624 = vpop.f32.mrf.mxu0
        %v1625 = vadd.f32 %v752, %v1624
        %v1626 = vpop.f32.mrf.mxu0
        %1627 = vmatprep.mubr.bf16.mxu0 0
        %1628 = vmatmul.mubr.bf16.gmra.mxu0 %v942
        %v1629 = vpop.f32.mrf.mxu0
        %v1630 = vadd.f32 %v752, %v1629
        %v1631 = vpop.f32.mrf.mxu0
        %v1632 = vpop.f32.mrf.mxu0
        %v1633 = vadd.f32 %v752, %v1632
        %v1634 = vpop.f32.mrf.mxu0
        %1635 = vmatprep.mubr.bf16.mxu0 0
        %1636 = vmatmul.mubr.bf16.gmra.mxu0 %v945
        %v1637 = vpop.f32.mrf.mxu0
        %v1638 = vadd.f32 %v752, %v1637
        %v1639 = vpop.f32.mrf.mxu0
        %v1640 = vpop.f32.mrf.mxu0
        %v1641 = vadd.f32 %v752, %v1640
        %v1642 = vpop.f32.mrf.mxu0
        %1643 = vmatprep.mubr.bf16.mxu0 0
        %1644 = vmatmul.mubr.bf16.gmra.mxu0 %v948
        %v1645 = vpop.f32.mrf.mxu0
        %v1646 = vadd.f32 %v752, %v1645
        %v1647 = vpop.f32.mrf.mxu0
        %v1648 = vpop.f32.mrf.mxu0
        %v1649 = vadd.f32 %v752, %v1648
        %v1650 = vpop.f32.mrf.mxu0
        %1651 = vmatprep.mubr.bf16.mxu0 0
        %1652 = vmatmul.mubr.bf16.gmra.mxu0 %v951
        %v1653 = vpop.f32.mrf.mxu0
        %v1654 = vadd.f32 %v752, %v1653
        %v1655 = vpop.f32.mrf.mxu0
        %v1656 = vpop.f32.mrf.mxu0
        %v1657 = vadd.f32 %v752, %v1656
        %v1658 = vpop.f32.mrf.mxu0
        %1659 = vmatprep.mubr.bf16.mxu0 0
        %1660 = vmatmul.mubr.bf16.gmra.mxu0 %v954
        %v1661 = vpop.f32.mrf.mxu0
        %v1662 = vadd.f32 %v752, %v1661
        %v1663 = vpop.f32.mrf.mxu0
        %v1664 = vpop.f32.mrf.mxu0
        %v1665 = vadd.f32 %v752, %v1664
        %v1666 = vpop.f32.mrf.mxu0
        %1667 = vmatprep.mubr.bf16.mxu0 0
        %1668 = vmatmul.mubr.bf16.gmra.mxu0 %v957
        %v1669 = vpop.f32.mrf.mxu0
        %v1670 = vadd.f32 %v752, %v1669
        %v1671 = vpop.f32.mrf.mxu0
        %v1672 = vpop.f32.mrf.mxu0
        %v1673 = vadd.f32 %v752, %v1672
        %v1674 = vpop.f32.mrf.mxu0
        %1675 = vmatprep.mubr.bf16.mxu0 0
        %1676 = vmatmul.mubr.bf16.gmra.mxu0 %v960
        %v1677 = vpop.f32.mrf.mxu0
        %v1678 = vadd.f32 %v752, %v1677
        %v1679 = vpop.f32.mrf.mxu0
        %v1680 = vpop.f32.mrf.mxu0
        %v1681 = vadd.f32 %v752, %v1680
        %v1682 = vpop.f32.mrf.mxu0
        %1683 = vmatprep.mubr.bf16.mxu0 0
        %1684 = vmatmul.mubr.bf16.gmra.mxu0 %v963
        %v1685 = vpop.f32.mrf.mxu0
        %v1686 = vadd.f32 %v752, %v1685
        %v1687 = vpop.f32.mrf.mxu0
        %v1688 = vpop.f32.mrf.mxu0
        %v1689 = vadd.f32 %v752, %v1688
        %v1690 = vpop.f32.mrf.mxu0
        %1691 = vmatprep.mubr.bf16.mxu0 0
        %1692 = vmatmul.mubr.bf16.gmra.mxu0 %v966
        %v1693 = vpop.f32.mrf.mxu0
        %v1694 = vadd.f32 %v752, %v1693
        %v1695 = vpop.f32.mrf.mxu0
        %v1696 = vpop.f32.mrf.mxu0
        %v1697 = vadd.f32 %v752, %v1696
        %v1698 = vpop.f32.mrf.mxu0
        %1699 = vmatprep.mubr.bf16.mxu0 0
        %1700 = vmatmul.mubr.bf16.gmra.mxu0 %v969
        %v1701 = vpop.f32.mrf.mxu0
        %v1702 = vadd.f32 %v752, %v1701
        %v1703 = vpop.f32.mrf.mxu0
        %v1704 = vpop.f32.mrf.mxu0
        %v1705 = vadd.f32 %v752, %v1704
        %v1706 = vpop.f32.mrf.mxu0
        %1707 = vmatprep.mubr.bf16.mxu0 0
        %1708 = vmatmul.mubr.bf16.gmra.mxu0 %v972
        %v1709 = vpop.f32.mrf.mxu0
        %v1710 = vadd.f32 %v752, %v1709
        %v1711 = vpop.f32.mrf.mxu0
        %v1712 = vpop.f32.mrf.mxu0
        %v1713 = vadd.f32 %v752, %v1712
        %v1714 = vpop.f32.mrf.mxu0
        %1715 = vmatprep.mubr.bf16.mxu0 0
        %1716 = vmatmul.mubr.bf16.gmra.mxu0 %v975
        %v1717 = vpop.f32.mrf.mxu0
        %v1718 = vadd.f32 %v752, %v1717
        %v1719 = vpop.f32.mrf.mxu0
        %v1720 = vpop.f32.mrf.mxu0
        %v1721 = vadd.f32 %v752, %v1720
        %v1722 = vpop.f32.mrf.mxu0
        %1723 = vmatprep.mubr.bf16.mxu0 0
        %1724 = vmatmul.mubr.bf16.gmra.mxu0 %v978
        %v1725 = vpop.f32.mrf.mxu0
        %v1726 = vadd.f32 %v752, %v1725
        %v1727 = vpop.f32.mrf.mxu0
        %v1728 = vpop.f32.mrf.mxu0
        %v1729 = vadd.f32 %v752, %v1728
        %v1730 = vpop.f32.mrf.mxu0
        %1731 = vmatprep.mubr.bf16.mxu0 0
        %1732 = vmatmul.mubr.bf16.gmra.mxu0 %v981
        %v1733 = vpop.f32.mrf.mxu0
        %v1734 = vadd.f32 %v752, %v1733
        %v1735 = vpop.f32.mrf.mxu0
        %v1736 = vpop.f32.mrf.mxu0
        %v1737 = vadd.f32 %v752, %v1736
        %v1738 = vpop.f32.mrf.mxu0
        %1739 = vmatprep.mubr.bf16.mxu0 0
        %1740 = vmatmul.mubr.bf16.gmra.mxu0 %v984
        %v1741 = vpop.f32.mrf.mxu0
        %v1742 = vadd.f32 %v752, %v1741
        %v1743 = vpop.f32.mrf.mxu0
        %v1744 = vpop.f32.mrf.mxu0
        %v1745 = vadd.f32 %v752, %v1744
        %v1746 = vpop.f32.mrf.mxu0
        %1747 = vmatprep.mubr.bf16.mxu0 0
        %1748 = vmatmul.mubr.bf16.gmra.mxu0 %v987
        %v1749 = vpop.f32.mrf.mxu0
        %v1750 = vadd.f32 %v752, %v1749
        %v1751 = vpop.f32.mrf.mxu0
        %v1752 = vpop.f32.mrf.mxu0
        %v1753 = vadd.f32 %v752, %v1752
        %v1754 = vpop.f32.mrf.mxu0
        %1755 = vmatprep.mubr.bf16.mxu0 0
        %1756 = vmatmul.mubr.bf16.gmra.mxu0 %v990
        %v1757 = vpop.f32.mrf.mxu0
        %v1758 = vadd.f32 %v752, %v1757
        %v1759 = vpop.f32.mrf.mxu0
        %v1760 = vpop.f32.mrf.mxu0
        %v1761 = vadd.f32 %v752, %v1760
        %v1762 = vpop.f32.mrf.mxu0
        %1763 = vmatprep.mubr.bf16.mxu0 0
        %1764 = vmatmul.mubr.bf16.gmra.mxu0 %v993
        %v1765 = vpop.f32.mrf.mxu0
        %v1766 = vadd.f32 %v752, %v1765
        %v1767 = vpop.f32.mrf.mxu0
        %v1768 = vpop.f32.mrf.mxu0
        %v1769 = vadd.f32 %v752, %v1768
        %v1770 = vpop.f32.mrf.mxu0
        %1771 = vmatprep.mubr.bf16.mxu0 0
        %1772 = vmatmul.mubr.bf16.gmra.mxu0 %v996
        %v1773 = vpop.f32.mrf.mxu0
        %v1774 = vadd.f32 %v752, %v1773
        %v1775 = vpop.f32.mrf.mxu0
        %v1776 = vpop.f32.mrf.mxu0
        %v1777 = vadd.f32 %v752, %v1776
        %v1778 = vpop.f32.mrf.mxu0
        %1779 = vmatprep.mubr.bf16.mxu0 0
        %1780 = vmatmul.mubr.bf16.gmra.mxu0 %v999
        %v1781 = vpop.f32.mrf.mxu0
        %v1782 = vadd.f32 %v752, %v1781
        %v1783 = vpop.f32.mrf.mxu0
        %v1784 = vpop.f32.mrf.mxu0
        %v1785 = vadd.f32 %v752, %v1784
        %v1786 = vpop.f32.mrf.mxu0
        %1787 = vmatprep.mubr.bf16.mxu0 0
        %1788 = vmatmul.mubr.bf16.gmra.mxu0 %v1002
        %v1789 = vpop.f32.mrf.mxu0
        %v1790 = vadd.f32 %v752, %v1789
        %v1791 = vpop.f32.mrf.mxu0
        %v1792 = vpop.f32.mrf.mxu0
        %v1793 = vadd.f32 %v752, %v1792
        %v1794 = vpop.f32.mrf.mxu0
        %1795 = vmatprep.mubr.bf16.mxu0 0
        %1796 = vmatmul.mubr.bf16.gmra.mxu0 %v1005
        %v1797 = vpop.f32.mrf.mxu0
        %v1798 = vadd.f32 %v752, %v1797
        %v1799 = vpop.f32.mrf.mxu0
        %v1800 = vpop.f32.mrf.mxu0
        %v1801 = vadd.f32 %v752, %v1800
        %v1802 = vpop.f32.mrf.mxu0
        %1803 = vmatprep.mubr.bf16.mxu0 0
        %1804 = vmatmul.mubr.bf16.gmra.mxu0 %v1008
        %v1805 = vpop.f32.mrf.mxu0
        %v1806 = vadd.f32 %v752, %v1805
        %v1807 = vpop.f32.mrf.mxu0
        %v1808 = vpop.f32.mrf.mxu0
        %v1809 = vadd.f32 %v752, %v1808
        %v1810 = vpop.f32.mrf.mxu0
        %1811 = vmatprep.mubr.bf16.mxu0 0
        %1812 = vmatmul.mubr.bf16.gmra.mxu0 %v1011
        %v1813 = vpop.f32.mrf.mxu0
        %v1814 = vadd.f32 %v752, %v1813
        %v1815 = vpop.f32.mrf.mxu0
        %v1816 = vpop.f32.mrf.mxu0
        %v1817 = vadd.f32 %v752, %v1816
        %v1818 = vpop.f32.mrf.mxu0
        %1819 = vmatprep.mubr.bf16.mxu0 0
        %1820 = vmatmul.mubr.bf16.gmra.mxu0 %v1014
        %v1821 = vpop.f32.mrf.mxu0
        %v1822 = vadd.f32 %v752, %v1821
        %v1823 = vpop.f32.mrf.mxu0
        %v1824 = vpop.f32.mrf.mxu0
        %v1825 = vadd.f32 %v752, %v1824
        %v1826 = vpop.f32.mrf.mxu0
        %1827 = vmatprep.mubr.bf16.mxu0 0
        %1828 = vmatmul.mubr.bf16.gmra.mxu0 %v1017
        %v1829 = vpop.f32.mrf.mxu0
        %v1830 = vadd.f32 %v752, %v1829
        %v1831 = vpop.f32.mrf.mxu0
        %v1832 = vpop.f32.mrf.mxu0
        %v1833 = vadd.f32 %v752, %v1832
        %v1834 = vpop.f32.mrf.mxu0
        %1835 = vmatprep.mubr.bf16.mxu0 0
        %1836 = vmatmul.mubr.bf16.gmra.mxu0 %v1020
        %v1837 = vpop.f32.mrf.mxu0
        %v1838 = vadd.f32 %v752, %v1837
        %v1839 = vpop.f32.mrf.mxu0
        %v1840 = vpop.f32.mrf.mxu0
        %v1841 = vadd.f32 %v752, %v1840
        %v1842 = vpop.f32.mrf.mxu0
        %1843 = vmatprep.mubr.bf16.mxu0 0
        %1844 = vmatmul.mubr.bf16.gmra.mxu0 %v1023
        %v1845 = vpop.f32.mrf.mxu0
        %v1846 = vadd.f32 %v752, %v1845
        %v1847 = vpop.f32.mrf.mxu0
        %v1848 = vpop.f32.mrf.mxu0
        %v1849 = vadd.f32 %v752, %v1848
        %v1850 = vpop.f32.mrf.mxu0
        %1851 = vmatprep.mubr.bf16.mxu0 0
        %1852 = vmatmul.mubr.bf16.gmra.mxu0 %v1026
        %v1853 = vpop.f32.mrf.mxu0
        %v1854 = vadd.f32 %v752, %v1853
        %v1855 = vpop.f32.mrf.mxu0
        %v1856 = vpop.f32.mrf.mxu0
        %v1857 = vadd.f32 %v752, %v1856
        %v1858 = vpop.f32.mrf.mxu0
        %1859 = vmatprep.mubr.bf16.mxu0 0
        %1860 = vmatmul.mubr.bf16.gmra.mxu0 %v1029
        %v1861 = vpop.f32.mrf.mxu0
        %v1862 = vadd.f32 %v752, %v1861
        %v1863 = vpop.f32.mrf.mxu0
        %v1864 = vpop.f32.mrf.mxu0
        %v1865 = vadd.f32 %v752, %v1864
        %v1866 = vpop.f32.mrf.mxu0
        %1867 = vmatprep.mubr.bf16.mxu0 0
        %1868 = vmatmul.mubr.bf16.gmra.mxu0 %v1032
        %v1869 = vpop.f32.mrf.mxu0
        %v1870 = vadd.f32 %v752, %v1869
        %v1871 = vpop.f32.mrf.mxu0
        %v1872 = vpop.f32.mrf.mxu0
        %v1873 = vadd.f32 %v752, %v1872
        %v1874 = vpop.f32.mrf.mxu0
        %1875 = vmatprep.mubr.bf16.mxu0 0
        %1876 = vmatmul.mubr.bf16.gmra.mxu0 %v1035
        %v1877 = vpop.f32.mrf.mxu0
        %v1878 = vadd.f32 %v752, %v1877
        %v1879 = vpop.f32.mrf.mxu0
        %v1880 = vpop.f32.mrf.mxu0
        %v1881 = vadd.f32 %v752, %v1880
        %v1882 = vpop.f32.mrf.mxu0
        %1883 = vmatprep.mubr.bf16.mxu0 0
        %1884 = vmatmul.mubr.bf16.gmra.mxu0 %v1038
        %v1885 = vpop.f32.mrf.mxu0
        %v1886 = vadd.f32 %v752, %v1885
        %v1887 = vpop.f32.mrf.mxu0
        %v1888 = vpop.f32.mrf.mxu0
        %v1889 = vadd.f32 %v752, %v1888
        %v1890 = vpop.f32.mrf.mxu0
        %1891 = vmatprep.mubr.bf16.mxu0 0
        %1892 = vmatmul.mubr.bf16.gmra.mxu0 %v1041
        %v1893 = vpop.f32.mrf.mxu0
        %v1894 = vadd.f32 %v752, %v1893
        %v1895 = vpop.f32.mrf.mxu0
        %v1896 = vpop.f32.mrf.mxu0
        %v1897 = vadd.f32 %v752, %v1896
        %v1898 = vpop.f32.mrf.mxu0
        %1899 = vmatprep.mubr.bf16.mxu0 0
        %1900 = vmatmul.mubr.bf16.gmra.mxu0 %v1044
        %v1901 = vpop.f32.mrf.mxu0
        %v1902 = vadd.f32 %v752, %v1901
        %v1903 = vpop.f32.mrf.mxu0
        %v1904 = vpop.f32.mrf.mxu0
        %v1905 = vadd.f32 %v752, %v1904
        %v1906 = vpop.f32.mrf.mxu0
        %1907 = vmatprep.mubr.bf16.mxu0 0
        %1908 = vmatmul.mubr.bf16.gmra.mxu0 %v1047
        %v1909 = vpop.f32.mrf.mxu0
        %v1910 = vadd.f32 %v752, %v1909
        %v1911 = vpop.f32.mrf.mxu0
        %v1912 = vpop.f32.mrf.mxu0
        %v1913 = vadd.f32 %v752, %v1912
        %v1914 = vpop.f32.mrf.mxu0
        %1915 = vmatprep.mubr.bf16.mxu0 0
        %1916 = vmatmul.mubr.bf16.gmra.mxu0 %v1050
        %v1917 = vpop.f32.mrf.mxu0
        %v1918 = vadd.f32 %v752, %v1917
        %v1919 = vpop.f32.mrf.mxu0
        %v1920 = vpop.f32.mrf.mxu0
        %v1921 = vadd.f32 %v752, %v1920
        %v1922 = vpop.f32.mrf.mxu0
        %1923 = vmatprep.mubr.bf16.mxu0 0
        %1924 = vmatmul.mubr.bf16.gmra.mxu0 %v1053
        %v1925 = vpop.f32.mrf.mxu0
        %v1926 = vadd.f32 %v752, %v1925
        %v1927 = vpop.f32.mrf.mxu0
        %v1928 = vpop.f32.mrf.mxu0
        %v1929 = vadd.f32 %v752, %v1928
        %v1930 = vpop.f32.mrf.mxu0
        %1931 = vmatprep.mubr.bf16.mxu0 0
        %1932 = vmatmul.mubr.bf16.gmra.mxu0 %v1056
        %v1933 = vpop.f32.mrf.mxu0
        %v1934 = vadd.f32 %v752, %v1933
        %v1935 = vpop.f32.mrf.mxu0
        %v1936 = vpop.f32.mrf.mxu0
        %v1937 = vadd.f32 %v752, %v1936
        %v1938 = vpop.f32.mrf.mxu0
        %1939 = vmatprep.mubr.bf16.mxu0 0
        %1940 = vmatmul.mubr.bf16.gmra.mxu0 %v1059
        %v1941 = vpop.f32.mrf.mxu0
        %v1942 = vadd.f32 %v752, %v1941
        %v1943 = vpop.f32.mrf.mxu0
        %v1944 = vpop.f32.mrf.mxu0
        %v1945 = vadd.f32 %v752, %v1944
        %v1946 = vpop.f32.mrf.mxu0
        %1947 = vmatprep.mubr.bf16.mxu0 0
        %1948 = vmatmul.mubr.bf16.gmra.mxu0 %v1062
        %v1949 = vpop.f32.mrf.mxu0
        %v1950 = vadd.f32 %v752, %v1949
        %v1951 = vpop.f32.mrf.mxu0
        %v1952 = vpop.f32.mrf.mxu0
        %v1953 = vadd.f32 %v752, %v1952
        %v1954 = vpop.f32.mrf.mxu0
        %1955 = vmatprep.mubr.bf16.mxu0 0
        %1956 = vmatmul.mubr.bf16.gmra.mxu0 %v1065
        %v1957 = vpop.f32.mrf.mxu0
        %v1958 = vadd.f32 %v752, %v1957
        %v1959 = vpop.f32.mrf.mxu0
        %v1960 = vpop.f32.mrf.mxu0
        %v1961 = vadd.f32 %v752, %v1960
        %v1962 = vpop.f32.mrf.mxu0
        %1963 = vmatprep.mubr.bf16.mxu0 0
        %1964 = vmatmul.mubr.bf16.gmra.mxu0 %v1068
        %v1965 = vpop.f32.mrf.mxu0
        %v1966 = vadd.f32 %v752, %v1965
        %v1967 = vpop.f32.mrf.mxu0
        %v1968 = vpop.f32.mrf.mxu0
        %v1969 = vadd.f32 %v752, %v1968
        %v1970 = vpop.f32.mrf.mxu0
        %1971 = vmatprep.mubr.bf16.mxu0 0
        %1972 = vmatmul.mubr.bf16.gmra.mxu0 %v1071
        %v1973 = vpop.f32.mrf.mxu0
        %v1974 = vadd.f32 %v752, %v1973
        %v1975 = vpop.f32.mrf.mxu0
        %v1976 = vpop.f32.mrf.mxu0
        %v1977 = vadd.f32 %v752, %v1976
        %v1978 = vpop.f32.mrf.mxu0
        %1979 = vmatprep.mubr.bf16.mxu0 0
        %1980 = vmatmul.mubr.bf16.gmra.mxu0 %v1074
        %v1981 = vpop.f32.mrf.mxu0
        %v1982 = vadd.f32 %v752, %v1981
        %v1983 = vpop.f32.mrf.mxu0
        %v1984 = vpop.f32.mrf.mxu0
        %v1985 = vadd.f32 %v752, %v1984
        %v1986 = vpop.f32.mrf.mxu0
        %1987 = vmatprep.mubr.bf16.mxu0 0
        %1988 = vmatmul.mubr.bf16.gmra.mxu0 %v1077
        %v1989 = vpop.f32.mrf.mxu0
        %v1990 = vadd.f32 %v752, %v1989
        %v1991 = vpop.f32.mrf.mxu0
        %v1992 = vpop.f32.mrf.mxu0
        %v1993 = vadd.f32 %v752, %v1992
        %v1994 = vpop.f32.mrf.mxu0
        %1995 = vmatprep.mubr.bf16.mxu0 0
        %1996 = vmatmul.mubr.bf16.gmra.mxu0 %v1080
        %v1997 = vpop.f32.mrf.mxu0
        %v1998 = vadd.f32 %v752, %v1997
        %v1999 = vpop.f32.mrf.mxu0
        %v2000 = vpop.f32.mrf.mxu0
        %v2001 = vadd.f32 %v752, %v2000
        %v2002 = vpop.f32.mrf.mxu0
        %2003 = vmatprep.mubr.bf16.mxu0 0
        %2004 = vmatmul.mubr.bf16.gmra.mxu0 %v1083
        %v2005 = vpop.f32.mrf.mxu0
        %v2006 = vadd.f32 %v752, %v2005
        %v2007 = vpop.f32.mrf.mxu0
        %v2008 = vpop.f32.mrf.mxu0
        %v2009 = vadd.f32 %v752, %v2008
        %v2010 = vpop.f32.mrf.mxu0
        %2011 = vmatprep.mubr.bf16.mxu0 0
        %2012 = vmatmul.mubr.bf16.gmra.mxu0 %v1086
        %v2013 = vpop.f32.mrf.mxu0
        %v2014 = vadd.f32 %v752, %v2013
        %v2015 = vpop.f32.mrf.mxu0
        %v2016 = vpop.f32.mrf.mxu0
        %v2017 = vadd.f32 %v752, %v2016
        %v2018 = vpop.f32.mrf.mxu0
        %2019 = vmatprep.mubr.bf16.mxu0 0
        %2020 = vmatmul.mubr.bf16.gmra.mxu0 %v1089
        %v2021 = vpop.f32.mrf.mxu0
        %v2022 = vadd.f32 %v752, %v2021
        %v2023 = vpop.f32.mrf.mxu0
        %v2024 = vpop.f32.mrf.mxu0
        %v2025 = vadd.f32 %v752, %v2024
        %v2026 = vpop.f32.mrf.mxu0
        %2027 = vmatprep.mubr.bf16.mxu0 0
        %2028 = vmatmul.mubr.bf16.gmra.mxu0 %v1092
        %v2029 = vpop.f32.mrf.mxu0
        %v2030 = vadd.f32 %v752, %v2029
        %v2031 = vpop.f32.mrf.mxu0
        %v2032 = vpop.f32.mrf.mxu0
        %v2033 = vadd.f32 %v752, %v2032
        %v2034 = vpop.f32.mrf.mxu0
        %2035 = vmatprep.mubr.bf16.mxu0 0
        %2036 = vmatmul.mubr.bf16.gmra.mxu0 %v1095
        %v2037 = vpop.f32.mrf.mxu0
        %v2038 = vadd.f32 %v752, %v2037
        %v2039 = vpop.f32.mrf.mxu0
        %v2040 = vpop.f32.mrf.mxu0
        %v2041 = vadd.f32 %v752, %v2040
        %v2042 = vpop.f32.mrf.mxu0
        %2043 = vmatprep.mubr.bf16.mxu0 0
        %2044 = vmatmul.mubr.bf16.gmra.mxu0 %v1098
        %v2045 = vpop.f32.mrf.mxu0
        %v2046 = vadd.f32 %v752, %v2045
        %v2047 = vpop.f32.mrf.mxu0
        %v2048 = vpop.f32.mrf.mxu0
        %v2049 = vadd.f32 %v752, %v2048
        %v2050 = vpop.f32.mrf.mxu0
        %2051 = vmatprep.mubr.bf16.mxu0 0
        %2052 = vmatmul.mubr.bf16.gmra.mxu0 %v1101
        %v2053 = vpop.f32.mrf.mxu0
        %v2054 = vadd.f32 %v752, %v2053
        %v2055 = vpop.f32.mrf.mxu0
        %v2056 = vpop.f32.mrf.mxu0
        %v2057 = vadd.f32 %v752, %v2056
        %v2058 = vpop.f32.mrf.mxu0
        %2059 = vmatprep.mubr.bf16.mxu0 0
        %2060 = vmatmul.mubr.bf16.gmra.mxu0 %v1104
        %v2061 = vpop.f32.mrf.mxu0
        %v2062 = vadd.f32 %v752, %v2061
        %v2063 = vpop.f32.mrf.mxu0
        %v2064 = vpop.f32.mrf.mxu0
        %v2065 = vadd.f32 %v752, %v2064
        %v2066 = vpop.f32.mrf.mxu0
        %2067 = vmatprep.mubr.bf16.mxu0 0
        %2068 = vmatmul.mubr.bf16.gmra.mxu0 %v1107
        %v2069 = vpop.f32.mrf.mxu0
        %v2070 = vadd.f32 %v752, %v2069
        %v2071 = vpop.f32.mrf.mxu0
        %v2072 = vpop.f32.mrf.mxu0
        %v2073 = vadd.f32 %v752, %v2072
        %v2074 = vpop.f32.mrf.mxu0
        %2075 = vmatprep.mubr.bf16.mxu0 0
        %2076 = vmatmul.mubr.bf16.gmra.mxu0 %v1110
        %v2077 = vpop.f32.mrf.mxu0
        %v2078 = vadd.f32 %v752, %v2077
        %v2079 = vpop.f32.mrf.mxu0
        %v2080 = vpop.f32.mrf.mxu0
        %v2081 = vadd.f32 %v752, %v2080
        %v2082 = vpop.f32.mrf.mxu0
        %2083 = vmatprep.mubr.bf16.mxu0 0
        %2084 = vmatmul.mubr.bf16.gmra.mxu0 %v1113
        %v2085 = vpop.f32.mrf.mxu0
        %v2086 = vadd.f32 %v752, %v2085
        %v2087 = vpop.f32.mrf.mxu0
        %v2088 = vpop.f32.mrf.mxu0
        %v2089 = vadd.f32 %v752, %v2088
        %v2090 = vpop.f32.mrf.mxu0
        %2091 = vmatprep.mubr.bf16.mxu0 0
        %2092 = vmatmul.mubr.bf16.gmra.mxu0 %v1116
        %v2093 = vpop.f32.mrf.mxu0
        %v2094 = vadd.f32 %v752, %v2093
        %v2095 = vpop.f32.mrf.mxu0
        %v2096 = vpop.f32.mrf.mxu0
        %v2097 = vadd.f32 %v752, %v2096
        %v2098 = vpop.f32.mrf.mxu0
        %2099 = vmatprep.mubr.bf16.mxu0 0
        %2100 = vmatmul.mubr.bf16.gmra.mxu0 %v1119
        %v2101 = vpop.f32.mrf.mxu0
        %v2102 = vadd.f32 %v752, %v2101
        %v2103 = vpop.f32.mrf.mxu0
        %v2104 = vpop.f32.mrf.mxu0
        %v2105 = vadd.f32 %v752, %v2104
        %v2106 = vpop.f32.mrf.mxu0
        %2107 = vmatprep.mubr.bf16.mxu0 0
        %2108 = vmatmul.mubr.bf16.gmra.mxu0 %v1122
        %v2109 = vpop.f32.mrf.mxu0
        %v2110 = vadd.f32 %v752, %v2109
        %v2111 = vpop.f32.mrf.mxu0
        %v2112 = vpop.f32.mrf.mxu0
        %v2113 = vadd.f32 %v752, %v2112
        %v2114 = vpop.f32.mrf.mxu0
        %2115 = vmatprep.mubr.bf16.mxu0 0
        %2116 = vmatmul.mubr.bf16.gmra.mxu0 %v1125
        %v2117 = vpop.f32.mrf.mxu0
        %v2118 = vadd.f32 %v752, %v2117
        %v2119 = vpop.f32.mrf.mxu0
        %v2120 = vpop.f32.mrf.mxu0
        %v2121 = vadd.f32 %v752, %v2120
        %v2122 = vpop.f32.mrf.mxu0
        %2123 = vmatprep.mubr.bf16.mxu0 0
        %2124 = vmatmul.mubr.bf16.gmra.mxu0 %v1128
        %v2125 = vpop.f32.mrf.mxu0
        %v2126 = vadd.f32 %v752, %v2125
        %v2127 = vpop.f32.mrf.mxu0
        %v2128 = vpop.f32.mrf.mxu0
        %v2129 = vadd.f32 %v752, %v2128
        %v2130 = vpop.f32.mrf.mxu0
        %2131 = vmatprep.mubr.bf16.mxu0 0
        %2132 = vmatmul.mubr.bf16.gmra.mxu0 %v1131
        %v2133 = vpop.f32.mrf.mxu0
        %v2134 = vadd.f32 %v752, %v2133
        %v2135 = vpop.f32.mrf.mxu0
        %v2136 = vpop.f32.mrf.mxu0
        %v2137 = vadd.f32 %v752, %v2136
        %v2138 = vpop.f32.mrf.mxu0
        %2139 = vmatprep.mubr.bf16.mxu0 0
        %2140 = vmatmul.mubr.bf16.gmra.mxu0 %v1134
        %v2141 = vpop.f32.mrf.mxu0
        %v2142 = vadd.f32 %v752, %v2141
        %v2143 = vpop.f32.mrf.mxu0
        %v2144 = vpop.f32.mrf.mxu0
        %v2145 = vadd.f32 %v752, %v2144
        %v2146 = vpop.f32.mrf.mxu0
        %2147 = vmatprep.mubr.bf16.mxu0 0
        %2148 = vmatmul.mubr.bf16.gmra.mxu0 %v1137
        %v2149 = vpop.f32.mrf.mxu0
        %v2150 = vadd.f32 %v752, %v2149
        %v2151 = vpop.f32.mrf.mxu0
        %v2152 = vpop.f32.mrf.mxu0
        %v2153 = vadd.f32 %v752, %v2152
        %v2154 = vpop.f32.mrf.mxu0
        %2155 = vmatprep.mubr.bf16.mxu0 0
        %2156 = vmatmul.mubr.bf16.gmra.mxu0 %v1140
        %v2157 = vpop.f32.mrf.mxu0
        %v2158 = vadd.f32 %v752, %v2157
        %v2159 = vpop.f32.mrf.mxu0
        %v2160 = vpop.f32.mrf.mxu0
        %v2161 = vadd.f32 %v752, %v2160
        %v2162 = vpop.f32.mrf.mxu0
        %2163 = vmatprep.mubr.bf16.mxu0 0
        %2164 = vmatmul.mubr.bf16.gmra.mxu0 %v1143
        %v2165 = vpop.f32.mrf.mxu0
        %v2166 = vadd.f32 %v752, %v2165
        %v2167 = vpop.f32.mrf.mxu0
        %v2168 = vpop.f32.mrf.mxu0
        %v2169 = vadd.f32 %v752, %v2168
        %v2170 = vpop.f32.mrf.mxu0
        %2171 = vmatprep.mubr.bf16.mxu0 0
        %2172 = vmatmul.mubr.bf16.gmra.mxu0 %v1146
        %v2173 = vpop.f32.mrf.mxu0
        %v2174 = vadd.f32 %v752, %v2173
        %v2175 = vpop.f32.mrf.mxu0
        %v2176 = vpop.f32.mrf.mxu0
        %v2177 = vadd.f32 %v752, %v2176
        %v2178 = vpop.f32.mrf.mxu0
        %2179 = vmatprep.mubr.bf16.mxu0 0
        %2180 = vmatmul.mubr.bf16.gmra.mxu0 %v1149
        %v2181 = vpop.f32.mrf.mxu0
        %v2182 = vadd.f32 %v752, %v2181
        %v2183 = vpop.f32.mrf.mxu0
        %v2184 = vpop.f32.mrf.mxu0
        %v2185 = vadd.f32 %v752, %v2184
        %v2186 = vpop.f32.mrf.mxu0
        %2187 = vmatprep.mubr.bf16.mxu0 0
        %2188 = vmatmul.mubr.bf16.gmra.mxu0 %v1152
        %v2189 = vpop.f32.mrf.mxu0
        %v2190 = vadd.f32 %v752, %v2189
        %v2191 = vpop.f32.mrf.mxu0
        %v2192 = vpop.f32.mrf.mxu0
        %v2193 = vadd.f32 %v752, %v2192
        %v2194 = vpop.f32.mrf.mxu0
        %2195 = vmatprep.mubr.bf16.mxu0 0
        %2196 = vmatmul.mubr.bf16.gmra.mxu0 %v1155
        %v2197 = vpop.f32.mrf.mxu0
        %v2198 = vadd.f32 %v752, %v2197
        %v2199 = vpop.f32.mrf.mxu0
        %v2200 = vpop.f32.mrf.mxu0
        %v2201 = vadd.f32 %v752, %v2200
        %v2202 = vpop.f32.mrf.mxu0
        %2203 = vmatprep.mubr.bf16.mxu0 0
        %2204 = vmatmul.mubr.bf16.gmra.mxu0 %v1158
        %v2205 = vpop.f32.mrf.mxu0
        %v2206 = vadd.f32 %v752, %v2205
        %v2207 = vpop.f32.mrf.mxu0
        %v2208 = vpop.f32.mrf.mxu0
        %v2209 = vadd.f32 %v752, %v2208
        %v2210 = vpop.f32.mrf.mxu0
        %2211 = vmatprep.mubr.bf16.mxu0 0
        %2212 = vmatmul.mubr.bf16.gmra.mxu0 %v1161
        %v2213 = vpop.f32.mrf.mxu0
        %v2214 = vadd.f32 %v752, %v2213
        %v2215 = vpop.f32.mrf.mxu0
        %v2216 = vpop.f32.mrf.mxu0
        %v2217 = vadd.f32 %v752, %v2216
        %v2218 = vpop.f32.mrf.mxu0
        %2219 = vdwg.mxu0
        %v2220 = vtanh.pop %v1198
        %v2221 = vtanh.pop %v1201
        %v2222 = vtanh.pop %v1206
        %v2223 = vtanh.pop %v1209
        %v2224 = vtanh.pop %v1214
        %v2225 = vtanh.pop %v1217
        %v2226 = vtanh.pop %v1222
        %v2227 = vtanh.pop %v1225
        %v2228 = vtanh.pop %v1230
        %v2229 = vtanh.pop %v1233
        %v2230 = vtanh.pop %v1238
        %v2231 = vtanh.pop %v1241
        %v2232 = vtanh.pop %v1246
        %v2233 = vtanh.pop %v1249
        %v2234 = vtanh.pop %v1254
        %v2235 = vtanh.pop %v1257
        %v2236 = vtanh.pop %v1262
        %v2237 = vtanh.pop %v1265
        %v2238 = vtanh.pop %v1270
        %v2239 = vtanh.pop %v1273
        %v2240 = vtanh.pop %v1278
        %v2241 = vtanh.pop %v1281
        %v2242 = vtanh.pop %v1286
        %v2243 = vtanh.pop %v1289
        %v2244 = vtanh.pop %v1294
        %v2245 = vtanh.pop %v1297
        %v2246 = vtanh.pop %v1302
        %v2247 = vtanh.pop %v1305
        %v2248 = vtanh.pop %v1310
        %v2249 = vtanh.pop %v1313
        %v2250 = vtanh.pop %v1318
        %v2251 = vtanh.pop %v1321
        %v2252 = vtanh.pop %v1326
        %v2253 = vtanh.pop %v1329
        %v2254 = vtanh.pop %v1334
        %v2255 = vtanh.pop %v1337
        %v2256 = vtanh.pop %v1342
        %v2257 = vtanh.pop %v1345
        %v2258 = vtanh.pop %v1350
        %v2259 = vtanh.pop %v1353
        %v2260 = vtanh.pop %v1358
        %v2261 = vtanh.pop %v1361
        %v2262 = vtanh.pop %v1366
        %v2263 = vtanh.pop %v1369
        %v2264 = vtanh.pop %v1374
        %v2265 = vtanh.pop %v1377
        %v2266 = vtanh.pop %v1382
        %v2267 = vtanh.pop %v1385
        %v2268 = vtanh.pop %v1390
        %v2269 = vtanh.pop %v1393
        %v2270 = vtanh.pop %v1398
        %v2271 = vtanh.pop %v1401
        %v2272 = vtanh.pop %v1406
        %v2273 = vtanh.pop %v1409
        %v2274 = vtanh.pop %v1414
        %v2275 = vtanh.pop %v1417
        %v2276 = vtanh.pop %v1422
        %v2277 = vtanh.pop %v1425
        %v2278 = vtanh.pop %v1430
        %v2279 = vtanh.pop %v1433
        %v2280 = vtanh.pop %v1438
        %v2281 = vtanh.pop %v1441
        %v2282 = vtanh.pop %v1446
        %v2283 = vtanh.pop %v1449
        %v2284 = vtanh.pop %v1454
        %v2285 = vtanh.pop %v1457
        %v2286 = vtanh.pop %v1462
        %v2287 = vtanh.pop %v1465
        %v2288 = vtanh.pop %v1470
        %v2289 = vtanh.pop %v1473
        %v2290 = vtanh.pop %v1478
        %v2291 = vtanh.pop %v1481
        %v2292 = vtanh.pop %v1486
        %v2293 = vtanh.pop %v1489
        %v2294 = vtanh.pop %v1494
        %v2295 = vtanh.pop %v1497
        %v2296 = vtanh.pop %v1502
        %v2297 = vtanh.pop %v1505
        %v2298 = vtanh.pop %v1510
        %v2299 = vtanh.pop %v1513
        %v2300 = vtanh.pop %v1518
        %v2301 = vtanh.pop %v1521
        %v2302 = vtanh.pop %v1526
        %v2303 = vtanh.pop %v1529
        %v2304 = vtanh.pop %v1534
        %v2305 = vtanh.pop %v1537
        %v2306 = vtanh.pop %v1542
        %v2307 = vtanh.pop %v1545
        %v2308 = vtanh.pop %v1550
        %v2309 = vtanh.pop %v1553
        %v2310 = vtanh.pop %v1558
        %v2311 = vtanh.pop %v1561
        %v2312 = vtanh.pop %v1566
        %v2313 = vtanh.pop %v1569
        %v2314 = vtanh.pop %v1574
        %v2315 = vtanh.pop %v1577
        %v2316 = vtanh.pop %v1582
        %v2317 = vtanh.pop %v1585
        %v2318 = vtanh.pop %v1590
        %v2319 = vtanh.pop %v1593
        %v2320 = vtanh.pop %v1598
        %v2321 = vtanh.pop %v1601
        %v2322 = vtanh.pop %v1606
        %v2323 = vtanh.pop %v1609
        %v2324 = vtanh.pop %v1614
        %v2325 = vtanh.pop %v1617
        %v2326 = vtanh.pop %v1622
        %v2327 = vtanh.pop %v1625
        %v2328 = vtanh.pop %v1630
        %v2329 = vtanh.pop %v1633
        %v2330 = vtanh.pop %v1638
        %v2331 = vtanh.pop %v1641
        %v2332 = vtanh.pop %v1646
        %v2333 = vtanh.pop %v1649
        %v2334 = vtanh.pop %v1654
        %v2335 = vtanh.pop %v1657
        %v2336 = vtanh.pop %v1662
        %v2337 = vtanh.pop %v1665
        %v2338 = vtanh.pop %v1670
        %v2339 = vtanh.pop %v1673
        %v2340 = vtanh.pop %v1678
        %v2341 = vtanh.pop %v1681
        %v2342 = vtanh.pop %v1686
        %v2343 = vtanh.pop %v1689
        %v2344 = vtanh.pop %v1694
        %v2345 = vtanh.pop %v1697
        %v2346 = vtanh.pop %v1702
        %v2347 = vtanh.pop %v1705
        %v2348 = vtanh.pop %v1710
        %v2349 = vtanh.pop %v1713
        %v2350 = vtanh.pop %v1718
        %v2351 = vtanh.pop %v1721
        %v2352 = vtanh.pop %v1726
        %v2353 = vtanh.pop %v1729
        %v2354 = vtanh.pop %v1734
        %v2355 = vtanh.pop %v1737
        %v2356 = vtanh.pop %v1742
        %v2357 = vtanh.pop %v1745
        %v2358 = vtanh.pop %v1750
        %v2359 = vtanh.pop %v1753
        %v2360 = vtanh.pop %v1758
        %v2361 = vtanh.pop %v1761
        %v2362 = vtanh.pop %v1766
        %v2363 = vtanh.pop %v1769
        %v2364 = vtanh.pop %v1774
        %v2365 = vtanh.pop %v1777
        %v2366 = vtanh.pop %v1782
        %v2367 = vtanh.pop %v1785
        %v2368 = vtanh.pop %v1790
        %v2369 = vtanh.pop %v1793
        %v2370 = vtanh.pop %v1798
        %v2371 = vtanh.pop %v1801
        %v2372 = vtanh.pop %v1806
        %v2373 = vtanh.pop %v1809
        %v2374 = vtanh.pop %v1814
        %v2375 = vtanh.pop %v1817
        %v2376 = vtanh.pop %v1822
        %v2377 = vtanh.pop %v1825
        %v2378 = vtanh.pop %v1830
        %v2379 = vtanh.pop %v1833
        %v2380 = vtanh.pop %v1838
        %v2381 = vtanh.pop %v1841
        %v2382 = vtanh.pop %v1846
        %v2383 = vtanh.pop %v1849
        %v2384 = vtanh.pop %v1854
        %v2385 = vtanh.pop %v1857
        %v2386 = vtanh.pop %v1862
        %v2387 = vtanh.pop %v1865
        %v2388 = vtanh.pop %v1870
        %v2389 = vtanh.pop %v1873
        %v2390 = vtanh.pop %v1878
        %v2391 = vtanh.pop %v1881
        %v2392 = vtanh.pop %v1886
        %v2393 = vtanh.pop %v1889
        %v2394 = vtanh.pop %v1894
        %v2395 = vtanh.pop %v1897
        %v2396 = vtanh.pop %v1902
        %v2397 = vtanh.pop %v1905
        %v2398 = vtanh.pop %v1910
        %v2399 = vtanh.pop %v1913
        %v2400 = vtanh.pop %v1918
        %v2401 = vtanh.pop %v1921
        %v2402 = vtanh.pop %v1926
        %v2403 = vtanh.pop %v1929
        %v2404 = vtanh.pop %v1934
        %v2405 = vtanh.pop %v1937
        %v2406 = vtanh.pop %v1942
        %v2407 = vtanh.pop %v1945
        %v2408 = vtanh.pop %v1950
        %v2409 = vtanh.pop %v1953
        %v2410 = vtanh.pop %v1958
        %v2411 = vtanh.pop %v1961
        %v2412 = vtanh.pop %v1966
        %v2413 = vtanh.pop %v1969
        %v2414 = vtanh.pop %v1974
        %v2415 = vtanh.pop %v1977
        %v2416 = vtanh.pop %v1982
        %v2417 = vtanh.pop %v1985
        %v2418 = vtanh.pop %v1990
        %v2419 = vtanh.pop %v1993
        %v2420 = vtanh.pop %v1998
        %v2421 = vtanh.pop %v2001
        %v2422 = vtanh.pop %v2006
        %v2423 = vtanh.pop %v2009
        %v2424 = vtanh.pop %v2014
        %v2425 = vtanh.pop %v2017
        %v2426 = vtanh.pop %v2022
        %v2427 = vtanh.pop %v2025
        %v2428 = vtanh.pop %v2030
        %v2429 = vtanh.pop %v2033
        %v2430 = vtanh.pop %v2038
        %v2431 = vtanh.pop %v2041
        %v2432 = vtanh.pop %v2046
        %v2433 = vtanh.pop %v2049
        %v2434 = vtanh.pop %v2054
        %v2435 = vtanh.pop %v2057
        %v2436 = vtanh.pop %v2062
        %v2437 = vtanh.pop %v2065
        %v2438 = vtanh.pop %v2070
        %v2439 = vtanh.pop %v2073
        %v2440 = vtanh.pop %v2078
        %v2441 = vtanh.pop %v2081
        %v2442 = vtanh.pop %v2086
        %v2443 = vtanh.pop %v2089
        %v2444 = vtanh.pop %v2094
        %v2445 = vtanh.pop %v2097
        %v2446 = vtanh.pop %v2102
        %v2447 = vtanh.pop %v2105
        %v2448 = vtanh.pop %v2110
        %v2449 = vtanh.pop %v2113
        %v2450 = vtanh.pop %v2118
        %v2451 = vtanh.pop %v2121
        %v2452 = vtanh.pop %v2126
        %v2453 = vtanh.pop %v2129
        %v2454 = vtanh.pop %v2134
        %v2455 = vtanh.pop %v2137
        %v2456 = vtanh.pop %v2142
        %v2457 = vtanh.pop %v2145
        %v2458 = vtanh.pop %v2150
        %v2459 = vtanh.pop %v2153
        %v2460 = vtanh.pop %v2158
        %v2461 = vtanh.pop %v2161
        %v2462 = vtanh.pop %v2166
        %v2463 = vtanh.pop %v2169
        %v2464 = vtanh.pop %v2174
        %v2465 = vtanh.pop %v2177
        %v2466 = vtanh.pop %v2182
        %v2467 = vtanh.pop %v2185
        %v2468 = vtanh.pop %v2190
        %v2469 = vtanh.pop %v2193
        %v2470 = vtanh.pop %v2198
        %v2471 = vtanh.pop %v2201
        %v2472 = vtanh.pop %v2206
        %v2473 = vtanh.pop %v2209
        %v2474 = vtanh.pop %v2214
        %v2475 = vtanh.pop %v2217
        %v2476 = vpack.c.bf16 %v2221, %v2220
        %v2477 = vpack.c.bf16 %v2223, %v2222
        %v2478 = vpack.c.bf16 %v2225, %v2224
        %v2479 = vpack.c.bf16 %v2227, %v2226
        %v2480 = vpack.c.bf16 %v2229, %v2228
        %v2481 = vpack.c.bf16 %v2231, %v2230
        %v2482 = vpack.c.bf16 %v2233, %v2232
        %v2483 = vpack.c.bf16 %v2235, %v2234
        %v2484 = vpack.c.bf16 %v2237, %v2236
        %v2485 = vpack.c.bf16 %v2239, %v2238
        %v2486 = vpack.c.bf16 %v2241, %v2240
        %v2487 = vpack.c.bf16 %v2243, %v2242
        %v2488 = vpack.c.bf16 %v2245, %v2244
        %v2489 = vpack.c.bf16 %v2247, %v2246
        %v2490 = vpack.c.bf16 %v2249, %v2248
        %v2491 = vpack.c.bf16 %v2251, %v2250
        %v2492 = vpack.c.bf16 %v2253, %v2252
        %v2493 = vpack.c.bf16 %v2255, %v2254
        %v2494 = vpack.c.bf16 %v2257, %v2256
        %v2495 = vpack.c.bf16 %v2259, %v2258
        %v2496 = vpack.c.bf16 %v2261, %v2260
        %v2497 = vpack.c.bf16 %v2263, %v2262
        %v2498 = vpack.c.bf16 %v2265, %v2264
        %v2499 = vpack.c.bf16 %v2267, %v2266
        %v2500 = vpack.c.bf16 %v2269, %v2268
        %v2501 = vpack.c.bf16 %v2271, %v2270
        %v2502 = vpack.c.bf16 %v2273, %v2272
        %v2503 = vpack.c.bf16 %v2275, %v2274
        %v2504 = vpack.c.bf16 %v2277, %v2276
        %v2505 = vpack.c.bf16 %v2279, %v2278
        %v2506 = vpack.c.bf16 %v2281, %v2280
        %v2507 = vpack.c.bf16 %v2283, %v2282
        %v2508 = vpack.c.bf16 %v2285, %v2284
        %v2509 = vpack.c.bf16 %v2287, %v2286
        %v2510 = vpack.c.bf16 %v2289, %v2288
        %v2511 = vpack.c.bf16 %v2291, %v2290
        %v2512 = vpack.c.bf16 %v2293, %v2292
        %v2513 = vpack.c.bf16 %v2295, %v2294
        %v2514 = vpack.c.bf16 %v2297, %v2296
        %v2515 = vpack.c.bf16 %v2299, %v2298
        %v2516 = vpack.c.bf16 %v2301, %v2300
        %v2517 = vpack.c.bf16 %v2303, %v2302
        %v2518 = vpack.c.bf16 %v2305, %v2304
        %v2519 = vpack.c.bf16 %v2307, %v2306
        %v2520 = vpack.c.bf16 %v2309, %v2308
        %v2521 = vpack.c.bf16 %v2311, %v2310
        %v2522 = vpack.c.bf16 %v2313, %v2312
        %v2523 = vpack.c.bf16 %v2315, %v2314
        %v2524 = vpack.c.bf16 %v2317, %v2316
        %v2525 = vpack.c.bf16 %v2319, %v2318
        %v2526 = vpack.c.bf16 %v2321, %v2320
        %v2527 = vpack.c.bf16 %v2323, %v2322
        %v2528 = vpack.c.bf16 %v2325, %v2324
        %v2529 = vpack.c.bf16 %v2327, %v2326
        %v2530 = vpack.c.bf16 %v2329, %v2328
        %v2531 = vpack.c.bf16 %v2331, %v2330
        %v2532 = vpack.c.bf16 %v2333, %v2332
        %v2533 = vpack.c.bf16 %v2335, %v2334
        %v2534 = vpack.c.bf16 %v2337, %v2336
        %v2535 = vpack.c.bf16 %v2339, %v2338
        %v2536 = vpack.c.bf16 %v2341, %v2340
        %v2537 = vpack.c.bf16 %v2343, %v2342
        %v2538 = vpack.c.bf16 %v2345, %v2344
        %v2539 = vpack.c.bf16 %v2347, %v2346
        %v2540 = vpack.c.bf16 %v2349, %v2348
        %v2541 = vpack.c.bf16 %v2351, %v2350
        %v2542 = vpack.c.bf16 %v2353, %v2352
        %v2543 = vpack.c.bf16 %v2355, %v2354
        %v2544 = vpack.c.bf16 %v2357, %v2356
        %v2545 = vpack.c.bf16 %v2359, %v2358
        %v2546 = vpack.c.bf16 %v2361, %v2360
        %v2547 = vpack.c.bf16 %v2363, %v2362
        %v2548 = vpack.c.bf16 %v2365, %v2364
        %v2549 = vpack.c.bf16 %v2367, %v2366
        %v2550 = vpack.c.bf16 %v2369, %v2368
        %v2551 = vpack.c.bf16 %v2371, %v2370
        %v2552 = vpack.c.bf16 %v2373, %v2372
        %v2553 = vpack.c.bf16 %v2375, %v2374
        %v2554 = vpack.c.bf16 %v2377, %v2376
        %v2555 = vpack.c.bf16 %v2379, %v2378
        %v2556 = vpack.c.bf16 %v2381, %v2380
        %v2557 = vpack.c.bf16 %v2383, %v2382
        %v2558 = vpack.c.bf16 %v2385, %v2384
        %v2559 = vpack.c.bf16 %v2387, %v2386
        %v2560 = vpack.c.bf16 %v2389, %v2388
        %v2561 = vpack.c.bf16 %v2391, %v2390
        %v2562 = vpack.c.bf16 %v2393, %v2392
        %v2563 = vpack.c.bf16 %v2395, %v2394
        %v2564 = vpack.c.bf16 %v2397, %v2396
        %v2565 = vpack.c.bf16 %v2399, %v2398
        %v2566 = vpack.c.bf16 %v2401, %v2400
        %v2567 = vpack.c.bf16 %v2403, %v2402
        %v2568 = vpack.c.bf16 %v2405, %v2404
        %v2569 = vpack.c.bf16 %v2407, %v2406
        %v2570 = vpack.c.bf16 %v2409, %v2408
        %v2571 = vpack.c.bf16 %v2411, %v2410
        %v2572 = vpack.c.bf16 %v2413, %v2412
        %v2573 = vpack.c.bf16 %v2415, %v2414
        %v2574 = vpack.c.bf16 %v2417, %v2416
        %v2575 = vpack.c.bf16 %v2419, %v2418
        %v2576 = vpack.c.bf16 %v2421, %v2420
        %v2577 = vpack.c.bf16 %v2423, %v2422
        %v2578 = vpack.c.bf16 %v2425, %v2424
        %v2579 = vpack.c.bf16 %v2427, %v2426
        %v2580 = vpack.c.bf16 %v2429, %v2428
        %v2581 = vpack.c.bf16 %v2431, %v2430
        %v2582 = vpack.c.bf16 %v2433, %v2432
        %v2583 = vpack.c.bf16 %v2435, %v2434
        %v2584 = vpack.c.bf16 %v2437, %v2436
        %v2585 = vpack.c.bf16 %v2439, %v2438
        %v2586 = vpack.c.bf16 %v2441, %v2440
        %v2587 = vpack.c.bf16 %v2443, %v2442
        %v2588 = vpack.c.bf16 %v2445, %v2444
        %v2589 = vpack.c.bf16 %v2447, %v2446
        %v2590 = vpack.c.bf16 %v2449, %v2448
        %v2591 = vpack.c.bf16 %v2451, %v2450
        %v2592 = vpack.c.bf16 %v2453, %v2452
        %v2593 = vpack.c.bf16 %v2455, %v2454
        %v2594 = vpack.c.bf16 %v2457, %v2456
        %v2595 = vpack.c.bf16 %v2459, %v2458
        %v2596 = vpack.c.bf16 %v2461, %v2460
        %v2597 = vpack.c.bf16 %v2463, %v2462
        %v2598 = vpack.c.bf16 %v2465, %v2464
        %v2599 = vpack.c.bf16 %v2467, %v2466
        %v2600 = vpack.c.bf16 %v2469, %v2468
        %v2601 = vpack.c.bf16 %v2471, %v2470
        %v2602 = vpack.c.bf16 %v2473, %v2472
        %v2603 = vpack.c.bf16 %v2475, %v2474
        %v2604 = vld [vmem:[%s3] sm:$0xf]
        %v2605 = vld [vmem:[%s3 + $0x4] sm:$0xf]
        %v2606 = vld [vmem:[%s3 + $0x8] sm:$0xf]
        %v2607 = vld [vmem:[%s3 + $0xc] sm:$0xf]
        %v2608 = vld [vmem:[%s3 + $0x10] sm:$0xf]
        %v2609 = vld [vmem:[%s3 + $0x14] sm:$0xf]
        %v2610 = vld [vmem:[%s3 + $0x18] sm:$0xf]
        %v2611 = vld [vmem:[%s3 + $0x1c] sm:$0xf]
        %v2612 = vld [vmem:[%s3 + $0x20] sm:$0xf]
        %v2613 = vld [vmem:[%s3 + $0x24] sm:$0xf]
        %v2614 = vld [vmem:[%s3 + $0x28] sm:$0xf]
        %v2615 = vld [vmem:[%s3 + $0x2c] sm:$0xf]
        %v2616 = vld [vmem:[%s3 + $0x30] sm:$0xf]
        %v2617 = vld [vmem:[%s3 + $0x34] sm:$0xf]
        %v2618 = vld [vmem:[%s3 + $0x38] sm:$0xf]
        %v2619 = vld [vmem:[%s3 + $0x3c] sm:$0xf]
        %v2620 = vld [vmem:[%s4] sm:$0x1]
        %v2622 = vlaneseq
        %v2623 = vshrl.u32 %v2622, 7
        %v2624 = vsub.s32 0, %v2623
        %v2625 = vrot.slane %v2620, %v2624
        %v2643 = vunpack.c.l.b16 %v2604
        %v2644 = vunpack.c.l.b16 %v2605
        %v2645 = vunpack.c.l.b16 %v2606
        %v2646 = vunpack.c.l.b16 %v2607
        %v2647 = vunpack.c.l.b16 %v2608
        %v2648 = vunpack.c.l.b16 %v2609
        %v2649 = vunpack.c.l.b16 %v2610
        %v2650 = vunpack.c.l.b16 %v2611
        %v2651 = vunpack.c.l.b16 %v2612
        %v2652 = vunpack.c.l.b16 %v2613
        %v2653 = vunpack.c.l.b16 %v2614
        %v2654 = vunpack.c.l.b16 %v2615
        %v2655 = vunpack.c.l.b16 %v2616
        %v2656 = vunpack.c.l.b16 %v2617
        %v2657 = vunpack.c.l.b16 %v2618
        %v2658 = vunpack.c.l.b16 %v2619
        %v2659 = vpack.c.b16 %v2644, %v2643
        %v2660 = vpack.c.b16 %v2646, %v2645
        %v2661 = vpack.c.b16 %v2648, %v2647
        %v2662 = vpack.c.b16 %v2650, %v2649
        %v2663 = vpack.c.b16 %v2652, %v2651
        %v2664 = vpack.c.b16 %v2654, %v2653
        %v2665 = vpack.c.b16 %v2656, %v2655
        %v2666 = vpack.c.b16 %v2658, %v2657
        %2675 = vmatprep.subr.bf16.mxu0 0
        %2676 = vmatpush1.bf16.msra.mxu0 %v2666
        %2677 = vmatprep.subr.bf16.mxu0 0
        %2678 = vmatpush1.bf16.msra.mxu0 %v2665
        %2679 = vmatprep.subr.bf16.mxu0 0
        %2680 = vmatpush1.bf16.msra.mxu0 %v2664
        %2681 = vmatprep.subr.bf16.mxu0 0
        %2682 = vmatpush1.bf16.msra.mxu0 %v2663
        %2683 = vmatprep.subr.bf16.mxu0 0
        %2684 = vmatpush1.bf16.msra.mxu0 %v2662
        %2685 = vmatprep.subr.bf16.mxu0 0
        %2686 = vmatpush1.bf16.msra.mxu0 %v2661
        %2687 = vmatprep.subr.bf16.mxu0 0
        %2688 = vmatpush1.bf16.msra.mxu0 %v2660
        %2689 = vmatprep.subr.bf16.mxu0 0
        %2690 = vmatpush1.bf16.msra.mxu0 %v2659
        %2691 = vmatprep.subr.bf16.mxu0 0
        %2692 = vmatpush2.bf16.msra.mxu0 0
        %2693 = vmatprep.subr.bf16.mxu0 0
        %2694 = vmatpush2.bf16.msra.mxu0 0
        %2695 = vmatprep.subr.bf16.mxu0 0
        %2696 = vmatpush2.bf16.msra.mxu0 0
        %2697 = vmatprep.subr.bf16.mxu0 0
        %2698 = vmatpush2.bf16.msra.mxu0 0
        %2699 = vmatprep.subr.bf16.mxu0 0
        %2700 = vmatpush2.bf16.msra.mxu0 0
        %2701 = vmatprep.subr.bf16.mxu0 0
        %2702 = vmatpush2.bf16.msra.mxu0 0
        %2703 = vmatprep.subr.bf16.mxu0 0
        %2704 = vmatpush2.bf16.msra.mxu0 0
        %2705 = vmatprep.subr.bf16.mxu0 0
        %2706 = vmatpush2.bf16.msra.mxu0 0
        %2707 = vmatprep.mubr.bf16.mxu0 0
        %2708 = vmatmul.mubr.bf16.gmra.mxu0 %v2476
        %v2709 = vpop.f32.mrf.mxu0
        %v2710 = vadd.f32 %v2625, %v2709
        %v2711 = vpop.f32.mrf.mxu0
        %v2712 = vpop.f32.mrf.mxu0
        %v2713 = vadd.f32 %v2625, %v2712
        %v2714 = vpop.f32.mrf.mxu0
        %2715 = vmatprep.mubr.bf16.mxu0 0
        %2716 = vmatmul.mubr.bf16.gmra.mxu0 %v2477
        %v2717 = vpop.f32.mrf.mxu0
        %v2718 = vadd.f32 %v2625, %v2717
        %v2719 = vpop.f32.mrf.mxu0
        %v2720 = vpop.f32.mrf.mxu0
        %v2721 = vadd.f32 %v2625, %v2720
        %v2722 = vpop.f32.mrf.mxu0
        %2723 = vmatprep.mubr.bf16.mxu0 0
        %2724 = vmatmul.mubr.bf16.gmra.mxu0 %v2478
        %v2725 = vpop.f32.mrf.mxu0
        %v2726 = vadd.f32 %v2625, %v2725
        %v2727 = vpop.f32.mrf.mxu0
        %v2728 = vpop.f32.mrf.mxu0
        %v2729 = vadd.f32 %v2625, %v2728
        %v2730 = vpop.f32.mrf.mxu0
        %2731 = vmatprep.mubr.bf16.mxu0 0
        %2732 = vmatmul.mubr.bf16.gmra.mxu0 %v2479
        %v2733 = vpop.f32.mrf.mxu0
        %v2734 = vadd.f32 %v2625, %v2733
        %v2735 = vpop.f32.mrf.mxu0
        %v2736 = vpop.f32.mrf.mxu0
        %v2737 = vadd.f32 %v2625, %v2736
        %v2738 = vpop.f32.mrf.mxu0
        %2739 = vmatprep.mubr.bf16.mxu0 0
        %2740 = vmatmul.mubr.bf16.gmra.mxu0 %v2480
        %v2741 = vpop.f32.mrf.mxu0
        %v2742 = vadd.f32 %v2625, %v2741
        %v2743 = vpop.f32.mrf.mxu0
        %v2744 = vpop.f32.mrf.mxu0
        %v2745 = vadd.f32 %v2625, %v2744
        %v2746 = vpop.f32.mrf.mxu0
        %2747 = vmatprep.mubr.bf16.mxu0 0
        %2748 = vmatmul.mubr.bf16.gmra.mxu0 %v2481
        %v2749 = vpop.f32.mrf.mxu0
        %v2750 = vadd.f32 %v2625, %v2749
        %v2751 = vpop.f32.mrf.mxu0
        %v2752 = vpop.f32.mrf.mxu0
        %v2753 = vadd.f32 %v2625, %v2752
        %v2754 = vpop.f32.mrf.mxu0
        %2755 = vmatprep.mubr.bf16.mxu0 0
        %2756 = vmatmul.mubr.bf16.gmra.mxu0 %v2482
        %v2757 = vpop.f32.mrf.mxu0
        %v2758 = vadd.f32 %v2625, %v2757
        %v2759 = vpop.f32.mrf.mxu0
        %v2760 = vpop.f32.mrf.mxu0
        %v2761 = vadd.f32 %v2625, %v2760
        %v2762 = vpop.f32.mrf.mxu0
        %2763 = vmatprep.mubr.bf16.mxu0 0
        %2764 = vmatmul.mubr.bf16.gmra.mxu0 %v2483
        %v2765 = vpop.f32.mrf.mxu0
        %v2766 = vadd.f32 %v2625, %v2765
        %v2767 = vpop.f32.mrf.mxu0
        %v2768 = vpop.f32.mrf.mxu0
        %v2769 = vadd.f32 %v2625, %v2768
        %v2770 = vpop.f32.mrf.mxu0
        %2771 = vmatprep.mubr.bf16.mxu0 0
        %2772 = vmatmul.mubr.bf16.gmra.mxu0 %v2484
        %v2773 = vpop.f32.mrf.mxu0
        %v2774 = vadd.f32 %v2625, %v2773
        %v2775 = vpop.f32.mrf.mxu0
        %v2776 = vpop.f32.mrf.mxu0
        %v2777 = vadd.f32 %v2625, %v2776
        %v2778 = vpop.f32.mrf.mxu0
        %2779 = vmatprep.mubr.bf16.mxu0 0
        %2780 = vmatmul.mubr.bf16.gmra.mxu0 %v2485
        %v2781 = vpop.f32.mrf.mxu0
        %v2782 = vadd.f32 %v2625, %v2781
        %v2783 = vpop.f32.mrf.mxu0
        %v2784 = vpop.f32.mrf.mxu0
        %v2785 = vadd.f32 %v2625, %v2784
        %v2786 = vpop.f32.mrf.mxu0
        %2787 = vmatprep.mubr.bf16.mxu0 0
        %2788 = vmatmul.mubr.bf16.gmra.mxu0 %v2486
        %v2789 = vpop.f32.mrf.mxu0
        %v2790 = vadd.f32 %v2625, %v2789
        %v2791 = vpop.f32.mrf.mxu0
        %v2792 = vpop.f32.mrf.mxu0
        %v2793 = vadd.f32 %v2625, %v2792
        %v2794 = vpop.f32.mrf.mxu0
        %2795 = vmatprep.mubr.bf16.mxu0 0
        %2796 = vmatmul.mubr.bf16.gmra.mxu0 %v2487
        %v2797 = vpop.f32.mrf.mxu0
        %v2798 = vadd.f32 %v2625, %v2797
        %v2799 = vpop.f32.mrf.mxu0
        %v2800 = vpop.f32.mrf.mxu0
        %v2801 = vadd.f32 %v2625, %v2800
        %v2802 = vpop.f32.mrf.mxu0
        %2803 = vmatprep.mubr.bf16.mxu0 0
        %2804 = vmatmul.mubr.bf16.gmra.mxu0 %v2488
        %v2805 = vpop.f32.mrf.mxu0
        %v2806 = vadd.f32 %v2625, %v2805
        %v2807 = vpop.f32.mrf.mxu0
        %v2808 = vpop.f32.mrf.mxu0
        %v2809 = vadd.f32 %v2625, %v2808
        %v2810 = vpop.f32.mrf.mxu0
        %2811 = vmatprep.mubr.bf16.mxu0 0
        %2812 = vmatmul.mubr.bf16.gmra.mxu0 %v2489
        %v2813 = vpop.f32.mrf.mxu0
        %v2814 = vadd.f32 %v2625, %v2813
        %v2815 = vpop.f32.mrf.mxu0
        %v2816 = vpop.f32.mrf.mxu0
        %v2817 = vadd.f32 %v2625, %v2816
        %v2818 = vpop.f32.mrf.mxu0
        %2819 = vmatprep.mubr.bf16.mxu0 0
        %2820 = vmatmul.mubr.bf16.gmra.mxu0 %v2490
        %v2821 = vpop.f32.mrf.mxu0
        %v2822 = vadd.f32 %v2625, %v2821
        %v2823 = vpop.f32.mrf.mxu0
        %v2824 = vpop.f32.mrf.mxu0
        %v2825 = vadd.f32 %v2625, %v2824
        %v2826 = vpop.f32.mrf.mxu0
        %2827 = vmatprep.mubr.bf16.mxu0 0
        %2828 = vmatmul.mubr.bf16.gmra.mxu0 %v2491
        %v2829 = vpop.f32.mrf.mxu0
        %v2830 = vadd.f32 %v2625, %v2829
        %v2831 = vpop.f32.mrf.mxu0
        %v2832 = vpop.f32.mrf.mxu0
        %v2833 = vadd.f32 %v2625, %v2832
        %v2834 = vpop.f32.mrf.mxu0
        %2835 = vmatprep.mubr.bf16.mxu0 0
        %2836 = vmatmul.mubr.bf16.gmra.mxu0 %v2492
        %v2837 = vpop.f32.mrf.mxu0
        %v2838 = vadd.f32 %v2625, %v2837
        %v2839 = vpop.f32.mrf.mxu0
        %v2840 = vpop.f32.mrf.mxu0
        %v2841 = vadd.f32 %v2625, %v2840
        %v2842 = vpop.f32.mrf.mxu0
        %2843 = vmatprep.mubr.bf16.mxu0 0
        %2844 = vmatmul.mubr.bf16.gmra.mxu0 %v2493
        %v2845 = vpop.f32.mrf.mxu0
        %v2846 = vadd.f32 %v2625, %v2845
        %v2847 = vpop.f32.mrf.mxu0
        %v2848 = vpop.f32.mrf.mxu0
        %v2849 = vadd.f32 %v2625, %v2848
        %v2850 = vpop.f32.mrf.mxu0
        %2851 = vmatprep.mubr.bf16.mxu0 0
        %2852 = vmatmul.mubr.bf16.gmra.mxu0 %v2494
        %v2853 = vpop.f32.mrf.mxu0
        %v2854 = vadd.f32 %v2625, %v2853
        %v2855 = vpop.f32.mrf.mxu0
        %v2856 = vpop.f32.mrf.mxu0
        %v2857 = vadd.f32 %v2625, %v2856
        %v2858 = vpop.f32.mrf.mxu0
        %2859 = vmatprep.mubr.bf16.mxu0 0
        %2860 = vmatmul.mubr.bf16.gmra.mxu0 %v2495
        %v2861 = vpop.f32.mrf.mxu0
        %v2862 = vadd.f32 %v2625, %v2861
        %v2863 = vpop.f32.mrf.mxu0
        %v2864 = vpop.f32.mrf.mxu0
        %v2865 = vadd.f32 %v2625, %v2864
        %v2866 = vpop.f32.mrf.mxu0
        %2867 = vmatprep.mubr.bf16.mxu0 0
        %2868 = vmatmul.mubr.bf16.gmra.mxu0 %v2496
        %v2869 = vpop.f32.mrf.mxu0
        %v2870 = vadd.f32 %v2625, %v2869
        %v2871 = vpop.f32.mrf.mxu0
        %v2872 = vpop.f32.mrf.mxu0
        %v2873 = vadd.f32 %v2625, %v2872
        %v2874 = vpop.f32.mrf.mxu0
        %2875 = vmatprep.mubr.bf16.mxu0 0
        %2876 = vmatmul.mubr.bf16.gmra.mxu0 %v2497
        %v2877 = vpop.f32.mrf.mxu0
        %v2878 = vadd.f32 %v2625, %v2877
        %v2879 = vpop.f32.mrf.mxu0
        %v2880 = vpop.f32.mrf.mxu0
        %v2881 = vadd.f32 %v2625, %v2880
        %v2882 = vpop.f32.mrf.mxu0
        %2883 = vmatprep.mubr.bf16.mxu0 0
        %2884 = vmatmul.mubr.bf16.gmra.mxu0 %v2498
        %v2885 = vpop.f32.mrf.mxu0
        %v2886 = vadd.f32 %v2625, %v2885
        %v2887 = vpop.f32.mrf.mxu0
        %v2888 = vpop.f32.mrf.mxu0
        %v2889 = vadd.f32 %v2625, %v2888
        %v2890 = vpop.f32.mrf.mxu0
        %2891 = vmatprep.mubr.bf16.mxu0 0
        %2892 = vmatmul.mubr.bf16.gmra.mxu0 %v2499
        %v2893 = vpop.f32.mrf.mxu0
        %v2894 = vadd.f32 %v2625, %v2893
        %v2895 = vpop.f32.mrf.mxu0
        %v2896 = vpop.f32.mrf.mxu0
        %v2897 = vadd.f32 %v2625, %v2896
        %v2898 = vpop.f32.mrf.mxu0
        %2899 = vmatprep.mubr.bf16.mxu0 0
        %2900 = vmatmul.mubr.bf16.gmra.mxu0 %v2500
        %v2901 = vpop.f32.mrf.mxu0
        %v2902 = vadd.f32 %v2625, %v2901
        %v2903 = vpop.f32.mrf.mxu0
        %v2904 = vpop.f32.mrf.mxu0
        %v2905 = vadd.f32 %v2625, %v2904
        %v2906 = vpop.f32.mrf.mxu0
        %2907 = vmatprep.mubr.bf16.mxu0 0
        %2908 = vmatmul.mubr.bf16.gmra.mxu0 %v2501
        %v2909 = vpop.f32.mrf.mxu0
        %v2910 = vadd.f32 %v2625, %v2909
        %v2911 = vpop.f32.mrf.mxu0
        %v2912 = vpop.f32.mrf.mxu0
        %v2913 = vadd.f32 %v2625, %v2912
        %v2914 = vpop.f32.mrf.mxu0
        %2915 = vmatprep.mubr.bf16.mxu0 0
        %2916 = vmatmul.mubr.bf16.gmra.mxu0 %v2502
        %v2917 = vpop.f32.mrf.mxu0
        %v2918 = vadd.f32 %v2625, %v2917
        %v2919 = vpop.f32.mrf.mxu0
        %v2920 = vpop.f32.mrf.mxu0
        %v2921 = vadd.f32 %v2625, %v2920
        %v2922 = vpop.f32.mrf.mxu0
        %2923 = vmatprep.mubr.bf16.mxu0 0
        %2924 = vmatmul.mubr.bf16.gmra.mxu0 %v2503
        %v2925 = vpop.f32.mrf.mxu0
        %v2926 = vadd.f32 %v2625, %v2925
        %v2927 = vpop.f32.mrf.mxu0
        %v2928 = vpop.f32.mrf.mxu0
        %v2929 = vadd.f32 %v2625, %v2928
        %v2930 = vpop.f32.mrf.mxu0
        %2931 = vmatprep.mubr.bf16.mxu0 0
        %2932 = vmatmul.mubr.bf16.gmra.mxu0 %v2504
        %v2933 = vpop.f32.mrf.mxu0
        %v2934 = vadd.f32 %v2625, %v2933
        %v2935 = vpop.f32.mrf.mxu0
        %v2936 = vpop.f32.mrf.mxu0
        %v2937 = vadd.f32 %v2625, %v2936
        %v2938 = vpop.f32.mrf.mxu0
        %2939 = vmatprep.mubr.bf16.mxu0 0
        %2940 = vmatmul.mubr.bf16.gmra.mxu0 %v2505
        %v2941 = vpop.f32.mrf.mxu0
        %v2942 = vadd.f32 %v2625, %v2941
        %v2943 = vpop.f32.mrf.mxu0
        %v2944 = vpop.f32.mrf.mxu0
        %v2945 = vadd.f32 %v2625, %v2944
        %v2946 = vpop.f32.mrf.mxu0
        %2947 = vmatprep.mubr.bf16.mxu0 0
        %2948 = vmatmul.mubr.bf16.gmra.mxu0 %v2506
        %v2949 = vpop.f32.mrf.mxu0
        %v2950 = vadd.f32 %v2625, %v2949
        %v2951 = vpop.f32.mrf.mxu0
        %v2952 = vpop.f32.mrf.mxu0
        %v2953 = vadd.f32 %v2625, %v2952
        %v2954 = vpop.f32.mrf.mxu0
        %2955 = vmatprep.mubr.bf16.mxu0 0
        %2956 = vmatmul.mubr.bf16.gmra.mxu0 %v2507
        %v2957 = vpop.f32.mrf.mxu0
        %v2958 = vadd.f32 %v2625, %v2957
        %v2959 = vpop.f32.mrf.mxu0
        %v2960 = vpop.f32.mrf.mxu0
        %v2961 = vadd.f32 %v2625, %v2960
        %v2962 = vpop.f32.mrf.mxu0
        %2963 = vmatprep.mubr.bf16.mxu0 0
        %2964 = vmatmul.mubr.bf16.gmra.mxu0 %v2508
        %v2965 = vpop.f32.mrf.mxu0
        %v2966 = vadd.f32 %v2625, %v2965
        %v2967 = vpop.f32.mrf.mxu0
        %v2968 = vpop.f32.mrf.mxu0
        %v2969 = vadd.f32 %v2625, %v2968
        %v2970 = vpop.f32.mrf.mxu0
        %2971 = vmatprep.mubr.bf16.mxu0 0
        %2972 = vmatmul.mubr.bf16.gmra.mxu0 %v2509
        %v2973 = vpop.f32.mrf.mxu0
        %v2974 = vadd.f32 %v2625, %v2973
        %v2975 = vpop.f32.mrf.mxu0
        %v2976 = vpop.f32.mrf.mxu0
        %v2977 = vadd.f32 %v2625, %v2976
        %v2978 = vpop.f32.mrf.mxu0
        %2979 = vmatprep.mubr.bf16.mxu0 0
        %2980 = vmatmul.mubr.bf16.gmra.mxu0 %v2510
        %v2981 = vpop.f32.mrf.mxu0
        %v2982 = vadd.f32 %v2625, %v2981
        %v2983 = vpop.f32.mrf.mxu0
        %v2984 = vpop.f32.mrf.mxu0
        %v2985 = vadd.f32 %v2625, %v2984
        %v2986 = vpop.f32.mrf.mxu0
        %2987 = vmatprep.mubr.bf16.mxu0 0
        %2988 = vmatmul.mubr.bf16.gmra.mxu0 %v2511
        %v2989 = vpop.f32.mrf.mxu0
        %v2990 = vadd.f32 %v2625, %v2989
        %v2991 = vpop.f32.mrf.mxu0
        %v2992 = vpop.f32.mrf.mxu0
        %v2993 = vadd.f32 %v2625, %v2992
        %v2994 = vpop.f32.mrf.mxu0
        %2995 = vmatprep.mubr.bf16.mxu0 0
        %2996 = vmatmul.mubr.bf16.gmra.mxu0 %v2512
        %v2997 = vpop.f32.mrf.mxu0
        %v2998 = vadd.f32 %v2625, %v2997
        %v2999 = vpop.f32.mrf.mxu0
        %v3000 = vpop.f32.mrf.mxu0
        %v3001 = vadd.f32 %v2625, %v3000
        %v3002 = vpop.f32.mrf.mxu0
        %3003 = vmatprep.mubr.bf16.mxu0 0
        %3004 = vmatmul.mubr.bf16.gmra.mxu0 %v2513
        %v3005 = vpop.f32.mrf.mxu0
        %v3006 = vadd.f32 %v2625, %v3005
        %v3007 = vpop.f32.mrf.mxu0
        %v3008 = vpop.f32.mrf.mxu0
        %v3009 = vadd.f32 %v2625, %v3008
        %v3010 = vpop.f32.mrf.mxu0
        %3011 = vmatprep.mubr.bf16.mxu0 0
        %3012 = vmatmul.mubr.bf16.gmra.mxu0 %v2514
        %v3013 = vpop.f32.mrf.mxu0
        %v3014 = vadd.f32 %v2625, %v3013
        %v3015 = vpop.f32.mrf.mxu0
        %v3016 = vpop.f32.mrf.mxu0
        %v3017 = vadd.f32 %v2625, %v3016
        %v3018 = vpop.f32.mrf.mxu0
        %3019 = vmatprep.mubr.bf16.mxu0 0
        %3020 = vmatmul.mubr.bf16.gmra.mxu0 %v2515
        %v3021 = vpop.f32.mrf.mxu0
        %v3022 = vadd.f32 %v2625, %v3021
        %v3023 = vpop.f32.mrf.mxu0
        %v3024 = vpop.f32.mrf.mxu0
        %v3025 = vadd.f32 %v2625, %v3024
        %v3026 = vpop.f32.mrf.mxu0
        %3027 = vmatprep.mubr.bf16.mxu0 0
        %3028 = vmatmul.mubr.bf16.gmra.mxu0 %v2516
        %v3029 = vpop.f32.mrf.mxu0
        %v3030 = vadd.f32 %v2625, %v3029
        %v3031 = vpop.f32.mrf.mxu0
        %v3032 = vpop.f32.mrf.mxu0
        %v3033 = vadd.f32 %v2625, %v3032
        %v3034 = vpop.f32.mrf.mxu0
        %3035 = vmatprep.mubr.bf16.mxu0 0
        %3036 = vmatmul.mubr.bf16.gmra.mxu0 %v2517
        %v3037 = vpop.f32.mrf.mxu0
        %v3038 = vadd.f32 %v2625, %v3037
        %v3039 = vpop.f32.mrf.mxu0
        %v3040 = vpop.f32.mrf.mxu0
        %v3041 = vadd.f32 %v2625, %v3040
        %v3042 = vpop.f32.mrf.mxu0
        %3043 = vmatprep.mubr.bf16.mxu0 0
        %3044 = vmatmul.mubr.bf16.gmra.mxu0 %v2518
        %v3045 = vpop.f32.mrf.mxu0
        %v3046 = vadd.f32 %v2625, %v3045
        %v3047 = vpop.f32.mrf.mxu0
        %v3048 = vpop.f32.mrf.mxu0
        %v3049 = vadd.f32 %v2625, %v3048
        %v3050 = vpop.f32.mrf.mxu0
        %3051 = vmatprep.mubr.bf16.mxu0 0
        %3052 = vmatmul.mubr.bf16.gmra.mxu0 %v2519
        %v3053 = vpop.f32.mrf.mxu0
        %v3054 = vadd.f32 %v2625, %v3053
        %v3055 = vpop.f32.mrf.mxu0
        %v3056 = vpop.f32.mrf.mxu0
        %v3057 = vadd.f32 %v2625, %v3056
        %v3058 = vpop.f32.mrf.mxu0
        %3059 = vmatprep.mubr.bf16.mxu0 0
        %3060 = vmatmul.mubr.bf16.gmra.mxu0 %v2520
        %v3061 = vpop.f32.mrf.mxu0
        %v3062 = vadd.f32 %v2625, %v3061
        %v3063 = vpop.f32.mrf.mxu0
        %v3064 = vpop.f32.mrf.mxu0
        %v3065 = vadd.f32 %v2625, %v3064
        %v3066 = vpop.f32.mrf.mxu0
        %3067 = vmatprep.mubr.bf16.mxu0 0
        %3068 = vmatmul.mubr.bf16.gmra.mxu0 %v2521
        %v3069 = vpop.f32.mrf.mxu0
        %v3070 = vadd.f32 %v2625, %v3069
        %v3071 = vpop.f32.mrf.mxu0
        %v3072 = vpop.f32.mrf.mxu0
        %v3073 = vadd.f32 %v2625, %v3072
        %v3074 = vpop.f32.mrf.mxu0
        %3075 = vmatprep.mubr.bf16.mxu0 0
        %3076 = vmatmul.mubr.bf16.gmra.mxu0 %v2522
        %v3077 = vpop.f32.mrf.mxu0
        %v3078 = vadd.f32 %v2625, %v3077
        %v3079 = vpop.f32.mrf.mxu0
        %v3080 = vpop.f32.mrf.mxu0
        %v3081 = vadd.f32 %v2625, %v3080
        %v3082 = vpop.f32.mrf.mxu0
        %3083 = vmatprep.mubr.bf16.mxu0 0
        %3084 = vmatmul.mubr.bf16.gmra.mxu0 %v2523
        %v3085 = vpop.f32.mrf.mxu0
        %v3086 = vadd.f32 %v2625, %v3085
        %v3087 = vpop.f32.mrf.mxu0
        %v3088 = vpop.f32.mrf.mxu0
        %v3089 = vadd.f32 %v2625, %v3088
        %v3090 = vpop.f32.mrf.mxu0
        %3091 = vmatprep.mubr.bf16.mxu0 0
        %3092 = vmatmul.mubr.bf16.gmra.mxu0 %v2524
        %v3093 = vpop.f32.mrf.mxu0
        %v3094 = vadd.f32 %v2625, %v3093
        %v3095 = vpop.f32.mrf.mxu0
        %v3096 = vpop.f32.mrf.mxu0
        %v3097 = vadd.f32 %v2625, %v3096
        %v3098 = vpop.f32.mrf.mxu0
        %3099 = vmatprep.mubr.bf16.mxu0 0
        %3100 = vmatmul.mubr.bf16.gmra.mxu0 %v2525
        %v3101 = vpop.f32.mrf.mxu0
        %v3102 = vadd.f32 %v2625, %v3101
        %v3103 = vpop.f32.mrf.mxu0
        %v3104 = vpop.f32.mrf.mxu0
        %v3105 = vadd.f32 %v2625, %v3104
        %v3106 = vpop.f32.mrf.mxu0
        %3107 = vmatprep.mubr.bf16.mxu0 0
        %3108 = vmatmul.mubr.bf16.gmra.mxu0 %v2526
        %v3109 = vpop.f32.mrf.mxu0
        %v3110 = vadd.f32 %v2625, %v3109
        %v3111 = vpop.f32.mrf.mxu0
        %v3112 = vpop.f32.mrf.mxu0
        %v3113 = vadd.f32 %v2625, %v3112
        %v3114 = vpop.f32.mrf.mxu0
        %3115 = vmatprep.mubr.bf16.mxu0 0
        %3116 = vmatmul.mubr.bf16.gmra.mxu0 %v2527
        %v3117 = vpop.f32.mrf.mxu0
        %v3118 = vadd.f32 %v2625, %v3117
        %v3119 = vpop.f32.mrf.mxu0
        %v3120 = vpop.f32.mrf.mxu0
        %v3121 = vadd.f32 %v2625, %v3120
        %v3122 = vpop.f32.mrf.mxu0
        %3123 = vmatprep.mubr.bf16.mxu0 0
        %3124 = vmatmul.mubr.bf16.gmra.mxu0 %v2528
        %v3125 = vpop.f32.mrf.mxu0
        %v3126 = vadd.f32 %v2625, %v3125
        %v3127 = vpop.f32.mrf.mxu0
        %v3128 = vpop.f32.mrf.mxu0
        %v3129 = vadd.f32 %v2625, %v3128
        %v3130 = vpop.f32.mrf.mxu0
        %3131 = vmatprep.mubr.bf16.mxu0 0
        %3132 = vmatmul.mubr.bf16.gmra.mxu0 %v2529
        %v3133 = vpop.f32.mrf.mxu0
        %v3134 = vadd.f32 %v2625, %v3133
        %v3135 = vpop.f32.mrf.mxu0
        %v3136 = vpop.f32.mrf.mxu0
        %v3137 = vadd.f32 %v2625, %v3136
        %v3138 = vpop.f32.mrf.mxu0
        %3139 = vmatprep.mubr.bf16.mxu0 0
        %3140 = vmatmul.mubr.bf16.gmra.mxu0 %v2530
        %v3141 = vpop.f32.mrf.mxu0
        %v3142 = vadd.f32 %v2625, %v3141
        %v3143 = vpop.f32.mrf.mxu0
        %v3144 = vpop.f32.mrf.mxu0
        %v3145 = vadd.f32 %v2625, %v3144
        %v3146 = vpop.f32.mrf.mxu0
        %3147 = vmatprep.mubr.bf16.mxu0 0
        %3148 = vmatmul.mubr.bf16.gmra.mxu0 %v2531
        %v3149 = vpop.f32.mrf.mxu0
        %v3150 = vadd.f32 %v2625, %v3149
        %v3151 = vpop.f32.mrf.mxu0
        %v3152 = vpop.f32.mrf.mxu0
        %v3153 = vadd.f32 %v2625, %v3152
        %v3154 = vpop.f32.mrf.mxu0
        %3155 = vmatprep.mubr.bf16.mxu0 0
        %3156 = vmatmul.mubr.bf16.gmra.mxu0 %v2532
        %v3157 = vpop.f32.mrf.mxu0
        %v3158 = vadd.f32 %v2625, %v3157
        %v3159 = vpop.f32.mrf.mxu0
        %v3160 = vpop.f32.mrf.mxu0
        %v3161 = vadd.f32 %v2625, %v3160
        %v3162 = vpop.f32.mrf.mxu0
        %3163 = vmatprep.mubr.bf16.mxu0 0
        %3164 = vmatmul.mubr.bf16.gmra.mxu0 %v2533
        %v3165 = vpop.f32.mrf.mxu0
        %v3166 = vadd.f32 %v2625, %v3165
        %v3167 = vpop.f32.mrf.mxu0
        %v3168 = vpop.f32.mrf.mxu0
        %v3169 = vadd.f32 %v2625, %v3168
        %v3170 = vpop.f32.mrf.mxu0
        %3171 = vmatprep.mubr.bf16.mxu0 0
        %3172 = vmatmul.mubr.bf16.gmra.mxu0 %v2534
        %v3173 = vpop.f32.mrf.mxu0
        %v3174 = vadd.f32 %v2625, %v3173
        %v3175 = vpop.f32.mrf.mxu0
        %v3176 = vpop.f32.mrf.mxu0
        %v3177 = vadd.f32 %v2625, %v3176
        %v3178 = vpop.f32.mrf.mxu0
        %3179 = vmatprep.mubr.bf16.mxu0 0
        %3180 = vmatmul.mubr.bf16.gmra.mxu0 %v2535
        %v3181 = vpop.f32.mrf.mxu0
        %v3182 = vadd.f32 %v2625, %v3181
        %v3183 = vpop.f32.mrf.mxu0
        %v3184 = vpop.f32.mrf.mxu0
        %v3185 = vadd.f32 %v2625, %v3184
        %v3186 = vpop.f32.mrf.mxu0
        %3187 = vmatprep.mubr.bf16.mxu0 0
        %3188 = vmatmul.mubr.bf16.gmra.mxu0 %v2536
        %v3189 = vpop.f32.mrf.mxu0
        %v3190 = vadd.f32 %v2625, %v3189
        %v3191 = vpop.f32.mrf.mxu0
        %v3192 = vpop.f32.mrf.mxu0
        %v3193 = vadd.f32 %v2625, %v3192
        %v3194 = vpop.f32.mrf.mxu0
        %3195 = vmatprep.mubr.bf16.mxu0 0
        %3196 = vmatmul.mubr.bf16.gmra.mxu0 %v2537
        %v3197 = vpop.f32.mrf.mxu0
        %v3198 = vadd.f32 %v2625, %v3197
        %v3199 = vpop.f32.mrf.mxu0
        %v3200 = vpop.f32.mrf.mxu0
        %v3201 = vadd.f32 %v2625, %v3200
        %v3202 = vpop.f32.mrf.mxu0
        %3203 = vmatprep.mubr.bf16.mxu0 0
        %3204 = vmatmul.mubr.bf16.gmra.mxu0 %v2538
        %v3205 = vpop.f32.mrf.mxu0
        %v3206 = vadd.f32 %v2625, %v3205
        %v3207 = vpop.f32.mrf.mxu0
        %v3208 = vpop.f32.mrf.mxu0
        %v3209 = vadd.f32 %v2625, %v3208
        %v3210 = vpop.f32.mrf.mxu0
        %3211 = vmatprep.mubr.bf16.mxu0 0
        %3212 = vmatmul.mubr.bf16.gmra.mxu0 %v2539
        %v3213 = vpop.f32.mrf.mxu0
        %v3214 = vadd.f32 %v2625, %v3213
        %v3215 = vpop.f32.mrf.mxu0
        %v3216 = vpop.f32.mrf.mxu0
        %v3217 = vadd.f32 %v2625, %v3216
        %v3218 = vpop.f32.mrf.mxu0
        %3219 = vmatprep.mubr.bf16.mxu0 0
        %3220 = vmatmul.mubr.bf16.gmra.mxu0 %v2540
        %v3221 = vpop.f32.mrf.mxu0
        %v3222 = vadd.f32 %v2625, %v3221
        %v3223 = vpop.f32.mrf.mxu0
        %v3224 = vpop.f32.mrf.mxu0
        %v3225 = vadd.f32 %v2625, %v3224
        %v3226 = vpop.f32.mrf.mxu0
        %3227 = vmatprep.mubr.bf16.mxu0 0
        %3228 = vmatmul.mubr.bf16.gmra.mxu0 %v2541
        %v3229 = vpop.f32.mrf.mxu0
        %v3230 = vadd.f32 %v2625, %v3229
        %v3231 = vpop.f32.mrf.mxu0
        %v3232 = vpop.f32.mrf.mxu0
        %v3233 = vadd.f32 %v2625, %v3232
        %v3234 = vpop.f32.mrf.mxu0
        %3235 = vmatprep.mubr.bf16.mxu0 0
        %3236 = vmatmul.mubr.bf16.gmra.mxu0 %v2542
        %v3237 = vpop.f32.mrf.mxu0
        %v3238 = vadd.f32 %v2625, %v3237
        %v3239 = vpop.f32.mrf.mxu0
        %v3240 = vpop.f32.mrf.mxu0
        %v3241 = vadd.f32 %v2625, %v3240
        %v3242 = vpop.f32.mrf.mxu0
        %3243 = vmatprep.mubr.bf16.mxu0 0
        %3244 = vmatmul.mubr.bf16.gmra.mxu0 %v2543
        %v3245 = vpop.f32.mrf.mxu0
        %v3246 = vadd.f32 %v2625, %v3245
        %v3247 = vpop.f32.mrf.mxu0
        %v3248 = vpop.f32.mrf.mxu0
        %v3249 = vadd.f32 %v2625, %v3248
        %v3250 = vpop.f32.mrf.mxu0
        %3251 = vmatprep.mubr.bf16.mxu0 0
        %3252 = vmatmul.mubr.bf16.gmra.mxu0 %v2544
        %v3253 = vpop.f32.mrf.mxu0
        %v3254 = vadd.f32 %v2625, %v3253
        %v3255 = vpop.f32.mrf.mxu0
        %v3256 = vpop.f32.mrf.mxu0
        %v3257 = vadd.f32 %v2625, %v3256
        %v3258 = vpop.f32.mrf.mxu0
        %3259 = vmatprep.mubr.bf16.mxu0 0
        %3260 = vmatmul.mubr.bf16.gmra.mxu0 %v2545
        %v3261 = vpop.f32.mrf.mxu0
        %v3262 = vadd.f32 %v2625, %v3261
        %v3263 = vpop.f32.mrf.mxu0
        %v3264 = vpop.f32.mrf.mxu0
        %v3265 = vadd.f32 %v2625, %v3264
        %v3266 = vpop.f32.mrf.mxu0
        %3267 = vmatprep.mubr.bf16.mxu0 0
        %3268 = vmatmul.mubr.bf16.gmra.mxu0 %v2546
        %v3269 = vpop.f32.mrf.mxu0
        %v3270 = vadd.f32 %v2625, %v3269
        %v3271 = vpop.f32.mrf.mxu0
        %v3272 = vpop.f32.mrf.mxu0
        %v3273 = vadd.f32 %v2625, %v3272
        %v3274 = vpop.f32.mrf.mxu0
        %3275 = vmatprep.mubr.bf16.mxu0 0
        %3276 = vmatmul.mubr.bf16.gmra.mxu0 %v2547
        %v3277 = vpop.f32.mrf.mxu0
        %v3278 = vadd.f32 %v2625, %v3277
        %v3279 = vpop.f32.mrf.mxu0
        %v3280 = vpop.f32.mrf.mxu0
        %v3281 = vadd.f32 %v2625, %v3280
        %v3282 = vpop.f32.mrf.mxu0
        %3283 = vmatprep.mubr.bf16.mxu0 0
        %3284 = vmatmul.mubr.bf16.gmra.mxu0 %v2548
        %v3285 = vpop.f32.mrf.mxu0
        %v3286 = vadd.f32 %v2625, %v3285
        %v3287 = vpop.f32.mrf.mxu0
        %v3288 = vpop.f32.mrf.mxu0
        %v3289 = vadd.f32 %v2625, %v3288
        %v3290 = vpop.f32.mrf.mxu0
        %3291 = vmatprep.mubr.bf16.mxu0 0
        %3292 = vmatmul.mubr.bf16.gmra.mxu0 %v2549
        %v3293 = vpop.f32.mrf.mxu0
        %v3294 = vadd.f32 %v2625, %v3293
        %v3295 = vpop.f32.mrf.mxu0
        %v3296 = vpop.f32.mrf.mxu0
        %v3297 = vadd.f32 %v2625, %v3296
        %v3298 = vpop.f32.mrf.mxu0
        %3299 = vmatprep.mubr.bf16.mxu0 0
        %3300 = vmatmul.mubr.bf16.gmra.mxu0 %v2550
        %v3301 = vpop.f32.mrf.mxu0
        %v3302 = vadd.f32 %v2625, %v3301
        %v3303 = vpop.f32.mrf.mxu0
        %v3304 = vpop.f32.mrf.mxu0
        %v3305 = vadd.f32 %v2625, %v3304
        %v3306 = vpop.f32.mrf.mxu0
        %3307 = vmatprep.mubr.bf16.mxu0 0
        %3308 = vmatmul.mubr.bf16.gmra.mxu0 %v2551
        %v3309 = vpop.f32.mrf.mxu0
        %v3310 = vadd.f32 %v2625, %v3309
        %v3311 = vpop.f32.mrf.mxu0
        %v3312 = vpop.f32.mrf.mxu0
        %v3313 = vadd.f32 %v2625, %v3312
        %v3314 = vpop.f32.mrf.mxu0
        %3315 = vmatprep.mubr.bf16.mxu0 0
        %3316 = vmatmul.mubr.bf16.gmra.mxu0 %v2552
        %v3317 = vpop.f32.mrf.mxu0
        %v3318 = vadd.f32 %v2625, %v3317
        %v3319 = vpop.f32.mrf.mxu0
        %v3320 = vpop.f32.mrf.mxu0
        %v3321 = vadd.f32 %v2625, %v3320
        %v3322 = vpop.f32.mrf.mxu0
        %3323 = vmatprep.mubr.bf16.mxu0 0
        %3324 = vmatmul.mubr.bf16.gmra.mxu0 %v2553
        %v3325 = vpop.f32.mrf.mxu0
        %v3326 = vadd.f32 %v2625, %v3325
        %v3327 = vpop.f32.mrf.mxu0
        %v3328 = vpop.f32.mrf.mxu0
        %v3329 = vadd.f32 %v2625, %v3328
        %v3330 = vpop.f32.mrf.mxu0
        %3331 = vmatprep.mubr.bf16.mxu0 0
        %3332 = vmatmul.mubr.bf16.gmra.mxu0 %v2554
        %v3333 = vpop.f32.mrf.mxu0
        %v3334 = vadd.f32 %v2625, %v3333
        %v3335 = vpop.f32.mrf.mxu0
        %v3336 = vpop.f32.mrf.mxu0
        %v3337 = vadd.f32 %v2625, %v3336
        %v3338 = vpop.f32.mrf.mxu0
        %3339 = vmatprep.mubr.bf16.mxu0 0
        %3340 = vmatmul.mubr.bf16.gmra.mxu0 %v2555
        %v3341 = vpop.f32.mrf.mxu0
        %v3342 = vadd.f32 %v2625, %v3341
        %v3343 = vpop.f32.mrf.mxu0
        %v3344 = vpop.f32.mrf.mxu0
        %v3345 = vadd.f32 %v2625, %v3344
        %v3346 = vpop.f32.mrf.mxu0
        %3347 = vmatprep.mubr.bf16.mxu0 0
        %3348 = vmatmul.mubr.bf16.gmra.mxu0 %v2556
        %v3349 = vpop.f32.mrf.mxu0
        %v3350 = vadd.f32 %v2625, %v3349
        %v3351 = vpop.f32.mrf.mxu0
        %v3352 = vpop.f32.mrf.mxu0
        %v3353 = vadd.f32 %v2625, %v3352
        %v3354 = vpop.f32.mrf.mxu0
        %3355 = vmatprep.mubr.bf16.mxu0 0
        %3356 = vmatmul.mubr.bf16.gmra.mxu0 %v2557
        %v3357 = vpop.f32.mrf.mxu0
        %v3358 = vadd.f32 %v2625, %v3357
        %v3359 = vpop.f32.mrf.mxu0
        %v3360 = vpop.f32.mrf.mxu0
        %v3361 = vadd.f32 %v2625, %v3360
        %v3362 = vpop.f32.mrf.mxu0
        %3363 = vmatprep.mubr.bf16.mxu0 0
        %3364 = vmatmul.mubr.bf16.gmra.mxu0 %v2558
        %v3365 = vpop.f32.mrf.mxu0
        %v3366 = vadd.f32 %v2625, %v3365
        %v3367 = vpop.f32.mrf.mxu0
        %v3368 = vpop.f32.mrf.mxu0
        %v3369 = vadd.f32 %v2625, %v3368
        %v3370 = vpop.f32.mrf.mxu0
        %3371 = vmatprep.mubr.bf16.mxu0 0
        %3372 = vmatmul.mubr.bf16.gmra.mxu0 %v2559
        %v3373 = vpop.f32.mrf.mxu0
        %v3374 = vadd.f32 %v2625, %v3373
        %v3375 = vpop.f32.mrf.mxu0
        %v3376 = vpop.f32.mrf.mxu0
        %v3377 = vadd.f32 %v2625, %v3376
        %v3378 = vpop.f32.mrf.mxu0
        %3379 = vmatprep.mubr.bf16.mxu0 0
        %3380 = vmatmul.mubr.bf16.gmra.mxu0 %v2560
        %v3381 = vpop.f32.mrf.mxu0
        %v3382 = vadd.f32 %v2625, %v3381
        %v3383 = vpop.f32.mrf.mxu0
        %v3384 = vpop.f32.mrf.mxu0
        %v3385 = vadd.f32 %v2625, %v3384
        %v3386 = vpop.f32.mrf.mxu0
        %3387 = vmatprep.mubr.bf16.mxu0 0
        %3388 = vmatmul.mubr.bf16.gmra.mxu0 %v2561
        %v3389 = vpop.f32.mrf.mxu0
        %v3390 = vadd.f32 %v2625, %v3389
        %v3391 = vpop.f32.mrf.mxu0
        %v3392 = vpop.f32.mrf.mxu0
        %v3393 = vadd.f32 %v2625, %v3392
        %v3394 = vpop.f32.mrf.mxu0
        %3395 = vmatprep.mubr.bf16.mxu0 0
        %3396 = vmatmul.mubr.bf16.gmra.mxu0 %v2562
        %v3397 = vpop.f32.mrf.mxu0
        %v3398 = vadd.f32 %v2625, %v3397
        %v3399 = vpop.f32.mrf.mxu0
        %v3400 = vpop.f32.mrf.mxu0
        %v3401 = vadd.f32 %v2625, %v3400
        %v3402 = vpop.f32.mrf.mxu0
        %3403 = vmatprep.mubr.bf16.mxu0 0
        %3404 = vmatmul.mubr.bf16.gmra.mxu0 %v2563
        %v3405 = vpop.f32.mrf.mxu0
        %v3406 = vadd.f32 %v2625, %v3405
        %v3407 = vpop.f32.mrf.mxu0
        %v3408 = vpop.f32.mrf.mxu0
        %v3409 = vadd.f32 %v2625, %v3408
        %v3410 = vpop.f32.mrf.mxu0
        %3411 = vmatprep.mubr.bf16.mxu0 0
        %3412 = vmatmul.mubr.bf16.gmra.mxu0 %v2564
        %v3413 = vpop.f32.mrf.mxu0
        %v3414 = vadd.f32 %v2625, %v3413
        %v3415 = vpop.f32.mrf.mxu0
        %v3416 = vpop.f32.mrf.mxu0
        %v3417 = vadd.f32 %v2625, %v3416
        %v3418 = vpop.f32.mrf.mxu0
        %3419 = vmatprep.mubr.bf16.mxu0 0
        %3420 = vmatmul.mubr.bf16.gmra.mxu0 %v2565
        %v3421 = vpop.f32.mrf.mxu0
        %v3422 = vadd.f32 %v2625, %v3421
        %v3423 = vpop.f32.mrf.mxu0
        %v3424 = vpop.f32.mrf.mxu0
        %v3425 = vadd.f32 %v2625, %v3424
        %v3426 = vpop.f32.mrf.mxu0
        %3427 = vmatprep.mubr.bf16.mxu0 0
        %3428 = vmatmul.mubr.bf16.gmra.mxu0 %v2566
        %v3429 = vpop.f32.mrf.mxu0
        %v3430 = vadd.f32 %v2625, %v3429
        %v3431 = vpop.f32.mrf.mxu0
        %v3432 = vpop.f32.mrf.mxu0
        %v3433 = vadd.f32 %v2625, %v3432
        %v3434 = vpop.f32.mrf.mxu0
        %3435 = vmatprep.mubr.bf16.mxu0 0
        %3436 = vmatmul.mubr.bf16.gmra.mxu0 %v2567
        %v3437 = vpop.f32.mrf.mxu0
        %v3438 = vadd.f32 %v2625, %v3437
        %v3439 = vpop.f32.mrf.mxu0
        %v3440 = vpop.f32.mrf.mxu0
        %v3441 = vadd.f32 %v2625, %v3440
        %v3442 = vpop.f32.mrf.mxu0
        %3443 = vmatprep.mubr.bf16.mxu0 0
        %3444 = vmatmul.mubr.bf16.gmra.mxu0 %v2568
        %v3445 = vpop.f32.mrf.mxu0
        %v3446 = vadd.f32 %v2625, %v3445
        %v3447 = vpop.f32.mrf.mxu0
        %v3448 = vpop.f32.mrf.mxu0
        %v3449 = vadd.f32 %v2625, %v3448
        %v3450 = vpop.f32.mrf.mxu0
        %3451 = vmatprep.mubr.bf16.mxu0 0
        %3452 = vmatmul.mubr.bf16.gmra.mxu0 %v2569
        %v3453 = vpop.f32.mrf.mxu0
        %v3454 = vadd.f32 %v2625, %v3453
        %v3455 = vpop.f32.mrf.mxu0
        %v3456 = vpop.f32.mrf.mxu0
        %v3457 = vadd.f32 %v2625, %v3456
        %v3458 = vpop.f32.mrf.mxu0
        %3459 = vmatprep.mubr.bf16.mxu0 0
        %3460 = vmatmul.mubr.bf16.gmra.mxu0 %v2570
        %v3461 = vpop.f32.mrf.mxu0
        %v3462 = vadd.f32 %v2625, %v3461
        %v3463 = vpop.f32.mrf.mxu0
        %v3464 = vpop.f32.mrf.mxu0
        %v3465 = vadd.f32 %v2625, %v3464
        %v3466 = vpop.f32.mrf.mxu0
        %3467 = vmatprep.mubr.bf16.mxu0 0
        %3468 = vmatmul.mubr.bf16.gmra.mxu0 %v2571
        %v3469 = vpop.f32.mrf.mxu0
        %v3470 = vadd.f32 %v2625, %v3469
        %v3471 = vpop.f32.mrf.mxu0
        %v3472 = vpop.f32.mrf.mxu0
        %v3473 = vadd.f32 %v2625, %v3472
        %v3474 = vpop.f32.mrf.mxu0
        %3475 = vmatprep.mubr.bf16.mxu0 0
        %3476 = vmatmul.mubr.bf16.gmra.mxu0 %v2572
        %v3477 = vpop.f32.mrf.mxu0
        %v3478 = vadd.f32 %v2625, %v3477
        %v3479 = vpop.f32.mrf.mxu0
        %v3480 = vpop.f32.mrf.mxu0
        %v3481 = vadd.f32 %v2625, %v3480
        %v3482 = vpop.f32.mrf.mxu0
        %3483 = vmatprep.mubr.bf16.mxu0 0
        %3484 = vmatmul.mubr.bf16.gmra.mxu0 %v2573
        %v3485 = vpop.f32.mrf.mxu0
        %v3486 = vadd.f32 %v2625, %v3485
        %v3487 = vpop.f32.mrf.mxu0
        %v3488 = vpop.f32.mrf.mxu0
        %v3489 = vadd.f32 %v2625, %v3488
        %v3490 = vpop.f32.mrf.mxu0
        %3491 = vmatprep.mubr.bf16.mxu0 0
        %3492 = vmatmul.mubr.bf16.gmra.mxu0 %v2574
        %v3493 = vpop.f32.mrf.mxu0
        %v3494 = vadd.f32 %v2625, %v3493
        %v3495 = vpop.f32.mrf.mxu0
        %v3496 = vpop.f32.mrf.mxu0
        %v3497 = vadd.f32 %v2625, %v3496
        %v3498 = vpop.f32.mrf.mxu0
        %3499 = vmatprep.mubr.bf16.mxu0 0
        %3500 = vmatmul.mubr.bf16.gmra.mxu0 %v2575
        %v3501 = vpop.f32.mrf.mxu0
        %v3502 = vadd.f32 %v2625, %v3501
        %v3503 = vpop.f32.mrf.mxu0
        %v3504 = vpop.f32.mrf.mxu0
        %v3505 = vadd.f32 %v2625, %v3504
        %v3506 = vpop.f32.mrf.mxu0
        %3507 = vmatprep.mubr.bf16.mxu0 0
        %3508 = vmatmul.mubr.bf16.gmra.mxu0 %v2576
        %v3509 = vpop.f32.mrf.mxu0
        %v3510 = vadd.f32 %v2625, %v3509
        %v3511 = vpop.f32.mrf.mxu0
        %v3512 = vpop.f32.mrf.mxu0
        %v3513 = vadd.f32 %v2625, %v3512
        %v3514 = vpop.f32.mrf.mxu0
        %3515 = vmatprep.mubr.bf16.mxu0 0
        %3516 = vmatmul.mubr.bf16.gmra.mxu0 %v2577
        %v3517 = vpop.f32.mrf.mxu0
        %v3518 = vadd.f32 %v2625, %v3517
        %v3519 = vpop.f32.mrf.mxu0
        %v3520 = vpop.f32.mrf.mxu0
        %v3521 = vadd.f32 %v2625, %v3520
        %v3522 = vpop.f32.mrf.mxu0
        %3523 = vmatprep.mubr.bf16.mxu0 0
        %3524 = vmatmul.mubr.bf16.gmra.mxu0 %v2578
        %v3525 = vpop.f32.mrf.mxu0
        %v3526 = vadd.f32 %v2625, %v3525
        %v3527 = vpop.f32.mrf.mxu0
        %v3528 = vpop.f32.mrf.mxu0
        %v3529 = vadd.f32 %v2625, %v3528
        %v3530 = vpop.f32.mrf.mxu0
        %3531 = vmatprep.mubr.bf16.mxu0 0
        %3532 = vmatmul.mubr.bf16.gmra.mxu0 %v2579
        %v3533 = vpop.f32.mrf.mxu0
        %v3534 = vadd.f32 %v2625, %v3533
        %v3535 = vpop.f32.mrf.mxu0
        %v3536 = vpop.f32.mrf.mxu0
        %v3537 = vadd.f32 %v2625, %v3536
        %v3538 = vpop.f32.mrf.mxu0
        %3539 = vmatprep.mubr.bf16.mxu0 0
        %3540 = vmatmul.mubr.bf16.gmra.mxu0 %v2580
        %v3541 = vpop.f32.mrf.mxu0
        %v3542 = vadd.f32 %v2625, %v3541
        %v3543 = vpop.f32.mrf.mxu0
        %v3544 = vpop.f32.mrf.mxu0
        %v3545 = vadd.f32 %v2625, %v3544
        %v3546 = vpop.f32.mrf.mxu0
        %3547 = vmatprep.mubr.bf16.mxu0 0
        %3548 = vmatmul.mubr.bf16.gmra.mxu0 %v2581
        %v3549 = vpop.f32.mrf.mxu0
        %v3550 = vadd.f32 %v2625, %v3549
        %v3551 = vpop.f32.mrf.mxu0
        %v3552 = vpop.f32.mrf.mxu0
        %v3553 = vadd.f32 %v2625, %v3552
        %v3554 = vpop.f32.mrf.mxu0
        %3555 = vmatprep.mubr.bf16.mxu0 0
        %3556 = vmatmul.mubr.bf16.gmra.mxu0 %v2582
        %v3557 = vpop.f32.mrf.mxu0
        %v3558 = vadd.f32 %v2625, %v3557
        %v3559 = vpop.f32.mrf.mxu0
        %v3560 = vpop.f32.mrf.mxu0
        %v3561 = vadd.f32 %v2625, %v3560
        %v3562 = vpop.f32.mrf.mxu0
        %3563 = vmatprep.mubr.bf16.mxu0 0
        %3564 = vmatmul.mubr.bf16.gmra.mxu0 %v2583
        %v3565 = vpop.f32.mrf.mxu0
        %v3566 = vadd.f32 %v2625, %v3565
        %v3567 = vpop.f32.mrf.mxu0
        %v3568 = vpop.f32.mrf.mxu0
        %v3569 = vadd.f32 %v2625, %v3568
        %v3570 = vpop.f32.mrf.mxu0
        %3571 = vmatprep.mubr.bf16.mxu0 0
        %3572 = vmatmul.mubr.bf16.gmra.mxu0 %v2584
        %v3573 = vpop.f32.mrf.mxu0
        %v3574 = vadd.f32 %v2625, %v3573
        %v3575 = vpop.f32.mrf.mxu0
        %v3576 = vpop.f32.mrf.mxu0
        %v3577 = vadd.f32 %v2625, %v3576
        %v3578 = vpop.f32.mrf.mxu0
        %3579 = vmatprep.mubr.bf16.mxu0 0
        %3580 = vmatmul.mubr.bf16.gmra.mxu0 %v2585
        %v3581 = vpop.f32.mrf.mxu0
        %v3582 = vadd.f32 %v2625, %v3581
        %v3583 = vpop.f32.mrf.mxu0
        %v3584 = vpop.f32.mrf.mxu0
        %v3585 = vadd.f32 %v2625, %v3584
        %v3586 = vpop.f32.mrf.mxu0
        %3587 = vmatprep.mubr.bf16.mxu0 0
        %3588 = vmatmul.mubr.bf16.gmra.mxu0 %v2586
        %v3589 = vpop.f32.mrf.mxu0
        %v3590 = vadd.f32 %v2625, %v3589
        %v3591 = vpop.f32.mrf.mxu0
        %v3592 = vpop.f32.mrf.mxu0
        %v3593 = vadd.f32 %v2625, %v3592
        %v3594 = vpop.f32.mrf.mxu0
        %3595 = vmatprep.mubr.bf16.mxu0 0
        %3596 = vmatmul.mubr.bf16.gmra.mxu0 %v2587
        %v3597 = vpop.f32.mrf.mxu0
        %v3598 = vadd.f32 %v2625, %v3597
        %v3599 = vpop.f32.mrf.mxu0
        %v3600 = vpop.f32.mrf.mxu0
        %v3601 = vadd.f32 %v2625, %v3600
        %v3602 = vpop.f32.mrf.mxu0
        %3603 = vmatprep.mubr.bf16.mxu0 0
        %3604 = vmatmul.mubr.bf16.gmra.mxu0 %v2588
        %v3605 = vpop.f32.mrf.mxu0
        %v3606 = vadd.f32 %v2625, %v3605
        %v3607 = vpop.f32.mrf.mxu0
        %v3608 = vpop.f32.mrf.mxu0
        %v3609 = vadd.f32 %v2625, %v3608
        %v3610 = vpop.f32.mrf.mxu0
        %3611 = vmatprep.mubr.bf16.mxu0 0
        %3612 = vmatmul.mubr.bf16.gmra.mxu0 %v2589
        %v3613 = vpop.f32.mrf.mxu0
        %v3614 = vadd.f32 %v2625, %v3613
        %v3615 = vpop.f32.mrf.mxu0
        %v3616 = vpop.f32.mrf.mxu0
        %v3617 = vadd.f32 %v2625, %v3616
        %v3618 = vpop.f32.mrf.mxu0
        %3619 = vmatprep.mubr.bf16.mxu0 0
        %3620 = vmatmul.mubr.bf16.gmra.mxu0 %v2590
        %v3621 = vpop.f32.mrf.mxu0
        %v3622 = vadd.f32 %v2625, %v3621
        %v3623 = vpop.f32.mrf.mxu0
        %v3624 = vpop.f32.mrf.mxu0
        %v3625 = vadd.f32 %v2625, %v3624
        %v3626 = vpop.f32.mrf.mxu0
        %3627 = vmatprep.mubr.bf16.mxu0 0
        %3628 = vmatmul.mubr.bf16.gmra.mxu0 %v2591
        %v3629 = vpop.f32.mrf.mxu0
        %v3630 = vadd.f32 %v2625, %v3629
        %v3631 = vpop.f32.mrf.mxu0
        %v3632 = vpop.f32.mrf.mxu0
        %v3633 = vadd.f32 %v2625, %v3632
        %v3634 = vpop.f32.mrf.mxu0
        %3635 = vmatprep.mubr.bf16.mxu0 0
        %3636 = vmatmul.mubr.bf16.gmra.mxu0 %v2592
        %v3637 = vpop.f32.mrf.mxu0
        %v3638 = vadd.f32 %v2625, %v3637
        %v3639 = vpop.f32.mrf.mxu0
        %v3640 = vpop.f32.mrf.mxu0
        %v3641 = vadd.f32 %v2625, %v3640
        %v3642 = vpop.f32.mrf.mxu0
        %3643 = vmatprep.mubr.bf16.mxu0 0
        %3644 = vmatmul.mubr.bf16.gmra.mxu0 %v2593
        %v3645 = vpop.f32.mrf.mxu0
        %v3646 = vadd.f32 %v2625, %v3645
        %v3647 = vpop.f32.mrf.mxu0
        %v3648 = vpop.f32.mrf.mxu0
        %v3649 = vadd.f32 %v2625, %v3648
        %v3650 = vpop.f32.mrf.mxu0
        %3651 = vmatprep.mubr.bf16.mxu0 0
        %3652 = vmatmul.mubr.bf16.gmra.mxu0 %v2594
        %v3653 = vpop.f32.mrf.mxu0
        %v3654 = vadd.f32 %v2625, %v3653
        %v3655 = vpop.f32.mrf.mxu0
        %v3656 = vpop.f32.mrf.mxu0
        %v3657 = vadd.f32 %v2625, %v3656
        %v3658 = vpop.f32.mrf.mxu0
        %3659 = vmatprep.mubr.bf16.mxu0 0
        %3660 = vmatmul.mubr.bf16.gmra.mxu0 %v2595
        %v3661 = vpop.f32.mrf.mxu0
        %v3662 = vadd.f32 %v2625, %v3661
        %v3663 = vpop.f32.mrf.mxu0
        %v3664 = vpop.f32.mrf.mxu0
        %v3665 = vadd.f32 %v2625, %v3664
        %v3666 = vpop.f32.mrf.mxu0
        %3667 = vmatprep.mubr.bf16.mxu0 0
        %3668 = vmatmul.mubr.bf16.gmra.mxu0 %v2596
        %v3669 = vpop.f32.mrf.mxu0
        %v3670 = vadd.f32 %v2625, %v3669
        %v3671 = vpop.f32.mrf.mxu0
        %v3672 = vpop.f32.mrf.mxu0
        %v3673 = vadd.f32 %v2625, %v3672
        %v3674 = vpop.f32.mrf.mxu0
        %3675 = vmatprep.mubr.bf16.mxu0 0
        %3676 = vmatmul.mubr.bf16.gmra.mxu0 %v2597
        %v3677 = vpop.f32.mrf.mxu0
        %v3678 = vadd.f32 %v2625, %v3677
        %v3679 = vpop.f32.mrf.mxu0
        %v3680 = vpop.f32.mrf.mxu0
        %v3681 = vadd.f32 %v2625, %v3680
        %v3682 = vpop.f32.mrf.mxu0
        %3683 = vmatprep.mubr.bf16.mxu0 0
        %3684 = vmatmul.mubr.bf16.gmra.mxu0 %v2598
        %v3685 = vpop.f32.mrf.mxu0
        %v3686 = vadd.f32 %v2625, %v3685
        %v3687 = vpop.f32.mrf.mxu0
        %v3688 = vpop.f32.mrf.mxu0
        %v3689 = vadd.f32 %v2625, %v3688
        %v3690 = vpop.f32.mrf.mxu0
        %3691 = vmatprep.mubr.bf16.mxu0 0
        %3692 = vmatmul.mubr.bf16.gmra.mxu0 %v2599
        %v3693 = vpop.f32.mrf.mxu0
        %v3694 = vadd.f32 %v2625, %v3693
        %v3695 = vpop.f32.mrf.mxu0
        %v3696 = vpop.f32.mrf.mxu0
        %v3697 = vadd.f32 %v2625, %v3696
        %v3698 = vpop.f32.mrf.mxu0
        %3699 = vmatprep.mubr.bf16.mxu0 0
        %3700 = vmatmul.mubr.bf16.gmra.mxu0 %v2600
        %v3701 = vpop.f32.mrf.mxu0
        %v3702 = vadd.f32 %v2625, %v3701
        %v3703 = vpop.f32.mrf.mxu0
        %v3704 = vpop.f32.mrf.mxu0
        %v3705 = vadd.f32 %v2625, %v3704
        %v3706 = vpop.f32.mrf.mxu0
        %3707 = vmatprep.mubr.bf16.mxu0 0
        %3708 = vmatmul.mubr.bf16.gmra.mxu0 %v2601
        %v3709 = vpop.f32.mrf.mxu0
        %v3710 = vadd.f32 %v2625, %v3709
        %v3711 = vpop.f32.mrf.mxu0
        %v3712 = vpop.f32.mrf.mxu0
        %v3713 = vadd.f32 %v2625, %v3712
        %v3714 = vpop.f32.mrf.mxu0
        %3715 = vmatprep.mubr.bf16.mxu0 0
        %3716 = vmatmul.mubr.bf16.gmra.mxu0 %v2602
        %v3717 = vpop.f32.mrf.mxu0
        %v3718 = vadd.f32 %v2625, %v3717
        %v3719 = vpop.f32.mrf.mxu0
        %v3720 = vpop.f32.mrf.mxu0
        %v3721 = vadd.f32 %v2625, %v3720
        %v3722 = vpop.f32.mrf.mxu0
        %3723 = vmatprep.mubr.bf16.mxu0 0
        %3724 = vmatmul.mubr.bf16.gmra.mxu0 %v2603
        %v3725 = vpop.f32.mrf.mxu0
        %v3726 = vadd.f32 %v2625, %v3725
        %v3727 = vpop.f32.mrf.mxu0
        %v3728 = vpop.f32.mrf.mxu0
        %v3729 = vadd.f32 %v2625, %v3728
        %v3730 = vpop.f32.mrf.mxu0
        %3731 = vdwg.mxu0
        %v3732 = vtanh.pop %v2710
        %v3733 = vtanh.pop %v2713
        %v3734 = vtanh.pop %v2718
        %v3735 = vtanh.pop %v2721
        %v3736 = vtanh.pop %v2726
        %v3737 = vtanh.pop %v2729
        %v3738 = vtanh.pop %v2734
        %v3739 = vtanh.pop %v2737
        %v3740 = vtanh.pop %v2742
        %v3741 = vtanh.pop %v2745
        %v3742 = vtanh.pop %v2750
        %v3743 = vtanh.pop %v2753
        %v3744 = vtanh.pop %v2758
        %v3745 = vtanh.pop %v2761
        %v3746 = vtanh.pop %v2766
        %v3747 = vtanh.pop %v2769
        %v3748 = vtanh.pop %v2774
        %v3749 = vtanh.pop %v2777
        %v3750 = vtanh.pop %v2782
        %v3751 = vtanh.pop %v2785
        %v3752 = vtanh.pop %v2790
        %v3753 = vtanh.pop %v2793
        %v3754 = vtanh.pop %v2798
        %v3755 = vtanh.pop %v2801
        %v3756 = vtanh.pop %v2806
        %v3757 = vtanh.pop %v2809
        %v3758 = vtanh.pop %v2814
        %v3759 = vtanh.pop %v2817
        %v3760 = vtanh.pop %v2822
        %v3761 = vtanh.pop %v2825
        %v3762 = vtanh.pop %v2830
        %v3763 = vtanh.pop %v2833
        %v3764 = vtanh.pop %v2838
        %v3765 = vtanh.pop %v2841
        %v3766 = vtanh.pop %v2846
        %v3767 = vtanh.pop %v2849
        %v3768 = vtanh.pop %v2854
        %v3769 = vtanh.pop %v2857
        %v3770 = vtanh.pop %v2862
        %v3771 = vtanh.pop %v2865
        %v3772 = vtanh.pop %v2870
        %v3773 = vtanh.pop %v2873
        %v3774 = vtanh.pop %v2878
        %v3775 = vtanh.pop %v2881
        %v3776 = vtanh.pop %v2886
        %v3777 = vtanh.pop %v2889
        %v3778 = vtanh.pop %v2894
        %v3779 = vtanh.pop %v2897
        %v3780 = vtanh.pop %v2902
        %v3781 = vtanh.pop %v2905
        %v3782 = vtanh.pop %v2910
        %v3783 = vtanh.pop %v2913
        %v3784 = vtanh.pop %v2918
        %v3785 = vtanh.pop %v2921
        %v3786 = vtanh.pop %v2926
        %v3787 = vtanh.pop %v2929
        %v3788 = vtanh.pop %v2934
        %v3789 = vtanh.pop %v2937
        %v3790 = vtanh.pop %v2942
        %v3791 = vtanh.pop %v2945
        %v3792 = vtanh.pop %v2950
        %v3793 = vtanh.pop %v2953
        %v3794 = vtanh.pop %v2958
        %v3795 = vtanh.pop %v2961
        %v3796 = vtanh.pop %v2966
        %v3797 = vtanh.pop %v2969
        %v3798 = vtanh.pop %v2974
        %v3799 = vtanh.pop %v2977
        %v3800 = vtanh.pop %v2982
        %v3801 = vtanh.pop %v2985
        %v3802 = vtanh.pop %v2990
        %v3803 = vtanh.pop %v2993
        %v3804 = vtanh.pop %v2998
        %v3805 = vtanh.pop %v3001
        %v3806 = vtanh.pop %v3006
        %v3807 = vtanh.pop %v3009
        %v3808 = vtanh.pop %v3014
        %v3809 = vtanh.pop %v3017
        %v3810 = vtanh.pop %v3022
        %v3811 = vtanh.pop %v3025
        %v3812 = vtanh.pop %v3030
        %v3813 = vtanh.pop %v3033
        %v3814 = vtanh.pop %v3038
        %v3815 = vtanh.pop %v3041
        %v3816 = vtanh.pop %v3046
        %v3817 = vtanh.pop %v3049
        %v3818 = vtanh.pop %v3054
        %v3819 = vtanh.pop %v3057
        %v3820 = vtanh.pop %v3062
        %v3821 = vtanh.pop %v3065
        %v3822 = vtanh.pop %v3070
        %v3823 = vtanh.pop %v3073
        %v3824 = vtanh.pop %v3078
        %v3825 = vtanh.pop %v3081
        %v3826 = vtanh.pop %v3086
        %v3827 = vtanh.pop %v3089
        %v3828 = vtanh.pop %v3094
        %v3829 = vtanh.pop %v3097
        %v3830 = vtanh.pop %v3102
        %v3831 = vtanh.pop %v3105
        %v3832 = vtanh.pop %v3110
        %v3833 = vtanh.pop %v3113
        %v3834 = vtanh.pop %v3118
        %v3835 = vtanh.pop %v3121
        %v3836 = vtanh.pop %v3126
        %v3837 = vtanh.pop %v3129
        %v3838 = vtanh.pop %v3134
        %v3839 = vtanh.pop %v3137
        %v3840 = vtanh.pop %v3142
        %v3841 = vtanh.pop %v3145
        %v3842 = vtanh.pop %v3150
        %v3843 = vtanh.pop %v3153
        %v3844 = vtanh.pop %v3158
        %v3845 = vtanh.pop %v3161
        %v3846 = vtanh.pop %v3166
        %v3847 = vtanh.pop %v3169
        %v3848 = vtanh.pop %v3174
        %v3849 = vtanh.pop %v3177
        %v3850 = vtanh.pop %v3182
        %v3851 = vtanh.pop %v3185
        %v3852 = vtanh.pop %v3190
        %v3853 = vtanh.pop %v3193
        %v3854 = vtanh.pop %v3198
        %v3855 = vtanh.pop %v3201
        %v3856 = vtanh.pop %v3206
        %v3857 = vtanh.pop %v3209
        %v3858 = vtanh.pop %v3214
        %v3859 = vtanh.pop %v3217
        %v3860 = vtanh.pop %v3222
        %v3861 = vtanh.pop %v3225
        %v3862 = vtanh.pop %v3230
        %v3863 = vtanh.pop %v3233
        %v3864 = vtanh.pop %v3238
        %v3865 = vtanh.pop %v3241
        %v3866 = vtanh.pop %v3246
        %v3867 = vtanh.pop %v3249
        %v3868 = vtanh.pop %v3254
        %v3869 = vtanh.pop %v3257
        %v3870 = vtanh.pop %v3262
        %v3871 = vtanh.pop %v3265
        %v3872 = vtanh.pop %v3270
        %v3873 = vtanh.pop %v3273
        %v3874 = vtanh.pop %v3278
        %v3875 = vtanh.pop %v3281
        %v3876 = vtanh.pop %v3286
        %v3877 = vtanh.pop %v3289
        %v3878 = vtanh.pop %v3294
        %v3879 = vtanh.pop %v3297
        %v3880 = vtanh.pop %v3302
        %v3881 = vtanh.pop %v3305
        %v3882 = vtanh.pop %v3310
        %v3883 = vtanh.pop %v3313
        %v3884 = vtanh.pop %v3318
        %v3885 = vtanh.pop %v3321
        %v3886 = vtanh.pop %v3326
        %v3887 = vtanh.pop %v3329
        %v3888 = vtanh.pop %v3334
        %v3889 = vtanh.pop %v3337
        %v3890 = vtanh.pop %v3342
        %v3891 = vtanh.pop %v3345
        %v3892 = vtanh.pop %v3350
        %v3893 = vtanh.pop %v3353
        %v3894 = vtanh.pop %v3358
        %v3895 = vtanh.pop %v3361
        %v3896 = vtanh.pop %v3366
        %v3897 = vtanh.pop %v3369
        %v3898 = vtanh.pop %v3374
        %v3899 = vtanh.pop %v3377
        %v3900 = vtanh.pop %v3382
        %v3901 = vtanh.pop %v3385
        %v3902 = vtanh.pop %v3390
        %v3903 = vtanh.pop %v3393
        %v3904 = vtanh.pop %v3398
        %v3905 = vtanh.pop %v3401
        %v3906 = vtanh.pop %v3406
        %v3907 = vtanh.pop %v3409
        %v3908 = vtanh.pop %v3414
        %v3909 = vtanh.pop %v3417
        %v3910 = vtanh.pop %v3422
        %v3911 = vtanh.pop %v3425
        %v3912 = vtanh.pop %v3430
        %v3913 = vtanh.pop %v3433
        %v3914 = vtanh.pop %v3438
        %v3915 = vtanh.pop %v3441
        %v3916 = vtanh.pop %v3446
        %v3917 = vtanh.pop %v3449
        %v3918 = vtanh.pop %v3454
        %v3919 = vtanh.pop %v3457
        %v3920 = vtanh.pop %v3462
        %v3921 = vtanh.pop %v3465
        %v3922 = vtanh.pop %v3470
        %v3923 = vtanh.pop %v3473
        %v3924 = vtanh.pop %v3478
        %v3925 = vtanh.pop %v3481
        %v3926 = vtanh.pop %v3486
        %v3927 = vtanh.pop %v3489
        %v3928 = vtanh.pop %v3494
        %v3929 = vtanh.pop %v3497
        %v3930 = vtanh.pop %v3502
        %v3931 = vtanh.pop %v3505
        %v3932 = vtanh.pop %v3510
        %v3933 = vtanh.pop %v3513
        %v3934 = vtanh.pop %v3518
        %v3935 = vtanh.pop %v3521
        %v3936 = vtanh.pop %v3526
        %v3937 = vtanh.pop %v3529
        %v3938 = vtanh.pop %v3534
        %v3939 = vtanh.pop %v3537
        %v3940 = vtanh.pop %v3542
        %v3941 = vtanh.pop %v3545
        %v3942 = vtanh.pop %v3550
        %v3943 = vtanh.pop %v3553
        %v3944 = vtanh.pop %v3558
        %v3945 = vtanh.pop %v3561
        %v3946 = vtanh.pop %v3566
        %v3947 = vtanh.pop %v3569
        %v3948 = vtanh.pop %v3574
        %v3949 = vtanh.pop %v3577
        %v3950 = vtanh.pop %v3582
        %v3951 = vtanh.pop %v3585
        %v3952 = vtanh.pop %v3590
        %v3953 = vtanh.pop %v3593
        %v3954 = vtanh.pop %v3598
        %v3955 = vtanh.pop %v3601
        %v3956 = vtanh.pop %v3606
        %v3957 = vtanh.pop %v3609
        %v3958 = vtanh.pop %v3614
        %v3959 = vtanh.pop %v3617
        %v3960 = vtanh.pop %v3622
        %v3961 = vtanh.pop %v3625
        %v3962 = vtanh.pop %v3630
        %v3963 = vtanh.pop %v3633
        %v3964 = vtanh.pop %v3638
        %v3965 = vtanh.pop %v3641
        %v3966 = vtanh.pop %v3646
        %v3967 = vtanh.pop %v3649
        %v3968 = vtanh.pop %v3654
        %v3969 = vtanh.pop %v3657
        %v3970 = vtanh.pop %v3662
        %v3971 = vtanh.pop %v3665
        %v3972 = vtanh.pop %v3670
        %v3973 = vtanh.pop %v3673
        %v3974 = vtanh.pop %v3678
        %v3975 = vtanh.pop %v3681
        %v3976 = vtanh.pop %v3686
        %v3977 = vtanh.pop %v3689
        %v3978 = vtanh.pop %v3694
        %v3979 = vtanh.pop %v3697
        %v3980 = vtanh.pop %v3702
        %v3981 = vtanh.pop %v3705
        %v3982 = vtanh.pop %v3710
        %v3983 = vtanh.pop %v3713
        %v3984 = vtanh.pop %v3718
        %v3985 = vtanh.pop %v3721
        %v3986 = vtanh.pop %v3726
        %v3987 = vtanh.pop %v3729
        %v3988 = vpack.c.bf16 %v3733, %v3732
        %v3989 = vpack.c.bf16 %v3735, %v3734
        %v3990 = vpack.c.bf16 %v3737, %v3736
        %v3991 = vpack.c.bf16 %v3739, %v3738
        %v3992 = vpack.c.bf16 %v3741, %v3740
        %v3993 = vpack.c.bf16 %v3743, %v3742
        %v3994 = vpack.c.bf16 %v3745, %v3744
        %v3995 = vpack.c.bf16 %v3747, %v3746
        %v3996 = vpack.c.bf16 %v3749, %v3748
        %v3997 = vpack.c.bf16 %v3751, %v3750
        %v3998 = vpack.c.bf16 %v3753, %v3752
        %v3999 = vpack.c.bf16 %v3755, %v3754
        %v4000 = vpack.c.bf16 %v3757, %v3756
        %v4001 = vpack.c.bf16 %v3759, %v3758
        %v4002 = vpack.c.bf16 %v3761, %v3760
        %v4003 = vpack.c.bf16 %v3763, %v3762
        %v4004 = vpack.c.bf16 %v3765, %v3764
        %v4005 = vpack.c.bf16 %v3767, %v3766
        %v4006 = vpack.c.bf16 %v3769, %v3768
        %v4007 = vpack.c.bf16 %v3771, %v3770
        %v4008 = vpack.c.bf16 %v3773, %v3772
        %v4009 = vpack.c.bf16 %v3775, %v3774
        %v4010 = vpack.c.bf16 %v3777, %v3776
        %v4011 = vpack.c.bf16 %v3779, %v3778
        %v4012 = vpack.c.bf16 %v3781, %v3780
        %v4013 = vpack.c.bf16 %v3783, %v3782
        %v4014 = vpack.c.bf16 %v3785, %v3784
        %v4015 = vpack.c.bf16 %v3787, %v3786
        %v4016 = vpack.c.bf16 %v3789, %v3788
        %v4017 = vpack.c.bf16 %v3791, %v3790
        %v4018 = vpack.c.bf16 %v3793, %v3792
        %v4019 = vpack.c.bf16 %v3795, %v3794
        %v4020 = vpack.c.bf16 %v3797, %v3796
        %v4021 = vpack.c.bf16 %v3799, %v3798
        %v4022 = vpack.c.bf16 %v3801, %v3800
        %v4023 = vpack.c.bf16 %v3803, %v3802
        %v4024 = vpack.c.bf16 %v3805, %v3804
        %v4025 = vpack.c.bf16 %v3807, %v3806
        %v4026 = vpack.c.bf16 %v3809, %v3808
        %v4027 = vpack.c.bf16 %v3811, %v3810
        %v4028 = vpack.c.bf16 %v3813, %v3812
        %v4029 = vpack.c.bf16 %v3815, %v3814
        %v4030 = vpack.c.bf16 %v3817, %v3816
        %v4031 = vpack.c.bf16 %v3819, %v3818
        %v4032 = vpack.c.bf16 %v3821, %v3820
        %v4033 = vpack.c.bf16 %v3823, %v3822
        %v4034 = vpack.c.bf16 %v3825, %v3824
        %v4035 = vpack.c.bf16 %v3827, %v3826
        %v4036 = vpack.c.bf16 %v3829, %v3828
        %v4037 = vpack.c.bf16 %v3831, %v3830
        %v4038 = vpack.c.bf16 %v3833, %v3832
        %v4039 = vpack.c.bf16 %v3835, %v3834
        %v4040 = vpack.c.bf16 %v3837, %v3836
        %v4041 = vpack.c.bf16 %v3839, %v3838
        %v4042 = vpack.c.bf16 %v3841, %v3840
        %v4043 = vpack.c.bf16 %v3843, %v3842
        %v4044 = vpack.c.bf16 %v3845, %v3844
        %v4045 = vpack.c.bf16 %v3847, %v3846
        %v4046 = vpack.c.bf16 %v3849, %v3848
        %v4047 = vpack.c.bf16 %v3851, %v3850
        %v4048 = vpack.c.bf16 %v3853, %v3852
        %v4049 = vpack.c.bf16 %v3855, %v3854
        %v4050 = vpack.c.bf16 %v3857, %v3856
        %v4051 = vpack.c.bf16 %v3859, %v3858
        %v4052 = vpack.c.bf16 %v3861, %v3860
        %v4053 = vpack.c.bf16 %v3863, %v3862
        %v4054 = vpack.c.bf16 %v3865, %v3864
        %v4055 = vpack.c.bf16 %v3867, %v3866
        %v4056 = vpack.c.bf16 %v3869, %v3868
        %v4057 = vpack.c.bf16 %v3871, %v3870
        %v4058 = vpack.c.bf16 %v3873, %v3872
        %v4059 = vpack.c.bf16 %v3875, %v3874
        %v4060 = vpack.c.bf16 %v3877, %v3876
        %v4061 = vpack.c.bf16 %v3879, %v3878
        %v4062 = vpack.c.bf16 %v3881, %v3880
        %v4063 = vpack.c.bf16 %v3883, %v3882
        %v4064 = vpack.c.bf16 %v3885, %v3884
        %v4065 = vpack.c.bf16 %v3887, %v3886
        %v4066 = vpack.c.bf16 %v3889, %v3888
        %v4067 = vpack.c.bf16 %v3891, %v3890
        %v4068 = vpack.c.bf16 %v3893, %v3892
        %v4069 = vpack.c.bf16 %v3895, %v3894
        %v4070 = vpack.c.bf16 %v3897, %v3896
        %v4071 = vpack.c.bf16 %v3899, %v3898
        %v4072 = vpack.c.bf16 %v3901, %v3900
        %v4073 = vpack.c.bf16 %v3903, %v3902
        %v4074 = vpack.c.bf16 %v3905, %v3904
        %v4075 = vpack.c.bf16 %v3907, %v3906
        %v4076 = vpack.c.bf16 %v3909, %v3908
        %v4077 = vpack.c.bf16 %v3911, %v3910
        %v4078 = vpack.c.bf16 %v3913, %v3912
        %v4079 = vpack.c.bf16 %v3915, %v3914
        %v4080 = vpack.c.bf16 %v3917, %v3916
        %v4081 = vpack.c.bf16 %v3919, %v3918
        %v4082 = vpack.c.bf16 %v3921, %v3920
        %v4083 = vpack.c.bf16 %v3923, %v3922
        %v4084 = vpack.c.bf16 %v3925, %v3924
        %v4085 = vpack.c.bf16 %v3927, %v3926
        %v4086 = vpack.c.bf16 %v3929, %v3928
        %v4087 = vpack.c.bf16 %v3931, %v3930
        %v4088 = vpack.c.bf16 %v3933, %v3932
        %v4089 = vpack.c.bf16 %v3935, %v3934
        %v4090 = vpack.c.bf16 %v3937, %v3936
        %v4091 = vpack.c.bf16 %v3939, %v3938
        %v4092 = vpack.c.bf16 %v3941, %v3940
        %v4093 = vpack.c.bf16 %v3943, %v3942
        %v4094 = vpack.c.bf16 %v3945, %v3944
        %v4095 = vpack.c.bf16 %v3947, %v3946
        %v4096 = vpack.c.bf16 %v3949, %v3948
        %v4097 = vpack.c.bf16 %v3951, %v3950
        %v4098 = vpack.c.bf16 %v3953, %v3952
        %v4099 = vpack.c.bf16 %v3955, %v3954
        %v4100 = vpack.c.bf16 %v3957, %v3956
        %v4101 = vpack.c.bf16 %v3959, %v3958
        %v4102 = vpack.c.bf16 %v3961, %v3960
        %v4103 = vpack.c.bf16 %v3963, %v3962
        %v4104 = vpack.c.bf16 %v3965, %v3964
        %v4105 = vpack.c.bf16 %v3967, %v3966
        %v4106 = vpack.c.bf16 %v3969, %v3968
        %v4107 = vpack.c.bf16 %v3971, %v3970
        %v4108 = vpack.c.bf16 %v3973, %v3972
        %v4109 = vpack.c.bf16 %v3975, %v3974
        %v4110 = vpack.c.bf16 %v3977, %v3976
        %v4111 = vpack.c.bf16 %v3979, %v3978
        %v4112 = vpack.c.bf16 %v3981, %v3980
        %v4113 = vpack.c.bf16 %v3983, %v3982
        %v4114 = vpack.c.bf16 %v3985, %v3984
        %v4115 = vpack.c.bf16 %v3987, %v3986
        %v4116 = vld [vmem:[%s5] sm:$0xf]
        %v4117 = vld [vmem:[%s5 + $0x4] sm:$0xf]
        %v4118 = vld [vmem:[%s5 + $0x8] sm:$0xf]
        %v4119 = vld [vmem:[%s5 + $0xc] sm:$0xf]
        %v4120 = vld [vmem:[%s5 + $0x10] sm:$0xf]
        %v4121 = vld [vmem:[%s5 + $0x14] sm:$0xf]
        %v4122 = vld [vmem:[%s5 + $0x18] sm:$0xf]
        %v4123 = vld [vmem:[%s5 + $0x1c] sm:$0xf]
        %v4124 = vld [vmem:[%s5 + $0x20] sm:$0xf]
        %v4125 = vld [vmem:[%s5 + $0x24] sm:$0xf]
        %v4126 = vld [vmem:[%s5 + $0x28] sm:$0xf]
        %v4127 = vld [vmem:[%s5 + $0x2c] sm:$0xf]
        %v4128 = vld [vmem:[%s5 + $0x30] sm:$0xf]
        %v4129 = vld [vmem:[%s5 + $0x34] sm:$0xf]
        %v4130 = vld [vmem:[%s5 + $0x38] sm:$0xf]
        %v4131 = vld [vmem:[%s5 + $0x3c] sm:$0xf]
        %v4132 = vld [vmem:[%s6] sm:$0x1]
        %v4134 = vlaneseq
        %v4135 = vshrl.u32 %v4134, 7
        %v4136 = vsub.s32 0, %v4135
        %v4137 = vrot.slane %v4132, %v4136
        %v4155 = vunpack.c.l.b16 %v4116
        %v4156 = vunpack.c.l.b16 %v4117
        %v4157 = vunpack.c.l.b16 %v4118
        %v4158 = vunpack.c.l.b16 %v4119
        %v4159 = vunpack.c.l.b16 %v4120
        %v4160 = vunpack.c.l.b16 %v4121
        %v4161 = vunpack.c.l.b16 %v4122
        %v4162 = vunpack.c.l.b16 %v4123
        %v4163 = vunpack.c.l.b16 %v4124
        %v4164 = vunpack.c.l.b16 %v4125
        %v4165 = vunpack.c.l.b16 %v4126
        %v4166 = vunpack.c.l.b16 %v4127
        %v4167 = vunpack.c.l.b16 %v4128
        %v4168 = vunpack.c.l.b16 %v4129
        %v4169 = vunpack.c.l.b16 %v4130
        %v4170 = vunpack.c.l.b16 %v4131
        %v4171 = vpack.c.b16 %v4156, %v4155
        %v4172 = vpack.c.b16 %v4158, %v4157
        %v4173 = vpack.c.b16 %v4160, %v4159
        %v4174 = vpack.c.b16 %v4162, %v4161
        %v4175 = vpack.c.b16 %v4164, %v4163
        %v4176 = vpack.c.b16 %v4166, %v4165
        %v4177 = vpack.c.b16 %v4168, %v4167
        %v4178 = vpack.c.b16 %v4170, %v4169
        %4187 = vmatprep.subr.bf16.mxu0 0
        %4188 = vmatpush1.bf16.msra.mxu0 %v4178
        %4189 = vmatprep.subr.bf16.mxu0 0
        %4190 = vmatpush1.bf16.msra.mxu0 %v4177
        %4191 = vmatprep.subr.bf16.mxu0 0
        %4192 = vmatpush1.bf16.msra.mxu0 %v4176
        %4193 = vmatprep.subr.bf16.mxu0 0
        %4194 = vmatpush1.bf16.msra.mxu0 %v4175
        %4195 = vmatprep.subr.bf16.mxu0 0
        %4196 = vmatpush1.bf16.msra.mxu0 %v4174
        %4197 = vmatprep.subr.bf16.mxu0 0
        %4198 = vmatpush1.bf16.msra.mxu0 %v4173
        %4199 = vmatprep.subr.bf16.mxu0 0
        %4200 = vmatpush1.bf16.msra.mxu0 %v4172
        %4201 = vmatprep.subr.bf16.mxu0 0
        %4202 = vmatpush1.bf16.msra.mxu0 %v4171
        %4203 = vmatprep.subr.bf16.mxu0 0
        %4204 = vmatpush2.bf16.msra.mxu0 0
        %4205 = vmatprep.subr.bf16.mxu0 0
        %4206 = vmatpush2.bf16.msra.mxu0 0
        %4207 = vmatprep.subr.bf16.mxu0 0
        %4208 = vmatpush2.bf16.msra.mxu0 0
        %4209 = vmatprep.subr.bf16.mxu0 0
        %4210 = vmatpush2.bf16.msra.mxu0 0
        %4211 = vmatprep.subr.bf16.mxu0 0
        %4212 = vmatpush2.bf16.msra.mxu0 0
        %4213 = vmatprep.subr.bf16.mxu0 0
        %4214 = vmatpush2.bf16.msra.mxu0 0
        %4215 = vmatprep.subr.bf16.mxu0 0
        %4216 = vmatpush2.bf16.msra.mxu0 0
        %4217 = vmatprep.subr.bf16.mxu0 0
        %4218 = vmatpush2.bf16.msra.mxu0 0
        %4219 = vmatprep.mubr.bf16.mxu0 0
        %4220 = vmatmul.mubr.bf16.gmra.mxu0 %v3988
        %v4221 = vpop.f32.mrf.mxu0
        %v4222 = vadd.f32 %v4137, %v4221
        %v4223 = vpop.f32.mrf.mxu0
        %v4224 = vpop.f32.mrf.mxu0
        %v4225 = vadd.f32 %v4137, %v4224
        %v4226 = vpop.f32.mrf.mxu0
        %4227 = vmatprep.mubr.bf16.mxu0 0
        %4228 = vmatmul.mubr.bf16.gmra.mxu0 %v3989
        %v4229 = vpop.f32.mrf.mxu0
        %v4230 = vadd.f32 %v4137, %v4229
        %v4231 = vpop.f32.mrf.mxu0
        %v4232 = vpop.f32.mrf.mxu0
        %v4233 = vadd.f32 %v4137, %v4232
        %v4234 = vpop.f32.mrf.mxu0
        %4235 = vmatprep.mubr.bf16.mxu0 0
        %4236 = vmatmul.mubr.bf16.gmra.mxu0 %v3990
        %v4237 = vpop.f32.mrf.mxu0
        %v4238 = vadd.f32 %v4137, %v4237
        %v4239 = vpop.f32.mrf.mxu0
        %v4240 = vpop.f32.mrf.mxu0
        %v4241 = vadd.f32 %v4137, %v4240
        %v4242 = vpop.f32.mrf.mxu0
        %4243 = vmatprep.mubr.bf16.mxu0 0
        %4244 = vmatmul.mubr.bf16.gmra.mxu0 %v3991
        %v4245 = vpop.f32.mrf.mxu0
        %v4246 = vadd.f32 %v4137, %v4245
        %v4247 = vpop.f32.mrf.mxu0
        %v4248 = vpop.f32.mrf.mxu0
        %v4249 = vadd.f32 %v4137, %v4248
        %v4250 = vpop.f32.mrf.mxu0
        %4251 = vmatprep.mubr.bf16.mxu0 0
        %4252 = vmatmul.mubr.bf16.gmra.mxu0 %v3992
        %v4253 = vpop.f32.mrf.mxu0
        %v4254 = vadd.f32 %v4137, %v4253
        %v4255 = vpop.f32.mrf.mxu0
        %v4256 = vpop.f32.mrf.mxu0
        %v4257 = vadd.f32 %v4137, %v4256
        %v4258 = vpop.f32.mrf.mxu0
        %4259 = vmatprep.mubr.bf16.mxu0 0
        %4260 = vmatmul.mubr.bf16.gmra.mxu0 %v3993
        %v4261 = vpop.f32.mrf.mxu0
        %v4262 = vadd.f32 %v4137, %v4261
        %v4263 = vpop.f32.mrf.mxu0
        %v4264 = vpop.f32.mrf.mxu0
        %v4265 = vadd.f32 %v4137, %v4264
        %v4266 = vpop.f32.mrf.mxu0
        %4267 = vmatprep.mubr.bf16.mxu0 0
        %4268 = vmatmul.mubr.bf16.gmra.mxu0 %v3994
        %v4269 = vpop.f32.mrf.mxu0
        %v4270 = vadd.f32 %v4137, %v4269
        %v4271 = vpop.f32.mrf.mxu0
        %v4272 = vpop.f32.mrf.mxu0
        %v4273 = vadd.f32 %v4137, %v4272
        %v4274 = vpop.f32.mrf.mxu0
        %4275 = vmatprep.mubr.bf16.mxu0 0
        %4276 = vmatmul.mubr.bf16.gmra.mxu0 %v3995
        %v4277 = vpop.f32.mrf.mxu0
        %v4278 = vadd.f32 %v4137, %v4277
        %v4279 = vpop.f32.mrf.mxu0
        %v4280 = vpop.f32.mrf.mxu0
        %v4281 = vadd.f32 %v4137, %v4280
        %v4282 = vpop.f32.mrf.mxu0
        %4283 = vmatprep.mubr.bf16.mxu0 0
        %4284 = vmatmul.mubr.bf16.gmra.mxu0 %v3996
        %v4285 = vpop.f32.mrf.mxu0
        %v4286 = vadd.f32 %v4137, %v4285
        %v4287 = vpop.f32.mrf.mxu0
        %v4288 = vpop.f32.mrf.mxu0
        %v4289 = vadd.f32 %v4137, %v4288
        %v4290 = vpop.f32.mrf.mxu0
        %4291 = vmatprep.mubr.bf16.mxu0 0
        %4292 = vmatmul.mubr.bf16.gmra.mxu0 %v3997
        %v4293 = vpop.f32.mrf.mxu0
        %v4294 = vadd.f32 %v4137, %v4293
        %v4295 = vpop.f32.mrf.mxu0
        %v4296 = vpop.f32.mrf.mxu0
        %v4297 = vadd.f32 %v4137, %v4296
        %v4298 = vpop.f32.mrf.mxu0
        %4299 = vmatprep.mubr.bf16.mxu0 0
        %4300 = vmatmul.mubr.bf16.gmra.mxu0 %v3998
        %v4301 = vpop.f32.mrf.mxu0
        %v4302 = vadd.f32 %v4137, %v4301
        %v4303 = vpop.f32.mrf.mxu0
        %v4304 = vpop.f32.mrf.mxu0
        %v4305 = vadd.f32 %v4137, %v4304
        %v4306 = vpop.f32.mrf.mxu0
        %4307 = vmatprep.mubr.bf16.mxu0 0
        %4308 = vmatmul.mubr.bf16.gmra.mxu0 %v3999
        %v4309 = vpop.f32.mrf.mxu0
        %v4310 = vadd.f32 %v4137, %v4309
        %v4311 = vpop.f32.mrf.mxu0
        %v4312 = vpop.f32.mrf.mxu0
        %v4313 = vadd.f32 %v4137, %v4312
        %v4314 = vpop.f32.mrf.mxu0
        %4315 = vmatprep.mubr.bf16.mxu0 0
        %4316 = vmatmul.mubr.bf16.gmra.mxu0 %v4000
        %v4317 = vpop.f32.mrf.mxu0
        %v4318 = vadd.f32 %v4137, %v4317
        %v4319 = vpop.f32.mrf.mxu0
        %v4320 = vpop.f32.mrf.mxu0
        %v4321 = vadd.f32 %v4137, %v4320
        %v4322 = vpop.f32.mrf.mxu0
        %4323 = vmatprep.mubr.bf16.mxu0 0
        %4324 = vmatmul.mubr.bf16.gmra.mxu0 %v4001
        %v4325 = vpop.f32.mrf.mxu0
        %v4326 = vadd.f32 %v4137, %v4325
        %v4327 = vpop.f32.mrf.mxu0
        %v4328 = vpop.f32.mrf.mxu0
        %v4329 = vadd.f32 %v4137, %v4328
        %v4330 = vpop.f32.mrf.mxu0
        %4331 = vmatprep.mubr.bf16.mxu0 0
        %4332 = vmatmul.mubr.bf16.gmra.mxu0 %v4002
        %v4333 = vpop.f32.mrf.mxu0
        %v4334 = vadd.f32 %v4137, %v4333
        %v4335 = vpop.f32.mrf.mxu0
        %v4336 = vpop.f32.mrf.mxu0
        %v4337 = vadd.f32 %v4137, %v4336
        %v4338 = vpop.f32.mrf.mxu0
        %4339 = vmatprep.mubr.bf16.mxu0 0
        %4340 = vmatmul.mubr.bf16.gmra.mxu0 %v4003
        %v4341 = vpop.f32.mrf.mxu0
        %v4342 = vadd.f32 %v4137, %v4341
        %v4343 = vpop.f32.mrf.mxu0
        %v4344 = vpop.f32.mrf.mxu0
        %v4345 = vadd.f32 %v4137, %v4344
        %v4346 = vpop.f32.mrf.mxu0
        %4347 = vmatprep.mubr.bf16.mxu0 0
        %4348 = vmatmul.mubr.bf16.gmra.mxu0 %v4004
        %v4349 = vpop.f32.mrf.mxu0
        %v4350 = vadd.f32 %v4137, %v4349
        %v4351 = vpop.f32.mrf.mxu0
        %v4352 = vpop.f32.mrf.mxu0
        %v4353 = vadd.f32 %v4137, %v4352
        %v4354 = vpop.f32.mrf.mxu0
        %4355 = vmatprep.mubr.bf16.mxu0 0
        %4356 = vmatmul.mubr.bf16.gmra.mxu0 %v4005
        %v4357 = vpop.f32.mrf.mxu0
        %v4358 = vadd.f32 %v4137, %v4357
        %v4359 = vpop.f32.mrf.mxu0
        %v4360 = vpop.f32.mrf.mxu0
        %v4361 = vadd.f32 %v4137, %v4360
        %v4362 = vpop.f32.mrf.mxu0
        %4363 = vmatprep.mubr.bf16.mxu0 0
        %4364 = vmatmul.mubr.bf16.gmra.mxu0 %v4006
        %v4365 = vpop.f32.mrf.mxu0
        %v4366 = vadd.f32 %v4137, %v4365
        %v4367 = vpop.f32.mrf.mxu0
        %v4368 = vpop.f32.mrf.mxu0
        %v4369 = vadd.f32 %v4137, %v4368
        %v4370 = vpop.f32.mrf.mxu0
        %4371 = vmatprep.mubr.bf16.mxu0 0
        %4372 = vmatmul.mubr.bf16.gmra.mxu0 %v4007
        %v4373 = vpop.f32.mrf.mxu0
        %v4374 = vadd.f32 %v4137, %v4373
        %v4375 = vpop.f32.mrf.mxu0
        %v4376 = vpop.f32.mrf.mxu0
        %v4377 = vadd.f32 %v4137, %v4376
        %v4378 = vpop.f32.mrf.mxu0
        %4379 = vmatprep.mubr.bf16.mxu0 0
        %4380 = vmatmul.mubr.bf16.gmra.mxu0 %v4008
        %v4381 = vpop.f32.mrf.mxu0
        %v4382 = vadd.f32 %v4137, %v4381
        %v4383 = vpop.f32.mrf.mxu0
        %v4384 = vpop.f32.mrf.mxu0
        %v4385 = vadd.f32 %v4137, %v4384
        %v4386 = vpop.f32.mrf.mxu0
        %4387 = vmatprep.mubr.bf16.mxu0 0
        %4388 = vmatmul.mubr.bf16.gmra.mxu0 %v4009
        %v4389 = vpop.f32.mrf.mxu0
        %v4390 = vadd.f32 %v4137, %v4389
        %v4391 = vpop.f32.mrf.mxu0
        %v4392 = vpop.f32.mrf.mxu0
        %v4393 = vadd.f32 %v4137, %v4392
        %v4394 = vpop.f32.mrf.mxu0
        %4395 = vmatprep.mubr.bf16.mxu0 0
        %4396 = vmatmul.mubr.bf16.gmra.mxu0 %v4010
        %v4397 = vpop.f32.mrf.mxu0
        %v4398 = vadd.f32 %v4137, %v4397
        %v4399 = vpop.f32.mrf.mxu0
        %v4400 = vpop.f32.mrf.mxu0
        %v4401 = vadd.f32 %v4137, %v4400
        %v4402 = vpop.f32.mrf.mxu0
        %4403 = vmatprep.mubr.bf16.mxu0 0
        %4404 = vmatmul.mubr.bf16.gmra.mxu0 %v4011
        %v4405 = vpop.f32.mrf.mxu0
        %v4406 = vadd.f32 %v4137, %v4405
        %v4407 = vpop.f32.mrf.mxu0
        %v4408 = vpop.f32.mrf.mxu0
        %v4409 = vadd.f32 %v4137, %v4408
        %v4410 = vpop.f32.mrf.mxu0
        %4411 = vmatprep.mubr.bf16.mxu0 0
        %4412 = vmatmul.mubr.bf16.gmra.mxu0 %v4012
        %v4413 = vpop.f32.mrf.mxu0
        %v4414 = vadd.f32 %v4137, %v4413
        %v4415 = vpop.f32.mrf.mxu0
        %v4416 = vpop.f32.mrf.mxu0
        %v4417 = vadd.f32 %v4137, %v4416
        %v4418 = vpop.f32.mrf.mxu0
        %4419 = vmatprep.mubr.bf16.mxu0 0
        %4420 = vmatmul.mubr.bf16.gmra.mxu0 %v4013
        %v4421 = vpop.f32.mrf.mxu0
        %v4422 = vadd.f32 %v4137, %v4421
        %v4423 = vpop.f32.mrf.mxu0
        %v4424 = vpop.f32.mrf.mxu0
        %v4425 = vadd.f32 %v4137, %v4424
        %v4426 = vpop.f32.mrf.mxu0
        %4427 = vmatprep.mubr.bf16.mxu0 0
        %4428 = vmatmul.mubr.bf16.gmra.mxu0 %v4014
        %v4429 = vpop.f32.mrf.mxu0
        %v4430 = vadd.f32 %v4137, %v4429
        %v4431 = vpop.f32.mrf.mxu0
        %v4432 = vpop.f32.mrf.mxu0
        %v4433 = vadd.f32 %v4137, %v4432
        %v4434 = vpop.f32.mrf.mxu0
        %4435 = vmatprep.mubr.bf16.mxu0 0
        %4436 = vmatmul.mubr.bf16.gmra.mxu0 %v4015
        %v4437 = vpop.f32.mrf.mxu0
        %v4438 = vadd.f32 %v4137, %v4437
        %v4439 = vpop.f32.mrf.mxu0
        %v4440 = vpop.f32.mrf.mxu0
        %v4441 = vadd.f32 %v4137, %v4440
        %v4442 = vpop.f32.mrf.mxu0
        %4443 = vmatprep.mubr.bf16.mxu0 0
        %4444 = vmatmul.mubr.bf16.gmra.mxu0 %v4016
        %v4445 = vpop.f32.mrf.mxu0
        %v4446 = vadd.f32 %v4137, %v4445
        %v4447 = vpop.f32.mrf.mxu0
        %v4448 = vpop.f32.mrf.mxu0
        %v4449 = vadd.f32 %v4137, %v4448
        %v4450 = vpop.f32.mrf.mxu0
        %4451 = vmatprep.mubr.bf16.mxu0 0
        %4452 = vmatmul.mubr.bf16.gmra.mxu0 %v4017
        %v4453 = vpop.f32.mrf.mxu0
        %v4454 = vadd.f32 %v4137, %v4453
        %v4455 = vpop.f32.mrf.mxu0
        %v4456 = vpop.f32.mrf.mxu0
        %v4457 = vadd.f32 %v4137, %v4456
        %v4458 = vpop.f32.mrf.mxu0
        %4459 = vmatprep.mubr.bf16.mxu0 0
        %4460 = vmatmul.mubr.bf16.gmra.mxu0 %v4018
        %v4461 = vpop.f32.mrf.mxu0
        %v4462 = vadd.f32 %v4137, %v4461
        %v4463 = vpop.f32.mrf.mxu0
        %v4464 = vpop.f32.mrf.mxu0
        %v4465 = vadd.f32 %v4137, %v4464
        %v4466 = vpop.f32.mrf.mxu0
        %4467 = vmatprep.mubr.bf16.mxu0 0
        %4468 = vmatmul.mubr.bf16.gmra.mxu0 %v4019
        %v4469 = vpop.f32.mrf.mxu0
        %v4470 = vadd.f32 %v4137, %v4469
        %v4471 = vpop.f32.mrf.mxu0
        %v4472 = vpop.f32.mrf.mxu0
        %v4473 = vadd.f32 %v4137, %v4472
        %v4474 = vpop.f32.mrf.mxu0
        %4475 = vmatprep.mubr.bf16.mxu0 0
        %4476 = vmatmul.mubr.bf16.gmra.mxu0 %v4020
        %v4477 = vpop.f32.mrf.mxu0
        %v4478 = vadd.f32 %v4137, %v4477
        %v4479 = vpop.f32.mrf.mxu0
        %v4480 = vpop.f32.mrf.mxu0
        %v4481 = vadd.f32 %v4137, %v4480
        %v4482 = vpop.f32.mrf.mxu0
        %4483 = vmatprep.mubr.bf16.mxu0 0
        %4484 = vmatmul.mubr.bf16.gmra.mxu0 %v4021
        %v4485 = vpop.f32.mrf.mxu0
        %v4486 = vadd.f32 %v4137, %v4485
        %v4487 = vpop.f32.mrf.mxu0
        %v4488 = vpop.f32.mrf.mxu0
        %v4489 = vadd.f32 %v4137, %v4488
        %v4490 = vpop.f32.mrf.mxu0
        %4491 = vmatprep.mubr.bf16.mxu0 0
        %4492 = vmatmul.mubr.bf16.gmra.mxu0 %v4022
        %v4493 = vpop.f32.mrf.mxu0
        %v4494 = vadd.f32 %v4137, %v4493
        %v4495 = vpop.f32.mrf.mxu0
        %v4496 = vpop.f32.mrf.mxu0
        %v4497 = vadd.f32 %v4137, %v4496
        %v4498 = vpop.f32.mrf.mxu0
        %4499 = vmatprep.mubr.bf16.mxu0 0
        %4500 = vmatmul.mubr.bf16.gmra.mxu0 %v4023
        %v4501 = vpop.f32.mrf.mxu0
        %v4502 = vadd.f32 %v4137, %v4501
        %v4503 = vpop.f32.mrf.mxu0
        %v4504 = vpop.f32.mrf.mxu0
        %v4505 = vadd.f32 %v4137, %v4504
        %v4506 = vpop.f32.mrf.mxu0
        %4507 = vmatprep.mubr.bf16.mxu0 0
        %4508 = vmatmul.mubr.bf16.gmra.mxu0 %v4024
        %v4509 = vpop.f32.mrf.mxu0
        %v4510 = vadd.f32 %v4137, %v4509
        %v4511 = vpop.f32.mrf.mxu0
        %v4512 = vpop.f32.mrf.mxu0
        %v4513 = vadd.f32 %v4137, %v4512
        %v4514 = vpop.f32.mrf.mxu0
        %4515 = vmatprep.mubr.bf16.mxu0 0
        %4516 = vmatmul.mubr.bf16.gmra.mxu0 %v4025
        %v4517 = vpop.f32.mrf.mxu0
        %v4518 = vadd.f32 %v4137, %v4517
        %v4519 = vpop.f32.mrf.mxu0
        %v4520 = vpop.f32.mrf.mxu0
        %v4521 = vadd.f32 %v4137, %v4520
        %v4522 = vpop.f32.mrf.mxu0
        %4523 = vmatprep.mubr.bf16.mxu0 0
        %4524 = vmatmul.mubr.bf16.gmra.mxu0 %v4026
        %v4525 = vpop.f32.mrf.mxu0
        %v4526 = vadd.f32 %v4137, %v4525
        %v4527 = vpop.f32.mrf.mxu0
        %v4528 = vpop.f32.mrf.mxu0
        %v4529 = vadd.f32 %v4137, %v4528
        %v4530 = vpop.f32.mrf.mxu0
        %4531 = vmatprep.mubr.bf16.mxu0 0
        %4532 = vmatmul.mubr.bf16.gmra.mxu0 %v4027
        %v4533 = vpop.f32.mrf.mxu0
        %v4534 = vadd.f32 %v4137, %v4533
        %v4535 = vpop.f32.mrf.mxu0
        %v4536 = vpop.f32.mrf.mxu0
        %v4537 = vadd.f32 %v4137, %v4536
        %v4538 = vpop.f32.mrf.mxu0
        %4539 = vmatprep.mubr.bf16.mxu0 0
        %4540 = vmatmul.mubr.bf16.gmra.mxu0 %v4028
        %v4541 = vpop.f32.mrf.mxu0
        %v4542 = vadd.f32 %v4137, %v4541
        %v4543 = vpop.f32.mrf.mxu0
        %v4544 = vpop.f32.mrf.mxu0
        %v4545 = vadd.f32 %v4137, %v4544
        %v4546 = vpop.f32.mrf.mxu0
        %4547 = vmatprep.mubr.bf16.mxu0 0
        %4548 = vmatmul.mubr.bf16.gmra.mxu0 %v4029
        %v4549 = vpop.f32.mrf.mxu0
        %v4550 = vadd.f32 %v4137, %v4549
        %v4551 = vpop.f32.mrf.mxu0
        %v4552 = vpop.f32.mrf.mxu0
        %v4553 = vadd.f32 %v4137, %v4552
        %v4554 = vpop.f32.mrf.mxu0
        %4555 = vmatprep.mubr.bf16.mxu0 0
        %4556 = vmatmul.mubr.bf16.gmra.mxu0 %v4030
        %v4557 = vpop.f32.mrf.mxu0
        %v4558 = vadd.f32 %v4137, %v4557
        %v4559 = vpop.f32.mrf.mxu0
        %v4560 = vpop.f32.mrf.mxu0
        %v4561 = vadd.f32 %v4137, %v4560
        %v4562 = vpop.f32.mrf.mxu0
        %4563 = vmatprep.mubr.bf16.mxu0 0
        %4564 = vmatmul.mubr.bf16.gmra.mxu0 %v4031
        %v4565 = vpop.f32.mrf.mxu0
        %v4566 = vadd.f32 %v4137, %v4565
        %v4567 = vpop.f32.mrf.mxu0
        %v4568 = vpop.f32.mrf.mxu0
        %v4569 = vadd.f32 %v4137, %v4568
        %v4570 = vpop.f32.mrf.mxu0
        %4571 = vmatprep.mubr.bf16.mxu0 0
        %4572 = vmatmul.mubr.bf16.gmra.mxu0 %v4032
        %v4573 = vpop.f32.mrf.mxu0
        %v4574 = vadd.f32 %v4137, %v4573
        %v4575 = vpop.f32.mrf.mxu0
        %v4576 = vpop.f32.mrf.mxu0
        %v4577 = vadd.f32 %v4137, %v4576
        %v4578 = vpop.f32.mrf.mxu0
        %4579 = vmatprep.mubr.bf16.mxu0 0
        %4580 = vmatmul.mubr.bf16.gmra.mxu0 %v4033
        %v4581 = vpop.f32.mrf.mxu0
        %v4582 = vadd.f32 %v4137, %v4581
        %v4583 = vpop.f32.mrf.mxu0
        %v4584 = vpop.f32.mrf.mxu0
        %v4585 = vadd.f32 %v4137, %v4584
        %v4586 = vpop.f32.mrf.mxu0
        %4587 = vmatprep.mubr.bf16.mxu0 0
        %4588 = vmatmul.mubr.bf16.gmra.mxu0 %v4034
        %v4589 = vpop.f32.mrf.mxu0
        %v4590 = vadd.f32 %v4137, %v4589
        %v4591 = vpop.f32.mrf.mxu0
        %v4592 = vpop.f32.mrf.mxu0
        %v4593 = vadd.f32 %v4137, %v4592
        %v4594 = vpop.f32.mrf.mxu0
        %4595 = vmatprep.mubr.bf16.mxu0 0
        %4596 = vmatmul.mubr.bf16.gmra.mxu0 %v4035
        %v4597 = vpop.f32.mrf.mxu0
        %v4598 = vadd.f32 %v4137, %v4597
        %v4599 = vpop.f32.mrf.mxu0
        %v4600 = vpop.f32.mrf.mxu0
        %v4601 = vadd.f32 %v4137, %v4600
        %v4602 = vpop.f32.mrf.mxu0
        %4603 = vmatprep.mubr.bf16.mxu0 0
        %4604 = vmatmul.mubr.bf16.gmra.mxu0 %v4036
        %v4605 = vpop.f32.mrf.mxu0
        %v4606 = vadd.f32 %v4137, %v4605
        %v4607 = vpop.f32.mrf.mxu0
        %v4608 = vpop.f32.mrf.mxu0
        %v4609 = vadd.f32 %v4137, %v4608
        %v4610 = vpop.f32.mrf.mxu0
        %4611 = vmatprep.mubr.bf16.mxu0 0
        %4612 = vmatmul.mubr.bf16.gmra.mxu0 %v4037
        %v4613 = vpop.f32.mrf.mxu0
        %v4614 = vadd.f32 %v4137, %v4613
        %v4615 = vpop.f32.mrf.mxu0
        %v4616 = vpop.f32.mrf.mxu0
        %v4617 = vadd.f32 %v4137, %v4616
        %v4618 = vpop.f32.mrf.mxu0
        %4619 = vmatprep.mubr.bf16.mxu0 0
        %4620 = vmatmul.mubr.bf16.gmra.mxu0 %v4038
        %v4621 = vpop.f32.mrf.mxu0
        %v4622 = vadd.f32 %v4137, %v4621
        %v4623 = vpop.f32.mrf.mxu0
        %v4624 = vpop.f32.mrf.mxu0
        %v4625 = vadd.f32 %v4137, %v4624
        %v4626 = vpop.f32.mrf.mxu0
        %4627 = vmatprep.mubr.bf16.mxu0 0
        %4628 = vmatmul.mubr.bf16.gmra.mxu0 %v4039
        %v4629 = vpop.f32.mrf.mxu0
        %v4630 = vadd.f32 %v4137, %v4629
        %v4631 = vpop.f32.mrf.mxu0
        %v4632 = vpop.f32.mrf.mxu0
        %v4633 = vadd.f32 %v4137, %v4632
        %v4634 = vpop.f32.mrf.mxu0
        %4635 = vmatprep.mubr.bf16.mxu0 0
        %4636 = vmatmul.mubr.bf16.gmra.mxu0 %v4040
        %v4637 = vpop.f32.mrf.mxu0
        %v4638 = vadd.f32 %v4137, %v4637
        %v4639 = vpop.f32.mrf.mxu0
        %v4640 = vpop.f32.mrf.mxu0
        %v4641 = vadd.f32 %v4137, %v4640
        %v4642 = vpop.f32.mrf.mxu0
        %4643 = vmatprep.mubr.bf16.mxu0 0
        %4644 = vmatmul.mubr.bf16.gmra.mxu0 %v4041
        %v4645 = vpop.f32.mrf.mxu0
        %v4646 = vadd.f32 %v4137, %v4645
        %v4647 = vpop.f32.mrf.mxu0
        %v4648 = vpop.f32.mrf.mxu0
        %v4649 = vadd.f32 %v4137, %v4648
        %v4650 = vpop.f32.mrf.mxu0
        %4651 = vmatprep.mubr.bf16.mxu0 0
        %4652 = vmatmul.mubr.bf16.gmra.mxu0 %v4042
        %v4653 = vpop.f32.mrf.mxu0
        %v4654 = vadd.f32 %v4137, %v4653
        %v4655 = vpop.f32.mrf.mxu0
        %v4656 = vpop.f32.mrf.mxu0
        %v4657 = vadd.f32 %v4137, %v4656
        %v4658 = vpop.f32.mrf.mxu0
        %4659 = vmatprep.mubr.bf16.mxu0 0
        %4660 = vmatmul.mubr.bf16.gmra.mxu0 %v4043
        %v4661 = vpop.f32.mrf.mxu0
        %v4662 = vadd.f32 %v4137, %v4661
        %v4663 = vpop.f32.mrf.mxu0
        %v4664 = vpop.f32.mrf.mxu0
        %v4665 = vadd.f32 %v4137, %v4664
        %v4666 = vpop.f32.mrf.mxu0
        %4667 = vmatprep.mubr.bf16.mxu0 0
        %4668 = vmatmul.mubr.bf16.gmra.mxu0 %v4044
        %v4669 = vpop.f32.mrf.mxu0
        %v4670 = vadd.f32 %v4137, %v4669
        %v4671 = vpop.f32.mrf.mxu0
        %v4672 = vpop.f32.mrf.mxu0
        %v4673 = vadd.f32 %v4137, %v4672
        %v4674 = vpop.f32.mrf.mxu0
        %4675 = vmatprep.mubr.bf16.mxu0 0
        %4676 = vmatmul.mubr.bf16.gmra.mxu0 %v4045
        %v4677 = vpop.f32.mrf.mxu0
        %v4678 = vadd.f32 %v4137, %v4677
        %v4679 = vpop.f32.mrf.mxu0
        %v4680 = vpop.f32.mrf.mxu0
        %v4681 = vadd.f32 %v4137, %v4680
        %v4682 = vpop.f32.mrf.mxu0
        %4683 = vmatprep.mubr.bf16.mxu0 0
        %4684 = vmatmul.mubr.bf16.gmra.mxu0 %v4046
        %v4685 = vpop.f32.mrf.mxu0
        %v4686 = vadd.f32 %v4137, %v4685
        %v4687 = vpop.f32.mrf.mxu0
        %v4688 = vpop.f32.mrf.mxu0
        %v4689 = vadd.f32 %v4137, %v4688
        %v4690 = vpop.f32.mrf.mxu0
        %4691 = vmatprep.mubr.bf16.mxu0 0
        %4692 = vmatmul.mubr.bf16.gmra.mxu0 %v4047
        %v4693 = vpop.f32.mrf.mxu0
        %v4694 = vadd.f32 %v4137, %v4693
        %v4695 = vpop.f32.mrf.mxu0
        %v4696 = vpop.f32.mrf.mxu0
        %v4697 = vadd.f32 %v4137, %v4696
        %v4698 = vpop.f32.mrf.mxu0
        %4699 = vmatprep.mubr.bf16.mxu0 0
        %4700 = vmatmul.mubr.bf16.gmra.mxu0 %v4048
        %v4701 = vpop.f32.mrf.mxu0
        %v4702 = vadd.f32 %v4137, %v4701
        %v4703 = vpop.f32.mrf.mxu0
        %v4704 = vpop.f32.mrf.mxu0
        %v4705 = vadd.f32 %v4137, %v4704
        %v4706 = vpop.f32.mrf.mxu0
        %4707 = vmatprep.mubr.bf16.mxu0 0
        %4708 = vmatmul.mubr.bf16.gmra.mxu0 %v4049
        %v4709 = vpop.f32.mrf.mxu0
        %v4710 = vadd.f32 %v4137, %v4709
        %v4711 = vpop.f32.mrf.mxu0
        %v4712 = vpop.f32.mrf.mxu0
        %v4713 = vadd.f32 %v4137, %v4712
        %v4714 = vpop.f32.mrf.mxu0
        %4715 = vmatprep.mubr.bf16.mxu0 0
        %4716 = vmatmul.mubr.bf16.gmra.mxu0 %v4050
        %v4717 = vpop.f32.mrf.mxu0
        %v4718 = vadd.f32 %v4137, %v4717
        %v4719 = vpop.f32.mrf.mxu0
        %v4720 = vpop.f32.mrf.mxu0
        %v4721 = vadd.f32 %v4137, %v4720
        %v4722 = vpop.f32.mrf.mxu0
        %4723 = vmatprep.mubr.bf16.mxu0 0
        %4724 = vmatmul.mubr.bf16.gmra.mxu0 %v4051
        %v4725 = vpop.f32.mrf.mxu0
        %v4726 = vadd.f32 %v4137, %v4725
        %v4727 = vpop.f32.mrf.mxu0
        %v4728 = vpop.f32.mrf.mxu0
        %v4729 = vadd.f32 %v4137, %v4728
        %v4730 = vpop.f32.mrf.mxu0
        %4731 = vmatprep.mubr.bf16.mxu0 0
        %4732 = vmatmul.mubr.bf16.gmra.mxu0 %v4052
        %v4733 = vpop.f32.mrf.mxu0
        %v4734 = vadd.f32 %v4137, %v4733
        %v4735 = vpop.f32.mrf.mxu0
        %v4736 = vpop.f32.mrf.mxu0
        %v4737 = vadd.f32 %v4137, %v4736
        %v4738 = vpop.f32.mrf.mxu0
        %4739 = vmatprep.mubr.bf16.mxu0 0
        %4740 = vmatmul.mubr.bf16.gmra.mxu0 %v4053
        %v4741 = vpop.f32.mrf.mxu0
        %v4742 = vadd.f32 %v4137, %v4741
        %v4743 = vpop.f32.mrf.mxu0
        %v4744 = vpop.f32.mrf.mxu0
        %v4745 = vadd.f32 %v4137, %v4744
        %v4746 = vpop.f32.mrf.mxu0
        %4747 = vmatprep.mubr.bf16.mxu0 0
        %4748 = vmatmul.mubr.bf16.gmra.mxu0 %v4054
        %v4749 = vpop.f32.mrf.mxu0
        %v4750 = vadd.f32 %v4137, %v4749
        %v4751 = vpop.f32.mrf.mxu0
        %v4752 = vpop.f32.mrf.mxu0
        %v4753 = vadd.f32 %v4137, %v4752
        %v4754 = vpop.f32.mrf.mxu0
        %4755 = vmatprep.mubr.bf16.mxu0 0
        %4756 = vmatmul.mubr.bf16.gmra.mxu0 %v4055
        %v4757 = vpop.f32.mrf.mxu0
        %v4758 = vadd.f32 %v4137, %v4757
        %v4759 = vpop.f32.mrf.mxu0
        %v4760 = vpop.f32.mrf.mxu0
        %v4761 = vadd.f32 %v4137, %v4760
        %v4762 = vpop.f32.mrf.mxu0
        %4763 = vmatprep.mubr.bf16.mxu0 0
        %4764 = vmatmul.mubr.bf16.gmra.mxu0 %v4056
        %v4765 = vpop.f32.mrf.mxu0
        %v4766 = vadd.f32 %v4137, %v4765
        %v4767 = vpop.f32.mrf.mxu0
        %v4768 = vpop.f32.mrf.mxu0
        %v4769 = vadd.f32 %v4137, %v4768
        %v4770 = vpop.f32.mrf.mxu0
        %4771 = vmatprep.mubr.bf16.mxu0 0
        %4772 = vmatmul.mubr.bf16.gmra.mxu0 %v4057
        %v4773 = vpop.f32.mrf.mxu0
        %v4774 = vadd.f32 %v4137, %v4773
        %v4775 = vpop.f32.mrf.mxu0
        %v4776 = vpop.f32.mrf.mxu0
        %v4777 = vadd.f32 %v4137, %v4776
        %v4778 = vpop.f32.mrf.mxu0
        %4779 = vmatprep.mubr.bf16.mxu0 0
        %4780 = vmatmul.mubr.bf16.gmra.mxu0 %v4058
        %v4781 = vpop.f32.mrf.mxu0
        %v4782 = vadd.f32 %v4137, %v4781
        %v4783 = vpop.f32.mrf.mxu0
        %v4784 = vpop.f32.mrf.mxu0
        %v4785 = vadd.f32 %v4137, %v4784
        %v4786 = vpop.f32.mrf.mxu0
        %4787 = vmatprep.mubr.bf16.mxu0 0
        %4788 = vmatmul.mubr.bf16.gmra.mxu0 %v4059
        %v4789 = vpop.f32.mrf.mxu0
        %v4790 = vadd.f32 %v4137, %v4789
        %v4791 = vpop.f32.mrf.mxu0
        %v4792 = vpop.f32.mrf.mxu0
        %v4793 = vadd.f32 %v4137, %v4792
        %v4794 = vpop.f32.mrf.mxu0
        %4795 = vmatprep.mubr.bf16.mxu0 0
        %4796 = vmatmul.mubr.bf16.gmra.mxu0 %v4060
        %v4797 = vpop.f32.mrf.mxu0
        %v4798 = vadd.f32 %v4137, %v4797
        %v4799 = vpop.f32.mrf.mxu0
        %v4800 = vpop.f32.mrf.mxu0
        %v4801 = vadd.f32 %v4137, %v4800
        %v4802 = vpop.f32.mrf.mxu0
        %4803 = vmatprep.mubr.bf16.mxu0 0
        %4804 = vmatmul.mubr.bf16.gmra.mxu0 %v4061
        %v4805 = vpop.f32.mrf.mxu0
        %v4806 = vadd.f32 %v4137, %v4805
        %v4807 = vpop.f32.mrf.mxu0
        %v4808 = vpop.f32.mrf.mxu0
        %v4809 = vadd.f32 %v4137, %v4808
        %v4810 = vpop.f32.mrf.mxu0
        %4811 = vmatprep.mubr.bf16.mxu0 0
        %4812 = vmatmul.mubr.bf16.gmra.mxu0 %v4062
        %v4813 = vpop.f32.mrf.mxu0
        %v4814 = vadd.f32 %v4137, %v4813
        %v4815 = vpop.f32.mrf.mxu0
        %v4816 = vpop.f32.mrf.mxu0
        %v4817 = vadd.f32 %v4137, %v4816
        %v4818 = vpop.f32.mrf.mxu0
        %4819 = vmatprep.mubr.bf16.mxu0 0
        %4820 = vmatmul.mubr.bf16.gmra.mxu0 %v4063
        %v4821 = vpop.f32.mrf.mxu0
        %v4822 = vadd.f32 %v4137, %v4821
        %v4823 = vpop.f32.mrf.mxu0
        %v4824 = vpop.f32.mrf.mxu0
        %v4825 = vadd.f32 %v4137, %v4824
        %v4826 = vpop.f32.mrf.mxu0
        %4827 = vmatprep.mubr.bf16.mxu0 0
        %4828 = vmatmul.mubr.bf16.gmra.mxu0 %v4064
        %v4829 = vpop.f32.mrf.mxu0
        %v4830 = vadd.f32 %v4137, %v4829
        %v4831 = vpop.f32.mrf.mxu0
        %v4832 = vpop.f32.mrf.mxu0
        %v4833 = vadd.f32 %v4137, %v4832
        %v4834 = vpop.f32.mrf.mxu0
        %4835 = vmatprep.mubr.bf16.mxu0 0
        %4836 = vmatmul.mubr.bf16.gmra.mxu0 %v4065
        %v4837 = vpop.f32.mrf.mxu0
        %v4838 = vadd.f32 %v4137, %v4837
        %v4839 = vpop.f32.mrf.mxu0
        %v4840 = vpop.f32.mrf.mxu0
        %v4841 = vadd.f32 %v4137, %v4840
        %v4842 = vpop.f32.mrf.mxu0
        %4843 = vmatprep.mubr.bf16.mxu0 0
        %4844 = vmatmul.mubr.bf16.gmra.mxu0 %v4066
        %v4845 = vpop.f32.mrf.mxu0
        %v4846 = vadd.f32 %v4137, %v4845
        %v4847 = vpop.f32.mrf.mxu0
        %v4848 = vpop.f32.mrf.mxu0
        %v4849 = vadd.f32 %v4137, %v4848
        %v4850 = vpop.f32.mrf.mxu0
        %4851 = vmatprep.mubr.bf16.mxu0 0
        %4852 = vmatmul.mubr.bf16.gmra.mxu0 %v4067
        %v4853 = vpop.f32.mrf.mxu0
        %v4854 = vadd.f32 %v4137, %v4853
        %v4855 = vpop.f32.mrf.mxu0
        %v4856 = vpop.f32.mrf.mxu0
        %v4857 = vadd.f32 %v4137, %v4856
        %v4858 = vpop.f32.mrf.mxu0
        %4859 = vmatprep.mubr.bf16.mxu0 0
        %4860 = vmatmul.mubr.bf16.gmra.mxu0 %v4068
        %v4861 = vpop.f32.mrf.mxu0
        %v4862 = vadd.f32 %v4137, %v4861
        %v4863 = vpop.f32.mrf.mxu0
        %v4864 = vpop.f32.mrf.mxu0
        %v4865 = vadd.f32 %v4137, %v4864
        %v4866 = vpop.f32.mrf.mxu0
        %4867 = vmatprep.mubr.bf16.mxu0 0
        %4868 = vmatmul.mubr.bf16.gmra.mxu0 %v4069
        %v4869 = vpop.f32.mrf.mxu0
        %v4870 = vadd.f32 %v4137, %v4869
        %v4871 = vpop.f32.mrf.mxu0
        %v4872 = vpop.f32.mrf.mxu0
        %v4873 = vadd.f32 %v4137, %v4872
        %v4874 = vpop.f32.mrf.mxu0
        %4875 = vmatprep.mubr.bf16.mxu0 0
        %4876 = vmatmul.mubr.bf16.gmra.mxu0 %v4070
        %v4877 = vpop.f32.mrf.mxu0
        %v4878 = vadd.f32 %v4137, %v4877
        %v4879 = vpop.f32.mrf.mxu0
        %v4880 = vpop.f32.mrf.mxu0
        %v4881 = vadd.f32 %v4137, %v4880
        %v4882 = vpop.f32.mrf.mxu0
        %4883 = vmatprep.mubr.bf16.mxu0 0
        %4884 = vmatmul.mubr.bf16.gmra.mxu0 %v4071
        %v4885 = vpop.f32.mrf.mxu0
        %v4886 = vadd.f32 %v4137, %v4885
        %v4887 = vpop.f32.mrf.mxu0
        %v4888 = vpop.f32.mrf.mxu0
        %v4889 = vadd.f32 %v4137, %v4888
        %v4890 = vpop.f32.mrf.mxu0
        %4891 = vmatprep.mubr.bf16.mxu0 0
        %4892 = vmatmul.mubr.bf16.gmra.mxu0 %v4072
        %v4893 = vpop.f32.mrf.mxu0
        %v4894 = vadd.f32 %v4137, %v4893
        %v4895 = vpop.f32.mrf.mxu0
        %v4896 = vpop.f32.mrf.mxu0
        %v4897 = vadd.f32 %v4137, %v4896
        %v4898 = vpop.f32.mrf.mxu0
        %4899 = vmatprep.mubr.bf16.mxu0 0
        %4900 = vmatmul.mubr.bf16.gmra.mxu0 %v4073
        %v4901 = vpop.f32.mrf.mxu0
        %v4902 = vadd.f32 %v4137, %v4901
        %v4903 = vpop.f32.mrf.mxu0
        %v4904 = vpop.f32.mrf.mxu0
        %v4905 = vadd.f32 %v4137, %v4904
        %v4906 = vpop.f32.mrf.mxu0
        %4907 = vmatprep.mubr.bf16.mxu0 0
        %4908 = vmatmul.mubr.bf16.gmra.mxu0 %v4074
        %v4909 = vpop.f32.mrf.mxu0
        %v4910 = vadd.f32 %v4137, %v4909
        %v4911 = vpop.f32.mrf.mxu0
        %v4912 = vpop.f32.mrf.mxu0
        %v4913 = vadd.f32 %v4137, %v4912
        %v4914 = vpop.f32.mrf.mxu0
        %4915 = vmatprep.mubr.bf16.mxu0 0
        %4916 = vmatmul.mubr.bf16.gmra.mxu0 %v4075
        %v4917 = vpop.f32.mrf.mxu0
        %v4918 = vadd.f32 %v4137, %v4917
        %v4919 = vpop.f32.mrf.mxu0
        %v4920 = vpop.f32.mrf.mxu0
        %v4921 = vadd.f32 %v4137, %v4920
        %v4922 = vpop.f32.mrf.mxu0
        %4923 = vmatprep.mubr.bf16.mxu0 0
        %4924 = vmatmul.mubr.bf16.gmra.mxu0 %v4076
        %v4925 = vpop.f32.mrf.mxu0
        %v4926 = vadd.f32 %v4137, %v4925
        %v4927 = vpop.f32.mrf.mxu0
        %v4928 = vpop.f32.mrf.mxu0
        %v4929 = vadd.f32 %v4137, %v4928
        %v4930 = vpop.f32.mrf.mxu0
        %4931 = vmatprep.mubr.bf16.mxu0 0
        %4932 = vmatmul.mubr.bf16.gmra.mxu0 %v4077
        %v4933 = vpop.f32.mrf.mxu0
        %v4934 = vadd.f32 %v4137, %v4933
        %v4935 = vpop.f32.mrf.mxu0
        %v4936 = vpop.f32.mrf.mxu0
        %v4937 = vadd.f32 %v4137, %v4936
        %v4938 = vpop.f32.mrf.mxu0
        %4939 = vmatprep.mubr.bf16.mxu0 0
        %4940 = vmatmul.mubr.bf16.gmra.mxu0 %v4078
        %v4941 = vpop.f32.mrf.mxu0
        %v4942 = vadd.f32 %v4137, %v4941
        %v4943 = vpop.f32.mrf.mxu0
        %v4944 = vpop.f32.mrf.mxu0
        %v4945 = vadd.f32 %v4137, %v4944
        %v4946 = vpop.f32.mrf.mxu0
        %4947 = vmatprep.mubr.bf16.mxu0 0
        %4948 = vmatmul.mubr.bf16.gmra.mxu0 %v4079
        %v4949 = vpop.f32.mrf.mxu0
        %v4950 = vadd.f32 %v4137, %v4949
        %v4951 = vpop.f32.mrf.mxu0
        %v4952 = vpop.f32.mrf.mxu0
        %v4953 = vadd.f32 %v4137, %v4952
        %v4954 = vpop.f32.mrf.mxu0
        %4955 = vmatprep.mubr.bf16.mxu0 0
        %4956 = vmatmul.mubr.bf16.gmra.mxu0 %v4080
        %v4957 = vpop.f32.mrf.mxu0
        %v4958 = vadd.f32 %v4137, %v4957
        %v4959 = vpop.f32.mrf.mxu0
        %v4960 = vpop.f32.mrf.mxu0
        %v4961 = vadd.f32 %v4137, %v4960
        %v4962 = vpop.f32.mrf.mxu0
        %4963 = vmatprep.mubr.bf16.mxu0 0
        %4964 = vmatmul.mubr.bf16.gmra.mxu0 %v4081
        %v4965 = vpop.f32.mrf.mxu0
        %v4966 = vadd.f32 %v4137, %v4965
        %v4967 = vpop.f32.mrf.mxu0
        %v4968 = vpop.f32.mrf.mxu0
        %v4969 = vadd.f32 %v4137, %v4968
        %v4970 = vpop.f32.mrf.mxu0
        %4971 = vmatprep.mubr.bf16.mxu0 0
        %4972 = vmatmul.mubr.bf16.gmra.mxu0 %v4082
        %v4973 = vpop.f32.mrf.mxu0
        %v4974 = vadd.f32 %v4137, %v4973
        %v4975 = vpop.f32.mrf.mxu0
        %v4976 = vpop.f32.mrf.mxu0
        %v4977 = vadd.f32 %v4137, %v4976
        %v4978 = vpop.f32.mrf.mxu0
        %4979 = vmatprep.mubr.bf16.mxu0 0
        %4980 = vmatmul.mubr.bf16.gmra.mxu0 %v4083
        %v4981 = vpop.f32.mrf.mxu0
        %v4982 = vadd.f32 %v4137, %v4981
        %v4983 = vpop.f32.mrf.mxu0
        %v4984 = vpop.f32.mrf.mxu0
        %v4985 = vadd.f32 %v4137, %v4984
        %v4986 = vpop.f32.mrf.mxu0
        %4987 = vmatprep.mubr.bf16.mxu0 0
        %4988 = vmatmul.mubr.bf16.gmra.mxu0 %v4084
        %v4989 = vpop.f32.mrf.mxu0
        %v4990 = vadd.f32 %v4137, %v4989
        %v4991 = vpop.f32.mrf.mxu0
        %v4992 = vpop.f32.mrf.mxu0
        %v4993 = vadd.f32 %v4137, %v4992
        %v4994 = vpop.f32.mrf.mxu0
        %4995 = vmatprep.mubr.bf16.mxu0 0
        %4996 = vmatmul.mubr.bf16.gmra.mxu0 %v4085
        %v4997 = vpop.f32.mrf.mxu0
        %v4998 = vadd.f32 %v4137, %v4997
        %v4999 = vpop.f32.mrf.mxu0
        %v5000 = vpop.f32.mrf.mxu0
        %v5001 = vadd.f32 %v4137, %v5000
        %v5002 = vpop.f32.mrf.mxu0
        %5003 = vmatprep.mubr.bf16.mxu0 0
        %5004 = vmatmul.mubr.bf16.gmra.mxu0 %v4086
        %v5005 = vpop.f32.mrf.mxu0
        %v5006 = vadd.f32 %v4137, %v5005
        %v5007 = vpop.f32.mrf.mxu0
        %v5008 = vpop.f32.mrf.mxu0
        %v5009 = vadd.f32 %v4137, %v5008
        %v5010 = vpop.f32.mrf.mxu0
        %5011 = vmatprep.mubr.bf16.mxu0 0
        %5012 = vmatmul.mubr.bf16.gmra.mxu0 %v4087
        %v5013 = vpop.f32.mrf.mxu0
        %v5014 = vadd.f32 %v4137, %v5013
        %v5015 = vpop.f32.mrf.mxu0
        %v5016 = vpop.f32.mrf.mxu0
        %v5017 = vadd.f32 %v4137, %v5016
        %v5018 = vpop.f32.mrf.mxu0
        %5019 = vmatprep.mubr.bf16.mxu0 0
        %5020 = vmatmul.mubr.bf16.gmra.mxu0 %v4088
        %v5021 = vpop.f32.mrf.mxu0
        %v5022 = vadd.f32 %v4137, %v5021
        %v5023 = vpop.f32.mrf.mxu0
        %v5024 = vpop.f32.mrf.mxu0
        %v5025 = vadd.f32 %v4137, %v5024
        %v5026 = vpop.f32.mrf.mxu0
        %5027 = vmatprep.mubr.bf16.mxu0 0
        %5028 = vmatmul.mubr.bf16.gmra.mxu0 %v4089
        %v5029 = vpop.f32.mrf.mxu0
        %v5030 = vadd.f32 %v4137, %v5029
        %v5031 = vpop.f32.mrf.mxu0
        %v5032 = vpop.f32.mrf.mxu0
        %v5033 = vadd.f32 %v4137, %v5032
        %v5034 = vpop.f32.mrf.mxu0
        %5035 = vmatprep.mubr.bf16.mxu0 0
        %5036 = vmatmul.mubr.bf16.gmra.mxu0 %v4090
        %v5037 = vpop.f32.mrf.mxu0
        %v5038 = vadd.f32 %v4137, %v5037
        %v5039 = vpop.f32.mrf.mxu0
        %v5040 = vpop.f32.mrf.mxu0
        %v5041 = vadd.f32 %v4137, %v5040
        %v5042 = vpop.f32.mrf.mxu0
        %5043 = vmatprep.mubr.bf16.mxu0 0
        %5044 = vmatmul.mubr.bf16.gmra.mxu0 %v4091
        %v5045 = vpop.f32.mrf.mxu0
        %v5046 = vadd.f32 %v4137, %v5045
        %v5047 = vpop.f32.mrf.mxu0
        %v5048 = vpop.f32.mrf.mxu0
        %v5049 = vadd.f32 %v4137, %v5048
        %v5050 = vpop.f32.mrf.mxu0
        %5051 = vmatprep.mubr.bf16.mxu0 0
        %5052 = vmatmul.mubr.bf16.gmra.mxu0 %v4092
        %v5053 = vpop.f32.mrf.mxu0
        %v5054 = vadd.f32 %v4137, %v5053
        %v5055 = vpop.f32.mrf.mxu0
        %v5056 = vpop.f32.mrf.mxu0
        %v5057 = vadd.f32 %v4137, %v5056
        %v5058 = vpop.f32.mrf.mxu0
        %5059 = vmatprep.mubr.bf16.mxu0 0
        %5060 = vmatmul.mubr.bf16.gmra.mxu0 %v4093
        %v5061 = vpop.f32.mrf.mxu0
        %v5062 = vadd.f32 %v4137, %v5061
        %v5063 = vpop.f32.mrf.mxu0
        %v5064 = vpop.f32.mrf.mxu0
        %v5065 = vadd.f32 %v4137, %v5064
        %v5066 = vpop.f32.mrf.mxu0
        %5067 = vmatprep.mubr.bf16.mxu0 0
        %5068 = vmatmul.mubr.bf16.gmra.mxu0 %v4094
        %v5069 = vpop.f32.mrf.mxu0
        %v5070 = vadd.f32 %v4137, %v5069
        %v5071 = vpop.f32.mrf.mxu0
        %v5072 = vpop.f32.mrf.mxu0
        %v5073 = vadd.f32 %v4137, %v5072
        %v5074 = vpop.f32.mrf.mxu0
        %5075 = vmatprep.mubr.bf16.mxu0 0
        %5076 = vmatmul.mubr.bf16.gmra.mxu0 %v4095
        %v5077 = vpop.f32.mrf.mxu0
        %v5078 = vadd.f32 %v4137, %v5077
        %v5079 = vpop.f32.mrf.mxu0
        %v5080 = vpop.f32.mrf.mxu0
        %v5081 = vadd.f32 %v4137, %v5080
        %v5082 = vpop.f32.mrf.mxu0
        %5083 = vmatprep.mubr.bf16.mxu0 0
        %5084 = vmatmul.mubr.bf16.gmra.mxu0 %v4096
        %v5085 = vpop.f32.mrf.mxu0
        %v5086 = vadd.f32 %v4137, %v5085
        %v5087 = vpop.f32.mrf.mxu0
        %v5088 = vpop.f32.mrf.mxu0
        %v5089 = vadd.f32 %v4137, %v5088
        %v5090 = vpop.f32.mrf.mxu0
        %5091 = vmatprep.mubr.bf16.mxu0 0
        %5092 = vmatmul.mubr.bf16.gmra.mxu0 %v4097
        %v5093 = vpop.f32.mrf.mxu0
        %v5094 = vadd.f32 %v4137, %v5093
        %v5095 = vpop.f32.mrf.mxu0
        %v5096 = vpop.f32.mrf.mxu0
        %v5097 = vadd.f32 %v4137, %v5096
        %v5098 = vpop.f32.mrf.mxu0
        %5099 = vmatprep.mubr.bf16.mxu0 0
        %5100 = vmatmul.mubr.bf16.gmra.mxu0 %v4098
        %v5101 = vpop.f32.mrf.mxu0
        %v5102 = vadd.f32 %v4137, %v5101
        %v5103 = vpop.f32.mrf.mxu0
        %v5104 = vpop.f32.mrf.mxu0
        %v5105 = vadd.f32 %v4137, %v5104
        %v5106 = vpop.f32.mrf.mxu0
        %5107 = vmatprep.mubr.bf16.mxu0 0
        %5108 = vmatmul.mubr.bf16.gmra.mxu0 %v4099
        %v5109 = vpop.f32.mrf.mxu0
        %v5110 = vadd.f32 %v4137, %v5109
        %v5111 = vpop.f32.mrf.mxu0
        %v5112 = vpop.f32.mrf.mxu0
        %v5113 = vadd.f32 %v4137, %v5112
        %v5114 = vpop.f32.mrf.mxu0
        %5115 = vmatprep.mubr.bf16.mxu0 0
        %5116 = vmatmul.mubr.bf16.gmra.mxu0 %v4100
        %v5117 = vpop.f32.mrf.mxu0
        %v5118 = vadd.f32 %v4137, %v5117
        %v5119 = vpop.f32.mrf.mxu0
        %v5120 = vpop.f32.mrf.mxu0
        %v5121 = vadd.f32 %v4137, %v5120
        %v5122 = vpop.f32.mrf.mxu0
        %5123 = vmatprep.mubr.bf16.mxu0 0
        %5124 = vmatmul.mubr.bf16.gmra.mxu0 %v4101
        %v5125 = vpop.f32.mrf.mxu0
        %v5126 = vadd.f32 %v4137, %v5125
        %v5127 = vpop.f32.mrf.mxu0
        %v5128 = vpop.f32.mrf.mxu0
        %v5129 = vadd.f32 %v4137, %v5128
        %v5130 = vpop.f32.mrf.mxu0
        %5131 = vmatprep.mubr.bf16.mxu0 0
        %5132 = vmatmul.mubr.bf16.gmra.mxu0 %v4102
        %v5133 = vpop.f32.mrf.mxu0
        %v5134 = vadd.f32 %v4137, %v5133
        %v5135 = vpop.f32.mrf.mxu0
        %v5136 = vpop.f32.mrf.mxu0
        %v5137 = vadd.f32 %v4137, %v5136
        %v5138 = vpop.f32.mrf.mxu0
        %5139 = vmatprep.mubr.bf16.mxu0 0
        %5140 = vmatmul.mubr.bf16.gmra.mxu0 %v4103
        %v5141 = vpop.f32.mrf.mxu0
        %v5142 = vadd.f32 %v4137, %v5141
        %v5143 = vpop.f32.mrf.mxu0
        %v5144 = vpop.f32.mrf.mxu0
        %v5145 = vadd.f32 %v4137, %v5144
        %v5146 = vpop.f32.mrf.mxu0
        %5147 = vmatprep.mubr.bf16.mxu0 0
        %5148 = vmatmul.mubr.bf16.gmra.mxu0 %v4104
        %v5149 = vpop.f32.mrf.mxu0
        %v5150 = vadd.f32 %v4137, %v5149
        %v5151 = vpop.f32.mrf.mxu0
        %v5152 = vpop.f32.mrf.mxu0
        %v5153 = vadd.f32 %v4137, %v5152
        %v5154 = vpop.f32.mrf.mxu0
        %5155 = vmatprep.mubr.bf16.mxu0 0
        %5156 = vmatmul.mubr.bf16.gmra.mxu0 %v4105
        %v5157 = vpop.f32.mrf.mxu0
        %v5158 = vadd.f32 %v4137, %v5157
        %v5159 = vpop.f32.mrf.mxu0
        %v5160 = vpop.f32.mrf.mxu0
        %v5161 = vadd.f32 %v4137, %v5160
        %v5162 = vpop.f32.mrf.mxu0
        %5163 = vmatprep.mubr.bf16.mxu0 0
        %5164 = vmatmul.mubr.bf16.gmra.mxu0 %v4106
        %v5165 = vpop.f32.mrf.mxu0
        %v5166 = vadd.f32 %v4137, %v5165
        %v5167 = vpop.f32.mrf.mxu0
        %v5168 = vpop.f32.mrf.mxu0
        %v5169 = vadd.f32 %v4137, %v5168
        %v5170 = vpop.f32.mrf.mxu0
        %5171 = vmatprep.mubr.bf16.mxu0 0
        %5172 = vmatmul.mubr.bf16.gmra.mxu0 %v4107
        %v5173 = vpop.f32.mrf.mxu0
        %v5174 = vadd.f32 %v4137, %v5173
        %v5175 = vpop.f32.mrf.mxu0
        %v5176 = vpop.f32.mrf.mxu0
        %v5177 = vadd.f32 %v4137, %v5176
        %v5178 = vpop.f32.mrf.mxu0
        %5179 = vmatprep.mubr.bf16.mxu0 0
        %5180 = vmatmul.mubr.bf16.gmra.mxu0 %v4108
        %v5181 = vpop.f32.mrf.mxu0
        %v5182 = vadd.f32 %v4137, %v5181
        %v5183 = vpop.f32.mrf.mxu0
        %v5184 = vpop.f32.mrf.mxu0
        %v5185 = vadd.f32 %v4137, %v5184
        %v5186 = vpop.f32.mrf.mxu0
        %5187 = vmatprep.mubr.bf16.mxu0 0
        %5188 = vmatmul.mubr.bf16.gmra.mxu0 %v4109
        %v5189 = vpop.f32.mrf.mxu0
        %v5190 = vadd.f32 %v4137, %v5189
        %v5191 = vpop.f32.mrf.mxu0
        %v5192 = vpop.f32.mrf.mxu0
        %v5193 = vadd.f32 %v4137, %v5192
        %v5194 = vpop.f32.mrf.mxu0
        %5195 = vmatprep.mubr.bf16.mxu0 0
        %5196 = vmatmul.mubr.bf16.gmra.mxu0 %v4110
        %v5197 = vpop.f32.mrf.mxu0
        %v5198 = vadd.f32 %v4137, %v5197
        %v5199 = vpop.f32.mrf.mxu0
        %v5200 = vpop.f32.mrf.mxu0
        %v5201 = vadd.f32 %v4137, %v5200
        %v5202 = vpop.f32.mrf.mxu0
        %5203 = vmatprep.mubr.bf16.mxu0 0
        %5204 = vmatmul.mubr.bf16.gmra.mxu0 %v4111
        %v5205 = vpop.f32.mrf.mxu0
        %v5206 = vadd.f32 %v4137, %v5205
        %v5207 = vpop.f32.mrf.mxu0
        %v5208 = vpop.f32.mrf.mxu0
        %v5209 = vadd.f32 %v4137, %v5208
        %v5210 = vpop.f32.mrf.mxu0
        %5211 = vmatprep.mubr.bf16.mxu0 0
        %5212 = vmatmul.mubr.bf16.gmra.mxu0 %v4112
        %v5213 = vpop.f32.mrf.mxu0
        %v5214 = vadd.f32 %v4137, %v5213
        %v5215 = vpop.f32.mrf.mxu0
        %v5216 = vpop.f32.mrf.mxu0
        %v5217 = vadd.f32 %v4137, %v5216
        %v5218 = vpop.f32.mrf.mxu0
        %5219 = vmatprep.mubr.bf16.mxu0 0
        %5220 = vmatmul.mubr.bf16.gmra.mxu0 %v4113
        %v5221 = vpop.f32.mrf.mxu0
        %v5222 = vadd.f32 %v4137, %v5221
        %v5223 = vpop.f32.mrf.mxu0
        %v5224 = vpop.f32.mrf.mxu0
        %v5225 = vadd.f32 %v4137, %v5224
        %v5226 = vpop.f32.mrf.mxu0
        %5227 = vmatprep.mubr.bf16.mxu0 0
        %5228 = vmatmul.mubr.bf16.gmra.mxu0 %v4114
        %v5229 = vpop.f32.mrf.mxu0
        %v5230 = vadd.f32 %v4137, %v5229
        %v5231 = vpop.f32.mrf.mxu0
        %v5232 = vpop.f32.mrf.mxu0
        %v5233 = vadd.f32 %v4137, %v5232
        %v5234 = vpop.f32.mrf.mxu0
        %5235 = vmatprep.mubr.bf16.mxu0 0
        %5236 = vmatmul.mubr.bf16.gmra.mxu0 %v4115
        %v5237 = vpop.f32.mrf.mxu0
        %v5238 = vadd.f32 %v4137, %v5237
        %v5239 = vpop.f32.mrf.mxu0
        %v5240 = vpop.f32.mrf.mxu0
        %v5241 = vadd.f32 %v4137, %v5240
        %v5242 = vpop.f32.mrf.mxu0
        %5243 = vdwg.mxu0
        %v5244 = vtanh.pop %v4222
        %v5245 = vtanh.pop %v4225
        %v5246 = vtanh.pop %v4230
        %v5247 = vtanh.pop %v4233
        %v5248 = vtanh.pop %v4238
        %v5249 = vtanh.pop %v4241
        %v5250 = vtanh.pop %v4246
        %v5251 = vtanh.pop %v4249
        %v5252 = vtanh.pop %v4254
        %v5253 = vtanh.pop %v4257
        %v5254 = vtanh.pop %v4262
        %v5255 = vtanh.pop %v4265
        %v5256 = vtanh.pop %v4270
        %v5257 = vtanh.pop %v4273
        %v5258 = vtanh.pop %v4278
        %v5259 = vtanh.pop %v4281
        %v5260 = vtanh.pop %v4286
        %v5261 = vtanh.pop %v4289
        %v5262 = vtanh.pop %v4294
        %v5263 = vtanh.pop %v4297
        %v5264 = vtanh.pop %v4302
        %v5265 = vtanh.pop %v4305
        %v5266 = vtanh.pop %v4310
        %v5267 = vtanh.pop %v4313
        %v5268 = vtanh.pop %v4318
        %v5269 = vtanh.pop %v4321
        %v5270 = vtanh.pop %v4326
        %v5271 = vtanh.pop %v4329
        %v5272 = vtanh.pop %v4334
        %v5273 = vtanh.pop %v4337
        %v5274 = vtanh.pop %v4342
        %v5275 = vtanh.pop %v4345
        %v5276 = vtanh.pop %v4350
        %v5277 = vtanh.pop %v4353
        %v5278 = vtanh.pop %v4358
        %v5279 = vtanh.pop %v4361
        %v5280 = vtanh.pop %v4366
        %v5281 = vtanh.pop %v4369
        %v5282 = vtanh.pop %v4374
        %v5283 = vtanh.pop %v4377
        %v5284 = vtanh.pop %v4382
        %v5285 = vtanh.pop %v4385
        %v5286 = vtanh.pop %v4390
        %v5287 = vtanh.pop %v4393
        %v5288 = vtanh.pop %v4398
        %v5289 = vtanh.pop %v4401
        %v5290 = vtanh.pop %v4406
        %v5291 = vtanh.pop %v4409
        %v5292 = vtanh.pop %v4414
        %v5293 = vtanh.pop %v4417
        %v5294 = vtanh.pop %v4422
        %v5295 = vtanh.pop %v4425
        %v5296 = vtanh.pop %v4430
        %v5297 = vtanh.pop %v4433
        %v5298 = vtanh.pop %v4438
        %v5299 = vtanh.pop %v4441
        %v5300 = vtanh.pop %v4446
        %v5301 = vtanh.pop %v4449
        %v5302 = vtanh.pop %v4454
        %v5303 = vtanh.pop %v4457
        %v5304 = vtanh.pop %v4462
        %v5305 = vtanh.pop %v4465
        %v5306 = vtanh.pop %v4470
        %v5307 = vtanh.pop %v4473
        %v5308 = vtanh.pop %v4478
        %v5309 = vtanh.pop %v4481
        %v5310 = vtanh.pop %v4486
        %v5311 = vtanh.pop %v4489
        %v5312 = vtanh.pop %v4494
        %v5313 = vtanh.pop %v4497
        %v5314 = vtanh.pop %v4502
        %v5315 = vtanh.pop %v4505
        %v5316 = vtanh.pop %v4510
        %v5317 = vtanh.pop %v4513
        %v5318 = vtanh.pop %v4518
        %v5319 = vtanh.pop %v4521
        %v5320 = vtanh.pop %v4526
        %v5321 = vtanh.pop %v4529
        %v5322 = vtanh.pop %v4534
        %v5323 = vtanh.pop %v4537
        %v5324 = vtanh.pop %v4542
        %v5325 = vtanh.pop %v4545
        %v5326 = vtanh.pop %v4550
        %v5327 = vtanh.pop %v4553
        %v5328 = vtanh.pop %v4558
        %v5329 = vtanh.pop %v4561
        %v5330 = vtanh.pop %v4566
        %v5331 = vtanh.pop %v4569
        %v5332 = vtanh.pop %v4574
        %v5333 = vtanh.pop %v4577
        %v5334 = vtanh.pop %v4582
        %v5335 = vtanh.pop %v4585
        %v5336 = vtanh.pop %v4590
        %v5337 = vtanh.pop %v4593
        %v5338 = vtanh.pop %v4598
        %v5339 = vtanh.pop %v4601
        %v5340 = vtanh.pop %v4606
        %v5341 = vtanh.pop %v4609
        %v5342 = vtanh.pop %v4614
        %v5343 = vtanh.pop %v4617
        %v5344 = vtanh.pop %v4622
        %v5345 = vtanh.pop %v4625
        %v5346 = vtanh.pop %v4630
        %v5347 = vtanh.pop %v4633
        %v5348 = vtanh.pop %v4638
        %v5349 = vtanh.pop %v4641
        %v5350 = vtanh.pop %v4646
        %v5351 = vtanh.pop %v4649
        %v5352 = vtanh.pop %v4654
        %v5353 = vtanh.pop %v4657
        %v5354 = vtanh.pop %v4662
        %v5355 = vtanh.pop %v4665
        %v5356 = vtanh.pop %v4670
        %v5357 = vtanh.pop %v4673
        %v5358 = vtanh.pop %v4678
        %v5359 = vtanh.pop %v4681
        %v5360 = vtanh.pop %v4686
        %v5361 = vtanh.pop %v4689
        %v5362 = vtanh.pop %v4694
        %v5363 = vtanh.pop %v4697
        %v5364 = vtanh.pop %v4702
        %v5365 = vtanh.pop %v4705
        %v5366 = vtanh.pop %v4710
        %v5367 = vtanh.pop %v4713
        %v5368 = vtanh.pop %v4718
        %v5369 = vtanh.pop %v4721
        %v5370 = vtanh.pop %v4726
        %v5371 = vtanh.pop %v4729
        %v5372 = vtanh.pop %v4734
        %v5373 = vtanh.pop %v4737
        %v5374 = vtanh.pop %v4742
        %v5375 = vtanh.pop %v4745
        %v5376 = vtanh.pop %v4750
        %v5377 = vtanh.pop %v4753
        %v5378 = vtanh.pop %v4758
        %v5379 = vtanh.pop %v4761
        %v5380 = vtanh.pop %v4766
        %v5381 = vtanh.pop %v4769
        %v5382 = vtanh.pop %v4774
        %v5383 = vtanh.pop %v4777
        %v5384 = vtanh.pop %v4782
        %v5385 = vtanh.pop %v4785
        %v5386 = vtanh.pop %v4790
        %v5387 = vtanh.pop %v4793
        %v5388 = vtanh.pop %v4798
        %v5389 = vtanh.pop %v4801
        %v5390 = vtanh.pop %v4806
        %v5391 = vtanh.pop %v4809
        %v5392 = vtanh.pop %v4814
        %v5393 = vtanh.pop %v4817
        %v5394 = vtanh.pop %v4822
        %v5395 = vtanh.pop %v4825
        %v5396 = vtanh.pop %v4830
        %v5397 = vtanh.pop %v4833
        %v5398 = vtanh.pop %v4838
        %v5399 = vtanh.pop %v4841
        %v5400 = vtanh.pop %v4846
        %v5401 = vtanh.pop %v4849
        %v5402 = vtanh.pop %v4854
        %v5403 = vtanh.pop %v4857
        %v5404 = vtanh.pop %v4862
        %v5405 = vtanh.pop %v4865
        %v5406 = vtanh.pop %v4870
        %v5407 = vtanh.pop %v4873
        %v5408 = vtanh.pop %v4878
        %v5409 = vtanh.pop %v4881
        %v5410 = vtanh.pop %v4886
        %v5411 = vtanh.pop %v4889
        %v5412 = vtanh.pop %v4894
        %v5413 = vtanh.pop %v4897
        %v5414 = vtanh.pop %v4902
        %v5415 = vtanh.pop %v4905
        %v5416 = vtanh.pop %v4910
        %v5417 = vtanh.pop %v4913
        %v5418 = vtanh.pop %v4918
        %v5419 = vtanh.pop %v4921
        %v5420 = vtanh.pop %v4926
        %v5421 = vtanh.pop %v4929
        %v5422 = vtanh.pop %v4934
        %v5423 = vtanh.pop %v4937
        %v5424 = vtanh.pop %v4942
        %v5425 = vtanh.pop %v4945
        %v5426 = vtanh.pop %v4950
        %v5427 = vtanh.pop %v4953
        %v5428 = vtanh.pop %v4958
        %v5429 = vtanh.pop %v4961
        %v5430 = vtanh.pop %v4966
        %v5431 = vtanh.pop %v4969
        %v5432 = vtanh.pop %v4974
        %v5433 = vtanh.pop %v4977
        %v5434 = vtanh.pop %v4982
        %v5435 = vtanh.pop %v4985
        %v5436 = vtanh.pop %v4990
        %v5437 = vtanh.pop %v4993
        %v5438 = vtanh.pop %v4998
        %v5439 = vtanh.pop %v5001
        %v5440 = vtanh.pop %v5006
        %v5441 = vtanh.pop %v5009
        %v5442 = vtanh.pop %v5014
        %v5443 = vtanh.pop %v5017
        %v5444 = vtanh.pop %v5022
        %v5445 = vtanh.pop %v5025
        %v5446 = vtanh.pop %v5030
        %v5447 = vtanh.pop %v5033
        %v5448 = vtanh.pop %v5038
        %v5449 = vtanh.pop %v5041
        %v5450 = vtanh.pop %v5046
        %v5451 = vtanh.pop %v5049
        %v5452 = vtanh.pop %v5054
        %v5453 = vtanh.pop %v5057
        %v5454 = vtanh.pop %v5062
        %v5455 = vtanh.pop %v5065
        %v5456 = vtanh.pop %v5070
        %v5457 = vtanh.pop %v5073
        %v5458 = vtanh.pop %v5078
        %v5459 = vtanh.pop %v5081
        %v5460 = vtanh.pop %v5086
        %v5461 = vtanh.pop %v5089
        %v5462 = vtanh.pop %v5094
        %v5463 = vtanh.pop %v5097
        %v5464 = vtanh.pop %v5102
        %v5465 = vtanh.pop %v5105
        %v5466 = vtanh.pop %v5110
        %v5467 = vtanh.pop %v5113
        %v5468 = vtanh.pop %v5118
        %v5469 = vtanh.pop %v5121
        %v5470 = vtanh.pop %v5126
        %v5471 = vtanh.pop %v5129
        %v5472 = vtanh.pop %v5134
        %v5473 = vtanh.pop %v5137
        %v5474 = vtanh.pop %v5142
        %v5475 = vtanh.pop %v5145
        %v5476 = vtanh.pop %v5150
        %v5477 = vtanh.pop %v5153
        %v5478 = vtanh.pop %v5158
        %v5479 = vtanh.pop %v5161
        %v5480 = vtanh.pop %v5166
        %v5481 = vtanh.pop %v5169
        %v5482 = vtanh.pop %v5174
        %v5483 = vtanh.pop %v5177
        %v5484 = vtanh.pop %v5182
        %v5485 = vtanh.pop %v5185
        %v5486 = vtanh.pop %v5190
        %v5487 = vtanh.pop %v5193
        %v5488 = vtanh.pop %v5198
        %v5489 = vtanh.pop %v5201
        %v5490 = vtanh.pop %v5206
        %v5491 = vtanh.pop %v5209
        %v5492 = vtanh.pop %v5214
        %v5493 = vtanh.pop %v5217
        %v5494 = vtanh.pop %v5222
        %v5495 = vtanh.pop %v5225
        %v5496 = vtanh.pop %v5230
        %v5497 = vtanh.pop %v5233
        %v5498 = vtanh.pop %v5238
        %v5499 = vtanh.pop %v5241
        %v5500 = vpack.c.bf16 %v5245, %v5244
        %v5501 = vpack.c.bf16 %v5247, %v5246
        %v5502 = vpack.c.bf16 %v5249, %v5248
        %v5503 = vpack.c.bf16 %v5251, %v5250
        %v5504 = vpack.c.bf16 %v5253, %v5252
        %v5505 = vpack.c.bf16 %v5255, %v5254
        %v5506 = vpack.c.bf16 %v5257, %v5256
        %v5507 = vpack.c.bf16 %v5259, %v5258
        %v5508 = vpack.c.bf16 %v5261, %v5260
        %v5509 = vpack.c.bf16 %v5263, %v5262
        %v5510 = vpack.c.bf16 %v5265, %v5264
        %v5511 = vpack.c.bf16 %v5267, %v5266
        %v5512 = vpack.c.bf16 %v5269, %v5268
        %v5513 = vpack.c.bf16 %v5271, %v5270
        %v5514 = vpack.c.bf16 %v5273, %v5272
        %v5515 = vpack.c.bf16 %v5275, %v5274
        %v5516 = vpack.c.bf16 %v5277, %v5276
        %v5517 = vpack.c.bf16 %v5279, %v5278
        %v5518 = vpack.c.bf16 %v5281, %v5280
        %v5519 = vpack.c.bf16 %v5283, %v5282
        %v5520 = vpack.c.bf16 %v5285, %v5284
        %v5521 = vpack.c.bf16 %v5287, %v5286
        %v5522 = vpack.c.bf16 %v5289, %v5288
        %v5523 = vpack.c.bf16 %v5291, %v5290
        %v5524 = vpack.c.bf16 %v5293, %v5292
        %v5525 = vpack.c.bf16 %v5295, %v5294
        %v5526 = vpack.c.bf16 %v5297, %v5296
        %v5527 = vpack.c.bf16 %v5299, %v5298
        %v5528 = vpack.c.bf16 %v5301, %v5300
        %v5529 = vpack.c.bf16 %v5303, %v5302
        %v5530 = vpack.c.bf16 %v5305, %v5304
        %v5531 = vpack.c.bf16 %v5307, %v5306
        %v5532 = vpack.c.bf16 %v5309, %v5308
        %v5533 = vpack.c.bf16 %v5311, %v5310
        %v5534 = vpack.c.bf16 %v5313, %v5312
        %v5535 = vpack.c.bf16 %v5315, %v5314
        %v5536 = vpack.c.bf16 %v5317, %v5316
        %v5537 = vpack.c.bf16 %v5319, %v5318
        %v5538 = vpack.c.bf16 %v5321, %v5320
        %v5539 = vpack.c.bf16 %v5323, %v5322
        %v5540 = vpack.c.bf16 %v5325, %v5324
        %v5541 = vpack.c.bf16 %v5327, %v5326
        %v5542 = vpack.c.bf16 %v5329, %v5328
        %v5543 = vpack.c.bf16 %v5331, %v5330
        %v5544 = vpack.c.bf16 %v5333, %v5332
        %v5545 = vpack.c.bf16 %v5335, %v5334
        %v5546 = vpack.c.bf16 %v5337, %v5336
        %v5547 = vpack.c.bf16 %v5339, %v5338
        %v5548 = vpack.c.bf16 %v5341, %v5340
        %v5549 = vpack.c.bf16 %v5343, %v5342
        %v5550 = vpack.c.bf16 %v5345, %v5344
        %v5551 = vpack.c.bf16 %v5347, %v5346
        %v5552 = vpack.c.bf16 %v5349, %v5348
        %v5553 = vpack.c.bf16 %v5351, %v5350
        %v5554 = vpack.c.bf16 %v5353, %v5352
        %v5555 = vpack.c.bf16 %v5355, %v5354
        %v5556 = vpack.c.bf16 %v5357, %v5356
        %v5557 = vpack.c.bf16 %v5359, %v5358
        %v5558 = vpack.c.bf16 %v5361, %v5360
        %v5559 = vpack.c.bf16 %v5363, %v5362
        %v5560 = vpack.c.bf16 %v5365, %v5364
        %v5561 = vpack.c.bf16 %v5367, %v5366
        %v5562 = vpack.c.bf16 %v5369, %v5368
        %v5563 = vpack.c.bf16 %v5371, %v5370
        %v5564 = vpack.c.bf16 %v5373, %v5372
        %v5565 = vpack.c.bf16 %v5375, %v5374
        %v5566 = vpack.c.bf16 %v5377, %v5376
        %v5567 = vpack.c.bf16 %v5379, %v5378
        %v5568 = vpack.c.bf16 %v5381, %v5380
        %v5569 = vpack.c.bf16 %v5383, %v5382
        %v5570 = vpack.c.bf16 %v5385, %v5384
        %v5571 = vpack.c.bf16 %v5387, %v5386
        %v5572 = vpack.c.bf16 %v5389, %v5388
        %v5573 = vpack.c.bf16 %v5391, %v5390
        %v5574 = vpack.c.bf16 %v5393, %v5392
        %v5575 = vpack.c.bf16 %v5395, %v5394
        %v5576 = vpack.c.bf16 %v5397, %v5396
        %v5577 = vpack.c.bf16 %v5399, %v5398
        %v5578 = vpack.c.bf16 %v5401, %v5400
        %v5579 = vpack.c.bf16 %v5403, %v5402
        %v5580 = vpack.c.bf16 %v5405, %v5404
        %v5581 = vpack.c.bf16 %v5407, %v5406
        %v5582 = vpack.c.bf16 %v5409, %v5408
        %v5583 = vpack.c.bf16 %v5411, %v5410
        %v5584 = vpack.c.bf16 %v5413, %v5412
        %v5585 = vpack.c.bf16 %v5415, %v5414
        %v5586 = vpack.c.bf16 %v5417, %v5416
        %v5587 = vpack.c.bf16 %v5419, %v5418
        %v5588 = vpack.c.bf16 %v5421, %v5420
        %v5589 = vpack.c.bf16 %v5423, %v5422
        %v5590 = vpack.c.bf16 %v5425, %v5424
        %v5591 = vpack.c.bf16 %v5427, %v5426
        %v5592 = vpack.c.bf16 %v5429, %v5428
        %v5593 = vpack.c.bf16 %v5431, %v5430
        %v5594 = vpack.c.bf16 %v5433, %v5432
        %v5595 = vpack.c.bf16 %v5435, %v5434
        %v5596 = vpack.c.bf16 %v5437, %v5436
        %v5597 = vpack.c.bf16 %v5439, %v5438
        %v5598 = vpack.c.bf16 %v5441, %v5440
        %v5599 = vpack.c.bf16 %v5443, %v5442
        %v5600 = vpack.c.bf16 %v5445, %v5444
        %v5601 = vpack.c.bf16 %v5447, %v5446
        %v5602 = vpack.c.bf16 %v5449, %v5448
        %v5603 = vpack.c.bf16 %v5451, %v5450
        %v5604 = vpack.c.bf16 %v5453, %v5452
        %v5605 = vpack.c.bf16 %v5455, %v5454
        %v5606 = vpack.c.bf16 %v5457, %v5456
        %v5607 = vpack.c.bf16 %v5459, %v5458
        %v5608 = vpack.c.bf16 %v5461, %v5460
        %v5609 = vpack.c.bf16 %v5463, %v5462
        %v5610 = vpack.c.bf16 %v5465, %v5464
        %v5611 = vpack.c.bf16 %v5467, %v5466
        %v5612 = vpack.c.bf16 %v5469, %v5468
        %v5613 = vpack.c.bf16 %v5471, %v5470
        %v5614 = vpack.c.bf16 %v5473, %v5472
        %v5615 = vpack.c.bf16 %v5475, %v5474
        %v5616 = vpack.c.bf16 %v5477, %v5476
        %v5617 = vpack.c.bf16 %v5479, %v5478
        %v5618 = vpack.c.bf16 %v5481, %v5480
        %v5619 = vpack.c.bf16 %v5483, %v5482
        %v5620 = vpack.c.bf16 %v5485, %v5484
        %v5621 = vpack.c.bf16 %v5487, %v5486
        %v5622 = vpack.c.bf16 %v5489, %v5488
        %v5623 = vpack.c.bf16 %v5491, %v5490
        %v5624 = vpack.c.bf16 %v5493, %v5492
        %v5625 = vpack.c.bf16 %v5495, %v5494
        %v5626 = vpack.c.bf16 %v5497, %v5496
        %v5627 = vpack.c.bf16 %v5499, %v5498
        %v5628 = vld [vmem:[%s7] sm:$0xf]
        %v5629 = vld [vmem:[%s7 + $0x4] sm:$0xf]
        %v5630 = vld [vmem:[%s7 + $0x8] sm:$0xf]
        %v5631 = vld [vmem:[%s7 + $0xc] sm:$0xf]
        %v5632 = vld [vmem:[%s7 + $0x10] sm:$0xf]
        %v5633 = vld [vmem:[%s7 + $0x14] sm:$0xf]
        %v5634 = vld [vmem:[%s7 + $0x18] sm:$0xf]
        %v5635 = vld [vmem:[%s7 + $0x1c] sm:$0xf]
        %v5636 = vld [vmem:[%s7 + $0x20] sm:$0xf]
        %v5637 = vld [vmem:[%s7 + $0x24] sm:$0xf]
        %v5638 = vld [vmem:[%s7 + $0x28] sm:$0xf]
        %v5639 = vld [vmem:[%s7 + $0x2c] sm:$0xf]
        %v5640 = vld [vmem:[%s7 + $0x30] sm:$0xf]
        %v5641 = vld [vmem:[%s7 + $0x34] sm:$0xf]
        %v5642 = vld [vmem:[%s7 + $0x38] sm:$0xf]
        %v5643 = vld [vmem:[%s7 + $0x3c] sm:$0xf]
        %v5644 = vld [vmem:[%s8] sm:$0x1]
        %v5646 = vlaneseq
        %v5647 = vshrl.u32 %v5646, 7
        %v5648 = vsub.s32 0, %v5647
        %v5649 = vrot.slane %v5644, %v5648
        %v5667 = vunpack.c.l.b16 %v5628
        %v5668 = vunpack.c.l.b16 %v5629
        %v5669 = vunpack.c.l.b16 %v5630
        %v5670 = vunpack.c.l.b16 %v5631
        %v5671 = vunpack.c.l.b16 %v5632
        %v5672 = vunpack.c.l.b16 %v5633
        %v5673 = vunpack.c.l.b16 %v5634
        %v5674 = vunpack.c.l.b16 %v5635
        %v5675 = vunpack.c.l.b16 %v5636
        %v5676 = vunpack.c.l.b16 %v5637
        %v5677 = vunpack.c.l.b16 %v5638
        %v5678 = vunpack.c.l.b16 %v5639
        %v5679 = vunpack.c.l.b16 %v5640
        %v5680 = vunpack.c.l.b16 %v5641
        %v5681 = vunpack.c.l.b16 %v5642
        %v5682 = vunpack.c.l.b16 %v5643
        %v5683 = vpack.c.b16 %v5668, %v5667
        %v5684 = vpack.c.b16 %v5670, %v5669
        %v5685 = vpack.c.b16 %v5672, %v5671
        %v5686 = vpack.c.b16 %v5674, %v5673
        %v5687 = vpack.c.b16 %v5676, %v5675
        %v5688 = vpack.c.b16 %v5678, %v5677
        %v5689 = vpack.c.b16 %v5680, %v5679
        %v5690 = vpack.c.b16 %v5682, %v5681
        %5699 = vmatprep.subr.bf16.mxu0 0
        %5700 = vmatpush1.bf16.msra.mxu0 %v5690
        %5701 = vmatprep.subr.bf16.mxu0 0
        %5702 = vmatpush1.bf16.msra.mxu0 %v5689
        %5703 = vmatprep.subr.bf16.mxu0 0
        %5704 = vmatpush1.bf16.msra.mxu0 %v5688
        %5705 = vmatprep.subr.bf16.mxu0 0
        %5706 = vmatpush1.bf16.msra.mxu0 %v5687
        %5707 = vmatprep.subr.bf16.mxu0 0
        %5708 = vmatpush1.bf16.msra.mxu0 %v5686
        %5709 = vmatprep.subr.bf16.mxu0 0
        %5710 = vmatpush1.bf16.msra.mxu0 %v5685
        %5711 = vmatprep.subr.bf16.mxu0 0
        %5712 = vmatpush1.bf16.msra.mxu0 %v5684
        %5713 = vmatprep.subr.bf16.mxu0 0
        %5714 = vmatpush1.bf16.msra.mxu0 %v5683
        %5715 = vmatprep.subr.bf16.mxu0 0
        %5716 = vmatpush2.bf16.msra.mxu0 0
        %5717 = vmatprep.subr.bf16.mxu0 0
        %5718 = vmatpush2.bf16.msra.mxu0 0
        %5719 = vmatprep.subr.bf16.mxu0 0
        %5720 = vmatpush2.bf16.msra.mxu0 0
        %5721 = vmatprep.subr.bf16.mxu0 0
        %5722 = vmatpush2.bf16.msra.mxu0 0
        %5723 = vmatprep.subr.bf16.mxu0 0
        %5724 = vmatpush2.bf16.msra.mxu0 0
        %5725 = vmatprep.subr.bf16.mxu0 0
        %5726 = vmatpush2.bf16.msra.mxu0 0
        %5727 = vmatprep.subr.bf16.mxu0 0
        %5728 = vmatpush2.bf16.msra.mxu0 0
        %5729 = vmatprep.subr.bf16.mxu0 0
        %5730 = vmatpush2.bf16.msra.mxu0 0
        %5731 = vmatprep.mubr.bf16.mxu0 0
        %5732 = vmatmul.mubr.bf16.gmra.mxu0 %v5500
        %v5733 = vpop.f32.mrf.mxu0
        %v5734 = vadd.f32 %v5649, %v5733
        %v5735 = vpop.f32.mrf.mxu0
        %v5736 = vpop.f32.mrf.mxu0
        %v5737 = vadd.f32 %v5649, %v5736
        %v5738 = vpop.f32.mrf.mxu0
        %5739 = vmatprep.mubr.bf16.mxu0 0
        %5740 = vmatmul.mubr.bf16.gmra.mxu0 %v5501
        %v5741 = vpop.f32.mrf.mxu0
        %v5742 = vadd.f32 %v5649, %v5741
        %v5743 = vpop.f32.mrf.mxu0
        %v5744 = vpop.f32.mrf.mxu0
        %v5745 = vadd.f32 %v5649, %v5744
        %v5746 = vpop.f32.mrf.mxu0
        %5747 = vmatprep.mubr.bf16.mxu0 0
        %5748 = vmatmul.mubr.bf16.gmra.mxu0 %v5502
        %v5749 = vpop.f32.mrf.mxu0
        %v5750 = vadd.f32 %v5649, %v5749
        %v5751 = vpop.f32.mrf.mxu0
        %v5752 = vpop.f32.mrf.mxu0
        %v5753 = vadd.f32 %v5649, %v5752
        %v5754 = vpop.f32.mrf.mxu0
        %5755 = vmatprep.mubr.bf16.mxu0 0
        %5756 = vmatmul.mubr.bf16.gmra.mxu0 %v5503
        %v5757 = vpop.f32.mrf.mxu0
        %v5758 = vadd.f32 %v5649, %v5757
        %v5759 = vpop.f32.mrf.mxu0
        %v5760 = vpop.f32.mrf.mxu0
        %v5761 = vadd.f32 %v5649, %v5760
        %v5762 = vpop.f32.mrf.mxu0
        %5763 = vmatprep.mubr.bf16.mxu0 0
        %5764 = vmatmul.mubr.bf16.gmra.mxu0 %v5504
        %v5765 = vpop.f32.mrf.mxu0
        %v5766 = vadd.f32 %v5649, %v5765
        %v5767 = vpop.f32.mrf.mxu0
        %v5768 = vpop.f32.mrf.mxu0
        %v5769 = vadd.f32 %v5649, %v5768
        %v5770 = vpop.f32.mrf.mxu0
        %5771 = vmatprep.mubr.bf16.mxu0 0
        %5772 = vmatmul.mubr.bf16.gmra.mxu0 %v5505
        %v5773 = vpop.f32.mrf.mxu0
        %v5774 = vadd.f32 %v5649, %v5773
        %v5775 = vpop.f32.mrf.mxu0
        %v5776 = vpop.f32.mrf.mxu0
        %v5777 = vadd.f32 %v5649, %v5776
        %v5778 = vpop.f32.mrf.mxu0
        %5779 = vmatprep.mubr.bf16.mxu0 0
        %5780 = vmatmul.mubr.bf16.gmra.mxu0 %v5506
        %v5781 = vpop.f32.mrf.mxu0
        %v5782 = vadd.f32 %v5649, %v5781
        %v5783 = vpop.f32.mrf.mxu0
        %v5784 = vpop.f32.mrf.mxu0
        %v5785 = vadd.f32 %v5649, %v5784
        %v5786 = vpop.f32.mrf.mxu0
        %5787 = vmatprep.mubr.bf16.mxu0 0
        %5788 = vmatmul.mubr.bf16.gmra.mxu0 %v5507
        %v5789 = vpop.f32.mrf.mxu0
        %v5790 = vadd.f32 %v5649, %v5789
        %v5791 = vpop.f32.mrf.mxu0
        %v5792 = vpop.f32.mrf.mxu0
        %v5793 = vadd.f32 %v5649, %v5792
        %v5794 = vpop.f32.mrf.mxu0
        %5795 = vmatprep.mubr.bf16.mxu0 0
        %5796 = vmatmul.mubr.bf16.gmra.mxu0 %v5508
        %v5797 = vpop.f32.mrf.mxu0
        %v5798 = vadd.f32 %v5649, %v5797
        %v5799 = vpop.f32.mrf.mxu0
        %v5800 = vpop.f32.mrf.mxu0
        %v5801 = vadd.f32 %v5649, %v5800
        %v5802 = vpop.f32.mrf.mxu0
        %5803 = vmatprep.mubr.bf16.mxu0 0
        %5804 = vmatmul.mubr.bf16.gmra.mxu0 %v5509
        %v5805 = vpop.f32.mrf.mxu0
        %v5806 = vadd.f32 %v5649, %v5805
        %v5807 = vpop.f32.mrf.mxu0
        %v5808 = vpop.f32.mrf.mxu0
        %v5809 = vadd.f32 %v5649, %v5808
        %v5810 = vpop.f32.mrf.mxu0
        %5811 = vmatprep.mubr.bf16.mxu0 0
        %5812 = vmatmul.mubr.bf16.gmra.mxu0 %v5510
        %v5813 = vpop.f32.mrf.mxu0
        %v5814 = vadd.f32 %v5649, %v5813
        %v5815 = vpop.f32.mrf.mxu0
        %v5816 = vpop.f32.mrf.mxu0
        %v5817 = vadd.f32 %v5649, %v5816
        %v5818 = vpop.f32.mrf.mxu0
        %5819 = vmatprep.mubr.bf16.mxu0 0
        %5820 = vmatmul.mubr.bf16.gmra.mxu0 %v5511
        %v5821 = vpop.f32.mrf.mxu0
        %v5822 = vadd.f32 %v5649, %v5821
        %v5823 = vpop.f32.mrf.mxu0
        %v5824 = vpop.f32.mrf.mxu0
        %v5825 = vadd.f32 %v5649, %v5824
        %v5826 = vpop.f32.mrf.mxu0
        %5827 = vmatprep.mubr.bf16.mxu0 0
        %5828 = vmatmul.mubr.bf16.gmra.mxu0 %v5512
        %v5829 = vpop.f32.mrf.mxu0
        %v5830 = vadd.f32 %v5649, %v5829
        %v5831 = vpop.f32.mrf.mxu0
        %v5832 = vpop.f32.mrf.mxu0
        %v5833 = vadd.f32 %v5649, %v5832
        %v5834 = vpop.f32.mrf.mxu0
        %5835 = vmatprep.mubr.bf16.mxu0 0
        %5836 = vmatmul.mubr.bf16.gmra.mxu0 %v5513
        %v5837 = vpop.f32.mrf.mxu0
        %v5838 = vadd.f32 %v5649, %v5837
        %v5839 = vpop.f32.mrf.mxu0
        %v5840 = vpop.f32.mrf.mxu0
        %v5841 = vadd.f32 %v5649, %v5840
        %v5842 = vpop.f32.mrf.mxu0
        %5843 = vmatprep.mubr.bf16.mxu0 0
        %5844 = vmatmul.mubr.bf16.gmra.mxu0 %v5514
        %v5845 = vpop.f32.mrf.mxu0
        %v5846 = vadd.f32 %v5649, %v5845
        %v5847 = vpop.f32.mrf.mxu0
        %v5848 = vpop.f32.mrf.mxu0
        %v5849 = vadd.f32 %v5649, %v5848
        %v5850 = vpop.f32.mrf.mxu0
        %5851 = vmatprep.mubr.bf16.mxu0 0
        %5852 = vmatmul.mubr.bf16.gmra.mxu0 %v5515
        %v5853 = vpop.f32.mrf.mxu0
        %v5854 = vadd.f32 %v5649, %v5853
        %v5855 = vpop.f32.mrf.mxu0
        %v5856 = vpop.f32.mrf.mxu0
        %v5857 = vadd.f32 %v5649, %v5856
        %v5858 = vpop.f32.mrf.mxu0
        %5859 = vmatprep.mubr.bf16.mxu0 0
        %5860 = vmatmul.mubr.bf16.gmra.mxu0 %v5516
        %v5861 = vpop.f32.mrf.mxu0
        %v5862 = vadd.f32 %v5649, %v5861
        %v5863 = vpop.f32.mrf.mxu0
        %v5864 = vpop.f32.mrf.mxu0
        %v5865 = vadd.f32 %v5649, %v5864
        %v5866 = vpop.f32.mrf.mxu0
        %5867 = vmatprep.mubr.bf16.mxu0 0
        %5868 = vmatmul.mubr.bf16.gmra.mxu0 %v5517
        %v5869 = vpop.f32.mrf.mxu0
        %v5870 = vadd.f32 %v5649, %v5869
        %v5871 = vpop.f32.mrf.mxu0
        %v5872 = vpop.f32.mrf.mxu0
        %v5873 = vadd.f32 %v5649, %v5872
        %v5874 = vpop.f32.mrf.mxu0
        %5875 = vmatprep.mubr.bf16.mxu0 0
        %5876 = vmatmul.mubr.bf16.gmra.mxu0 %v5518
        %v5877 = vpop.f32.mrf.mxu0
        %v5878 = vadd.f32 %v5649, %v5877
        %v5879 = vpop.f32.mrf.mxu0
        %v5880 = vpop.f32.mrf.mxu0
        %v5881 = vadd.f32 %v5649, %v5880
        %v5882 = vpop.f32.mrf.mxu0
        %5883 = vmatprep.mubr.bf16.mxu0 0
        %5884 = vmatmul.mubr.bf16.gmra.mxu0 %v5519
        %v5885 = vpop.f32.mrf.mxu0
        %v5886 = vadd.f32 %v5649, %v5885
        %v5887 = vpop.f32.mrf.mxu0
        %v5888 = vpop.f32.mrf.mxu0
        %v5889 = vadd.f32 %v5649, %v5888
        %v5890 = vpop.f32.mrf.mxu0
        %5891 = vmatprep.mubr.bf16.mxu0 0
        %5892 = vmatmul.mubr.bf16.gmra.mxu0 %v5520
        %v5893 = vpop.f32.mrf.mxu0
        %v5894 = vadd.f32 %v5649, %v5893
        %v5895 = vpop.f32.mrf.mxu0
        %v5896 = vpop.f32.mrf.mxu0
        %v5897 = vadd.f32 %v5649, %v5896
        %v5898 = vpop.f32.mrf.mxu0
        %5899 = vmatprep.mubr.bf16.mxu0 0
        %5900 = vmatmul.mubr.bf16.gmra.mxu0 %v5521
        %v5901 = vpop.f32.mrf.mxu0
        %v5902 = vadd.f32 %v5649, %v5901
        %v5903 = vpop.f32.mrf.mxu0
        %v5904 = vpop.f32.mrf.mxu0
        %v5905 = vadd.f32 %v5649, %v5904
        %v5906 = vpop.f32.mrf.mxu0
        %5907 = vmatprep.mubr.bf16.mxu0 0
        %5908 = vmatmul.mubr.bf16.gmra.mxu0 %v5522
        %v5909 = vpop.f32.mrf.mxu0
        %v5910 = vadd.f32 %v5649, %v5909
        %v5911 = vpop.f32.mrf.mxu0
        %v5912 = vpop.f32.mrf.mxu0
        %v5913 = vadd.f32 %v5649, %v5912
        %v5914 = vpop.f32.mrf.mxu0
        %5915 = vmatprep.mubr.bf16.mxu0 0
        %5916 = vmatmul.mubr.bf16.gmra.mxu0 %v5523
        %v5917 = vpop.f32.mrf.mxu0
        %v5918 = vadd.f32 %v5649, %v5917
        %v5919 = vpop.f32.mrf.mxu0
        %v5920 = vpop.f32.mrf.mxu0
        %v5921 = vadd.f32 %v5649, %v5920
        %v5922 = vpop.f32.mrf.mxu0
        %5923 = vmatprep.mubr.bf16.mxu0 0
        %5924 = vmatmul.mubr.bf16.gmra.mxu0 %v5524
        %v5925 = vpop.f32.mrf.mxu0
        %v5926 = vadd.f32 %v5649, %v5925
        %v5927 = vpop.f32.mrf.mxu0
        %v5928 = vpop.f32.mrf.mxu0
        %v5929 = vadd.f32 %v5649, %v5928
        %v5930 = vpop.f32.mrf.mxu0
        %5931 = vmatprep.mubr.bf16.mxu0 0
        %5932 = vmatmul.mubr.bf16.gmra.mxu0 %v5525
        %v5933 = vpop.f32.mrf.mxu0
        %v5934 = vadd.f32 %v5649, %v5933
        %v5935 = vpop.f32.mrf.mxu0
        %v5936 = vpop.f32.mrf.mxu0
        %v5937 = vadd.f32 %v5649, %v5936
        %v5938 = vpop.f32.mrf.mxu0
        %5939 = vmatprep.mubr.bf16.mxu0 0
        %5940 = vmatmul.mubr.bf16.gmra.mxu0 %v5526
        %v5941 = vpop.f32.mrf.mxu0
        %v5942 = vadd.f32 %v5649, %v5941
        %v5943 = vpop.f32.mrf.mxu0
        %v5944 = vpop.f32.mrf.mxu0
        %v5945 = vadd.f32 %v5649, %v5944
        %v5946 = vpop.f32.mrf.mxu0
        %5947 = vmatprep.mubr.bf16.mxu0 0
        %5948 = vmatmul.mubr.bf16.gmra.mxu0 %v5527
        %v5949 = vpop.f32.mrf.mxu0
        %v5950 = vadd.f32 %v5649, %v5949
        %v5951 = vpop.f32.mrf.mxu0
        %v5952 = vpop.f32.mrf.mxu0
        %v5953 = vadd.f32 %v5649, %v5952
        %v5954 = vpop.f32.mrf.mxu0
        %5955 = vmatprep.mubr.bf16.mxu0 0
        %5956 = vmatmul.mubr.bf16.gmra.mxu0 %v5528
        %v5957 = vpop.f32.mrf.mxu0
        %v5958 = vadd.f32 %v5649, %v5957
        %v5959 = vpop.f32.mrf.mxu0
        %v5960 = vpop.f32.mrf.mxu0
        %v5961 = vadd.f32 %v5649, %v5960
        %v5962 = vpop.f32.mrf.mxu0
        %5963 = vmatprep.mubr.bf16.mxu0 0
        %5964 = vmatmul.mubr.bf16.gmra.mxu0 %v5529
        %v5965 = vpop.f32.mrf.mxu0
        %v5966 = vadd.f32 %v5649, %v5965
        %v5967 = vpop.f32.mrf.mxu0
        %v5968 = vpop.f32.mrf.mxu0
        %v5969 = vadd.f32 %v5649, %v5968
        %v5970 = vpop.f32.mrf.mxu0
        %5971 = vmatprep.mubr.bf16.mxu0 0
        %5972 = vmatmul.mubr.bf16.gmra.mxu0 %v5530
        %v5973 = vpop.f32.mrf.mxu0
        %v5974 = vadd.f32 %v5649, %v5973
        %v5975 = vpop.f32.mrf.mxu0
        %v5976 = vpop.f32.mrf.mxu0
        %v5977 = vadd.f32 %v5649, %v5976
        %v5978 = vpop.f32.mrf.mxu0
        %5979 = vmatprep.mubr.bf16.mxu0 0
        %5980 = vmatmul.mubr.bf16.gmra.mxu0 %v5531
        %v5981 = vpop.f32.mrf.mxu0
        %v5982 = vadd.f32 %v5649, %v5981
        %v5983 = vpop.f32.mrf.mxu0
        %v5984 = vpop.f32.mrf.mxu0
        %v5985 = vadd.f32 %v5649, %v5984
        %v5986 = vpop.f32.mrf.mxu0
        %5987 = vmatprep.mubr.bf16.mxu0 0
        %5988 = vmatmul.mubr.bf16.gmra.mxu0 %v5532
        %v5989 = vpop.f32.mrf.mxu0
        %v5990 = vadd.f32 %v5649, %v5989
        %v5991 = vpop.f32.mrf.mxu0
        %v5992 = vpop.f32.mrf.mxu0
        %v5993 = vadd.f32 %v5649, %v5992
        %v5994 = vpop.f32.mrf.mxu0
        %5995 = vmatprep.mubr.bf16.mxu0 0
        %5996 = vmatmul.mubr.bf16.gmra.mxu0 %v5533
        %v5997 = vpop.f32.mrf.mxu0
        %v5998 = vadd.f32 %v5649, %v5997
        %v5999 = vpop.f32.mrf.mxu0
        %v6000 = vpop.f32.mrf.mxu0
        %v6001 = vadd.f32 %v5649, %v6000
        %v6002 = vpop.f32.mrf.mxu0
        %6003 = vmatprep.mubr.bf16.mxu0 0
        %6004 = vmatmul.mubr.bf16.gmra.mxu0 %v5534
        %v6005 = vpop.f32.mrf.mxu0
        %v6006 = vadd.f32 %v5649, %v6005
        %v6007 = vpop.f32.mrf.mxu0
        %v6008 = vpop.f32.mrf.mxu0
        %v6009 = vadd.f32 %v5649, %v6008
        %v6010 = vpop.f32.mrf.mxu0
        %6011 = vmatprep.mubr.bf16.mxu0 0
        %6012 = vmatmul.mubr.bf16.gmra.mxu0 %v5535
        %v6013 = vpop.f32.mrf.mxu0
        %v6014 = vadd.f32 %v5649, %v6013
        %v6015 = vpop.f32.mrf.mxu0
        %v6016 = vpop.f32.mrf.mxu0
        %v6017 = vadd.f32 %v5649, %v6016
        %v6018 = vpop.f32.mrf.mxu0
        %6019 = vmatprep.mubr.bf16.mxu0 0
        %6020 = vmatmul.mubr.bf16.gmra.mxu0 %v5536
        %v6021 = vpop.f32.mrf.mxu0
        %v6022 = vadd.f32 %v5649, %v6021
        %v6023 = vpop.f32.mrf.mxu0
        %v6024 = vpop.f32.mrf.mxu0
        %v6025 = vadd.f32 %v5649, %v6024
        %v6026 = vpop.f32.mrf.mxu0
        %6027 = vmatprep.mubr.bf16.mxu0 0
        %6028 = vmatmul.mubr.bf16.gmra.mxu0 %v5537
        %v6029 = vpop.f32.mrf.mxu0
        %v6030 = vadd.f32 %v5649, %v6029
        %v6031 = vpop.f32.mrf.mxu0
        %v6032 = vpop.f32.mrf.mxu0
        %v6033 = vadd.f32 %v5649, %v6032
        %v6034 = vpop.f32.mrf.mxu0
        %6035 = vmatprep.mubr.bf16.mxu0 0
        %6036 = vmatmul.mubr.bf16.gmra.mxu0 %v5538
        %v6037 = vpop.f32.mrf.mxu0
        %v6038 = vadd.f32 %v5649, %v6037
        %v6039 = vpop.f32.mrf.mxu0
        %v6040 = vpop.f32.mrf.mxu0
        %v6041 = vadd.f32 %v5649, %v6040
        %v6042 = vpop.f32.mrf.mxu0
        %6043 = vmatprep.mubr.bf16.mxu0 0
        %6044 = vmatmul.mubr.bf16.gmra.mxu0 %v5539
        %v6045 = vpop.f32.mrf.mxu0
        %v6046 = vadd.f32 %v5649, %v6045
        %v6047 = vpop.f32.mrf.mxu0
        %v6048 = vpop.f32.mrf.mxu0
        %v6049 = vadd.f32 %v5649, %v6048
        %v6050 = vpop.f32.mrf.mxu0
        %6051 = vmatprep.mubr.bf16.mxu0 0
        %6052 = vmatmul.mubr.bf16.gmra.mxu0 %v5540
        %v6053 = vpop.f32.mrf.mxu0
        %v6054 = vadd.f32 %v5649, %v6053
        %v6055 = vpop.f32.mrf.mxu0
        %v6056 = vpop.f32.mrf.mxu0
        %v6057 = vadd.f32 %v5649, %v6056
        %v6058 = vpop.f32.mrf.mxu0
        %6059 = vmatprep.mubr.bf16.mxu0 0
        %6060 = vmatmul.mubr.bf16.gmra.mxu0 %v5541
        %v6061 = vpop.f32.mrf.mxu0
        %v6062 = vadd.f32 %v5649, %v6061
        %v6063 = vpop.f32.mrf.mxu0
        %v6064 = vpop.f32.mrf.mxu0
        %v6065 = vadd.f32 %v5649, %v6064
        %v6066 = vpop.f32.mrf.mxu0
        %6067 = vmatprep.mubr.bf16.mxu0 0
        %6068 = vmatmul.mubr.bf16.gmra.mxu0 %v5542
        %v6069 = vpop.f32.mrf.mxu0
        %v6070 = vadd.f32 %v5649, %v6069
        %v6071 = vpop.f32.mrf.mxu0
        %v6072 = vpop.f32.mrf.mxu0
        %v6073 = vadd.f32 %v5649, %v6072
        %v6074 = vpop.f32.mrf.mxu0
        %6075 = vmatprep.mubr.bf16.mxu0 0
        %6076 = vmatmul.mubr.bf16.gmra.mxu0 %v5543
        %v6077 = vpop.f32.mrf.mxu0
        %v6078 = vadd.f32 %v5649, %v6077
        %v6079 = vpop.f32.mrf.mxu0
        %v6080 = vpop.f32.mrf.mxu0
        %v6081 = vadd.f32 %v5649, %v6080
        %v6082 = vpop.f32.mrf.mxu0
        %6083 = vmatprep.mubr.bf16.mxu0 0
        %6084 = vmatmul.mubr.bf16.gmra.mxu0 %v5544
        %v6085 = vpop.f32.mrf.mxu0
        %v6086 = vadd.f32 %v5649, %v6085
        %v6087 = vpop.f32.mrf.mxu0
        %v6088 = vpop.f32.mrf.mxu0
        %v6089 = vadd.f32 %v5649, %v6088
        %v6090 = vpop.f32.mrf.mxu0
        %6091 = vmatprep.mubr.bf16.mxu0 0
        %6092 = vmatmul.mubr.bf16.gmra.mxu0 %v5545
        %v6093 = vpop.f32.mrf.mxu0
        %v6094 = vadd.f32 %v5649, %v6093
        %v6095 = vpop.f32.mrf.mxu0
        %v6096 = vpop.f32.mrf.mxu0
        %v6097 = vadd.f32 %v5649, %v6096
        %v6098 = vpop.f32.mrf.mxu0
        %6099 = vmatprep.mubr.bf16.mxu0 0
        %6100 = vmatmul.mubr.bf16.gmra.mxu0 %v5546
        %v6101 = vpop.f32.mrf.mxu0
        %v6102 = vadd.f32 %v5649, %v6101
        %v6103 = vpop.f32.mrf.mxu0
        %v6104 = vpop.f32.mrf.mxu0
        %v6105 = vadd.f32 %v5649, %v6104
        %v6106 = vpop.f32.mrf.mxu0
        %6107 = vmatprep.mubr.bf16.mxu0 0
        %6108 = vmatmul.mubr.bf16.gmra.mxu0 %v5547
        %v6109 = vpop.f32.mrf.mxu0
        %v6110 = vadd.f32 %v5649, %v6109
        %v6111 = vpop.f32.mrf.mxu0
        %v6112 = vpop.f32.mrf.mxu0
        %v6113 = vadd.f32 %v5649, %v6112
        %v6114 = vpop.f32.mrf.mxu0
        %6115 = vmatprep.mubr.bf16.mxu0 0
        %6116 = vmatmul.mubr.bf16.gmra.mxu0 %v5548
        %v6117 = vpop.f32.mrf.mxu0
        %v6118 = vadd.f32 %v5649, %v6117
        %v6119 = vpop.f32.mrf.mxu0
        %v6120 = vpop.f32.mrf.mxu0
        %v6121 = vadd.f32 %v5649, %v6120
        %v6122 = vpop.f32.mrf.mxu0
        %6123 = vmatprep.mubr.bf16.mxu0 0
        %6124 = vmatmul.mubr.bf16.gmra.mxu0 %v5549
        %v6125 = vpop.f32.mrf.mxu0
        %v6126 = vadd.f32 %v5649, %v6125
        %v6127 = vpop.f32.mrf.mxu0
        %v6128 = vpop.f32.mrf.mxu0
        %v6129 = vadd.f32 %v5649, %v6128
        %v6130 = vpop.f32.mrf.mxu0
        %6131 = vmatprep.mubr.bf16.mxu0 0
        %6132 = vmatmul.mubr.bf16.gmra.mxu0 %v5550
        %v6133 = vpop.f32.mrf.mxu0
        %v6134 = vadd.f32 %v5649, %v6133
        %v6135 = vpop.f32.mrf.mxu0
        %v6136 = vpop.f32.mrf.mxu0
        %v6137 = vadd.f32 %v5649, %v6136
        %v6138 = vpop.f32.mrf.mxu0
        %6139 = vmatprep.mubr.bf16.mxu0 0
        %6140 = vmatmul.mubr.bf16.gmra.mxu0 %v5551
        %v6141 = vpop.f32.mrf.mxu0
        %v6142 = vadd.f32 %v5649, %v6141
        %v6143 = vpop.f32.mrf.mxu0
        %v6144 = vpop.f32.mrf.mxu0
        %v6145 = vadd.f32 %v5649, %v6144
        %v6146 = vpop.f32.mrf.mxu0
        %6147 = vmatprep.mubr.bf16.mxu0 0
        %6148 = vmatmul.mubr.bf16.gmra.mxu0 %v5552
        %v6149 = vpop.f32.mrf.mxu0
        %v6150 = vadd.f32 %v5649, %v6149
        %v6151 = vpop.f32.mrf.mxu0
        %v6152 = vpop.f32.mrf.mxu0
        %v6153 = vadd.f32 %v5649, %v6152
        %v6154 = vpop.f32.mrf.mxu0
        %6155 = vmatprep.mubr.bf16.mxu0 0
        %6156 = vmatmul.mubr.bf16.gmra.mxu0 %v5553
        %v6157 = vpop.f32.mrf.mxu0
        %v6158 = vadd.f32 %v5649, %v6157
        %v6159 = vpop.f32.mrf.mxu0
        %v6160 = vpop.f32.mrf.mxu0
        %v6161 = vadd.f32 %v5649, %v6160
        %v6162 = vpop.f32.mrf.mxu0
        %6163 = vmatprep.mubr.bf16.mxu0 0
        %6164 = vmatmul.mubr.bf16.gmra.mxu0 %v5554
        %v6165 = vpop.f32.mrf.mxu0
        %v6166 = vadd.f32 %v5649, %v6165
        %v6167 = vpop.f32.mrf.mxu0
        %v6168 = vpop.f32.mrf.mxu0
        %v6169 = vadd.f32 %v5649, %v6168
        %v6170 = vpop.f32.mrf.mxu0
        %6171 = vmatprep.mubr.bf16.mxu0 0
        %6172 = vmatmul.mubr.bf16.gmra.mxu0 %v5555
        %v6173 = vpop.f32.mrf.mxu0
        %v6174 = vadd.f32 %v5649, %v6173
        %v6175 = vpop.f32.mrf.mxu0
        %v6176 = vpop.f32.mrf.mxu0
        %v6177 = vadd.f32 %v5649, %v6176
        %v6178 = vpop.f32.mrf.mxu0
        %6179 = vmatprep.mubr.bf16.mxu0 0
        %6180 = vmatmul.mubr.bf16.gmra.mxu0 %v5556
        %v6181 = vpop.f32.mrf.mxu0
        %v6182 = vadd.f32 %v5649, %v6181
        %v6183 = vpop.f32.mrf.mxu0
        %v6184 = vpop.f32.mrf.mxu0
        %v6185 = vadd.f32 %v5649, %v6184
        %v6186 = vpop.f32.mrf.mxu0
        %6187 = vmatprep.mubr.bf16.mxu0 0
        %6188 = vmatmul.mubr.bf16.gmra.mxu0 %v5557
        %v6189 = vpop.f32.mrf.mxu0
        %v6190 = vadd.f32 %v5649, %v6189
        %v6191 = vpop.f32.mrf.mxu0
        %v6192 = vpop.f32.mrf.mxu0
        %v6193 = vadd.f32 %v5649, %v6192
        %v6194 = vpop.f32.mrf.mxu0
        %6195 = vmatprep.mubr.bf16.mxu0 0
        %6196 = vmatmul.mubr.bf16.gmra.mxu0 %v5558
        %v6197 = vpop.f32.mrf.mxu0
        %v6198 = vadd.f32 %v5649, %v6197
        %v6199 = vpop.f32.mrf.mxu0
        %v6200 = vpop.f32.mrf.mxu0
        %v6201 = vadd.f32 %v5649, %v6200
        %v6202 = vpop.f32.mrf.mxu0
        %6203 = vmatprep.mubr.bf16.mxu0 0
        %6204 = vmatmul.mubr.bf16.gmra.mxu0 %v5559
        %v6205 = vpop.f32.mrf.mxu0
        %v6206 = vadd.f32 %v5649, %v6205
        %v6207 = vpop.f32.mrf.mxu0
        %v6208 = vpop.f32.mrf.mxu0
        %v6209 = vadd.f32 %v5649, %v6208
        %v6210 = vpop.f32.mrf.mxu0
        %6211 = vmatprep.mubr.bf16.mxu0 0
        %6212 = vmatmul.mubr.bf16.gmra.mxu0 %v5560
        %v6213 = vpop.f32.mrf.mxu0
        %v6214 = vadd.f32 %v5649, %v6213
        %v6215 = vpop.f32.mrf.mxu0
        %v6216 = vpop.f32.mrf.mxu0
        %v6217 = vadd.f32 %v5649, %v6216
        %v6218 = vpop.f32.mrf.mxu0
        %6219 = vmatprep.mubr.bf16.mxu0 0
        %6220 = vmatmul.mubr.bf16.gmra.mxu0 %v5561
        %v6221 = vpop.f32.mrf.mxu0
        %v6222 = vadd.f32 %v5649, %v6221
        %v6223 = vpop.f32.mrf.mxu0
        %v6224 = vpop.f32.mrf.mxu0
        %v6225 = vadd.f32 %v5649, %v6224
        %v6226 = vpop.f32.mrf.mxu0
        %6227 = vmatprep.mubr.bf16.mxu0 0
        %6228 = vmatmul.mubr.bf16.gmra.mxu0 %v5562
        %v6229 = vpop.f32.mrf.mxu0
        %v6230 = vadd.f32 %v5649, %v6229
        %v6231 = vpop.f32.mrf.mxu0
        %v6232 = vpop.f32.mrf.mxu0
        %v6233 = vadd.f32 %v5649, %v6232
        %v6234 = vpop.f32.mrf.mxu0
        %6235 = vmatprep.mubr.bf16.mxu0 0
        %6236 = vmatmul.mubr.bf16.gmra.mxu0 %v5563
        %v6237 = vpop.f32.mrf.mxu0
        %v6238 = vadd.f32 %v5649, %v6237
        %v6239 = vpop.f32.mrf.mxu0
        %v6240 = vpop.f32.mrf.mxu0
        %v6241 = vadd.f32 %v5649, %v6240
        %v6242 = vpop.f32.mrf.mxu0
        %6243 = vmatprep.mubr.bf16.mxu0 0
        %6244 = vmatmul.mubr.bf16.gmra.mxu0 %v5564
        %v6245 = vpop.f32.mrf.mxu0
        %v6246 = vadd.f32 %v5649, %v6245
        %v6247 = vpop.f32.mrf.mxu0
        %v6248 = vpop.f32.mrf.mxu0
        %v6249 = vadd.f32 %v5649, %v6248
        %v6250 = vpop.f32.mrf.mxu0
        %6251 = vmatprep.mubr.bf16.mxu0 0
        %6252 = vmatmul.mubr.bf16.gmra.mxu0 %v5565
        %v6253 = vpop.f32.mrf.mxu0
        %v6254 = vadd.f32 %v5649, %v6253
        %v6255 = vpop.f32.mrf.mxu0
        %v6256 = vpop.f32.mrf.mxu0
        %v6257 = vadd.f32 %v5649, %v6256
        %v6258 = vpop.f32.mrf.mxu0
        %6259 = vmatprep.mubr.bf16.mxu0 0
        %6260 = vmatmul.mubr.bf16.gmra.mxu0 %v5566
        %v6261 = vpop.f32.mrf.mxu0
        %v6262 = vadd.f32 %v5649, %v6261
        %v6263 = vpop.f32.mrf.mxu0
        %v6264 = vpop.f32.mrf.mxu0
        %v6265 = vadd.f32 %v5649, %v6264
        %v6266 = vpop.f32.mrf.mxu0
        %6267 = vmatprep.mubr.bf16.mxu0 0
        %6268 = vmatmul.mubr.bf16.gmra.mxu0 %v5567
        %v6269 = vpop.f32.mrf.mxu0
        %v6270 = vadd.f32 %v5649, %v6269
        %v6271 = vpop.f32.mrf.mxu0
        %v6272 = vpop.f32.mrf.mxu0
        %v6273 = vadd.f32 %v5649, %v6272
        %v6274 = vpop.f32.mrf.mxu0
        %6275 = vmatprep.mubr.bf16.mxu0 0
        %6276 = vmatmul.mubr.bf16.gmra.mxu0 %v5568
        %v6277 = vpop.f32.mrf.mxu0
        %v6278 = vadd.f32 %v5649, %v6277
        %v6279 = vpop.f32.mrf.mxu0
        %v6280 = vpop.f32.mrf.mxu0
        %v6281 = vadd.f32 %v5649, %v6280
        %v6282 = vpop.f32.mrf.mxu0
        %6283 = vmatprep.mubr.bf16.mxu0 0
        %6284 = vmatmul.mubr.bf16.gmra.mxu0 %v5569
        %v6285 = vpop.f32.mrf.mxu0
        %v6286 = vadd.f32 %v5649, %v6285
        %v6287 = vpop.f32.mrf.mxu0
        %v6288 = vpop.f32.mrf.mxu0
        %v6289 = vadd.f32 %v5649, %v6288
        %v6290 = vpop.f32.mrf.mxu0
        %6291 = vmatprep.mubr.bf16.mxu0 0
        %6292 = vmatmul.mubr.bf16.gmra.mxu0 %v5570
        %v6293 = vpop.f32.mrf.mxu0
        %v6294 = vadd.f32 %v5649, %v6293
        %v6295 = vpop.f32.mrf.mxu0
        %v6296 = vpop.f32.mrf.mxu0
        %v6297 = vadd.f32 %v5649, %v6296
        %v6298 = vpop.f32.mrf.mxu0
        %6299 = vmatprep.mubr.bf16.mxu0 0
        %6300 = vmatmul.mubr.bf16.gmra.mxu0 %v5571
        %v6301 = vpop.f32.mrf.mxu0
        %v6302 = vadd.f32 %v5649, %v6301
        %v6303 = vpop.f32.mrf.mxu0
        %v6304 = vpop.f32.mrf.mxu0
        %v6305 = vadd.f32 %v5649, %v6304
        %v6306 = vpop.f32.mrf.mxu0
        %6307 = vmatprep.mubr.bf16.mxu0 0
        %6308 = vmatmul.mubr.bf16.gmra.mxu0 %v5572
        %v6309 = vpop.f32.mrf.mxu0
        %v6310 = vadd.f32 %v5649, %v6309
        %v6311 = vpop.f32.mrf.mxu0
        %v6312 = vpop.f32.mrf.mxu0
        %v6313 = vadd.f32 %v5649, %v6312
        %v6314 = vpop.f32.mrf.mxu0
        %6315 = vmatprep.mubr.bf16.mxu0 0
        %6316 = vmatmul.mubr.bf16.gmra.mxu0 %v5573
        %v6317 = vpop.f32.mrf.mxu0
        %v6318 = vadd.f32 %v5649, %v6317
        %v6319 = vpop.f32.mrf.mxu0
        %v6320 = vpop.f32.mrf.mxu0
        %v6321 = vadd.f32 %v5649, %v6320
        %v6322 = vpop.f32.mrf.mxu0
        %6323 = vmatprep.mubr.bf16.mxu0 0
        %6324 = vmatmul.mubr.bf16.gmra.mxu0 %v5574
        %v6325 = vpop.f32.mrf.mxu0
        %v6326 = vadd.f32 %v5649, %v6325
        %v6327 = vpop.f32.mrf.mxu0
        %v6328 = vpop.f32.mrf.mxu0
        %v6329 = vadd.f32 %v5649, %v6328
        %v6330 = vpop.f32.mrf.mxu0
        %6331 = vmatprep.mubr.bf16.mxu0 0
        %6332 = vmatmul.mubr.bf16.gmra.mxu0 %v5575
        %v6333 = vpop.f32.mrf.mxu0
        %v6334 = vadd.f32 %v5649, %v6333
        %v6335 = vpop.f32.mrf.mxu0
        %v6336 = vpop.f32.mrf.mxu0
        %v6337 = vadd.f32 %v5649, %v6336
        %v6338 = vpop.f32.mrf.mxu0
        %6339 = vmatprep.mubr.bf16.mxu0 0
        %6340 = vmatmul.mubr.bf16.gmra.mxu0 %v5576
        %v6341 = vpop.f32.mrf.mxu0
        %v6342 = vadd.f32 %v5649, %v6341
        %v6343 = vpop.f32.mrf.mxu0
        %v6344 = vpop.f32.mrf.mxu0
        %v6345 = vadd.f32 %v5649, %v6344
        %v6346 = vpop.f32.mrf.mxu0
        %6347 = vmatprep.mubr.bf16.mxu0 0
        %6348 = vmatmul.mubr.bf16.gmra.mxu0 %v5577
        %v6349 = vpop.f32.mrf.mxu0
        %v6350 = vadd.f32 %v5649, %v6349
        %v6351 = vpop.f32.mrf.mxu0
        %v6352 = vpop.f32.mrf.mxu0
        %v6353 = vadd.f32 %v5649, %v6352
        %v6354 = vpop.f32.mrf.mxu0
        %6355 = vmatprep.mubr.bf16.mxu0 0
        %6356 = vmatmul.mubr.bf16.gmra.mxu0 %v5578
        %v6357 = vpop.f32.mrf.mxu0
        %v6358 = vadd.f32 %v5649, %v6357
        %v6359 = vpop.f32.mrf.mxu0
        %v6360 = vpop.f32.mrf.mxu0
        %v6361 = vadd.f32 %v5649, %v6360
        %v6362 = vpop.f32.mrf.mxu0
        %6363 = vmatprep.mubr.bf16.mxu0 0
        %6364 = vmatmul.mubr.bf16.gmra.mxu0 %v5579
        %v6365 = vpop.f32.mrf.mxu0
        %v6366 = vadd.f32 %v5649, %v6365
        %v6367 = vpop.f32.mrf.mxu0
        %v6368 = vpop.f32.mrf.mxu0
        %v6369 = vadd.f32 %v5649, %v6368
        %v6370 = vpop.f32.mrf.mxu0
        %6371 = vmatprep.mubr.bf16.mxu0 0
        %6372 = vmatmul.mubr.bf16.gmra.mxu0 %v5580
        %v6373 = vpop.f32.mrf.mxu0
        %v6374 = vadd.f32 %v5649, %v6373
        %v6375 = vpop.f32.mrf.mxu0
        %v6376 = vpop.f32.mrf.mxu0
        %v6377 = vadd.f32 %v5649, %v6376
        %v6378 = vpop.f32.mrf.mxu0
        %6379 = vmatprep.mubr.bf16.mxu0 0
        %6380 = vmatmul.mubr.bf16.gmra.mxu0 %v5581
        %v6381 = vpop.f32.mrf.mxu0
        %v6382 = vadd.f32 %v5649, %v6381
        %v6383 = vpop.f32.mrf.mxu0
        %v6384 = vpop.f32.mrf.mxu0
        %v6385 = vadd.f32 %v5649, %v6384
        %v6386 = vpop.f32.mrf.mxu0
        %6387 = vmatprep.mubr.bf16.mxu0 0
        %6388 = vmatmul.mubr.bf16.gmra.mxu0 %v5582
        %v6389 = vpop.f32.mrf.mxu0
        %v6390 = vadd.f32 %v5649, %v6389
        %v6391 = vpop.f32.mrf.mxu0
        %v6392 = vpop.f32.mrf.mxu0
        %v6393 = vadd.f32 %v5649, %v6392
        %v6394 = vpop.f32.mrf.mxu0
        %6395 = vmatprep.mubr.bf16.mxu0 0
        %6396 = vmatmul.mubr.bf16.gmra.mxu0 %v5583
        %v6397 = vpop.f32.mrf.mxu0
        %v6398 = vadd.f32 %v5649, %v6397
        %v6399 = vpop.f32.mrf.mxu0
        %v6400 = vpop.f32.mrf.mxu0
        %v6401 = vadd.f32 %v5649, %v6400
        %v6402 = vpop.f32.mrf.mxu0
        %6403 = vmatprep.mubr.bf16.mxu0 0
        %6404 = vmatmul.mubr.bf16.gmra.mxu0 %v5584
        %v6405 = vpop.f32.mrf.mxu0
        %v6406 = vadd.f32 %v5649, %v6405
        %v6407 = vpop.f32.mrf.mxu0
        %v6408 = vpop.f32.mrf.mxu0
        %v6409 = vadd.f32 %v5649, %v6408
        %v6410 = vpop.f32.mrf.mxu0
        %6411 = vmatprep.mubr.bf16.mxu0 0
        %6412 = vmatmul.mubr.bf16.gmra.mxu0 %v5585
        %v6413 = vpop.f32.mrf.mxu0
        %v6414 = vadd.f32 %v5649, %v6413
        %v6415 = vpop.f32.mrf.mxu0
        %v6416 = vpop.f32.mrf.mxu0
        %v6417 = vadd.f32 %v5649, %v6416
        %v6418 = vpop.f32.mrf.mxu0
        %6419 = vmatprep.mubr.bf16.mxu0 0
        %6420 = vmatmul.mubr.bf16.gmra.mxu0 %v5586
        %v6421 = vpop.f32.mrf.mxu0
        %v6422 = vadd.f32 %v5649, %v6421
        %v6423 = vpop.f32.mrf.mxu0
        %v6424 = vpop.f32.mrf.mxu0
        %v6425 = vadd.f32 %v5649, %v6424
        %v6426 = vpop.f32.mrf.mxu0
        %6427 = vmatprep.mubr.bf16.mxu0 0
        %6428 = vmatmul.mubr.bf16.gmra.mxu0 %v5587
        %v6429 = vpop.f32.mrf.mxu0
        %v6430 = vadd.f32 %v5649, %v6429
        %v6431 = vpop.f32.mrf.mxu0
        %v6432 = vpop.f32.mrf.mxu0
        %v6433 = vadd.f32 %v5649, %v6432
        %v6434 = vpop.f32.mrf.mxu0
        %6435 = vmatprep.mubr.bf16.mxu0 0
        %6436 = vmatmul.mubr.bf16.gmra.mxu0 %v5588
        %v6437 = vpop.f32.mrf.mxu0
        %v6438 = vadd.f32 %v5649, %v6437
        %v6439 = vpop.f32.mrf.mxu0
        %v6440 = vpop.f32.mrf.mxu0
        %v6441 = vadd.f32 %v5649, %v6440
        %v6442 = vpop.f32.mrf.mxu0
        %6443 = vmatprep.mubr.bf16.mxu0 0
        %6444 = vmatmul.mubr.bf16.gmra.mxu0 %v5589
        %v6445 = vpop.f32.mrf.mxu0
        %v6446 = vadd.f32 %v5649, %v6445
        %v6447 = vpop.f32.mrf.mxu0
        %v6448 = vpop.f32.mrf.mxu0
        %v6449 = vadd.f32 %v5649, %v6448
        %v6450 = vpop.f32.mrf.mxu0
        %6451 = vmatprep.mubr.bf16.mxu0 0
        %6452 = vmatmul.mubr.bf16.gmra.mxu0 %v5590
        %v6453 = vpop.f32.mrf.mxu0
        %v6454 = vadd.f32 %v5649, %v6453
        %v6455 = vpop.f32.mrf.mxu0
        %v6456 = vpop.f32.mrf.mxu0
        %v6457 = vadd.f32 %v5649, %v6456
        %v6458 = vpop.f32.mrf.mxu0
        %6459 = vmatprep.mubr.bf16.mxu0 0
        %6460 = vmatmul.mubr.bf16.gmra.mxu0 %v5591
        %v6461 = vpop.f32.mrf.mxu0
        %v6462 = vadd.f32 %v5649, %v6461
        %v6463 = vpop.f32.mrf.mxu0
        %v6464 = vpop.f32.mrf.mxu0
        %v6465 = vadd.f32 %v5649, %v6464
        %v6466 = vpop.f32.mrf.mxu0
        %6467 = vmatprep.mubr.bf16.mxu0 0
        %6468 = vmatmul.mubr.bf16.gmra.mxu0 %v5592
        %v6469 = vpop.f32.mrf.mxu0
        %v6470 = vadd.f32 %v5649, %v6469
        %v6471 = vpop.f32.mrf.mxu0
        %v6472 = vpop.f32.mrf.mxu0
        %v6473 = vadd.f32 %v5649, %v6472
        %v6474 = vpop.f32.mrf.mxu0
        %6475 = vmatprep.mubr.bf16.mxu0 0
        %6476 = vmatmul.mubr.bf16.gmra.mxu0 %v5593
        %v6477 = vpop.f32.mrf.mxu0
        %v6478 = vadd.f32 %v5649, %v6477
        %v6479 = vpop.f32.mrf.mxu0
        %v6480 = vpop.f32.mrf.mxu0
        %v6481 = vadd.f32 %v5649, %v6480
        %v6482 = vpop.f32.mrf.mxu0
        %6483 = vmatprep.mubr.bf16.mxu0 0
        %6484 = vmatmul.mubr.bf16.gmra.mxu0 %v5594
        %v6485 = vpop.f32.mrf.mxu0
        %v6486 = vadd.f32 %v5649, %v6485
        %v6487 = vpop.f32.mrf.mxu0
        %v6488 = vpop.f32.mrf.mxu0
        %v6489 = vadd.f32 %v5649, %v6488
        %v6490 = vpop.f32.mrf.mxu0
        %6491 = vmatprep.mubr.bf16.mxu0 0
        %6492 = vmatmul.mubr.bf16.gmra.mxu0 %v5595
        %v6493 = vpop.f32.mrf.mxu0
        %v6494 = vadd.f32 %v5649, %v6493
        %v6495 = vpop.f32.mrf.mxu0
        %v6496 = vpop.f32.mrf.mxu0
        %v6497 = vadd.f32 %v5649, %v6496
        %v6498 = vpop.f32.mrf.mxu0
        %6499 = vmatprep.mubr.bf16.mxu0 0
        %6500 = vmatmul.mubr.bf16.gmra.mxu0 %v5596
        %v6501 = vpop.f32.mrf.mxu0
        %v6502 = vadd.f32 %v5649, %v6501
        %v6503 = vpop.f32.mrf.mxu0
        %v6504 = vpop.f32.mrf.mxu0
        %v6505 = vadd.f32 %v5649, %v6504
        %v6506 = vpop.f32.mrf.mxu0
        %6507 = vmatprep.mubr.bf16.mxu0 0
        %6508 = vmatmul.mubr.bf16.gmra.mxu0 %v5597
        %v6509 = vpop.f32.mrf.mxu0
        %v6510 = vadd.f32 %v5649, %v6509
        %v6511 = vpop.f32.mrf.mxu0
        %v6512 = vpop.f32.mrf.mxu0
        %v6513 = vadd.f32 %v5649, %v6512
        %v6514 = vpop.f32.mrf.mxu0
        %6515 = vmatprep.mubr.bf16.mxu0 0
        %6516 = vmatmul.mubr.bf16.gmra.mxu0 %v5598
        %v6517 = vpop.f32.mrf.mxu0
        %v6518 = vadd.f32 %v5649, %v6517
        %v6519 = vpop.f32.mrf.mxu0
        %v6520 = vpop.f32.mrf.mxu0
        %v6521 = vadd.f32 %v5649, %v6520
        %v6522 = vpop.f32.mrf.mxu0
        %6523 = vmatprep.mubr.bf16.mxu0 0
        %6524 = vmatmul.mubr.bf16.gmra.mxu0 %v5599
        %v6525 = vpop.f32.mrf.mxu0
        %v6526 = vadd.f32 %v5649, %v6525
        %v6527 = vpop.f32.mrf.mxu0
        %v6528 = vpop.f32.mrf.mxu0
        %v6529 = vadd.f32 %v5649, %v6528
        %v6530 = vpop.f32.mrf.mxu0
        %6531 = vmatprep.mubr.bf16.mxu0 0
        %6532 = vmatmul.mubr.bf16.gmra.mxu0 %v5600
        %v6533 = vpop.f32.mrf.mxu0
        %v6534 = vadd.f32 %v5649, %v6533
        %v6535 = vpop.f32.mrf.mxu0
        %v6536 = vpop.f32.mrf.mxu0
        %v6537 = vadd.f32 %v5649, %v6536
        %v6538 = vpop.f32.mrf.mxu0
        %6539 = vmatprep.mubr.bf16.mxu0 0
        %6540 = vmatmul.mubr.bf16.gmra.mxu0 %v5601
        %v6541 = vpop.f32.mrf.mxu0
        %v6542 = vadd.f32 %v5649, %v6541
        %v6543 = vpop.f32.mrf.mxu0
        %v6544 = vpop.f32.mrf.mxu0
        %v6545 = vadd.f32 %v5649, %v6544
        %v6546 = vpop.f32.mrf.mxu0
        %6547 = vmatprep.mubr.bf16.mxu0 0
        %6548 = vmatmul.mubr.bf16.gmra.mxu0 %v5602
        %v6549 = vpop.f32.mrf.mxu0
        %v6550 = vadd.f32 %v5649, %v6549
        %v6551 = vpop.f32.mrf.mxu0
        %v6552 = vpop.f32.mrf.mxu0
        %v6553 = vadd.f32 %v5649, %v6552
        %v6554 = vpop.f32.mrf.mxu0
        %6555 = vmatprep.mubr.bf16.mxu0 0
        %6556 = vmatmul.mubr.bf16.gmra.mxu0 %v5603
        %v6557 = vpop.f32.mrf.mxu0
        %v6558 = vadd.f32 %v5649, %v6557
        %v6559 = vpop.f32.mrf.mxu0
        %v6560 = vpop.f32.mrf.mxu0
        %v6561 = vadd.f32 %v5649, %v6560
        %v6562 = vpop.f32.mrf.mxu0
        %6563 = vmatprep.mubr.bf16.mxu0 0
        %6564 = vmatmul.mubr.bf16.gmra.mxu0 %v5604
        %v6565 = vpop.f32.mrf.mxu0
        %v6566 = vadd.f32 %v5649, %v6565
        %v6567 = vpop.f32.mrf.mxu0
        %v6568 = vpop.f32.mrf.mxu0
        %v6569 = vadd.f32 %v5649, %v6568
        %v6570 = vpop.f32.mrf.mxu0
        %6571 = vmatprep.mubr.bf16.mxu0 0
        %6572 = vmatmul.mubr.bf16.gmra.mxu0 %v5605
        %v6573 = vpop.f32.mrf.mxu0
        %v6574 = vadd.f32 %v5649, %v6573
        %v6575 = vpop.f32.mrf.mxu0
        %v6576 = vpop.f32.mrf.mxu0
        %v6577 = vadd.f32 %v5649, %v6576
        %v6578 = vpop.f32.mrf.mxu0
        %6579 = vmatprep.mubr.bf16.mxu0 0
        %6580 = vmatmul.mubr.bf16.gmra.mxu0 %v5606
        %v6581 = vpop.f32.mrf.mxu0
        %v6582 = vadd.f32 %v5649, %v6581
        %v6583 = vpop.f32.mrf.mxu0
        %v6584 = vpop.f32.mrf.mxu0
        %v6585 = vadd.f32 %v5649, %v6584
        %v6586 = vpop.f32.mrf.mxu0
        %6587 = vmatprep.mubr.bf16.mxu0 0
        %6588 = vmatmul.mubr.bf16.gmra.mxu0 %v5607
        %v6589 = vpop.f32.mrf.mxu0
        %v6590 = vadd.f32 %v5649, %v6589
        %v6591 = vpop.f32.mrf.mxu0
        %v6592 = vpop.f32.mrf.mxu0
        %v6593 = vadd.f32 %v5649, %v6592
        %v6594 = vpop.f32.mrf.mxu0
        %6595 = vmatprep.mubr.bf16.mxu0 0
        %6596 = vmatmul.mubr.bf16.gmra.mxu0 %v5608
        %v6597 = vpop.f32.mrf.mxu0
        %v6598 = vadd.f32 %v5649, %v6597
        %v6599 = vpop.f32.mrf.mxu0
        %v6600 = vpop.f32.mrf.mxu0
        %v6601 = vadd.f32 %v5649, %v6600
        %v6602 = vpop.f32.mrf.mxu0
        %6603 = vmatprep.mubr.bf16.mxu0 0
        %6604 = vmatmul.mubr.bf16.gmra.mxu0 %v5609
        %v6605 = vpop.f32.mrf.mxu0
        %v6606 = vadd.f32 %v5649, %v6605
        %v6607 = vpop.f32.mrf.mxu0
        %v6608 = vpop.f32.mrf.mxu0
        %v6609 = vadd.f32 %v5649, %v6608
        %v6610 = vpop.f32.mrf.mxu0
        %6611 = vmatprep.mubr.bf16.mxu0 0
        %6612 = vmatmul.mubr.bf16.gmra.mxu0 %v5610
        %v6613 = vpop.f32.mrf.mxu0
        %v6614 = vadd.f32 %v5649, %v6613
        %v6615 = vpop.f32.mrf.mxu0
        %v6616 = vpop.f32.mrf.mxu0
        %v6617 = vadd.f32 %v5649, %v6616
        %v6618 = vpop.f32.mrf.mxu0
        %6619 = vmatprep.mubr.bf16.mxu0 0
        %6620 = vmatmul.mubr.bf16.gmra.mxu0 %v5611
        %v6621 = vpop.f32.mrf.mxu0
        %v6622 = vadd.f32 %v5649, %v6621
        %v6623 = vpop.f32.mrf.mxu0
        %v6624 = vpop.f32.mrf.mxu0
        %v6625 = vadd.f32 %v5649, %v6624
        %v6626 = vpop.f32.mrf.mxu0
        %6627 = vmatprep.mubr.bf16.mxu0 0
        %6628 = vmatmul.mubr.bf16.gmra.mxu0 %v5612
        %v6629 = vpop.f32.mrf.mxu0
        %v6630 = vadd.f32 %v5649, %v6629
        %v6631 = vpop.f32.mrf.mxu0
        %v6632 = vpop.f32.mrf.mxu0
        %v6633 = vadd.f32 %v5649, %v6632
        %v6634 = vpop.f32.mrf.mxu0
        %6635 = vmatprep.mubr.bf16.mxu0 0
        %6636 = vmatmul.mubr.bf16.gmra.mxu0 %v5613
        %v6637 = vpop.f32.mrf.mxu0
        %v6638 = vadd.f32 %v5649, %v6637
        %v6639 = vpop.f32.mrf.mxu0
        %v6640 = vpop.f32.mrf.mxu0
        %v6641 = vadd.f32 %v5649, %v6640
        %v6642 = vpop.f32.mrf.mxu0
        %6643 = vmatprep.mubr.bf16.mxu0 0
        %6644 = vmatmul.mubr.bf16.gmra.mxu0 %v5614
        %v6645 = vpop.f32.mrf.mxu0
        %v6646 = vadd.f32 %v5649, %v6645
        %v6647 = vpop.f32.mrf.mxu0
        %v6648 = vpop.f32.mrf.mxu0
        %v6649 = vadd.f32 %v5649, %v6648
        %v6650 = vpop.f32.mrf.mxu0
        %6651 = vmatprep.mubr.bf16.mxu0 0
        %6652 = vmatmul.mubr.bf16.gmra.mxu0 %v5615
        %v6653 = vpop.f32.mrf.mxu0
        %v6654 = vadd.f32 %v5649, %v6653
        %v6655 = vpop.f32.mrf.mxu0
        %v6656 = vpop.f32.mrf.mxu0
        %v6657 = vadd.f32 %v5649, %v6656
        %v6658 = vpop.f32.mrf.mxu0
        %6659 = vmatprep.mubr.bf16.mxu0 0
        %6660 = vmatmul.mubr.bf16.gmra.mxu0 %v5616
        %v6661 = vpop.f32.mrf.mxu0
        %v6662 = vadd.f32 %v5649, %v6661
        %v6663 = vpop.f32.mrf.mxu0
        %v6664 = vpop.f32.mrf.mxu0
        %v6665 = vadd.f32 %v5649, %v6664
        %v6666 = vpop.f32.mrf.mxu0
        %6667 = vmatprep.mubr.bf16.mxu0 0
        %6668 = vmatmul.mubr.bf16.gmra.mxu0 %v5617
        %v6669 = vpop.f32.mrf.mxu0
        %v6670 = vadd.f32 %v5649, %v6669
        %v6671 = vpop.f32.mrf.mxu0
        %v6672 = vpop.f32.mrf.mxu0
        %v6673 = vadd.f32 %v5649, %v6672
        %v6674 = vpop.f32.mrf.mxu0
        %6675 = vmatprep.mubr.bf16.mxu0 0
        %6676 = vmatmul.mubr.bf16.gmra.mxu0 %v5618
        %v6677 = vpop.f32.mrf.mxu0
        %v6678 = vadd.f32 %v5649, %v6677
        %v6679 = vpop.f32.mrf.mxu0
        %v6680 = vpop.f32.mrf.mxu0
        %v6681 = vadd.f32 %v5649, %v6680
        %v6682 = vpop.f32.mrf.mxu0
        %6683 = vmatprep.mubr.bf16.mxu0 0
        %6684 = vmatmul.mubr.bf16.gmra.mxu0 %v5619
        %v6685 = vpop.f32.mrf.mxu0
        %v6686 = vadd.f32 %v5649, %v6685
        %v6687 = vpop.f32.mrf.mxu0
        %v6688 = vpop.f32.mrf.mxu0
        %v6689 = vadd.f32 %v5649, %v6688
        %v6690 = vpop.f32.mrf.mxu0
        %6691 = vmatprep.mubr.bf16.mxu0 0
        %6692 = vmatmul.mubr.bf16.gmra.mxu0 %v5620
        %v6693 = vpop.f32.mrf.mxu0
        %v6694 = vadd.f32 %v5649, %v6693
        %v6695 = vpop.f32.mrf.mxu0
        %v6696 = vpop.f32.mrf.mxu0
        %v6697 = vadd.f32 %v5649, %v6696
        %v6698 = vpop.f32.mrf.mxu0
        %6699 = vmatprep.mubr.bf16.mxu0 0
        %6700 = vmatmul.mubr.bf16.gmra.mxu0 %v5621
        %v6701 = vpop.f32.mrf.mxu0
        %v6702 = vadd.f32 %v5649, %v6701
        %v6703 = vpop.f32.mrf.mxu0
        %v6704 = vpop.f32.mrf.mxu0
        %v6705 = vadd.f32 %v5649, %v6704
        %v6706 = vpop.f32.mrf.mxu0
        %6707 = vmatprep.mubr.bf16.mxu0 0
        %6708 = vmatmul.mubr.bf16.gmra.mxu0 %v5622
        %v6709 = vpop.f32.mrf.mxu0
        %v6710 = vadd.f32 %v5649, %v6709
        %v6711 = vpop.f32.mrf.mxu0
        %v6712 = vpop.f32.mrf.mxu0
        %v6713 = vadd.f32 %v5649, %v6712
        %v6714 = vpop.f32.mrf.mxu0
        %6715 = vmatprep.mubr.bf16.mxu0 0
        %6716 = vmatmul.mubr.bf16.gmra.mxu0 %v5623
        %v6717 = vpop.f32.mrf.mxu0
        %v6718 = vadd.f32 %v5649, %v6717
        %v6719 = vpop.f32.mrf.mxu0
        %v6720 = vpop.f32.mrf.mxu0
        %v6721 = vadd.f32 %v5649, %v6720
        %v6722 = vpop.f32.mrf.mxu0
        %6723 = vmatprep.mubr.bf16.mxu0 0
        %6724 = vmatmul.mubr.bf16.gmra.mxu0 %v5624
        %v6725 = vpop.f32.mrf.mxu0
        %v6726 = vadd.f32 %v5649, %v6725
        %v6727 = vpop.f32.mrf.mxu0
        %v6728 = vpop.f32.mrf.mxu0
        %v6729 = vadd.f32 %v5649, %v6728
        %v6730 = vpop.f32.mrf.mxu0
        %6731 = vmatprep.mubr.bf16.mxu0 0
        %6732 = vmatmul.mubr.bf16.gmra.mxu0 %v5625
        %v6733 = vpop.f32.mrf.mxu0
        %v6734 = vadd.f32 %v5649, %v6733
        %v6735 = vpop.f32.mrf.mxu0
        %v6736 = vpop.f32.mrf.mxu0
        %v6737 = vadd.f32 %v5649, %v6736
        %v6738 = vpop.f32.mrf.mxu0
        %6739 = vmatprep.mubr.bf16.mxu0 0
        %6740 = vmatmul.mubr.bf16.gmra.mxu0 %v5626
        %v6741 = vpop.f32.mrf.mxu0
        %v6742 = vadd.f32 %v5649, %v6741
        %v6743 = vpop.f32.mrf.mxu0
        %v6744 = vpop.f32.mrf.mxu0
        %v6745 = vadd.f32 %v5649, %v6744
        %v6746 = vpop.f32.mrf.mxu0
        %6747 = vmatprep.mubr.bf16.mxu0 0
        %6748 = vmatmul.mubr.bf16.gmra.mxu0 %v5627
        %v6749 = vpop.f32.mrf.mxu0
        %v6750 = vadd.f32 %v5649, %v6749
        %v6751 = vpop.f32.mrf.mxu0
        %v6752 = vpop.f32.mrf.mxu0
        %v6753 = vadd.f32 %v5649, %v6752
        %v6754 = vpop.f32.mrf.mxu0
        %6755 = vdwg.mxu0
        %v6756 = vadd.f32 %v3732, %v5734
        %v6757 = vadd.f32 %v3733, %v5737
        %v6758 = vadd.f32 %v3734, %v5742
        %v6759 = vadd.f32 %v3735, %v5745
        %v6760 = vadd.f32 %v3736, %v5750
        %v6761 = vadd.f32 %v3737, %v5753
        %v6762 = vadd.f32 %v3738, %v5758
        %v6763 = vadd.f32 %v3739, %v5761
        %v6764 = vadd.f32 %v3740, %v5766
        %v6765 = vadd.f32 %v3741, %v5769
        %v6766 = vadd.f32 %v3742, %v5774
        %v6767 = vadd.f32 %v3743, %v5777
        %v6768 = vadd.f32 %v3744, %v5782
        %v6769 = vadd.f32 %v3745, %v5785
        %v6770 = vadd.f32 %v3746, %v5790
        %v6771 = vadd.f32 %v3747, %v5793
        %v6772 = vadd.f32 %v3748, %v5798
        %v6773 = vadd.f32 %v3749, %v5801
        %v6774 = vadd.f32 %v3750, %v5806
        %v6775 = vadd.f32 %v3751, %v5809
        %v6776 = vadd.f32 %v3752, %v5814
        %v6777 = vadd.f32 %v3753, %v5817
        %v6778 = vadd.f32 %v3754, %v5822
        %v6779 = vadd.f32 %v3755, %v5825
        %v6780 = vadd.f32 %v3756, %v5830
        %v6781 = vadd.f32 %v3757, %v5833
        %v6782 = vadd.f32 %v3758, %v5838
        %v6783 = vadd.f32 %v3759, %v5841
        %v6784 = vadd.f32 %v3760, %v5846
        %v6785 = vadd.f32 %v3761, %v5849
        %v6786 = vadd.f32 %v3762, %v5854
        %v6787 = vadd.f32 %v3763, %v5857
        %v6788 = vadd.f32 %v3764, %v5862
        %v6789 = vadd.f32 %v3765, %v5865
        %v6790 = vadd.f32 %v3766, %v5870
        %v6791 = vadd.f32 %v3767, %v5873
        %v6792 = vadd.f32 %v3768, %v5878
        %v6793 = vadd.f32 %v3769, %v5881
        %v6794 = vadd.f32 %v3770, %v5886
        %v6795 = vadd.f32 %v3771, %v5889
        %v6796 = vadd.f32 %v3772, %v5894
        %v6797 = vadd.f32 %v3773, %v5897
        %v6798 = vadd.f32 %v3774, %v5902
        %v6799 = vadd.f32 %v3775, %v5905
        %v6800 = vadd.f32 %v3776, %v5910
        %v6801 = vadd.f32 %v3777, %v5913
        %v6802 = vadd.f32 %v3778, %v5918
        %v6803 = vadd.f32 %v3779, %v5921
        %v6804 = vadd.f32 %v3780, %v5926
        %v6805 = vadd.f32 %v3781, %v5929
        %v6806 = vadd.f32 %v3782, %v5934
        %v6807 = vadd.f32 %v3783, %v5937
        %v6808 = vadd.f32 %v3784, %v5942
        %v6809 = vadd.f32 %v3785, %v5945
        %v6810 = vadd.f32 %v3786, %v5950
        %v6811 = vadd.f32 %v3787, %v5953
        %v6812 = vadd.f32 %v3788, %v5958
        %v6813 = vadd.f32 %v3789, %v5961
        %v6814 = vadd.f32 %v3790, %v5966
        %v6815 = vadd.f32 %v3791, %v5969
        %v6816 = vadd.f32 %v3792, %v5974
        %v6817 = vadd.f32 %v3793, %v5977
        %v6818 = vadd.f32 %v3794, %v5982
        %v6819 = vadd.f32 %v3795, %v5985
        %v6820 = vadd.f32 %v3796, %v5990
        %v6821 = vadd.f32 %v3797, %v5993
        %v6822 = vadd.f32 %v3798, %v5998
        %v6823 = vadd.f32 %v3799, %v6001
        %v6824 = vadd.f32 %v3800, %v6006
        %v6825 = vadd.f32 %v3801, %v6009
        %v6826 = vadd.f32 %v3802, %v6014
        %v6827 = vadd.f32 %v3803, %v6017
        %v6828 = vadd.f32 %v3804, %v6022
        %v6829 = vadd.f32 %v3805, %v6025
        %v6830 = vadd.f32 %v3806, %v6030
        %v6831 = vadd.f32 %v3807, %v6033
        %v6832 = vadd.f32 %v3808, %v6038
        %v6833 = vadd.f32 %v3809, %v6041
        %v6834 = vadd.f32 %v3810, %v6046
        %v6835 = vadd.f32 %v3811, %v6049
        %v6836 = vadd.f32 %v3812, %v6054
        %v6837 = vadd.f32 %v3813, %v6057
        %v6838 = vadd.f32 %v3814, %v6062
        %v6839 = vadd.f32 %v3815, %v6065
        %v6840 = vadd.f32 %v3816, %v6070
        %v6841 = vadd.f32 %v3817, %v6073
        %v6842 = vadd.f32 %v3818, %v6078
        %v6843 = vadd.f32 %v3819, %v6081
        %v6844 = vadd.f32 %v3820, %v6086
        %v6845 = vadd.f32 %v3821, %v6089
        %v6846 = vadd.f32 %v3822, %v6094
        %v6847 = vadd.f32 %v3823, %v6097
        %v6848 = vadd.f32 %v3824, %v6102
        %v6849 = vadd.f32 %v3825, %v6105
        %v6850 = vadd.f32 %v3826, %v6110
        %v6851 = vadd.f32 %v3827, %v6113
        %v6852 = vadd.f32 %v3828, %v6118
        %v6853 = vadd.f32 %v3829, %v6121
        %v6854 = vadd.f32 %v3830, %v6126
        %v6855 = vadd.f32 %v3831, %v6129
        %v6856 = vadd.f32 %v3832, %v6134
        %v6857 = vadd.f32 %v3833, %v6137
        %v6858 = vadd.f32 %v3834, %v6142
        %v6859 = vadd.f32 %v3835, %v6145
        %v6860 = vadd.f32 %v3836, %v6150
        %v6861 = vadd.f32 %v3837, %v6153
        %v6862 = vadd.f32 %v3838, %v6158
        %v6863 = vadd.f32 %v3839, %v6161
        %v6864 = vadd.f32 %v3840, %v6166
        %v6865 = vadd.f32 %v3841, %v6169
        %v6866 = vadd.f32 %v3842, %v6174
        %v6867 = vadd.f32 %v3843, %v6177
        %v6868 = vadd.f32 %v3844, %v6182
        %v6869 = vadd.f32 %v3845, %v6185
        %v6870 = vadd.f32 %v3846, %v6190
        %v6871 = vadd.f32 %v3847, %v6193
        %v6872 = vadd.f32 %v3848, %v6198
        %v6873 = vadd.f32 %v3849, %v6201
        %v6874 = vadd.f32 %v3850, %v6206
        %v6875 = vadd.f32 %v3851, %v6209
        %v6876 = vadd.f32 %v3852, %v6214
        %v6877 = vadd.f32 %v3853, %v6217
        %v6878 = vadd.f32 %v3854, %v6222
        %v6879 = vadd.f32 %v3855, %v6225
        %v6880 = vadd.f32 %v3856, %v6230
        %v6881 = vadd.f32 %v3857, %v6233
        %v6882 = vadd.f32 %v3858, %v6238
        %v6883 = vadd.f32 %v3859, %v6241
        %v6884 = vadd.f32 %v3860, %v6246
        %v6885 = vadd.f32 %v3861, %v6249
        %v6886 = vadd.f32 %v3862, %v6254
        %v6887 = vadd.f32 %v3863, %v6257
        %v6888 = vadd.f32 %v3864, %v6262
        %v6889 = vadd.f32 %v3865, %v6265
        %v6890 = vadd.f32 %v3866, %v6270
        %v6891 = vadd.f32 %v3867, %v6273
        %v6892 = vadd.f32 %v3868, %v6278
        %v6893 = vadd.f32 %v3869, %v6281
        %v6894 = vadd.f32 %v3870, %v6286
        %v6895 = vadd.f32 %v3871, %v6289
        %v6896 = vadd.f32 %v3872, %v6294
        %v6897 = vadd.f32 %v3873, %v6297
        %v6898 = vadd.f32 %v3874, %v6302
        %v6899 = vadd.f32 %v3875, %v6305
        %v6900 = vadd.f32 %v3876, %v6310
        %v6901 = vadd.f32 %v3877, %v6313
        %v6902 = vadd.f32 %v3878, %v6318
        %v6903 = vadd.f32 %v3879, %v6321
        %v6904 = vadd.f32 %v3880, %v6326
        %v6905 = vadd.f32 %v3881, %v6329
        %v6906 = vadd.f32 %v3882, %v6334
        %v6907 = vadd.f32 %v3883, %v6337
        %v6908 = vadd.f32 %v3884, %v6342
        %v6909 = vadd.f32 %v3885, %v6345
        %v6910 = vadd.f32 %v3886, %v6350
        %v6911 = vadd.f32 %v3887, %v6353
        %v6912 = vadd.f32 %v3888, %v6358
        %v6913 = vadd.f32 %v3889, %v6361
        %v6914 = vadd.f32 %v3890, %v6366
        %v6915 = vadd.f32 %v3891, %v6369
        %v6916 = vadd.f32 %v3892, %v6374
        %v6917 = vadd.f32 %v3893, %v6377
        %v6918 = vadd.f32 %v3894, %v6382
        %v6919 = vadd.f32 %v3895, %v6385
        %v6920 = vadd.f32 %v3896, %v6390
        %v6921 = vadd.f32 %v3897, %v6393
        %v6922 = vadd.f32 %v3898, %v6398
        %v6923 = vadd.f32 %v3899, %v6401
        %v6924 = vadd.f32 %v3900, %v6406
        %v6925 = vadd.f32 %v3901, %v6409
        %v6926 = vadd.f32 %v3902, %v6414
        %v6927 = vadd.f32 %v3903, %v6417
        %v6928 = vadd.f32 %v3904, %v6422
        %v6929 = vadd.f32 %v3905, %v6425
        %v6930 = vadd.f32 %v3906, %v6430
        %v6931 = vadd.f32 %v3907, %v6433
        %v6932 = vadd.f32 %v3908, %v6438
        %v6933 = vadd.f32 %v3909, %v6441
        %v6934 = vadd.f32 %v3910, %v6446
        %v6935 = vadd.f32 %v3911, %v6449
        %v6936 = vadd.f32 %v3912, %v6454
        %v6937 = vadd.f32 %v3913, %v6457
        %v6938 = vadd.f32 %v3914, %v6462
        %v6939 = vadd.f32 %v3915, %v6465
        %v6940 = vadd.f32 %v3916, %v6470
        %v6941 = vadd.f32 %v3917, %v6473
        %v6942 = vadd.f32 %v3918, %v6478
        %v6943 = vadd.f32 %v3919, %v6481
        %v6944 = vadd.f32 %v3920, %v6486
        %v6945 = vadd.f32 %v3921, %v6489
        %v6946 = vadd.f32 %v3922, %v6494
        %v6947 = vadd.f32 %v3923, %v6497
        %v6948 = vadd.f32 %v3924, %v6502
        %v6949 = vadd.f32 %v3925, %v6505
        %v6950 = vadd.f32 %v3926, %v6510
        %v6951 = vadd.f32 %v3927, %v6513
        %v6952 = vadd.f32 %v3928, %v6518
        %v6953 = vadd.f32 %v3929, %v6521
        %v6954 = vadd.f32 %v3930, %v6526
        %v6955 = vadd.f32 %v3931, %v6529
        %v6956 = vadd.f32 %v3932, %v6534
        %v6957 = vadd.f32 %v3933, %v6537
        %v6958 = vadd.f32 %v3934, %v6542
        %v6959 = vadd.f32 %v3935, %v6545
        %v6960 = vadd.f32 %v3936, %v6550
        %v6961 = vadd.f32 %v3937, %v6553
        %v6962 = vadd.f32 %v3938, %v6558
        %v6963 = vadd.f32 %v3939, %v6561
        %v6964 = vadd.f32 %v3940, %v6566
        %v6965 = vadd.f32 %v3941, %v6569
        %v6966 = vadd.f32 %v3942, %v6574
        %v6967 = vadd.f32 %v3943, %v6577
        %v6968 = vadd.f32 %v3944, %v6582
        %v6969 = vadd.f32 %v3945, %v6585
        %v6970 = vadd.f32 %v3946, %v6590
        %v6971 = vadd.f32 %v3947, %v6593
        %v6972 = vadd.f32 %v3948, %v6598
        %v6973 = vadd.f32 %v3949, %v6601
        %v6974 = vadd.f32 %v3950, %v6606
        %v6975 = vadd.f32 %v3951, %v6609
        %v6976 = vadd.f32 %v3952, %v6614
        %v6977 = vadd.f32 %v3953, %v6617
        %v6978 = vadd.f32 %v3954, %v6622
        %v6979 = vadd.f32 %v3955, %v6625
        %v6980 = vadd.f32 %v3956, %v6630
        %v6981 = vadd.f32 %v3957, %v6633
        %v6982 = vadd.f32 %v3958, %v6638
        %v6983 = vadd.f32 %v3959, %v6641
        %v6984 = vadd.f32 %v3960, %v6646
        %v6985 = vadd.f32 %v3961, %v6649
        %v6986 = vadd.f32 %v3962, %v6654
        %v6987 = vadd.f32 %v3963, %v6657
        %v6988 = vadd.f32 %v3964, %v6662
        %v6989 = vadd.f32 %v3965, %v6665
        %v6990 = vadd.f32 %v3966, %v6670
        %v6991 = vadd.f32 %v3967, %v6673
        %v6992 = vadd.f32 %v3968, %v6678
        %v6993 = vadd.f32 %v3969, %v6681
        %v6994 = vadd.f32 %v3970, %v6686
        %v6995 = vadd.f32 %v3971, %v6689
        %v6996 = vadd.f32 %v3972, %v6694
        %v6997 = vadd.f32 %v3973, %v6697
        %v6998 = vadd.f32 %v3974, %v6702
        %v6999 = vadd.f32 %v3975, %v6705
        %v7000 = vadd.f32 %v3976, %v6710
        %v7001 = vadd.f32 %v3977, %v6713
        %v7002 = vadd.f32 %v3978, %v6718
        %v7003 = vadd.f32 %v3979, %v6721
        %v7004 = vadd.f32 %v3980, %v6726
        %v7005 = vadd.f32 %v3981, %v6729
        %v7006 = vadd.f32 %v3982, %v6734
        %v7007 = vadd.f32 %v3983, %v6737
        %v7008 = vadd.f32 %v3984, %v6742
        %v7009 = vadd.f32 %v3985, %v6745
        %v7010 = vadd.f32 %v3986, %v6750
        %v7011 = vadd.f32 %v3987, %v6753
        %7012 = vst [vmem:[%s334] sm:$0xff] %v6756
        %7013 = vst [vmem:[%s334 + $0x8] sm:$0xff] %v6757
        %7014 = vst [vmem:[%s334 + $0x10] sm:$0xff] %v6758
        %7015 = vst [vmem:[%s334 + $0x18] sm:$0xff] %v6759
        %7016 = vst [vmem:[%s334 + $0x20] sm:$0xff] %v6760
        %7017 = vst [vmem:[%s334 + $0x28] sm:$0xff] %v6761
        %7018 = vst [vmem:[%s334 + $0x30] sm:$0xff] %v6762
        %7019 = vst [vmem:[%s334 + $0x38] sm:$0xff] %v6763
        %7020 = vst [vmem:[%s334 + $0x40] sm:$0xff] %v6764
        %7021 = vst [vmem:[%s334 + $0x48] sm:$0xff] %v6765
        %7022 = vst [vmem:[%s334 + $0x50] sm:$0xff] %v6766
        %7023 = vst [vmem:[%s334 + $0x58] sm:$0xff] %v6767
        %7024 = vst [vmem:[%s334 + $0x60] sm:$0xff] %v6768
        %7025 = vst [vmem:[%s334 + $0x68] sm:$0xff] %v6769
        %7026 = vst [vmem:[%s334 + $0x70] sm:$0xff] %v6770
        %7027 = vst [vmem:[%s334 + $0x78] sm:$0xff] %v6771
        %7028 = vst [vmem:[%s334 + $0x80] sm:$0xff] %v6772
        %7029 = vst [vmem:[%s334 + $0x88] sm:$0xff] %v6773
        %7030 = vst [vmem:[%s334 + $0x90] sm:$0xff] %v6774
        %7031 = vst [vmem:[%s334 + $0x98] sm:$0xff] %v6775
        %7032 = vst [vmem:[%s334 + $0xa0] sm:$0xff] %v6776
        %7033 = vst [vmem:[%s334 + $0xa8] sm:$0xff] %v6777
        %7034 = vst [vmem:[%s334 + $0xb0] sm:$0xff] %v6778
        %7035 = vst [vmem:[%s334 + $0xb8] sm:$0xff] %v6779
        %7036 = vst [vmem:[%s334 + $0xc0] sm:$0xff] %v6780
        %7037 = vst [vmem:[%s334 + $0xc8] sm:$0xff] %v6781
        %7038 = vst [vmem:[%s334 + $0xd0] sm:$0xff] %v6782
        %7039 = vst [vmem:[%s334 + $0xd8] sm:$0xff] %v6783
        %7040 = vst [vmem:[%s334 + $0xe0] sm:$0xff] %v6784
        %7041 = vst [vmem:[%s334 + $0xe8] sm:$0xff] %v6785
        %7042 = vst [vmem:[%s334 + $0xf0] sm:$0xff] %v6786
        %7043 = vst [vmem:[%s334 + $0xf8] sm:$0xff] %v6787
        %7044 = vst [vmem:[%s334 + $0x100] sm:$0xff] %v6788
        %7045 = vst [vmem:[%s334 + $0x108] sm:$0xff] %v6789
        %7046 = vst [vmem:[%s334 + $0x110] sm:$0xff] %v6790
        %7047 = vst [vmem:[%s334 + $0x118] sm:$0xff] %v6791
        %7048 = vst [vmem:[%s334 + $0x120] sm:$0xff] %v6792
        %7049 = vst [vmem:[%s334 + $0x128] sm:$0xff] %v6793
        %7050 = vst [vmem:[%s334 + $0x130] sm:$0xff] %v6794
        %7051 = vst [vmem:[%s334 + $0x138] sm:$0xff] %v6795
        %7052 = vst [vmem:[%s334 + $0x140] sm:$0xff] %v6796
        %7053 = vst [vmem:[%s334 + $0x148] sm:$0xff] %v6797
        %7054 = vst [vmem:[%s334 + $0x150] sm:$0xff] %v6798
        %7055 = vst [vmem:[%s334 + $0x158] sm:$0xff] %v6799
        %7056 = vst [vmem:[%s334 + $0x160] sm:$0xff] %v6800
        %7057 = vst [vmem:[%s334 + $0x168] sm:$0xff] %v6801
        %7058 = vst [vmem:[%s334 + $0x170] sm:$0xff] %v6802
        %7059 = vst [vmem:[%s334 + $0x178] sm:$0xff] %v6803
        %7060 = vst [vmem:[%s334 + $0x180] sm:$0xff] %v6804
        %7061 = vst [vmem:[%s334 + $0x188] sm:$0xff] %v6805
        %7062 = vst [vmem:[%s334 + $0x190] sm:$0xff] %v6806
        %7063 = vst [vmem:[%s334 + $0x198] sm:$0xff] %v6807
        %7064 = vst [vmem:[%s334 + $0x1a0] sm:$0xff] %v6808
        %7065 = vst [vmem:[%s334 + $0x1a8] sm:$0xff] %v6809
        %7066 = vst [vmem:[%s334 + $0x1b0] sm:$0xff] %v6810
        %7067 = vst [vmem:[%s334 + $0x1b8] sm:$0xff] %v6811
        %7068 = vst [vmem:[%s334 + $0x1c0] sm:$0xff] %v6812
        %7069 = vst [vmem:[%s334 + $0x1c8] sm:$0xff] %v6813
        %7070 = vst [vmem:[%s334 + $0x1d0] sm:$0xff] %v6814
        %7071 = vst [vmem:[%s334 + $0x1d8] sm:$0xff] %v6815
        %7072 = vst [vmem:[%s334 + $0x1e0] sm:$0xff] %v6816
        %7073 = vst [vmem:[%s334 + $0x1e8] sm:$0xff] %v6817
        %7074 = vst [vmem:[%s334 + $0x1f0] sm:$0xff] %v6818
        %7075 = vst [vmem:[%s334 + $0x1f8] sm:$0xff] %v6819
        %7076 = vst [vmem:[%s334 + $0x200] sm:$0xff] %v6820
        %7077 = vst [vmem:[%s334 + $0x208] sm:$0xff] %v6821
        %7078 = vst [vmem:[%s334 + $0x210] sm:$0xff] %v6822
        %7079 = vst [vmem:[%s334 + $0x218] sm:$0xff] %v6823
        %7080 = vst [vmem:[%s334 + $0x220] sm:$0xff] %v6824
        %7081 = vst [vmem:[%s334 + $0x228] sm:$0xff] %v6825
        %7082 = vst [vmem:[%s334 + $0x230] sm:$0xff] %v6826
        %7083 = vst [vmem:[%s334 + $0x238] sm:$0xff] %v6827
        %7084 = vst [vmem:[%s334 + $0x240] sm:$0xff] %v6828
        %7085 = vst [vmem:[%s334 + $0x248] sm:$0xff] %v6829
        %7086 = vst [vmem:[%s334 + $0x250] sm:$0xff] %v6830
        %7087 = vst [vmem:[%s334 + $0x258] sm:$0xff] %v6831
        %7088 = vst [vmem:[%s334 + $0x260] sm:$0xff] %v6832
        %7089 = vst [vmem:[%s334 + $0x268] sm:$0xff] %v6833
        %7090 = vst [vmem:[%s334 + $0x270] sm:$0xff] %v6834
        %7091 = vst [vmem:[%s334 + $0x278] sm:$0xff] %v6835
        %7092 = vst [vmem:[%s334 + $0x280] sm:$0xff] %v6836
        %7093 = vst [vmem:[%s334 + $0x288] sm:$0xff] %v6837
        %7094 = vst [vmem:[%s334 + $0x290] sm:$0xff] %v6838
        %7095 = vst [vmem:[%s334 + $0x298] sm:$0xff] %v6839
        %7096 = vst [vmem:[%s334 + $0x2a0] sm:$0xff] %v6840
        %7097 = vst [vmem:[%s334 + $0x2a8] sm:$0xff] %v6841
        %7098 = vst [vmem:[%s334 + $0x2b0] sm:$0xff] %v6842
        %7099 = vst [vmem:[%s334 + $0x2b8] sm:$0xff] %v6843
        %7100 = vst [vmem:[%s334 + $0x2c0] sm:$0xff] %v6844
        %7101 = vst [vmem:[%s334 + $0x2c8] sm:$0xff] %v6845
        %7102 = vst [vmem:[%s334 + $0x2d0] sm:$0xff] %v6846
        %7103 = vst [vmem:[%s334 + $0x2d8] sm:$0xff] %v6847
        %7104 = vst [vmem:[%s334 + $0x2e0] sm:$0xff] %v6848
        %7105 = vst [vmem:[%s334 + $0x2e8] sm:$0xff] %v6849
        %7106 = vst [vmem:[%s334 + $0x2f0] sm:$0xff] %v6850
        %7107 = vst [vmem:[%s334 + $0x2f8] sm:$0xff] %v6851
        %7108 = vst [vmem:[%s334 + $0x300] sm:$0xff] %v6852
        %7109 = vst [vmem:[%s334 + $0x308] sm:$0xff] %v6853
        %7110 = vst [vmem:[%s334 + $0x310] sm:$0xff] %v6854
        %7111 = vst [vmem:[%s334 + $0x318] sm:$0xff] %v6855
        %7112 = vst [vmem:[%s334 + $0x320] sm:$0xff] %v6856
        %7113 = vst [vmem:[%s334 + $0x328] sm:$0xff] %v6857
        %7114 = vst [vmem:[%s334 + $0x330] sm:$0xff] %v6858
        %7115 = vst [vmem:[%s334 + $0x338] sm:$0xff] %v6859
        %7116 = vst [vmem:[%s334 + $0x340] sm:$0xff] %v6860
        %7117 = vst [vmem:[%s334 + $0x348] sm:$0xff] %v6861
        %7118 = vst [vmem:[%s334 + $0x350] sm:$0xff] %v6862
        %7119 = vst [vmem:[%s334 + $0x358] sm:$0xff] %v6863
        %7120 = vst [vmem:[%s334 + $0x360] sm:$0xff] %v6864
        %7121 = vst [vmem:[%s334 + $0x368] sm:$0xff] %v6865
        %7122 = vst [vmem:[%s334 + $0x370] sm:$0xff] %v6866
        %7123 = vst [vmem:[%s334 + $0x378] sm:$0xff] %v6867
        %7124 = vst [vmem:[%s334 + $0x380] sm:$0xff] %v6868
        %7125 = vst [vmem:[%s334 + $0x388] sm:$0xff] %v6869
        %7126 = vst [vmem:[%s334 + $0x390] sm:$0xff] %v6870
        %7127 = vst [vmem:[%s334 + $0x398] sm:$0xff] %v6871
        %7128 = vst [vmem:[%s334 + $0x3a0] sm:$0xff] %v6872
        %7129 = vst [vmem:[%s334 + $0x3a8] sm:$0xff] %v6873
        %7130 = vst [vmem:[%s334 + $0x3b0] sm:$0xff] %v6874
        %7131 = vst [vmem:[%s334 + $0x3b8] sm:$0xff] %v6875
        %7132 = vst [vmem:[%s334 + $0x3c0] sm:$0xff] %v6876
        %7133 = vst [vmem:[%s334 + $0x3c8] sm:$0xff] %v6877
        %7134 = vst [vmem:[%s334 + $0x3d0] sm:$0xff] %v6878
        %7135 = vst [vmem:[%s334 + $0x3d8] sm:$0xff] %v6879
        %7136 = vst [vmem:[%s334 + $0x3e0] sm:$0xff] %v6880
        %7137 = vst [vmem:[%s334 + $0x3e8] sm:$0xff] %v6881
        %7138 = vst [vmem:[%s334 + $0x3f0] sm:$0xff] %v6882
        %7139 = vst [vmem:[%s334 + $0x3f8] sm:$0xff] %v6883
        %7140 = vst [vmem:[%s334 + $0x400] sm:$0xff] %v6884
        %7141 = vst [vmem:[%s334 + $0x408] sm:$0xff] %v6885
        %7142 = vst [vmem:[%s334 + $0x410] sm:$0xff] %v6886
        %7143 = vst [vmem:[%s334 + $0x418] sm:$0xff] %v6887
        %7144 = vst [vmem:[%s334 + $0x420] sm:$0xff] %v6888
        %7145 = vst [vmem:[%s334 + $0x428] sm:$0xff] %v6889
        %7146 = vst [vmem:[%s334 + $0x430] sm:$0xff] %v6890
        %7147 = vst [vmem:[%s334 + $0x438] sm:$0xff] %v6891
        %7148 = vst [vmem:[%s334 + $0x440] sm:$0xff] %v6892
        %7149 = vst [vmem:[%s334 + $0x448] sm:$0xff] %v6893
        %7150 = vst [vmem:[%s334 + $0x450] sm:$0xff] %v6894
        %7151 = vst [vmem:[%s334 + $0x458] sm:$0xff] %v6895
        %7152 = vst [vmem:[%s334 + $0x460] sm:$0xff] %v6896
        %7153 = vst [vmem:[%s334 + $0x468] sm:$0xff] %v6897
        %7154 = vst [vmem:[%s334 + $0x470] sm:$0xff] %v6898
        %7155 = vst [vmem:[%s334 + $0x478] sm:$0xff] %v6899
        %7156 = vst [vmem:[%s334 + $0x480] sm:$0xff] %v6900
        %7157 = vst [vmem:[%s334 + $0x488] sm:$0xff] %v6901
        %7158 = vst [vmem:[%s334 + $0x490] sm:$0xff] %v6902
        %7159 = vst [vmem:[%s334 + $0x498] sm:$0xff] %v6903
        %7160 = vst [vmem:[%s334 + $0x4a0] sm:$0xff] %v6904
        %7161 = vst [vmem:[%s334 + $0x4a8] sm:$0xff] %v6905
        %7162 = vst [vmem:[%s334 + $0x4b0] sm:$0xff] %v6906
        %7163 = vst [vmem:[%s334 + $0x4b8] sm:$0xff] %v6907
        %7164 = vst [vmem:[%s334 + $0x4c0] sm:$0xff] %v6908
        %7165 = vst [vmem:[%s334 + $0x4c8] sm:$0xff] %v6909
        %7166 = vst [vmem:[%s334 + $0x4d0] sm:$0xff] %v6910
        %7167 = vst [vmem:[%s334 + $0x4d8] sm:$0xff] %v6911
        %7168 = vst [vmem:[%s334 + $0x4e0] sm:$0xff] %v6912
        %7169 = vst [vmem:[%s334 + $0x4e8] sm:$0xff] %v6913
        %7170 = vst [vmem:[%s334 + $0x4f0] sm:$0xff] %v6914
        %7171 = vst [vmem:[%s334 + $0x4f8] sm:$0xff] %v6915
        %7172 = vst [vmem:[%s334 + $0x500] sm:$0xff] %v6916
        %7173 = vst [vmem:[%s334 + $0x508] sm:$0xff] %v6917
        %7174 = vst [vmem:[%s334 + $0x510] sm:$0xff] %v6918
        %7175 = vst [vmem:[%s334 + $0x518] sm:$0xff] %v6919
        %7176 = vst [vmem:[%s334 + $0x520] sm:$0xff] %v6920
        %7177 = vst [vmem:[%s334 + $0x528] sm:$0xff] %v6921
        %7178 = vst [vmem:[%s334 + $0x530] sm:$0xff] %v6922
        %7179 = vst [vmem:[%s334 + $0x538] sm:$0xff] %v6923
        %7180 = vst [vmem:[%s334 + $0x540] sm:$0xff] %v6924
        %7181 = vst [vmem:[%s334 + $0x548] sm:$0xff] %v6925
        %7182 = vst [vmem:[%s334 + $0x550] sm:$0xff] %v6926
        %7183 = vst [vmem:[%s334 + $0x558] sm:$0xff] %v6927
        %7184 = vst [vmem:[%s334 + $0x560] sm:$0xff] %v6928
        %7185 = vst [vmem:[%s334 + $0x568] sm:$0xff] %v6929
        %7186 = vst [vmem:[%s334 + $0x570] sm:$0xff] %v6930
        %7187 = vst [vmem:[%s334 + $0x578] sm:$0xff] %v6931
        %7188 = vst [vmem:[%s334 + $0x580] sm:$0xff] %v6932
        %7189 = vst [vmem:[%s334 + $0x588] sm:$0xff] %v6933
        %7190 = vst [vmem:[%s334 + $0x590] sm:$0xff] %v6934
        %7191 = vst [vmem:[%s334 + $0x598] sm:$0xff] %v6935
        %7192 = vst [vmem:[%s334 + $0x5a0] sm:$0xff] %v6936
        %7193 = vst [vmem:[%s334 + $0x5a8] sm:$0xff] %v6937
        %7194 = vst [vmem:[%s334 + $0x5b0] sm:$0xff] %v6938
        %7195 = vst [vmem:[%s334 + $0x5b8] sm:$0xff] %v6939
        %7196 = vst [vmem:[%s334 + $0x5c0] sm:$0xff] %v6940
        %7197 = vst [vmem:[%s334 + $0x5c8] sm:$0xff] %v6941
        %7198 = vst [vmem:[%s334 + $0x5d0] sm:$0xff] %v6942
        %7199 = vst [vmem:[%s334 + $0x5d8] sm:$0xff] %v6943
        %7200 = vst [vmem:[%s334 + $0x5e0] sm:$0xff] %v6944
        %7201 = vst [vmem:[%s334 + $0x5e8] sm:$0xff] %v6945
        %7202 = vst [vmem:[%s334 + $0x5f0] sm:$0xff] %v6946
        %7203 = vst [vmem:[%s334 + $0x5f8] sm:$0xff] %v6947
        %7204 = vst [vmem:[%s334 + $0x600] sm:$0xff] %v6948
        %7205 = vst [vmem:[%s334 + $0x608] sm:$0xff] %v6949
        %7206 = vst [vmem:[%s334 + $0x610] sm:$0xff] %v6950
        %7207 = vst [vmem:[%s334 + $0x618] sm:$0xff] %v6951
        %7208 = vst [vmem:[%s334 + $0x620] sm:$0xff] %v6952
        %7209 = vst [vmem:[%s334 + $0x628] sm:$0xff] %v6953
        %7210 = vst [vmem:[%s334 + $0x630] sm:$0xff] %v6954
        %7211 = vst [vmem:[%s334 + $0x638] sm:$0xff] %v6955
        %7212 = vst [vmem:[%s334 + $0x640] sm:$0xff] %v6956
        %7213 = vst [vmem:[%s334 + $0x648] sm:$0xff] %v6957
        %7214 = vst [vmem:[%s334 + $0x650] sm:$0xff] %v6958
        %7215 = vst [vmem:[%s334 + $0x658] sm:$0xff] %v6959
        %7216 = vst [vmem:[%s334 + $0x660] sm:$0xff] %v6960
        %7217 = vst [vmem:[%s334 + $0x668] sm:$0xff] %v6961
        %7218 = vst [vmem:[%s334 + $0x670] sm:$0xff] %v6962
        %7219 = vst [vmem:[%s334 + $0x678] sm:$0xff] %v6963
        %7220 = vst [vmem:[%s334 + $0x680] sm:$0xff] %v6964
        %7221 = vst [vmem:[%s334 + $0x688] sm:$0xff] %v6965
        %7222 = vst [vmem:[%s334 + $0x690] sm:$0xff] %v6966
        %7223 = vst [vmem:[%s334 + $0x698] sm:$0xff] %v6967
        %7224 = vst [vmem:[%s334 + $0x6a0] sm:$0xff] %v6968
        %7225 = vst [vmem:[%s334 + $0x6a8] sm:$0xff] %v6969
        %7226 = vst [vmem:[%s334 + $0x6b0] sm:$0xff] %v6970
        %7227 = vst [vmem:[%s334 + $0x6b8] sm:$0xff] %v6971
        %7228 = vst [vmem:[%s334 + $0x6c0] sm:$0xff] %v6972
        %7229 = vst [vmem:[%s334 + $0x6c8] sm:$0xff] %v6973
        %7230 = vst [vmem:[%s334 + $0x6d0] sm:$0xff] %v6974
        %7231 = vst [vmem:[%s334 + $0x6d8] sm:$0xff] %v6975
        %7232 = vst [vmem:[%s334 + $0x6e0] sm:$0xff] %v6976
        %7233 = vst [vmem:[%s334 + $0x6e8] sm:$0xff] %v6977
        %7234 = vst [vmem:[%s334 + $0x6f0] sm:$0xff] %v6978
        %7235 = vst [vmem:[%s334 + $0x6f8] sm:$0xff] %v6979
        %7236 = vst [vmem:[%s334 + $0x700] sm:$0xff] %v6980
        %7237 = vst [vmem:[%s334 + $0x708] sm:$0xff] %v6981
        %7238 = vst [vmem:[%s334 + $0x710] sm:$0xff] %v6982
        %7239 = vst [vmem:[%s334 + $0x718] sm:$0xff] %v6983
        %7240 = vst [vmem:[%s334 + $0x720] sm:$0xff] %v6984
        %7241 = vst [vmem:[%s334 + $0x728] sm:$0xff] %v6985
        %7242 = vst [vmem:[%s334 + $0x730] sm:$0xff] %v6986
        %7243 = vst [vmem:[%s334 + $0x738] sm:$0xff] %v6987
        %7244 = vst [vmem:[%s334 + $0x740] sm:$0xff] %v6988
        %7245 = vst [vmem:[%s334 + $0x748] sm:$0xff] %v6989
        %7246 = vst [vmem:[%s334 + $0x750] sm:$0xff] %v6990
        %7247 = vst [vmem:[%s334 + $0x758] sm:$0xff] %v6991
        %7248 = vst [vmem:[%s334 + $0x760] sm:$0xff] %v6992
        %7249 = vst [vmem:[%s334 + $0x768] sm:$0xff] %v6993
        %7250 = vst [vmem:[%s334 + $0x770] sm:$0xff] %v6994
        %7251 = vst [vmem:[%s334 + $0x778] sm:$0xff] %v6995
        %7252 = vst [vmem:[%s334 + $0x780] sm:$0xff] %v6996
        %7253 = vst [vmem:[%s334 + $0x788] sm:$0xff] %v6997
        %7254 = vst [vmem:[%s334 + $0x790] sm:$0xff] %v6998
        %7255 = vst [vmem:[%s334 + $0x798] sm:$0xff] %v6999
        %7256 = vst [vmem:[%s334 + $0x7a0] sm:$0xff] %v7000
        %7257 = vst [vmem:[%s334 + $0x7a8] sm:$0xff] %v7001
        %7258 = vst [vmem:[%s334 + $0x7b0] sm:$0xff] %v7002
        %7259 = vst [vmem:[%s334 + $0x7b8] sm:$0xff] %v7003
        %7260 = vst [vmem:[%s334 + $0x7c0] sm:$0xff] %v7004
        %7261 = vst [vmem:[%s334 + $0x7c8] sm:$0xff] %v7005
        %7262 = vst [vmem:[%s334 + $0x7d0] sm:$0xff] %v7006
        %7263 = vst [vmem:[%s334 + $0x7d8] sm:$0xff] %v7007
        %7264 = vst [vmem:[%s334 + $0x7e0] sm:$0xff] %v7008
        %7265 = vst [vmem:[%s334 + $0x7e8] sm:$0xff] %v7009
        %7266 = vst [vmem:[%s334 + $0x7f0] sm:$0xff] %v7010
        %7267 = vst [vmem:[%s334 + $0x7f8] sm:$0xff] %v7011
        %s7268 = sand.u32 %s222, 1
        %s7269 = sand.u32 %s222, 1
        %s7270 = smul.addr %s7269, 2048
        %s7271 = scalar_lea.vmem [#allocation2], %s7270
        // Predicated region
        $region57: #{autoencoder_forward.1} parent=55 // pred_check
          %p7272 = pneg %p232
        $region58: #{autoencoder_forward.1} parent=55 // pred_check_branch
          %7274 = sbr.rel (%p7272) target = $region60
        $region59: #{autoencoder_forward.1} parent=55 // pred_region
          %s7275 = smul.u32 256, %s20
          %s7276 = ssub.s32 500, %s7275
          %p7277 = scmp.lt.s32.totalorder %s7276, 256
          %s7278 = scalar_select %p7277, %s7276, 256
          %s7279 = smul.u32 128, %s7278
          %p7280 = scmp.ne.s32.totalorder 0, %s7279
          %s7281 = smul.addr %s7275, 8
          %s7282 = scalar_lea.vmem %s9, %s7281
          // Predicated region
          $region61: #{autoencoder_forward.1} parent=59 // pred_check
            %p7283 = pneg %p7280
          $region62: #{autoencoder_forward.1} parent=59 // pred_check_branch
            %7285 = sbr.rel (%p7283) target = $region64
          $region63: #{autoencoder_forward.1} parent=59 // pred_region
            // Predicated region
            $region65: #{autoencoder_forward.1} parent=63 // pred_check
              _
            $region66: #{autoencoder_forward.1} parent=63 // pred_check_branch
              %7287 = sbr.rel (0) target = $region68
            $region67: #{autoencoder_forward.1} parent=63 // pred_region
              // Predicated region
              $region87: #{autoencoder_forward.1} parent=67 // pred_check
                _
              $region88: #{autoencoder_forward.1} parent=67 // pred_check_branch
                %7463 = sbr.rel (0) target = $region90
              $region89: #{autoencoder_forward.1} parent=67 // pred_region
                %s7464 = sshrl.u32 %s7278, 6
                // While loop
                $region91: #{autoencoder_forward.1} parent=89 // loop_pre_header
                  _
                $region92: #{autoencoder_forward.1} parent=89 // loop_header
                  %s7466 = sphi 0, %s7468
                  %p7467 = scmp.ge.s32.totalorder %s7466, %s7464
                  %s7471 = sphi 0, %s7604
                  %s7472 = sphi %s7271, %s7607
                  %s7473 = sphi %s7282, %s7608
                $region93: #{autoencoder_forward.1} parent=89 // loop_header_branch
                  %7470 = sbr.rel (%p7467) target = $region97
                $region94: #{autoencoder_forward.1} parent=89 // loop_body
                  %v7474 = vld [vmem:[%s7472] sm:$0xff]
                  %7475 = vst [vmem:[%s7473] sm:$0xff] %v7474
                  %v7476 = vld [vmem:[%s7472 + $0x8] sm:$0xff]
                  %7477 = vst [vmem:[%s7473 + $0x8] sm:$0xff] %v7476
                  %v7478 = vld [vmem:[%s7472 + $0x10] sm:$0xff]
                  %7479 = vst [vmem:[%s7473 + $0x10] sm:$0xff] %v7478
                  %v7480 = vld [vmem:[%s7472 + $0x18] sm:$0xff]
                  %7481 = vst [vmem:[%s7473 + $0x18] sm:$0xff] %v7480
                  %v7482 = vld [vmem:[%s7472 + $0x20] sm:$0xff]
                  %7483 = vst [vmem:[%s7473 + $0x20] sm:$0xff] %v7482
                  %v7484 = vld [vmem:[%s7472 + $0x28] sm:$0xff]
                  %7485 = vst [vmem:[%s7473 + $0x28] sm:$0xff] %v7484
                  %v7486 = vld [vmem:[%s7472 + $0x30] sm:$0xff]
                  %7487 = vst [vmem:[%s7473 + $0x30] sm:$0xff] %v7486
                  %v7488 = vld [vmem:[%s7472 + $0x38] sm:$0xff]
                  %7489 = vst [vmem:[%s7473 + $0x38] sm:$0xff] %v7488
                  %v7490 = vld [vmem:[%s7472 + $0x40] sm:$0xff]
                  %7491 = vst [vmem:[%s7473 + $0x40] sm:$0xff] %v7490
                  %v7492 = vld [vmem:[%s7472 + $0x48] sm:$0xff]
                  %7493 = vst [vmem:[%s7473 + $0x48] sm:$0xff] %v7492
                  %v7494 = vld [vmem:[%s7472 + $0x50] sm:$0xff]
                  %7495 = vst [vmem:[%s7473 + $0x50] sm:$0xff] %v7494
                  %v7496 = vld [vmem:[%s7472 + $0x58] sm:$0xff]
                  %7497 = vst [vmem:[%s7473 + $0x58] sm:$0xff] %v7496
                  %v7498 = vld [vmem:[%s7472 + $0x60] sm:$0xff]
                  %7499 = vst [vmem:[%s7473 + $0x60] sm:$0xff] %v7498
                  %v7500 = vld [vmem:[%s7472 + $0x68] sm:$0xff]
                  %7501 = vst [vmem:[%s7473 + $0x68] sm:$0xff] %v7500
                  %v7502 = vld [vmem:[%s7472 + $0x70] sm:$0xff]
                  %7503 = vst [vmem:[%s7473 + $0x70] sm:$0xff] %v7502
                  %v7504 = vld [vmem:[%s7472 + $0x78] sm:$0xff]
                  %7505 = vst [vmem:[%s7473 + $0x78] sm:$0xff] %v7504
                  %v7506 = vld [vmem:[%s7472 + $0x80] sm:$0xff]
                  %7507 = vst [vmem:[%s7473 + $0x80] sm:$0xff] %v7506
                  %v7508 = vld [vmem:[%s7472 + $0x88] sm:$0xff]
                  %7509 = vst [vmem:[%s7473 + $0x88] sm:$0xff] %v7508
                  %v7510 = vld [vmem:[%s7472 + $0x90] sm:$0xff]
                  %7511 = vst [vmem:[%s7473 + $0x90] sm:$0xff] %v7510
                  %v7512 = vld [vmem:[%s7472 + $0x98] sm:$0xff]
                  %7513 = vst [vmem:[%s7473 + $0x98] sm:$0xff] %v7512
                  %v7514 = vld [vmem:[%s7472 + $0xa0] sm:$0xff]
                  %7515 = vst [vmem:[%s7473 + $0xa0] sm:$0xff] %v7514
                  %v7516 = vld [vmem:[%s7472 + $0xa8] sm:$0xff]
                  %7517 = vst [vmem:[%s7473 + $0xa8] sm:$0xff] %v7516
                  %v7518 = vld [vmem:[%s7472 + $0xb0] sm:$0xff]
                  %7519 = vst [vmem:[%s7473 + $0xb0] sm:$0xff] %v7518
                  %v7520 = vld [vmem:[%s7472 + $0xb8] sm:$0xff]
                  %7521 = vst [vmem:[%s7473 + $0xb8] sm:$0xff] %v7520
                  %v7522 = vld [vmem:[%s7472 + $0xc0] sm:$0xff]
                  %7523 = vst [vmem:[%s7473 + $0xc0] sm:$0xff] %v7522
                  %v7524 = vld [vmem:[%s7472 + $0xc8] sm:$0xff]
                  %7525 = vst [vmem:[%s7473 + $0xc8] sm:$0xff] %v7524
                  %v7526 = vld [vmem:[%s7472 + $0xd0] sm:$0xff]
                  %7527 = vst [vmem:[%s7473 + $0xd0] sm:$0xff] %v7526
                  %v7528 = vld [vmem:[%s7472 + $0xd8] sm:$0xff]
                  %7529 = vst [vmem:[%s7473 + $0xd8] sm:$0xff] %v7528
                  %v7530 = vld [vmem:[%s7472 + $0xe0] sm:$0xff]
                  %7531 = vst [vmem:[%s7473 + $0xe0] sm:$0xff] %v7530
                  %v7532 = vld [vmem:[%s7472 + $0xe8] sm:$0xff]
                  %7533 = vst [vmem:[%s7473 + $0xe8] sm:$0xff] %v7532
                  %v7534 = vld [vmem:[%s7472 + $0xf0] sm:$0xff]
                  %7535 = vst [vmem:[%s7473 + $0xf0] sm:$0xff] %v7534
                  %v7536 = vld [vmem:[%s7472 + $0xf8] sm:$0xff]
                  %7537 = vst [vmem:[%s7473 + $0xf8] sm:$0xff] %v7536
                  %v7538 = vld [vmem:[%s7472 + $0x100] sm:$0xff]
                  %7539 = vst [vmem:[%s7473 + $0x100] sm:$0xff] %v7538
                  %v7540 = vld [vmem:[%s7472 + $0x108] sm:$0xff]
                  %7541 = vst [vmem:[%s7473 + $0x108] sm:$0xff] %v7540
                  %v7542 = vld [vmem:[%s7472 + $0x110] sm:$0xff]
                  %7543 = vst [vmem:[%s7473 + $0x110] sm:$0xff] %v7542
                  %v7544 = vld [vmem:[%s7472 + $0x118] sm:$0xff]
                  %7545 = vst [vmem:[%s7473 + $0x118] sm:$0xff] %v7544
                  %v7546 = vld [vmem:[%s7472 + $0x120] sm:$0xff]
                  %7547 = vst [vmem:[%s7473 + $0x120] sm:$0xff] %v7546
                  %v7548 = vld [vmem:[%s7472 + $0x128] sm:$0xff]
                  %7549 = vst [vmem:[%s7473 + $0x128] sm:$0xff] %v7548
                  %v7550 = vld [vmem:[%s7472 + $0x130] sm:$0xff]
                  %7551 = vst [vmem:[%s7473 + $0x130] sm:$0xff] %v7550
                  %v7552 = vld [vmem:[%s7472 + $0x138] sm:$0xff]
                  %7553 = vst [vmem:[%s7473 + $0x138] sm:$0xff] %v7552
                  %v7554 = vld [vmem:[%s7472 + $0x140] sm:$0xff]
                  %7555 = vst [vmem:[%s7473 + $0x140] sm:$0xff] %v7554
                  %v7556 = vld [vmem:[%s7472 + $0x148] sm:$0xff]
                  %7557 = vst [vmem:[%s7473 + $0x148] sm:$0xff] %v7556
                  %v7558 = vld [vmem:[%s7472 + $0x150] sm:$0xff]
                  %7559 = vst [vmem:[%s7473 + $0x150] sm:$0xff] %v7558
                  %v7560 = vld [vmem:[%s7472 + $0x158] sm:$0xff]
                  %7561 = vst [vmem:[%s7473 + $0x158] sm:$0xff] %v7560
                  %v7562 = vld [vmem:[%s7472 + $0x160] sm:$0xff]
                  %7563 = vst [vmem:[%s7473 + $0x160] sm:$0xff] %v7562
                  %v7564 = vld [vmem:[%s7472 + $0x168] sm:$0xff]
                  %7565 = vst [vmem:[%s7473 + $0x168] sm:$0xff] %v7564
                  %v7566 = vld [vmem:[%s7472 + $0x170] sm:$0xff]
                  %7567 = vst [vmem:[%s7473 + $0x170] sm:$0xff] %v7566
                  %v7568 = vld [vmem:[%s7472 + $0x178] sm:$0xff]
                  %7569 = vst [vmem:[%s7473 + $0x178] sm:$0xff] %v7568
                  %v7570 = vld [vmem:[%s7472 + $0x180] sm:$0xff]
                  %7571 = vst [vmem:[%s7473 + $0x180] sm:$0xff] %v7570
                  %v7572 = vld [vmem:[%s7472 + $0x188] sm:$0xff]
                  %7573 = vst [vmem:[%s7473 + $0x188] sm:$0xff] %v7572
                  %v7574 = vld [vmem:[%s7472 + $0x190] sm:$0xff]
                  %7575 = vst [vmem:[%s7473 + $0x190] sm:$0xff] %v7574
                  %v7576 = vld [vmem:[%s7472 + $0x198] sm:$0xff]
                  %7577 = vst [vmem:[%s7473 + $0x198] sm:$0xff] %v7576
                  %v7578 = vld [vmem:[%s7472 + $0x1a0] sm:$0xff]
                  %7579 = vst [vmem:[%s7473 + $0x1a0] sm:$0xff] %v7578
                  %v7580 = vld [vmem:[%s7472 + $0x1a8] sm:$0xff]
                  %7581 = vst [vmem:[%s7473 + $0x1a8] sm:$0xff] %v7580
                  %v7582 = vld [vmem:[%s7472 + $0x1b0] sm:$0xff]
                  %7583 = vst [vmem:[%s7473 + $0x1b0] sm:$0xff] %v7582
                  %v7584 = vld [vmem:[%s7472 + $0x1b8] sm:$0xff]
                  %7585 = vst [vmem:[%s7473 + $0x1b8] sm:$0xff] %v7584
                  %v7586 = vld [vmem:[%s7472 + $0x1c0] sm:$0xff]
                  %7587 = vst [vmem:[%s7473 + $0x1c0] sm:$0xff] %v7586
                  %v7588 = vld [vmem:[%s7472 + $0x1c8] sm:$0xff]
                  %7589 = vst [vmem:[%s7473 + $0x1c8] sm:$0xff] %v7588
                  %v7590 = vld [vmem:[%s7472 + $0x1d0] sm:$0xff]
                  %7591 = vst [vmem:[%s7473 + $0x1d0] sm:$0xff] %v7590
                  %v7592 = vld [vmem:[%s7472 + $0x1d8] sm:$0xff]
                  %7593 = vst [vmem:[%s7473 + $0x1d8] sm:$0xff] %v7592
                  %v7594 = vld [vmem:[%s7472 + $0x1e0] sm:$0xff]
                  %7595 = vst [vmem:[%s7473 + $0x1e0] sm:$0xff] %v7594
                  %v7596 = vld [vmem:[%s7472 + $0x1e8] sm:$0xff]
                  %7597 = vst [vmem:[%s7473 + $0x1e8] sm:$0xff] %v7596
                  %v7598 = vld [vmem:[%s7472 + $0x1f0] sm:$0xff]
                  %7599 = vst [vmem:[%s7473 + $0x1f0] sm:$0xff] %v7598
                  %v7600 = vld [vmem:[%s7472 + $0x1f8] sm:$0xff]
                  %7601 = vst [vmem:[%s7473 + $0x1f8] sm:$0xff] %v7600
                  %s7602 = sadd.s32 1, %s7471
                  %p7603 = scmp.ge.s32.totalorder %s7602, %s7464
                  %s7604 = scalar_select %p7603, 0, %s7602
                  %s7605 = smul.u32 %s7604, 512
                  %s7606 = smul.u32 %s7604, 512
                  %s7607 = scalar_lea.vmem %s7271, %s7605 [#allocation2]
                  %s7608 = scalar_lea.vmem %s7282, %s7606
                $region95: #{autoencoder_forward.1} parent=89 // loop_footer
                  %s7468 = sadd.s32 %s7466, 1
                $region96: #{autoencoder_forward.1} parent=89 // loop_footer_branch
                  %7465 = sbr.rel target = $region92
                $region97: #{autoencoder_forward.1} parent=89 // loop_exit
                  _
                %s7609 = sshrl.u32 %s7278, 6
                %s7610 = sand.u32 %s7278, 63
                %s7611 = smul.u32 %s7609, 64
                %s7612 = smul.u32 8, %s7611
                %s7613 = scalar_lea.vmem %s7271, %s7612 [#allocation2]
                %s7614 = smul.u32 8, %s7611
                %s7615 = scalar_lea.vmem %s7282, %s7614
                // While loop
                $region98: #{autoencoder_forward.1} parent=89 // loop_pre_header
                  _
                $region99: #{autoencoder_forward.1} parent=89 // loop_header
                  %s7617 = sphi 0, %s7619
                  %p7618 = scmp.ge.s32.totalorder %s7617, %s7610
                  %s7622 = sphi 0, %s7629
                  %s7623 = sphi %s7613, %s7632
                  %s7624 = sphi %s7615, %s7633
                $region100: #{autoencoder_forward.1} parent=89 // loop_header_branch
                  %7621 = sbr.rel (%p7618) target = $region104
                $region101: #{autoencoder_forward.1} parent=89 // loop_body
                  %v7625 = vld [vmem:[%s7623] sm:$0xff]
                  %7626 = vst [vmem:[%s7624] sm:$0xff] %v7625
                  %s7627 = sadd.s32 1, %s7622
                  %p7628 = scmp.ge.s32.totalorder %s7627, %s7610
                  %s7629 = scalar_select %p7628, 0, %s7627
                  %s7630 = smul.u32 %s7629, 8
                  %s7631 = smul.u32 %s7629, 8
                  %s7632 = scalar_lea.vmem %s7613, %s7630 [#allocation2]
                  %s7633 = scalar_lea.vmem %s7615, %s7631
                $region102: #{autoencoder_forward.1} parent=89 // loop_footer
                  %s7619 = sadd.s32 %s7617, 1
                $region103: #{autoencoder_forward.1} parent=89 // loop_footer_branch
                  %7616 = sbr.rel target = $region99
                $region104: #{autoencoder_forward.1} parent=89 // loop_exit
                  _
              $region90: #{autoencoder_forward.1} parent=67 // pred_fallthru
                _
              // Predicated region
              $region105: #{autoencoder_forward.1} parent=67 // pred_check
                _
              $region106: #{autoencoder_forward.1} parent=67 // pred_check_branch
                %7635 = sbr.rel target = $region108
              $region107: #{autoencoder_forward.1} parent=67 // pred_region
                _
              $region108: #{autoencoder_forward.1} parent=67 // pred_fallthru
                _
            $region68: #{autoencoder_forward.1} parent=63 // pred_fallthru
              _
            // Predicated region
            $region69: #{autoencoder_forward.1} parent=63 // pred_check
              _
            $region70: #{autoencoder_forward.1} parent=63 // pred_check_branch
              %7289 = sbr.rel target = $region72
            $region71: #{autoencoder_forward.1} parent=63 // pred_region
              %s7291 = ssub.s32 256, 1
              %s7292 = sshrl.u32 %s7278, 6
              // While loop
              $region73: #{autoencoder_forward.1} parent=71 // loop_pre_header
                _
              $region74: #{autoencoder_forward.1} parent=71 // loop_header
                %s7294 = sphi 0, %s7296
                %p7295 = scmp.ge.s32.totalorder %s7294, %s7292
                %s7299 = sphi 0, %s7432
                %s7300 = sphi %s7271, %s7435
                %s7301 = sphi %s7282, %s7436
              $region75: #{autoencoder_forward.1} parent=71 // loop_header_branch
                %7298 = sbr.rel (%p7295) target = $region79
              $region76: #{autoencoder_forward.1} parent=71 // loop_body
                %v7302 = vld [vmem:[%s7300] sm:%s7291]
                %7303 = vst [vmem:[%s7301] sm:%s7291] %v7302
                %v7304 = vld [vmem:[%s7300 + $0x8] sm:%s7291]
                %7305 = vst [vmem:[%s7301 + $0x8] sm:%s7291] %v7304
                %v7306 = vld [vmem:[%s7300 + $0x10] sm:%s7291]
                %7307 = vst [vmem:[%s7301 + $0x10] sm:%s7291] %v7306
                %v7308 = vld [vmem:[%s7300 + $0x18] sm:%s7291]
                %7309 = vst [vmem:[%s7301 + $0x18] sm:%s7291] %v7308
                %v7310 = vld [vmem:[%s7300 + $0x20] sm:%s7291]
                %7311 = vst [vmem:[%s7301 + $0x20] sm:%s7291] %v7310
                %v7312 = vld [vmem:[%s7300 + $0x28] sm:%s7291]
                %7313 = vst [vmem:[%s7301 + $0x28] sm:%s7291] %v7312
                %v7314 = vld [vmem:[%s7300 + $0x30] sm:%s7291]
                %7315 = vst [vmem:[%s7301 + $0x30] sm:%s7291] %v7314
                %v7316 = vld [vmem:[%s7300 + $0x38] sm:%s7291]
                %7317 = vst [vmem:[%s7301 + $0x38] sm:%s7291] %v7316
                %v7318 = vld [vmem:[%s7300 + $0x40] sm:%s7291]
                %7319 = vst [vmem:[%s7301 + $0x40] sm:%s7291] %v7318
                %v7320 = vld [vmem:[%s7300 + $0x48] sm:%s7291]
                %7321 = vst [vmem:[%s7301 + $0x48] sm:%s7291] %v7320
                %v7322 = vld [vmem:[%s7300 + $0x50] sm:%s7291]
                %7323 = vst [vmem:[%s7301 + $0x50] sm:%s7291] %v7322
                %v7324 = vld [vmem:[%s7300 + $0x58] sm:%s7291]
                %7325 = vst [vmem:[%s7301 + $0x58] sm:%s7291] %v7324
                %v7326 = vld [vmem:[%s7300 + $0x60] sm:%s7291]
                %7327 = vst [vmem:[%s7301 + $0x60] sm:%s7291] %v7326
                %v7328 = vld [vmem:[%s7300 + $0x68] sm:%s7291]
                %7329 = vst [vmem:[%s7301 + $0x68] sm:%s7291] %v7328
                %v7330 = vld [vmem:[%s7300 + $0x70] sm:%s7291]
                %7331 = vst [vmem:[%s7301 + $0x70] sm:%s7291] %v7330
                %v7332 = vld [vmem:[%s7300 + $0x78] sm:%s7291]
                %7333 = vst [vmem:[%s7301 + $0x78] sm:%s7291] %v7332
                %v7334 = vld [vmem:[%s7300 + $0x80] sm:%s7291]
                %7335 = vst [vmem:[%s7301 + $0x80] sm:%s7291] %v7334
                %v7336 = vld [vmem:[%s7300 + $0x88] sm:%s7291]
                %7337 = vst [vmem:[%s7301 + $0x88] sm:%s7291] %v7336
                %v7338 = vld [vmem:[%s7300 + $0x90] sm:%s7291]
                %7339 = vst [vmem:[%s7301 + $0x90] sm:%s7291] %v7338
                %v7340 = vld [vmem:[%s7300 + $0x98] sm:%s7291]
                %7341 = vst [vmem:[%s7301 + $0x98] sm:%s7291] %v7340
                %v7342 = vld [vmem:[%s7300 + $0xa0] sm:%s7291]
                %7343 = vst [vmem:[%s7301 + $0xa0] sm:%s7291] %v7342
                %v7344 = vld [vmem:[%s7300 + $0xa8] sm:%s7291]
                %7345 = vst [vmem:[%s7301 + $0xa8] sm:%s7291] %v7344
                %v7346 = vld [vmem:[%s7300 + $0xb0] sm:%s7291]
                %7347 = vst [vmem:[%s7301 + $0xb0] sm:%s7291] %v7346
                %v7348 = vld [vmem:[%s7300 + $0xb8] sm:%s7291]
                %7349 = vst [vmem:[%s7301 + $0xb8] sm:%s7291] %v7348
                %v7350 = vld [vmem:[%s7300 + $0xc0] sm:%s7291]
                %7351 = vst [vmem:[%s7301 + $0xc0] sm:%s7291] %v7350
                %v7352 = vld [vmem:[%s7300 + $0xc8] sm:%s7291]
                %7353 = vst [vmem:[%s7301 + $0xc8] sm:%s7291] %v7352
                %v7354 = vld [vmem:[%s7300 + $0xd0] sm:%s7291]
                %7355 = vst [vmem:[%s7301 + $0xd0] sm:%s7291] %v7354
                %v7356 = vld [vmem:[%s7300 + $0xd8] sm:%s7291]
                %7357 = vst [vmem:[%s7301 + $0xd8] sm:%s7291] %v7356
                %v7358 = vld [vmem:[%s7300 + $0xe0] sm:%s7291]
                %7359 = vst [vmem:[%s7301 + $0xe0] sm:%s7291] %v7358
                %v7360 = vld [vmem:[%s7300 + $0xe8] sm:%s7291]
                %7361 = vst [vmem:[%s7301 + $0xe8] sm:%s7291] %v7360
                %v7362 = vld [vmem:[%s7300 + $0xf0] sm:%s7291]
                %7363 = vst [vmem:[%s7301 + $0xf0] sm:%s7291] %v7362
                %v7364 = vld [vmem:[%s7300 + $0xf8] sm:%s7291]
                %7365 = vst [vmem:[%s7301 + $0xf8] sm:%s7291] %v7364
                %v7366 = vld [vmem:[%s7300 + $0x100] sm:%s7291]
                %7367 = vst [vmem:[%s7301 + $0x100] sm:%s7291] %v7366
                %v7368 = vld [vmem:[%s7300 + $0x108] sm:%s7291]
                %7369 = vst [vmem:[%s7301 + $0x108] sm:%s7291] %v7368
                %v7370 = vld [vmem:[%s7300 + $0x110] sm:%s7291]
                %7371 = vst [vmem:[%s7301 + $0x110] sm:%s7291] %v7370
                %v7372 = vld [vmem:[%s7300 + $0x118] sm:%s7291]
                %7373 = vst [vmem:[%s7301 + $0x118] sm:%s7291] %v7372
                %v7374 = vld [vmem:[%s7300 + $0x120] sm:%s7291]
                %7375 = vst [vmem:[%s7301 + $0x120] sm:%s7291] %v7374
                %v7376 = vld [vmem:[%s7300 + $0x128] sm:%s7291]
                %7377 = vst [vmem:[%s7301 + $0x128] sm:%s7291] %v7376
                %v7378 = vld [vmem:[%s7300 + $0x130] sm:%s7291]
                %7379 = vst [vmem:[%s7301 + $0x130] sm:%s7291] %v7378
                %v7380 = vld [vmem:[%s7300 + $0x138] sm:%s7291]
                %7381 = vst [vmem:[%s7301 + $0x138] sm:%s7291] %v7380
                %v7382 = vld [vmem:[%s7300 + $0x140] sm:%s7291]
                %7383 = vst [vmem:[%s7301 + $0x140] sm:%s7291] %v7382
                %v7384 = vld [vmem:[%s7300 + $0x148] sm:%s7291]
                %7385 = vst [vmem:[%s7301 + $0x148] sm:%s7291] %v7384
                %v7386 = vld [vmem:[%s7300 + $0x150] sm:%s7291]
                %7387 = vst [vmem:[%s7301 + $0x150] sm:%s7291] %v7386
                %v7388 = vld [vmem:[%s7300 + $0x158] sm:%s7291]
                %7389 = vst [vmem:[%s7301 + $0x158] sm:%s7291] %v7388
                %v7390 = vld [vmem:[%s7300 + $0x160] sm:%s7291]
                %7391 = vst [vmem:[%s7301 + $0x160] sm:%s7291] %v7390
                %v7392 = vld [vmem:[%s7300 + $0x168] sm:%s7291]
                %7393 = vst [vmem:[%s7301 + $0x168] sm:%s7291] %v7392
                %v7394 = vld [vmem:[%s7300 + $0x170] sm:%s7291]
                %7395 = vst [vmem:[%s7301 + $0x170] sm:%s7291] %v7394
                %v7396 = vld [vmem:[%s7300 + $0x178] sm:%s7291]
                %7397 = vst [vmem:[%s7301 + $0x178] sm:%s7291] %v7396
                %v7398 = vld [vmem:[%s7300 + $0x180] sm:%s7291]
                %7399 = vst [vmem:[%s7301 + $0x180] sm:%s7291] %v7398
                %v7400 = vld [vmem:[%s7300 + $0x188] sm:%s7291]
                %7401 = vst [vmem:[%s7301 + $0x188] sm:%s7291] %v7400
                %v7402 = vld [vmem:[%s7300 + $0x190] sm:%s7291]
                %7403 = vst [vmem:[%s7301 + $0x190] sm:%s7291] %v7402
                %v7404 = vld [vmem:[%s7300 + $0x198] sm:%s7291]
                %7405 = vst [vmem:[%s7301 + $0x198] sm:%s7291] %v7404
                %v7406 = vld [vmem:[%s7300 + $0x1a0] sm:%s7291]
                %7407 = vst [vmem:[%s7301 + $0x1a0] sm:%s7291] %v7406
                %v7408 = vld [vmem:[%s7300 + $0x1a8] sm:%s7291]
                %7409 = vst [vmem:[%s7301 + $0x1a8] sm:%s7291] %v7408
                %v7410 = vld [vmem:[%s7300 + $0x1b0] sm:%s7291]
                %7411 = vst [vmem:[%s7301 + $0x1b0] sm:%s7291] %v7410
                %v7412 = vld [vmem:[%s7300 + $0x1b8] sm:%s7291]
                %7413 = vst [vmem:[%s7301 + $0x1b8] sm:%s7291] %v7412
                %v7414 = vld [vmem:[%s7300 + $0x1c0] sm:%s7291]
                %7415 = vst [vmem:[%s7301 + $0x1c0] sm:%s7291] %v7414
                %v7416 = vld [vmem:[%s7300 + $0x1c8] sm:%s7291]
                %7417 = vst [vmem:[%s7301 + $0x1c8] sm:%s7291] %v7416
                %v7418 = vld [vmem:[%s7300 + $0x1d0] sm:%s7291]
                %7419 = vst [vmem:[%s7301 + $0x1d0] sm:%s7291] %v7418
                %v7420 = vld [vmem:[%s7300 + $0x1d8] sm:%s7291]
                %7421 = vst [vmem:[%s7301 + $0x1d8] sm:%s7291] %v7420
                %v7422 = vld [vmem:[%s7300 + $0x1e0] sm:%s7291]
                %7423 = vst [vmem:[%s7301 + $0x1e0] sm:%s7291] %v7422
                %v7424 = vld [vmem:[%s7300 + $0x1e8] sm:%s7291]
                %7425 = vst [vmem:[%s7301 + $0x1e8] sm:%s7291] %v7424
                %v7426 = vld [vmem:[%s7300 + $0x1f0] sm:%s7291]
                %7427 = vst [vmem:[%s7301 + $0x1f0] sm:%s7291] %v7426
                %v7428 = vld [vmem:[%s7300 + $0x1f8] sm:%s7291]
                %7429 = vst [vmem:[%s7301 + $0x1f8] sm:%s7291] %v7428
                %s7430 = sadd.s32 1, %s7299
                %p7431 = scmp.ge.s32.totalorder %s7430, %s7292
                %s7432 = scalar_select %p7431, 0, %s7430
                %s7433 = smul.u32 %s7432, 512
                %s7434 = smul.u32 %s7432, 512
                %s7435 = scalar_lea.vmem %s7271, %s7433 [#allocation2]
                %s7436 = scalar_lea.vmem %s7282, %s7434
              $region77: #{autoencoder_forward.1} parent=71 // loop_footer
                %s7296 = sadd.s32 %s7294, 1
              $region78: #{autoencoder_forward.1} parent=71 // loop_footer_branch
                %7293 = sbr.rel target = $region74
              $region79: #{autoencoder_forward.1} parent=71 // loop_exit
                _
              %s7437 = sshrl.u32 %s7278, 6
              %s7438 = sand.u32 %s7278, 63
              %s7439 = smul.u32 %s7437, 64
              %s7440 = smul.u32 8, %s7439
              %s7441 = scalar_lea.vmem %s7271, %s7440 [#allocation2]
              %s7442 = smul.u32 8, %s7439
              %s7443 = scalar_lea.vmem %s7282, %s7442
              // While loop
              $region80: #{autoencoder_forward.1} parent=71 // loop_pre_header
                _
              $region81: #{autoencoder_forward.1} parent=71 // loop_header
                %s7445 = sphi 0, %s7447
                %p7446 = scmp.ge.s32.totalorder %s7445, %s7438
                %s7450 = sphi 0, %s7457
                %s7451 = sphi %s7441, %s7460
                %s7452 = sphi %s7443, %s7461
              $region82: #{autoencoder_forward.1} parent=71 // loop_header_branch
                %7449 = sbr.rel (%p7446) target = $region86
              $region83: #{autoencoder_forward.1} parent=71 // loop_body
                %v7453 = vld [vmem:[%s7451] sm:%s7291]
                %7454 = vst [vmem:[%s7452] sm:%s7291] %v7453
                %s7455 = sadd.s32 1, %s7450
                %p7456 = scmp.ge.s32.totalorder %s7455, %s7438
                %s7457 = scalar_select %p7456, 0, %s7455
                %s7458 = smul.u32 %s7457, 8
                %s7459 = smul.u32 %s7457, 8
                %s7460 = scalar_lea.vmem %s7441, %s7458 [#allocation2]
                %s7461 = scalar_lea.vmem %s7443, %s7459
              $region84: #{autoencoder_forward.1} parent=71 // loop_footer
                %s7447 = sadd.s32 %s7445, 1
              $region85: #{autoencoder_forward.1} parent=71 // loop_footer_branch
                %7444 = sbr.rel target = $region81
              $region86: #{autoencoder_forward.1} parent=71 // loop_exit
                _
            $region72: #{autoencoder_forward.1} parent=63 // pred_fallthru
              _
          $region64: #{autoencoder_forward.1} parent=59 // pred_fallthru
            _
          %7636 = vnop
        $region60: #{autoencoder_forward.1} parent=55 // pred_fallthru
          _
      $region56: #{autoencoder_forward.1} parent=5 // pred_fallthru
        _
      %p7637 = scmp.le.s32.totalorder 2, %s15
      // Predicated region
      $region109: #{autoencoder_forward.1} parent=5 // pred_check
        %p7638 = pneg %p7637
      $region110: #{autoencoder_forward.1} parent=5 // pred_check_branch
        %7640 = sbr.rel (%p7638) target = $region112
      $region111: #{autoencoder_forward.1} parent=5 // pred_region
        %s7641 = ssub.s32 %s15, 2
        // Predicated region
        $region113: #{autoencoder_forward.1} parent=111 // pred_check
          %p7642 = pneg %p238
        $region114: #{autoencoder_forward.1} parent=111 // pred_check_branch
          %7644 = sbr.rel (%p7642) target = $region116
        $region115: #{autoencoder_forward.1} parent=111 // pred_region
          %s7645 = sand.u32 %s223, 1
          %s7646 = sand.u32 %s223, 1
          %s7647 = smul.addr %s7646, 2048
          %s7648 = scalar_lea.vmem [#allocation2], %s7647
        $region116: #{autoencoder_forward.1} parent=111 // pred_fallthru
          _
      $region112: #{autoencoder_forward.1} parent=5 // pred_fallthru
        _
    $region6: #{autoencoder_forward.1} parent=1 // loop_footer
      %s19 = sadd.s32 1, %s15
    $region7: #{autoencoder_forward.1} parent=1 // loop_footer_branch
      %14 = sbr.rel target = $region3
    $region8: #{autoencoder_forward.1} parent=1 // loop_exit
      _

</llo_original>
